<compile_context>
chip_gen: v5e
topology: v5e:2x2
jax: 0.10.0
libtpu: 0.0.40
codegen_flags: <defaults>
</compile_context>

<pallas_src>
import functools
import math

import jax
import jax.numpy as jnp
from jax import lax
from jax.experimental import pallas as pl
from jax.experimental.pallas import tpu as pltpu


# ----------------------------------------------------------------------------
# helpers (kernel-only softmax: divide on the EUP)
# ----------------------------------------------------------------------------
def _softmax(x, axis):
    m = jnp.max(x, axis=axis, keepdims=True)
    e = jnp.exp(x - m)
    s = jnp.sum(e, axis=axis, keepdims=True)
    return e * pl.reciprocal(s, approx=True)


def _round_up(a, b):
    return ((a + b - 1) // b) * b


def _choose_tiling(n, titles_per_step):
    """Pick (tile, n_pad, grid): tile multiple of 8 (or == n), and >= 2 grid
    steps whenever n >= 16 so both v7x TensorCores get work."""
    if n < 16:
        return n, n, 1
    grid = max(2, -(-n // titles_per_step))
    tile = min(_round_up(titles_per_step, 8), _round_up(-(-n // grid), 8))
    n_pad = _round_up(n, tile)
    return tile, n_pad, n_pad // tile


# ----------------------------------------------------------------------------
# encoder kernel: multi-head self-attention + AttLayer2 pooling
#   x block:  [T, S, in_dim]  ->  pooled block: [T, out_dim]
# ----------------------------------------------------------------------------
def make_encoder_kernel(heads, head_dim):
    out_dim = heads * head_dim
    scale = 1.0 / math.sqrt(float(head_dim))

    def kernel(x_ref, wq_ref, bq_ref, wk_ref, bk_ref, wv_ref, bv_ref,
               aw_ref, ab_ref, aq_ref, o_ref):
        x = x_ref[...]                                   # [T, S, E]  bf16
        tb = x.shape[0]

        # Q/K/V projections: bf16 inputs, f32 accumulation on the MXU
        # (dot_general folds [T, S] into the M axis -> one big matmul each).
        dproj = (((2,), (0,)), ((), ()))                 # contract feature dim
        q = lax.dot_general(x, wq_ref[...], dproj,
                            preferred_element_type=jnp.float32) + bq_ref[...]
        k = lax.dot_general(x, wk_ref[...], dproj,
                            preferred_element_type=jnp.float32) + bk_ref[...]
        v = lax.dot_general(x, wv_ref[...], dproj,
                            preferred_element_type=jnp.float32) + bv_ref[...]

        # --- head-batched attention -------------------------------------
        # Stack heads on the leading batch axis: [heads*T, S, head_dim].
        # One batched dot_general pair then handles every (title, head) with
        # only a head_dim-long contraction (no masked full-D redundancy).
        def split_heads(z):
            return jnp.concatenate(
                [z[:, :, h * head_dim:(h + 1) * head_dim] for h in range(heads)],
                axis=0)

        qh = split_heads(q)                              # [H*T, S, hd]
        kh = split_heads(k)
        vh = split_heads(v)

        d_qk = (((2,), (2,)), ((0,), (0,)))              # contract head_dim, batch (h*t)
        d_av = (((2,), (1,)), ((0,), (0,)))              # contract keys,     batch (h*t)
        a = lax.dot_general(qh, kh, d_qk,
                            preferred_element_type=jnp.float32) * scale
        a = _softmax(a, axis=-1)                         # [H*T, S, S]
        ob = lax.dot_general(a, vh, d_av,
                             preferred_element_type=jnp.float32)   # [H*T, S, hd]

        # un-stack back to [T, S, out_dim] (head h -> lanes [h*hd, (h+1)*hd))
        o = jnp.concatenate(
            [ob[h * tb:(h + 1) * tb] for h in range(heads)], axis=-1)

        # --- AttLayer2: softmax(tanh(o @ W + b) . q_att) over the sequence
        att = jnp.tanh(
            lax.dot_general(o.astype(jnp.bfloat16), aw_ref[...], dproj,
                            preferred_element_type=jnp.float32) + ab_ref[...])
        score = jnp.sum(att * aq_ref[...], axis=-1)      # [T, S] (VPU mult + lane reduce)
        w = _softmax(score, axis=-1)                     # softmax over sequence
        o_ref[...] = jnp.sum(o * w[:, :, None], axis=1)  # [T, out_dim], lane-dense store

    return kernel


def encoder_pallas(x, params, heads, head_dim, titles_per_step=32):
    """x: [N, S, in_dim] -> [N, heads*head_dim] float32."""
    n, s, in_dim = x.shape
    out_dim = heads * head_dim
    att_dim = params["aw"].shape[1]

    if x.dtype != jnp.bfloat16:
        x = x.astype(jnp.bfloat16)

    tile, n_pad, grid = _choose_tiling(n, titles_per_step)
    if n_pad != n:
        x = jnp.pad(x, ((0, n_pad - n), (0, 0), (0, 0)))

    const = lambda shape: pl.BlockSpec(shape, lambda i: (0, 0))

    flops = (2 * n_pad * s * in_dim * out_dim * 3          # Q/K/V projections
             + 2 * n_pad * s * s * out_dim * 2             # QK^T + AV (all heads)
             + 2 * n_pad * s * out_dim * att_dim           # AttLayer2 projection
             + 2 * n_pad * s * out_dim)                    # weighted pooling
    transcendentals = n_pad * (heads * s * s + s * att_dim + 2 * s)
    bytes_accessed = (n_pad * s * in_dim * 2 + n_pad * out_dim * 4
                      + 3 * (in_dim * out_dim * 2 + out_dim * 4)
                      + out_dim * att_dim * 2 + 2 * att_dim * 4)

    out = pl.pallas_call(
        make_encoder_kernel(heads, head_dim),
        out_shape=jax.ShapeDtypeStruct((n_pad, out_dim), jnp.float32),
        grid_spec=pltpu.PrefetchScalarGridSpec(
            num_scalar_prefetch=0,
            grid=(grid,),
            in_specs=[
                pl.BlockSpec((tile, s, in_dim), lambda i: (i, 0, 0)),  # x tile
                const((in_dim, out_dim)),                              # WQ (bf16)
                const((1, out_dim)),                                   # bQ
                const((in_dim, out_dim)),                              # WK (bf16)
                const((1, out_dim)),                                   # bK
                const((in_dim, out_dim)),                              # WV (bf16)
                const((1, out_dim)),                                   # bV
                const((out_dim, att_dim)),                             # AttLayer2 W (bf16)
                const((1, att_dim)),                                   # AttLayer2 b
                const((1, att_dim)),                                   # AttLayer2 q (row)
            ],
            out_specs=pl.BlockSpec((tile, out_dim), lambda i: (i, 0)),
        ),
        compiler_params=pltpu.CompilerParams(
            dimension_semantics=("parallel",),
            vmem_limit_bytes=48 * 1024 * 1024),
        cost_estimate=pl.CostEstimate(flops=int(flops),
                                      transcendentals=int(transcendentals),
                                      bytes_accessed=int(bytes_accessed)),
    )(x,
      params["wq"], params["bq"],
      params["wk"], params["bk"],
      params["wv"], params["bv"],
      params["aw"], params["ab"],
      params["aq"].reshape(1, att_dim))
    return out[:n]      # drop padded titles immediately (keep slice adjacent)


# ----------------------------------------------------------------------------
# deterministic parameter construction (synthetic weights, no checkpoint load)
# ----------------------------------------------------------------------------
def _xavier(key, shape):
    limit = math.sqrt(6.0 / (shape[0] + shape[1]))
    return jax.random.uniform(key, shape, jnp.float32, -limit, limit)


def init_params(key, vocab_size, emb_dim, head_num, head_dim, att_dim):
    d_news = head_num * head_dim          # news-encoder output dim
    d_user = head_num * head_num          # user-encoder self-attn output dim
    keys = iter(jax.random.split(key, 32))

    def encoder_params(in_dim, out_dim):
        return {
            "wq": _xavier(next(keys), (in_dim, out_dim)).astype(jnp.bfloat16),
            "bq": 0.02 * jax.random.normal(next(keys), (1, out_dim), jnp.float32),
            "wk": _xavier(next(keys), (in_dim, out_dim)).astype(jnp.bfloat16),
            "bk": 0.02 * jax.random.normal(next(keys), (1, out_dim), jnp.float32),
            "wv": _xavier(next(keys), (in_dim, out_dim)).astype(jnp.bfloat16),
            "bv": 0.02 * jax.random.normal(next(keys), (1, out_dim), jnp.float32),
            "aw": _xavier(next(keys), (out_dim, att_dim)).astype(jnp.bfloat16),
            "ab": jnp.zeros((1, att_dim), jnp.float32),
            "aq": _xavier(next(keys), (att_dim, 1)),
        }

    # embedding table stored in bf16 once -> bf16 gathered rows, half the
    # activation HBM traffic and no per-call cast pass.
    embedding = jax.random.normal(next(keys), (vocab_size, emb_dim),
                                  jnp.float32).astype(jnp.bfloat16)
    return {"embedding": embedding,
            "news": encoder_params(emb_dim, d_news),
            "user": encoder_params(d_news, d_user)}


# ----------------------------------------------------------------------------
# full NRMSModel_addition forward
# ----------------------------------------------------------------------------
def nrms_forward(params, his_input_title, pred_input_title, time_embedding,
                 head_num, head_dim):
    b, hs, mtl = his_input_title.shape
    _, ps, _ = pred_input_title.shape
    emb = params["embedding"]                       # bf16 table
    e = emb.shape[1]
    d_news = head_num * head_dim

    # embedding gather (plain-JAX glue); dropout = identity (eval mode)
    tokens = jnp.concatenate([his_input_title.reshape(b * hs, mtl),
                              pred_input_title.reshape(b * ps, mtl)], axis=0)
    emb_seq = jnp.take(emb, tokens.reshape(-1), axis=0).reshape(
        b * (hs + ps), mtl, e)                      # bf16 activations

    # single news-encoder pallas_call over clicked + candidate titles
    presents = encoder_pallas(emb_seq, params["news"], head_num, head_dim)
    click_title_presents = presents[: b * hs].reshape(b, hs, d_news)
    news_present = presents[b * hs:].reshape(b, ps, d_news)

    # user encoder: self-attn (heads=head_num, head_dim=head_num) + AttLayer2
    user_present = encoder_pallas(click_title_presents, params["user"],
                                  head_num, head_num)            # [B, head_num^2]

    # scoring: (news + time_emb) . user, softmax over candidates (tiny -> JAX)
    logits = jnp.einsum("bpd,bd->bp", news_present + time_embedding, user_present)
    return jax.nn.softmax(logits, axis=-1)


# ----------------------------------------------------------------------------
# pure-JAX reference (same bf16-in / f32-accumulate precision as the kernel)
# ----------------------------------------------------------------------------
def encoder_ref(x, params, heads, head_dim):
    n, s, _ = x.shape
    d = heads * head_dim
    xb = x.astype(jnp.bfloat16)

    def proj(w, b):
        return jnp.einsum("nse,ed->nsd", xb, w.astype(jnp.bfloat16),
                          preferred_element_type=jnp.float32) + b

    q = proj(params["wq"], params["bq"]).reshape(n, s, heads, head_dim)
    k = proj(params["wk"], params["bk"]).reshape(n, s, heads, head_dim)
    v = proj(params["wv"], params["bv"]).reshape(n, s, heads, head_dim)
    a = jnp.einsum("nshd,nthd->nhst", q, k,
                   preferred_element_type=jnp.float32) / math.sqrt(head_dim)
    a = jax.nn.softmax(a, axis=-1)
    o = jnp.einsum("nhst,nthd->nshd", a, v,
                   preferred_element_type=jnp.float32).reshape(n, s, d)
    t = jnp.tanh(jnp.einsum("nsd,da->nsa", o.astype(jnp.bfloat16),
                            params["aw"].astype(jnp.bfloat16),
                            preferred_element_type=jnp.float32) + params["ab"])
    score = jnp.einsum("nsa,a->ns", t, params["aq"][:, 0])
    w = jax.nn.softmax(score, axis=-1)
    return jnp.einsum("nsd,ns->nd", o, w)


def nrms_forward_ref(params, his_input_title, pred_input_title, time_embedding,
                     head_num, head_dim):
    b, hs, mtl = his_input_title.shape
    _, ps, _ = pred_input_title.shape
    emb = params["embedding"]
    e = emb.shape[1]
    d_news = head_num * head_dim

    his_emb = jnp.take(emb, his_input_title.reshape(-1), axis=0).reshape(b * hs, mtl, e)
    pred_emb = jnp.take(emb, pred_input_title.reshape(-1), axis=0).reshape(b * ps, mtl, e)

    click = encoder_ref(his_emb, params["news"], head_num, head_dim).reshape(b, hs, d_news)
    news = encoder_ref(pred_emb, params["news"], head_num, head_dim).reshape(b, ps, d_news)
    user = encoder_ref(click, params["user"], head_num, head_num)

    logits = jnp.einsum("bpd,bd->bp", news + time_embedding, user)
    return jax.nn.softmax(logits, axis=-1)


if __name__ == "__main__":
    # small, forward-consistent shapes (head_dim == head_num required by the
    # reference model's bmm between news and user representations)
    B, HS, PS, MTL = 2, 4, 5, 8
    VOCAB, EMB_DIM = 64, 32
    HEAD_NUM, HEAD_DIM = 4, 4            # => news dim = user dim = 16
    ATT_DIM = 32
    D = HEAD_NUM * HEAD_DIM

    key = jax.random.PRNGKey(0)
    k_par, k_his, k_pred, k_time = jax.random.split(key, 4)

    params = init_params(k_par, VOCAB, EMB_DIM, HEAD_NUM, HEAD_DIM, ATT_DIM)

    his_input_title = jax.random.randint(k_his, (B, HS, MTL), 0, VOCAB, jnp.int32)
    pred_input_title = jax.random.randint(k_pred, (B, PS, MTL), 0, VOCAB, jnp.int32)
    time_embedding = jax.random.normal(k_time, (B, PS, D), jnp.float32)

    fwd = jax.jit(functools.partial(nrms_forward, params,
                                    head_num=HEAD_NUM, head_dim=HEAD_DIM))
    preds = fwd(his_input_title, pred_input_title, time_embedding)
    jax.block_until_ready(preds)

    ref = nrms_forward_ref(params, his_input_title, pred_input_title,
                           time_embedding, HEAD_NUM, HEAD_DIM)

    assert preds.shape == (B, PS)
    assert bool(jnp.all(jnp.isfinite(preds)))
    assert bool(jnp.allclose(jnp.sum(preds, axis=-1), 1.0, atol=1e-5))
    assert bool(jnp.allclose(preds, ref, atol=2e-2, rtol=2e-2))
    print("KERNEL_OK")
</pallas_src>

<mosaic_0001>
module attributes {stable_mosaic.version = 11 : i64} {
  func.func @kernel(%arg0: i32, %arg1: memref<16x8x32xbf16, #tpu.memory_space<vmem>>, %arg2: memref<32x16xbf16, #tpu.memory_space<vmem>>, %arg3: memref<1x16xf32, #tpu.memory_space<vmem>>, %arg4: memref<32x16xbf16, #tpu.memory_space<vmem>>, %arg5: memref<1x16xf32, #tpu.memory_space<vmem>>, %arg6: memref<32x16xbf16, #tpu.memory_space<vmem>>, %arg7: memref<1x16xf32, #tpu.memory_space<vmem>>, %arg8: memref<16x32xbf16, #tpu.memory_space<vmem>>, %arg9: memref<1x32xf32, #tpu.memory_space<vmem>>, %arg10: memref<1x32xf32, #tpu.memory_space<vmem>>, %arg11: memref<16x16xf32, #tpu.memory_space<vmem>>) attributes {dimension_semantics = [#tpu.dimension_semantics<parallel>], iteration_bounds = array<i64: 2>, scalar_prefetch = 0 : i64, scratch_operands = 0 : i64, tpu.core_type = #tpu.core_type<tc>, window_params = [{transform_indices = @transform_0, window_bounds = array<i64: 16, 8, 32>}, {pipeline_mode = #tpu.pipeline_mode<synchronous>, transform_indices = @transform_1, window_bounds = array<i64: 32, 16>}, {pipeline_mode = #tpu.pipeline_mode<synchronous>, transform_indices = @transform_2, window_bounds = array<i64: 1, 16>}, {pipeline_mode = #tpu.pipeline_mode<synchronous>, transform_indices = @transform_3, window_bounds = array<i64: 32, 16>}, {pipeline_mode = #tpu.pipeline_mode<synchronous>, transform_indices = @transform_4, window_bounds = array<i64: 1, 16>}, {pipeline_mode = #tpu.pipeline_mode<synchronous>, transform_indices = @transform_5, window_bounds = array<i64: 32, 16>}, {pipeline_mode = #tpu.pipeline_mode<synchronous>, transform_indices = @transform_6, window_bounds = array<i64: 1, 16>}, {pipeline_mode = #tpu.pipeline_mode<synchronous>, transform_indices = @transform_7, window_bounds = array<i64: 16, 32>}, {pipeline_mode = #tpu.pipeline_mode<synchronous>, transform_indices = @transform_8, window_bounds = array<i64: 1, 32>}, {pipeline_mode = #tpu.pipeline_mode<synchronous>, transform_indices = @transform_9, window_bounds = array<i64: 1, 32>}, {transform_indices = @transform_10, window_bounds = array<i64: 16, 16>}]} {
    %c0 = arith.constant 0 : index
    %c0_0 = arith.constant 0 : index
    %c0_1 = arith.constant 0 : index
    %0 = vector.load %arg1[%c0, %c0_0, %c0_1] : memref<16x8x32xbf16, #tpu.memory_space<vmem>>, vector<16x8x32xbf16>
    %c0_2 = arith.constant 0 : index
    %c0_3 = arith.constant 0 : index
    %1 = vector.load %arg2[%c0_2, %c0_3] : memref<32x16xbf16, #tpu.memory_space<vmem>>, vector<32x16xbf16>
    %cst = arith.constant dense<0.000000e+00> : vector<16x8x16xf32>
    %2 = tpu.matmul %0, %1, %cst {dimension_numbers = #tpu.dot_dimension_numbers<[2], [0], [0, 1], [1], [0, 0, 0, 1, 1, 1], [], []>} : vector<16x8x32xbf16>, vector<32x16xbf16>, vector<16x8x16xf32> -> vector<16x8x16xf32>
    %c0_4 = arith.constant 0 : index
    %c0_5 = arith.constant 0 : index
    %3 = vector.load %arg3[%c0_4, %c0_5] : memref<1x16xf32, #tpu.memory_space<vmem>>, vector<1x16xf32>
    %4 = vector.shape_cast %3 : vector<1x16xf32> to vector<1x1x16xf32>
    %5 = vector.broadcast %4 : vector<1x1x16xf32> to vector<16x8x16xf32>
    %6 = arith.addf %2, %5 : vector<16x8x16xf32>
    %c0_6 = arith.constant 0 : index
    %c0_7 = arith.constant 0 : index
    %7 = vector.load %arg4[%c0_6, %c0_7] : memref<32x16xbf16, #tpu.memory_space<vmem>>, vector<32x16xbf16>
    %cst_8 = arith.constant dense<0.000000e+00> : vector<16x8x16xf32>
    %8 = tpu.matmul %0, %7, %cst_8 {dimension_numbers = #tpu.dot_dimension_numbers<[2], [0], [0, 1], [1], [0, 0, 0, 1, 1, 1], [], []>} : vector<16x8x32xbf16>, vector<32x16xbf16>, vector<16x8x16xf32> -> vector<16x8x16xf32>
    %c0_9 = arith.constant 0 : index
    %c0_10 = arith.constant 0 : index
    %9 = vector.load %arg5[%c0_9, %c0_10] : memref<1x16xf32, #tpu.memory_space<vmem>>, vector<1x16xf32>
    %10 = vector.shape_cast %9 : vector<1x16xf32> to vector<1x1x16xf32>
    %11 = vector.broadcast %10 : vector<1x1x16xf32> to vector<16x8x16xf32>
    %12 = arith.addf %8, %11 : vector<16x8x16xf32>
    %c0_11 = arith.constant 0 : index
    %c0_12 = arith.constant 0 : index
    %13 = vector.load %arg6[%c0_11, %c0_12] : memref<32x16xbf16, #tpu.memory_space<vmem>>, vector<32x16xbf16>
    %cst_13 = arith.constant dense<0.000000e+00> : vector<16x8x16xf32>
    %14 = tpu.matmul %0, %13, %cst_13 {dimension_numbers = #tpu.dot_dimension_numbers<[2], [0], [0, 1], [1], [0, 0, 0, 1, 1, 1], [], []>} : vector<16x8x32xbf16>, vector<32x16xbf16>, vector<16x8x16xf32> -> vector<16x8x16xf32>
    %c0_14 = arith.constant 0 : index
    %c0_15 = arith.constant 0 : index
    %15 = vector.load %arg7[%c0_14, %c0_15] : memref<1x16xf32, #tpu.memory_space<vmem>>, vector<1x16xf32>
    %16 = vector.shape_cast %15 : vector<1x16xf32> to vector<1x1x16xf32>
    %17 = vector.broadcast %16 : vector<1x1x16xf32> to vector<16x8x16xf32>
    %18 = arith.addf %14, %17 : vector<16x8x16xf32>
    %19 = vector.extract_strided_slice %6 {offsets = [0, 0, 0], sizes = [16, 8, 4], strides = [1, 1, 1]} : vector<16x8x16xf32> to vector<16x8x4xf32>
    %20 = vector.extract_strided_slice %6 {offsets = [0, 0, 4], sizes = [16, 8, 4], strides = [1, 1, 1]} : vector<16x8x16xf32> to vector<16x8x4xf32>
    %21 = vector.extract_strided_slice %6 {offsets = [0, 0, 8], sizes = [16, 8, 4], strides = [1, 1, 1]} : vector<16x8x16xf32> to vector<16x8x4xf32>
    %22 = vector.extract_strided_slice %6 {offsets = [0, 0, 12], sizes = [16, 8, 4], strides = [1, 1, 1]} : vector<16x8x16xf32> to vector<16x8x4xf32>
    %23 = tpu.concatenate %19, %20, %21, %22 in 0 : vector<16x8x4xf32>, vector<16x8x4xf32>, vector<16x8x4xf32>, vector<16x8x4xf32> -> vector<64x8x4xf32>
    %24 = vector.extract_strided_slice %12 {offsets = [0, 0, 0], sizes = [16, 8, 4], strides = [1, 1, 1]} : vector<16x8x16xf32> to vector<16x8x4xf32>
    %25 = vector.extract_strided_slice %12 {offsets = [0, 0, 4], sizes = [16, 8, 4], strides = [1, 1, 1]} : vector<16x8x16xf32> to vector<16x8x4xf32>
    %26 = vector.extract_strided_slice %12 {offsets = [0, 0, 8], sizes = [16, 8, 4], strides = [1, 1, 1]} : vector<16x8x16xf32> to vector<16x8x4xf32>
    %27 = vector.extract_strided_slice %12 {offsets = [0, 0, 12], sizes = [16, 8, 4], strides = [1, 1, 1]} : vector<16x8x16xf32> to vector<16x8x4xf32>
    %28 = tpu.concatenate %24, %25, %26, %27 in 0 : vector<16x8x4xf32>, vector<16x8x4xf32>, vector<16x8x4xf32>, vector<16x8x4xf32> -> vector<64x8x4xf32>
    %29 = vector.extract_strided_slice %18 {offsets = [0, 0, 0], sizes = [16, 8, 4], strides = [1, 1, 1]} : vector<16x8x16xf32> to vector<16x8x4xf32>
    %30 = vector.extract_strided_slice %18 {offsets = [0, 0, 4], sizes = [16, 8, 4], strides = [1, 1, 1]} : vector<16x8x16xf32> to vector<16x8x4xf32>
    %31 = vector.extract_strided_slice %18 {offsets = [0, 0, 8], sizes = [16, 8, 4], strides = [1, 1, 1]} : vector<16x8x16xf32> to vector<16x8x4xf32>
    %32 = vector.extract_strided_slice %18 {offsets = [0, 0, 12], sizes = [16, 8, 4], strides = [1, 1, 1]} : vector<16x8x16xf32> to vector<16x8x4xf32>
    %33 = tpu.concatenate %29, %30, %31, %32 in 0 : vector<16x8x4xf32>, vector<16x8x4xf32>, vector<16x8x4xf32>, vector<16x8x4xf32> -> vector<64x8x4xf32>
    %cst_16 = arith.constant dense<0.000000e+00> : vector<64x8x8xf32>
    %34 = tpu.matmul %23, %28, %cst_16 {dimension_numbers = #tpu.dot_dimension_numbers<[2], [2], [1], [1], [0, 0, 0, 1, 1, 1], [0], [0]>} : vector<64x8x4xf32>, vector<64x8x4xf32>, vector<64x8x8xf32> -> vector<64x8x8xf32>
    %cst_17 = arith.constant 5.000000e-01 : f32
    %35 = vector.broadcast %cst_17 : f32 to vector<64x8x8xf32>
    %36 = arith.mulf %34, %35 : vector<64x8x8xf32>
    %cst_18 = arith.constant dense<0xFF800000> : vector<64x8xf32>
    %37 = vector.multi_reduction <maximumf>, %36, %cst_18 [2] : vector<64x8x8xf32> to vector<64x8xf32>
    %38 = vector.shape_cast %37 : vector<64x8xf32> to vector<64x8x1xf32>
    %39 = vector.broadcast %38 : vector<64x8x1xf32> to vector<64x8x8xf32>
    %40 = arith.subf %36, %39 : vector<64x8x8xf32>
    %41 = math.exp %40 : vector<64x8x8xf32>
    %cst_19 = arith.constant dense<0.000000e+00> : vector<64x8xf32>
    %42 = vector.multi_reduction <add>, %41, %cst_19 [2] : vector<64x8x8xf32> to vector<64x8xf32>
    %43 = vector.shape_cast %42 : vector<64x8xf32> to vector<64x8x1xf32>
    %44 = tpu.reciprocal %43 {approx = true} : vector<64x8x1xf32> -> vector<64x8x1xf32>
    %45 = vector.broadcast %44 : vector<64x8x1xf32> to vector<64x8x8xf32>
    %46 = arith.mulf %41, %45 : vector<64x8x8xf32>
    %cst_20 = arith.constant dense<0.000000e+00> : vector<64x8x4xf32>
    %47 = tpu.matmul %46, %33, %cst_20 {dimension_numbers = #tpu.dot_dimension_numbers<[2], [1], [1], [2], [0, 0, 0, 1, 1, 2], [0], [0]>} : vector<64x8x8xf32>, vector<64x8x4xf32>, vector<64x8x4xf32> -> vector<64x8x4xf32>
    %48 = vector.extract_strided_slice %47 {offsets = [0, 0, 0], sizes = [16, 8, 4], strides = [1, 1, 1]} : vector<64x8x4xf32> to vector<16x8x4xf32>
    %49 = vector.extract_strided_slice %47 {offsets = [16, 0, 0], sizes = [16, 8, 4], strides = [1, 1, 1]} : vector<64x8x4xf32> to vector<16x8x4xf32>
    %50 = vector.extract_strided_slice %47 {offsets = [32, 0, 0], sizes = [16, 8, 4], strides = [1, 1, 1]} : vector<64x8x4xf32> to vector<16x8x4xf32>
    %51 = vector.extract_strided_slice %47 {offsets = [48, 0, 0], sizes = [16, 8, 4], strides = [1, 1, 1]} : vector<64x8x4xf32> to vector<16x8x4xf32>
    %52 = tpu.concatenate %48, %49, %50, %51 in 2 : vector<16x8x4xf32>, vector<16x8x4xf32>, vector<16x8x4xf32>, vector<16x8x4xf32> -> vector<16x8x16xf32>
    %53 = arith.truncf %52 : vector<16x8x16xf32> to vector<16x8x16xbf16>
    %c0_21 = arith.constant 0 : index
    %c0_22 = arith.constant 0 : index
    %54 = vector.load %arg8[%c0_21, %c0_22] : memref<16x32xbf16, #tpu.memory_space<vmem>>, vector<16x32xbf16>
    %cst_23 = arith.constant dense<0.000000e+00> : vector<16x8x32xf32>
    %55 = tpu.matmul %53, %54, %cst_23 {dimension_numbers = #tpu.dot_dimension_numbers<[2], [0], [0, 1], [1], [0, 0, 0, 1, 1, 1], [], []>} : vector<16x8x16xbf16>, vector<16x32xbf16>, vector<16x8x32xf32> -> vector<16x8x32xf32>
    %c0_24 = arith.constant 0 : index
    %c0_25 = arith.constant 0 : index
    %56 = vector.load %arg9[%c0_24, %c0_25] : memref<1x32xf32, #tpu.memory_space<vmem>>, vector<1x32xf32>
    %57 = vector.shape_cast %56 : vector<1x32xf32> to vector<1x1x32xf32>
    %58 = vector.broadcast %57 : vector<1x1x32xf32> to vector<16x8x32xf32>
    %59 = arith.addf %55, %58 : vector<16x8x32xf32>
    %60 = math.tanh %59 : vector<16x8x32xf32>
    %c0_26 = arith.constant 0 : index
    %c0_27 = arith.constant 0 : index
    %61 = vector.load %arg10[%c0_26, %c0_27] : memref<1x32xf32, #tpu.memory_space<vmem>>, vector<1x32xf32>
    %62 = vector.shape_cast %61 : vector<1x32xf32> to vector<1x1x32xf32>
    %63 = vector.broadcast %62 : vector<1x1x32xf32> to vector<16x8x32xf32>
    %64 = arith.mulf %60, %63 : vector<16x8x32xf32>
    %cst_28 = arith.constant dense<0.000000e+00> : vector<16x8xf32>
    %65 = vector.multi_reduction <add>, %64, %cst_28 [2] : vector<16x8x32xf32> to vector<16x8xf32>
    %cst_29 = arith.constant dense<0xFF800000> : vector<16xf32>
    %66 = vector.multi_reduction <maximumf>, %65, %cst_29 [1] : vector<16x8xf32> to vector<16xf32>
    %67 = vector.shape_cast %66 : vector<16xf32> to vector<16x1xf32>
    %68 = vector.broadcast %67 : vector<16x1xf32> to vector<16x8xf32>
    %69 = arith.subf %65, %68 : vector<16x8xf32>
    %70 = math.exp %69 : vector<16x8xf32>
    %cst_30 = arith.constant dense<0.000000e+00> : vector<16xf32>
    %71 = vector.multi_reduction <add>, %70, %cst_30 [1] : vector<16x8xf32> to vector<16xf32>
    %72 = vector.shape_cast %71 : vector<16xf32> to vector<16x1xf32>
    %73 = tpu.reciprocal %72 {approx = true} : vector<16x1xf32> -> vector<16x1xf32>
    %74 = vector.broadcast %73 : vector<16x1xf32> to vector<16x8xf32>
    %75 = arith.mulf %70, %74 : vector<16x8xf32>
    %76 = vector.shape_cast %75 : vector<16x8xf32> to vector<16x8x1xf32>
    %77 = vector.broadcast %76 : vector<16x8x1xf32> to vector<16x8x16xf32>
    %78 = arith.mulf %52, %77 : vector<16x8x16xf32>
    %cst_31 = arith.constant dense<0.000000e+00> : vector<16x16xf32>
    %79 = vector.multi_reduction <add>, %78, %cst_31 [1] : vector<16x8x16xf32> to vector<16x16xf32>
    %c0_32 = arith.constant 0 : index
    %c0_33 = arith.constant 0 : index
    %80 = vector.load %arg11[%c0_32, %c0_33] : memref<16x16xf32, #tpu.memory_space<vmem>>, vector<16x16xf32>
    tpu.vector_store %arg11[%c0_32, %c0_33], %79 {strides = array<i32>} : memref<16x16xf32, #tpu.memory_space<vmem>>, vector<16x16xf32>,
    return
  }
  func.func @transform_0(%arg0: i32) -> (i32, i32, i32) {
    %c0_i32 = arith.constant 0 : i32
    %c0_i32_0 = arith.constant 0 : i32
    %c0_i32_1 = arith.constant 0 : i32
    return %arg0, %c0_i32, %c0_i32_0 : i32, i32, i32
  }
  func.func @transform_1(%arg0: i32) -> (i32, i32) {
    %c0_i32 = arith.constant 0 : i32
    %c0_i32_0 = arith.constant 0 : i32
    %c0_i32_1 = arith.constant 0 : i32
    return %c0_i32, %c0_i32_0 : i32, i32
  }
  func.func @transform_2(%arg0: i32) -> (i32, i32) {
    %c0_i32 = arith.constant 0 : i32
    %c0_i32_0 = arith.constant 0 : i32
    %c0_i32_1 = arith.constant 0 : i32
    return %c0_i32, %c0_i32_0 : i32, i32
  }
  func.func @transform_3(%arg0: i32) -> (i32, i32) {
    %c0_i32 = arith.constant 0 : i32
    %c0_i32_0 = arith.constant 0 : i32
    %c0_i32_1 = arith.constant 0 : i32
    return %c0_i32, %c0_i32_0 : i32, i32
  }
  func.func @transform_4(%arg0: i32) -> (i32, i32) {
    %c0_i32 = arith.constant 0 : i32
    %c0_i32_0 = arith.constant 0 : i32
    %c0_i32_1 = arith.constant 0 : i32
    return %c0_i32, %c0_i32_0 : i32, i32
  }
  func.func @transform_5(%arg0: i32) -> (i32, i32) {
    %c0_i32 = arith.constant 0 : i32
    %c0_i32_0 = arith.constant 0 : i32
    %c0_i32_1 = arith.constant 0 : i32
    return %c0_i32, %c0_i32_0 : i32, i32
  }
  func.func @transform_6(%arg0: i32) -> (i32, i32) {
    %c0_i32 = arith.constant 0 : i32
    %c0_i32_0 = arith.constant 0 : i32
    %c0_i32_1 = arith.constant 0 : i32
    return %c0_i32, %c0_i32_0 : i32, i32
  }
  func.func @transform_7(%arg0: i32) -> (i32, i32) {
    %c0_i32 = arith.constant 0 : i32
    %c0_i32_0 = arith.constant 0 : i32
    %c0_i32_1 = arith.constant 0 : i32
    return %c0_i32, %c0_i32_0 : i32, i32
  }
  func.func @transform_8(%arg0: i32) -> (i32, i32) {
    %c0_i32 = arith.constant 0 : i32
    %c0_i32_0 = arith.constant 0 : i32
    %c0_i32_1 = arith.constant 0 : i32
    return %c0_i32, %c0_i32_0 : i32, i32
  }
  func.func @transform_9(%arg0: i32) -> (i32, i32) {
    %c0_i32 = arith.constant 0 : i32
    %c0_i32_0 = arith.constant 0 : i32
    %c0_i32_1 = arith.constant 0 : i32
    return %c0_i32, %c0_i32_0 : i32, i32
  }
  func.func @transform_10(%arg0: i32) -> (i32, i32) {
    %c0_i32 = arith.constant 0 : i32
    %c0_i32_0 = arith.constant 0 : i32
    return %arg0, %c0_i32 : i32, i32
  }
}

module attributes {stable_mosaic.version = 11 : i64} {
  func.func @kernel(%arg0: i32, %arg1: memref<2x4x16xbf16, #tpu.memory_space<vmem>>, %arg2: memref<16x16xbf16, #tpu.memory_space<vmem>>, %arg3: memref<1x16xf32, #tpu.memory_space<vmem>>, %arg4: memref<16x16xbf16, #tpu.memory_space<vmem>>, %arg5: memref<1x16xf32, #tpu.memory_space<vmem>>, %arg6: memref<16x16xbf16, #tpu.memory_space<vmem>>, %arg7: memref<1x16xf32, #tpu.memory_space<vmem>>, %arg8: memref<16x32xbf16, #tpu.memory_space<vmem>>, %arg9: memref<1x32xf32, #tpu.memory_space<vmem>>, %arg10: memref<1x32xf32, #tpu.memory_space<vmem>>, %arg11: memref<2x16xf32, #tpu.memory_space<vmem>>) attributes {dimension_semantics = [#tpu.dimension_semantics<parallel>], iteration_bounds = array<i64: 1>, scalar_prefetch = 0 : i64, scratch_operands = 0 : i64, tpu.core_type = #tpu.core_type<tc>, window_params = [{transform_indices = @transform_0, window_bounds = array<i64: 2, 4, 16>}, {pipeline_mode = #tpu.pipeline_mode<synchronous>, transform_indices = @transform_1, window_bounds = array<i64: 16, 16>}, {pipeline_mode = #tpu.pipeline_mode<synchronous>, transform_indices = @transform_2, window_bounds = array<i64: 1, 16>}, {pipeline_mode = #tpu.pipeline_mode<synchronous>, transform_indices = @transform_3, window_bounds = array<i64: 16, 16>}, {pipeline_mode = #tpu.pipeline_mode<synchronous>, transform_indices = @transform_4, window_bounds = array<i64: 1, 16>}, {pipeline_mode = #tpu.pipeline_mode<synchronous>, transform_indices = @transform_5, window_bounds = array<i64: 16, 16>}, {pipeline_mode = #tpu.pipeline_mode<synchronous>, transform_indices = @transform_6, window_bounds = array<i64: 1, 16>}, {pipeline_mode = #tpu.pipeline_mode<synchronous>, transform_indices = @transform_7, window_bounds = array<i64: 16, 32>}, {pipeline_mode = #tpu.pipeline_mode<synchronous>, transform_indices = @transform_8, window_bounds = array<i64: 1, 32>}, {pipeline_mode = #tpu.pipeline_mode<synchronous>, transform_indices = @transform_9, window_bounds = array<i64: 1, 32>}, {transform_indices = @transform_10, window_bounds = array<i64: 2, 16>}]} {
    %c0 = arith.constant 0 : index
    %c0_0 = arith.constant 0 : index
    %c0_1 = arith.constant 0 : index
    %0 = vector.load %arg1[%c0, %c0_0, %c0_1] : memref<2x4x16xbf16, #tpu.memory_space<vmem>>, vector<2x4x16xbf16>
    %c0_2 = arith.constant 0 : index
    %c0_3 = arith.constant 0 : index
    %1 = vector.load %arg2[%c0_2, %c0_3] : memref<16x16xbf16, #tpu.memory_space<vmem>>, vector<16x16xbf16>
    %cst = arith.constant dense<0.000000e+00> : vector<2x4x16xf32>
    %2 = tpu.matmul %0, %1, %cst {dimension_numbers = #tpu.dot_dimension_numbers<[2], [0], [0, 1], [1], [0, 0, 0, 1, 1, 1], [], []>} : vector<2x4x16xbf16>, vector<16x16xbf16>, vector<2x4x16xf32> -> vector<2x4x16xf32>
    %c0_4 = arith.constant 0 : index
    %c0_5 = arith.constant 0 : index
    %3 = vector.load %arg3[%c0_4, %c0_5] : memref<1x16xf32, #tpu.memory_space<vmem>>, vector<1x16xf32>
    %4 = vector.shape_cast %3 : vector<1x16xf32> to vector<1x1x16xf32>
    %5 = vector.broadcast %4 : vector<1x1x16xf32> to vector<2x4x16xf32>
    %6 = arith.addf %2, %5 : vector<2x4x16xf32>
    %c0_6 = arith.constant 0 : index
    %c0_7 = arith.constant 0 : index
    %7 = vector.load %arg4[%c0_6, %c0_7] : memref<16x16xbf16, #tpu.memory_space<vmem>>, vector<16x16xbf16>
    %cst_8 = arith.constant dense<0.000000e+00> : vector<2x4x16xf32>
    %8 = tpu.matmul %0, %7, %cst_8 {dimension_numbers = #tpu.dot_dimension_numbers<[2], [0], [0, 1], [1], [0, 0, 0, 1, 1, 1], [], []>} : vector<2x4x16xbf16>, vector<16x16xbf16>, vector<2x4x16xf32> -> vector<2x4x16xf32>
    %c0_9 = arith.constant 0 : index
    %c0_10 = arith.constant 0 : index
    %9 = vector.load %arg5[%c0_9, %c0_10] : memref<1x16xf32, #tpu.memory_space<vmem>>, vector<1x16xf32>
    %10 = vector.shape_cast %9 : vector<1x16xf32> to vector<1x1x16xf32>
    %11 = vector.broadcast %10 : vector<1x1x16xf32> to vector<2x4x16xf32>
    %12 = arith.addf %8, %11 : vector<2x4x16xf32>
    %c0_11 = arith.constant 0 : index
    %c0_12 = arith.constant 0 : index
    %13 = vector.load %arg6[%c0_11, %c0_12] : memref<16x16xbf16, #tpu.memory_space<vmem>>, vector<16x16xbf16>
    %cst_13 = arith.constant dense<0.000000e+00> : vector<2x4x16xf32>
    %14 = tpu.matmul %0, %13, %cst_13 {dimension_numbers = #tpu.dot_dimension_numbers<[2], [0], [0, 1], [1], [0, 0, 0, 1, 1, 1], [], []>} : vector<2x4x16xbf16>, vector<16x16xbf16>, vector<2x4x16xf32> -> vector<2x4x16xf32>
    %c0_14 = arith.constant 0 : index
    %c0_15 = arith.constant 0 : index
    %15 = vector.load %arg7[%c0_14, %c0_15] : memref<1x16xf32, #tpu.memory_space<vmem>>, vector<1x16xf32>
    %16 = vector.shape_cast %15 : vector<1x16xf32> to vector<1x1x16xf32>
    %17 = vector.broadcast %16 : vector<1x1x16xf32> to vector<2x4x16xf32>
    %18 = arith.addf %14, %17 : vector<2x4x16xf32>
    %19 = vector.extract_strided_slice %6 {offsets = [0, 0, 0], sizes = [2, 4, 4], strides = [1, 1, 1]} : vector<2x4x16xf32> to vector<2x4x4xf32>
    %20 = vector.extract_strided_slice %6 {offsets = [0, 0, 4], sizes = [2, 4, 4], strides = [1, 1, 1]} : vector<2x4x16xf32> to vector<2x4x4xf32>
    %21 = vector.extract_strided_slice %6 {offsets = [0, 0, 8], sizes = [2, 4, 4], strides = [1, 1, 1]} : vector<2x4x16xf32> to vector<2x4x4xf32>
    %22 = vector.extract_strided_slice %6 {offsets = [0, 0, 12], sizes = [2, 4, 4], strides = [1, 1, 1]} : vector<2x4x16xf32> to vector<2x4x4xf32>
    %23 = tpu.concatenate %19, %20, %21, %22 in 0 : vector<2x4x4xf32>, vector<2x4x4xf32>, vector<2x4x4xf32>, vector<2x4x4xf32> -> vector<8x4x4xf32>
    %24 = vector.extract_strided_slice %12 {offsets = [0, 0, 0], sizes = [2, 4, 4], strides = [1, 1, 1]} : vector<2x4x16xf32> to vector<2x4x4xf32>
    %25 = vector.extract_strided_slice %12 {offsets = [0, 0, 4], sizes = [2, 4, 4], strides = [1, 1, 1]} : vector<2x4x16xf32> to vector<2x4x4xf32>
    %26 = vector.extract_strided_slice %12 {offsets = [0, 0, 8], sizes = [2, 4, 4], strides = [1, 1, 1]} : vector<2x4x16xf32> to vector<2x4x4xf32>
    %27 = vector.extract_strided_slice %12 {offsets = [0, 0, 12], sizes = [2, 4, 4], strides = [1, 1, 1]} : vector<2x4x16xf32> to vector<2x4x4xf32>
    %28 = tpu.concatenate %24, %25, %26, %27 in 0 : vector<2x4x4xf32>, vector<2x4x4xf32>, vector<2x4x4xf32>, vector<2x4x4xf32> -> vector<8x4x4xf32>
    %29 = vector.extract_strided_slice %18 {offsets = [0, 0, 0], sizes = [2, 4, 4], strides = [1, 1, 1]} : vector<2x4x16xf32> to vector<2x4x4xf32>
    %30 = vector.extract_strided_slice %18 {offsets = [0, 0, 4], sizes = [2, 4, 4], strides = [1, 1, 1]} : vector<2x4x16xf32> to vector<2x4x4xf32>
    %31 = vector.extract_strided_slice %18 {offsets = [0, 0, 8], sizes = [2, 4, 4], strides = [1, 1, 1]} : vector<2x4x16xf32> to vector<2x4x4xf32>
    %32 = vector.extract_strided_slice %18 {offsets = [0, 0, 12], sizes = [2, 4, 4], strides = [1, 1, 1]} : vector<2x4x16xf32> to vector<2x4x4xf32>
    %33 = tpu.concatenate %29, %30, %31, %32 in 0 : vector<2x4x4xf32>, vector<2x4x4xf32>, vector<2x4x4xf32>, vector<2x4x4xf32> -> vector<8x4x4xf32>
    %cst_16 = arith.constant dense<0.000000e+00> : vector<8x4x4xf32>
    %34 = tpu.matmul %23, %28, %cst_16 {dimension_numbers = #tpu.dot_dimension_numbers<[2], [2], [1], [1], [0, 0, 0, 1, 1, 1], [0], [0]>} : vector<8x4x4xf32>, vector<8x4x4xf32>, vector<8x4x4xf32> -> vector<8x4x4xf32>
    %cst_17 = arith.constant 5.000000e-01 : f32
    %35 = vector.broadcast %cst_17 : f32 to vector<8x4x4xf32>
    %36 = arith.mulf %34, %35 : vector<8x4x4xf32>
    %cst_18 = arith.constant dense<0xFF800000> : vector<8x4xf32>
    %37 = vector.multi_reduction <maximumf>, %36, %cst_18 [2] : vector<8x4x4xf32> to vector<8x4xf32>
    %38 = vector.shape_cast %37 : vector<8x4xf32> to vector<8x4x1xf32>
    %39 = vector.broadcast %38 : vector<8x4x1xf32> to vector<8x4x4xf32>
    %40 = arith.subf %36, %39 : vector<8x4x4xf32>
    %41 = math.exp %40 : vector<8x4x4xf32>
    %cst_19 = arith.constant dense<0.000000e+00> : vector<8x4xf32>
    %42 = vector.multi_reduction <add>, %41, %cst_19 [2] : vector<8x4x4xf32> to vector<8x4xf32>
    %43 = vector.shape_cast %42 : vector<8x4xf32> to vector<8x4x1xf32>
    %44 = tpu.reciprocal %43 {approx = true} : vector<8x4x1xf32> -> vector<8x4x1xf32>
    %45 = vector.broadcast %44 : vector<8x4x1xf32> to vector<8x4x4xf32>
    %46 = arith.mulf %41, %45 : vector<8x4x4xf32>
    %cst_20 = arith.constant dense<0.000000e+00> : vector<8x4x4xf32>
    %47 = tpu.matmul %46, %33, %cst_20 {dimension_numbers = #tpu.dot_dimension_numbers<[2], [1], [1], [2], [0, 0, 0, 1, 1, 2], [0], [0]>} : vector<8x4x4xf32>, vector<8x4x4xf32>, vector<8x4x4xf32> -> vector<8x4x4xf32>
    %48 = vector.extract_strided_slice %47 {offsets = [0, 0, 0], sizes = [2, 4, 4], strides = [1, 1, 1]} : vector<8x4x4xf32> to vector<2x4x4xf32>
    %49 = vector.extract_strided_slice %47 {offsets = [2, 0, 0], sizes = [2, 4, 4], strides = [1, 1, 1]} : vector<8x4x4xf32> to vector<2x4x4xf32>
    %50 = vector.extract_strided_slice %47 {offsets = [4, 0, 0], sizes = [2, 4, 4], strides = [1, 1, 1]} : vector<8x4x4xf32> to vector<2x4x4xf32>
    %51 = vector.extract_strided_slice %47 {offsets = [6, 0, 0], sizes = [2, 4, 4], strides = [1, 1, 1]} : vector<8x4x4xf32> to vector<2x4x4xf32>
    %52 = tpu.concatenate %48, %49, %50, %51 in 2 : vector<2x4x4xf32>, vector<2x4x4xf32>, vector<2x4x4xf32>, vector<2x4x4xf32> -> vector<2x4x16xf32>
    %53 = arith.truncf %52 : vector<2x4x16xf32> to vector<2x4x16xbf16>
    %c0_21 = arith.constant 0 : index
    %c0_22 = arith.constant 0 : index
    %54 = vector.load %arg8[%c0_21, %c0_22] : memref<16x32xbf16, #tpu.memory_space<vmem>>, vector<16x32xbf16>
    %cst_23 = arith.constant dense<0.000000e+00> : vector<2x4x32xf32>
    %55 = tpu.matmul %53, %54, %cst_23 {dimension_numbers = #tpu.dot_dimension_numbers<[2], [0], [0, 1], [1], [0, 0, 0, 1, 1, 1], [], []>} : vector<2x4x16xbf16>, vector<16x32xbf16>, vector<2x4x32xf32> -> vector<2x4x32xf32>
    %c0_24 = arith.constant 0 : index
    %c0_25 = arith.constant 0 : index
    %56 = vector.load %arg9[%c0_24, %c0_25] : memref<1x32xf32, #tpu.memory_space<vmem>>, vector<1x32xf32>
    %57 = vector.shape_cast %56 : vector<1x32xf32> to vector<1x1x32xf32>
    %58 = vector.broadcast %57 : vector<1x1x32xf32> to vector<2x4x32xf32>
    %59 = arith.addf %55, %58 : vector<2x4x32xf32>
    %60 = math.tanh %59 : vector<2x4x32xf32>
    %c0_26 = arith.constant 0 : index
    %c0_27 = arith.constant 0 : index
    %61 = vector.load %arg10[%c0_26, %c0_27] : memref<1x32xf32, #tpu.memory_space<vmem>>, vector<1x32xf32>
    %62 = vector.shape_cast %61 : vector<1x32xf32> to vector<1x1x32xf32>
    %63 = vector.broadcast %62 : vector<1x1x32xf32> to vector<2x4x32xf32>
    %64 = arith.mulf %60, %63 : vector<2x4x32xf32>
    %cst_28 = arith.constant dense<0.000000e+00> : vector<2x4xf32>
    %65 = vector.multi_reduction <add>, %64, %cst_28 [2] : vector<2x4x32xf32> to vector<2x4xf32>
    %cst_29 = arith.constant dense<0xFF800000> : vector<2xf32>
    %66 = vector.multi_reduction <maximumf>, %65, %cst_29 [1] : vector<2x4xf32> to vector<2xf32>
    %67 = vector.shape_cast %66 : vector<2xf32> to vector<2x1xf32>
    %68 = vector.broadcast %67 : vector<2x1xf32> to vector<2x4xf32>
    %69 = arith.subf %65, %68 : vector<2x4xf32>
    %70 = math.exp %69 : vector<2x4xf32>
    %cst_30 = arith.constant dense<0.000000e+00> : vector<2xf32>
    %71 = vector.multi_reduction <add>, %70, %cst_30 [1] : vector<2x4xf32> to vector<2xf32>
    %72 = vector.shape_cast %71 : vector<2xf32> to vector<2x1xf32>
    %73 = tpu.reciprocal %72 {approx = true} : vector<2x1xf32> -> vector<2x1xf32>
    %74 = vector.broadcast %73 : vector<2x1xf32> to vector<2x4xf32>
    %75 = arith.mulf %70, %74 : vector<2x4xf32>
    %76 = vector.shape_cast %75 : vector<2x4xf32> to vector<2x4x1xf32>
    %77 = vector.broadcast %76 : vector<2x4x1xf32> to vector<2x4x16xf32>
    %78 = arith.mulf %52, %77 : vector<2x4x16xf32>
    %cst_31 = arith.constant dense<0.000000e+00> : vector<2x16xf32>
    %79 = vector.multi_reduction <add>, %78, %cst_31 [1] : vector<2x4x16xf32> to vector<2x16xf32>
    %c0_32 = arith.constant 0 : index
    %c0_33 = arith.constant 0 : index
    %80 = vector.load %arg11[%c0_32, %c0_33] : memref<2x16xf32, #tpu.memory_space<vmem>>, vector<2x16xf32>
    tpu.vector_store %arg11[%c0_32, %c0_33], %79 {strides = array<i32>} : memref<2x16xf32, #tpu.memory_space<vmem>>, vector<2x16xf32>,
    return
  }
  func.func @transform_0(%arg0: i32) -> (i32, i32, i32) {
    %c0_i32 = arith.constant 0 : i32
    %c0_i32_0 = arith.constant 0 : i32
    %c0_i32_1 = arith.constant 0 : i32
    return %arg0, %c0_i32, %c0_i32_0 : i32, i32, i32
  }
  func.func @transform_1(%arg0: i32) -> (i32, i32) {
    %c0_i32 = arith.constant 0 : i32
    %c0_i32_0 = arith.constant 0 : i32
    %c0_i32_1 = arith.constant 0 : i32
    return %c0_i32, %c0_i32_0 : i32, i32
  }
  func.func @transform_2(%arg0: i32) -> (i32, i32) {
    %c0_i32 = arith.constant 0 : i32
    %c0_i32_0 = arith.constant 0 : i32
    %c0_i32_1 = arith.constant 0 : i32
    return %c0_i32, %c0_i32_0 : i32, i32
  }
  func.func @transform_3(%arg0: i32) -> (i32, i32) {
    %c0_i32 = arith.constant 0 : i32
    %c0_i32_0 = arith.constant 0 : i32
    %c0_i32_1 = arith.constant 0 : i32
    return %c0_i32, %c0_i32_0 : i32, i32
  }
  func.func @transform_4(%arg0: i32) -> (i32, i32) {
    %c0_i32 = arith.constant 0 : i32
    %c0_i32_0 = arith.constant 0 : i32
    %c0_i32_1 = arith.constant 0 : i32
    return %c0_i32, %c0_i32_0 : i32, i32
  }
  func.func @transform_5(%arg0: i32) -> (i32, i32) {
    %c0_i32 = arith.constant 0 : i32
    %c0_i32_0 = arith.constant 0 : i32
    %c0_i32_1 = arith.constant 0 : i32
    return %c0_i32, %c0_i32_0 : i32, i32
  }
  func.func @transform_6(%arg0: i32) -> (i32, i32) {
    %c0_i32 = arith.constant 0 : i32
    %c0_i32_0 = arith.constant 0 : i32
    %c0_i32_1 = arith.constant 0 : i32
    return %c0_i32, %c0_i32_0 : i32, i32
  }
  func.func @transform_7(%arg0: i32) -> (i32, i32) {
    %c0_i32 = arith.constant 0 : i32
    %c0_i32_0 = arith.constant 0 : i32
    %c0_i32_1 = arith.constant 0 : i32
    return %c0_i32, %c0_i32_0 : i32, i32
  }
  func.func @transform_8(%arg0: i32) -> (i32, i32) {
    %c0_i32 = arith.constant 0 : i32
    %c0_i32_0 = arith.constant 0 : i32
    %c0_i32_1 = arith.constant 0 : i32
    return %c0_i32, %c0_i32_0 : i32, i32
  }
  func.func @transform_9(%arg0: i32) -> (i32, i32) {
    %c0_i32 = arith.constant 0 : i32
    %c0_i32_0 = arith.constant 0 : i32
    %c0_i32_1 = arith.constant 0 : i32
    return %c0_i32, %c0_i32_0 : i32, i32
  }
  func.func @transform_10(%arg0: i32) -> (i32, i32) {
    %c0_i32 = arith.constant 0 : i32
    %c0_i32_0 = arith.constant 0 : i32
    return %arg0, %c0_i32 : i32, i32
  }
}

</mosaic_0001>

<llo_original>
// kernel: nrms_forward.3
$region0: #{nrms_forward.3}
  #allocation0 [shape = 'u32[]', space=smem, size = 0x4, offset = 0x4, fixed_abs, tag = 'smem constant byte address 0x4 - core index']
  #allocation1 [shape = 'u32[72,128]{1,0:T(1,128)}', space=vmem, size = 0x9000, scoped, tag = 'internal scratch']
  %s0 = inlined_call_operand.vmem [shape: bf16[2,4,16], index: 0, kind: input, shape index: {}]
  %s1 = inlined_call_operand.vmem [shape: bf16[16,16], index: 1, kind: input, shape index: {}]
  %s2 = inlined_call_operand.vmem [shape: f32[1,16], index: 2, kind: input, shape index: {}]
  %s3 = inlined_call_operand.vmem [shape: bf16[16,16], index: 3, kind: input, shape index: {}]
  %s4 = inlined_call_operand.vmem [shape: f32[1,16], index: 4, kind: input, shape index: {}]
  %s5 = inlined_call_operand.vmem [shape: bf16[16,16], index: 5, kind: input, shape index: {}]
  %s6 = inlined_call_operand.vmem [shape: f32[1,16], index: 6, kind: input, shape index: {}]
  %s7 = inlined_call_operand.vmem [shape: bf16[16,32], index: 7, kind: input, shape index: {}]
  %s8 = inlined_call_operand.vmem [shape: f32[1,32], index: 8, kind: input, shape index: {}]
  %s9 = inlined_call_operand.vmem [shape: f32[1,32], index: 9, kind: input, shape index: {}]
  %s10 = inlined_call_operand.vmem [shape: f32[2,16], index: 10, kind: output, shape index: {}]
  %s11 = sld [smem:[#allocation0]]
  $region50: #{nrms_forward.3} parent=0
    _
  %s13 = ssub.s32 1, %s11
  %s14 = scalar_select 0, %s13, %s11
  // Predicated region
  $region2: #{nrms_forward.3} parent=0 // pred_check
    _
  $region3: #{nrms_forward.3} parent=0 // pred_check_branch
    %16 = sbr.rel (0) target = $region5
  $region4: #{nrms_forward.3} parent=0 // pred_region
    _
  $region5: #{nrms_forward.3} parent=0 // pred_fallthru
    _
  // Predicated region
  $region6: #{nrms_forward.3} parent=0 // pred_check
    _
  $region7: #{nrms_forward.3} parent=0 // pred_check_branch
    %18 = sbr.rel (0) target = $region9
  $region8: #{nrms_forward.3} parent=0 // pred_region
    _
  $region9: #{nrms_forward.3} parent=0 // pred_fallthru
    _
  // Predicated region
  $region10: #{nrms_forward.3} parent=0 // pred_check
    _
  $region11: #{nrms_forward.3} parent=0 // pred_check_branch
    %20 = sbr.rel (0) target = $region13
  $region12: #{nrms_forward.3} parent=0 // pred_region
    _
  $region13: #{nrms_forward.3} parent=0 // pred_fallthru
    _
  // Predicated region
  $region14: #{nrms_forward.3} parent=0 // pred_check
    _
  $region15: #{nrms_forward.3} parent=0 // pred_check_branch
    %22 = sbr.rel (0) target = $region17
  $region16: #{nrms_forward.3} parent=0 // pred_region
    _
  $region17: #{nrms_forward.3} parent=0 // pred_fallthru
    _
  // Predicated region
  $region18: #{nrms_forward.3} parent=0 // pred_check
    _
  $region19: #{nrms_forward.3} parent=0 // pred_check_branch
    %24 = sbr.rel (0) target = $region21
  $region20: #{nrms_forward.3} parent=0 // pred_region
    _
  $region21: #{nrms_forward.3} parent=0 // pred_fallthru
    _
  // Predicated region
  $region22: #{nrms_forward.3} parent=0 // pred_check
    _
  $region23: #{nrms_forward.3} parent=0 // pred_check_branch
    %26 = sbr.rel (0) target = $region25
  $region24: #{nrms_forward.3} parent=0 // pred_region
    _
  $region25: #{nrms_forward.3} parent=0 // pred_fallthru
    _
  // Predicated region
  $region26: #{nrms_forward.3} parent=0 // pred_check
    _
  $region27: #{nrms_forward.3} parent=0 // pred_check_branch
    %28 = sbr.rel (0) target = $region29
  $region28: #{nrms_forward.3} parent=0 // pred_region
    _
  $region29: #{nrms_forward.3} parent=0 // pred_fallthru
    _
  // Predicated region
  $region30: #{nrms_forward.3} parent=0 // pred_check
    _
  $region31: #{nrms_forward.3} parent=0 // pred_check_branch
    %30 = sbr.rel (0) target = $region33
  $region32: #{nrms_forward.3} parent=0 // pred_region
    _
  $region33: #{nrms_forward.3} parent=0 // pred_fallthru
    _
  // Predicated region
  $region34: #{nrms_forward.3} parent=0 // pred_check
    _
  $region35: #{nrms_forward.3} parent=0 // pred_check_branch
    %32 = sbr.rel (0) target = $region37
  $region36: #{nrms_forward.3} parent=0 // pred_region
    _
  $region37: #{nrms_forward.3} parent=0 // pred_fallthru
    _
  // Predicated region
  $region38: #{nrms_forward.3} parent=0 // pred_check
    _
  $region39: #{nrms_forward.3} parent=0 // pred_check_branch
    %34 = sbr.rel (0) target = $region41
  $region40: #{nrms_forward.3} parent=0 // pred_region
    _
  $region41: #{nrms_forward.3} parent=0 // pred_fallthru
    _
  %v36 = vld [vmem:[%s0] sm:$0x3]
  %v37 = vld [vmem:[%s0 + $0x2] sm:$0x3]
  %v38 = vld [vmem:[%s1] sm:$0xf]
  %v39 = vld [vmem:[%s1 + $0x4] sm:$0xf]
  %v40 = vld [vmem:[%s2] sm:$0x1]
  %v42 = vperm.slane %v40, 0
  %44 = vst [vmem:[#allocation1] ss:$4 sm:$0xff] %v36
  %s46 = scalar_lea.vmem [#allocation1], 1
  %47 = vst [vmem:[%s46] ss:$4 sm:$0xff] %v37
  %v48 = vld.sshfl [vmem:[#allocation1] sm:$0xff pattern:$0x73625140]
  %v51 = vunpack.c.l.b16 %v38
  %v52 = vunpack.c.l.b16 %v39
  %v53 = vpack.c.b16 %v52, %v51
  %55 = vst [vmem:[#allocation1] ss:$2 sm:$0xff] %v42
  %s56 = scalar_lea.vmem [#allocation1], 1
  %57 = vst [vmem:[%s56] ss:$2 sm:$0xff] %v42
  %v58 = vld.sshfl [vmem:[#allocation1] sm:$0xff pattern:$0x75316420]
  %vm60 = vcmask 130048
  %v61 = vsel %vm60, %v48, 0
  %63 = vmatpush.bf16.msra.mxu0 0
  %64 = vmatpush.bf16.msra.mxu0 0
  %65 = vmatpush.bf16.msra.mxu0 0
  %66 = vmatpush.bf16.msra.mxu0 0
  %67 = vmatpush.bf16.msra.mxu0 0
  %68 = vmatpush.bf16.msra.mxu0 0
  %69 = vmatpush.bf16.msra.mxu0 0
  %70 = vmatpush.bf16.msra.mxu0 %v53
  %71 = vmatmul.bf16.gmra.mxu0 %v61
  %v72 = vpop.f32.mrf.mxu0
  %v73 = vadd.f32 %v58, %v72
  %v74 = vpop.f32.mrf.mxu0
  %75 = vdwg.mxu0
  %v77 = vrot.slane %v73, 4
  %v78 = vld [vmem:[%s3] sm:$0xf]
  %v79 = vld [vmem:[%s3 + $0x4] sm:$0xf]
  %v80 = vld [vmem:[%s4] sm:$0x1]
  %v82 = vperm.slane %v80, 0
  %83 = vst [vmem:[#allocation1] ss:$4 sm:$0xff] %v36
  %s84 = scalar_lea.vmem [#allocation1], 1
  %85 = vst [vmem:[%s84] ss:$4 sm:$0xff] %v37
  %v86 = vld.sshfl [vmem:[#allocation1] sm:$0xff pattern:$0x73625140]
  %v89 = vunpack.c.l.b16 %v78
  %v90 = vunpack.c.l.b16 %v79
  %v91 = vpack.c.b16 %v90, %v89
  %93 = vst [vmem:[#allocation1] ss:$2 sm:$0xff] %v82
  %s94 = scalar_lea.vmem [#allocation1], 1
  %95 = vst [vmem:[%s94] ss:$2 sm:$0xff] %v82
  %v96 = vld.sshfl [vmem:[#allocation1] sm:$0xff pattern:$0x75316420]
  %v98 = vsel %vm60, %v86, 0
  %100 = vmatpush.bf16.msra.mxu0 0
  %101 = vmatpush.bf16.msra.mxu0 0
  %102 = vmatpush.bf16.msra.mxu0 0
  %103 = vmatpush.bf16.msra.mxu0 0
  %104 = vmatpush.bf16.msra.mxu0 0
  %105 = vmatpush.bf16.msra.mxu0 0
  %106 = vmatpush.bf16.msra.mxu0 0
  %107 = vmatpush.bf16.msra.mxu0 %v91
  %108 = vmatmul.bf16.gmra.mxu0 %v98
  %v109 = vpop.f32.mrf.mxu0
  %v110 = vadd.f32 %v96, %v109
  %v111 = vpop.f32.mrf.mxu0
  %112 = vdwg.mxu0
  %v114 = vrot.slane %v110, 4
  %v115 = vld [vmem:[%s5] sm:$0xf]
  %v116 = vld [vmem:[%s5 + $0x4] sm:$0xf]
  %v117 = vld [vmem:[%s6] sm:$0x1]
  %v119 = vperm.slane %v117, 0
  %120 = vst [vmem:[#allocation1] ss:$4 sm:$0xff] %v36
  %s121 = scalar_lea.vmem [#allocation1], 1
  %122 = vst [vmem:[%s121] ss:$4 sm:$0xff] %v37
  %v123 = vld.sshfl [vmem:[#allocation1] sm:$0xff pattern:$0x73625140]
  %v126 = vunpack.c.l.b16 %v115
  %v127 = vunpack.c.l.b16 %v116
  %v128 = vpack.c.b16 %v127, %v126
  %130 = vst [vmem:[#allocation1] ss:$2 sm:$0xff] %v119
  %s131 = scalar_lea.vmem [#allocation1], 1
  %132 = vst [vmem:[%s131] ss:$2 sm:$0xff] %v119
  %v133 = vld.sshfl [vmem:[#allocation1] sm:$0xff pattern:$0x75316420]
  %v135 = vsel %vm60, %v123, 0
  %137 = vmatpush.bf16.msra.mxu0 0
  %138 = vmatpush.bf16.msra.mxu0 0
  %139 = vmatpush.bf16.msra.mxu0 0
  %140 = vmatpush.bf16.msra.mxu0 0
  %141 = vmatpush.bf16.msra.mxu0 0
  %142 = vmatpush.bf16.msra.mxu0 0
  %143 = vmatpush.bf16.msra.mxu0 0
  %144 = vmatpush.bf16.msra.mxu0 %v128
  %145 = vmatmul.bf16.gmra.mxu0 %v135
  %v146 = vpop.f32.mrf.mxu0
  %v147 = vadd.f32 %v133, %v146
  %v148 = vpop.f32.mrf.mxu0
  %149 = vdwg.mxu0
  %v151 = vrot.slane %v147, 4
  %152 = vrot.lane.b32.xlu0 %v73, 124
  %v153 = vpop.permute.xlu0 %152
  %154 = vrot.lane.b32.xlu0 %v77, 124
  %v155 = vpop.permute.xlu0 %154
  %156 = vrot.lane.b32.xlu0 %v73, 120
  %v157 = vpop.permute.xlu0 %156
  %158 = vrot.lane.b32.xlu0 %v77, 120
  %v159 = vpop.permute.xlu0 %158
  %160 = vrot.lane.b32.xlu0 %v73, 116
  %v161 = vpop.permute.xlu0 %160
  %162 = vrot.lane.b32.xlu0 %v77, 116
  %v163 = vpop.permute.xlu0 %162
  %164 = vrot.lane.b32.xlu0 %v110, 124
  %v165 = vpop.permute.xlu0 %164
  %166 = vrot.lane.b32.xlu0 %v114, 124
  %v167 = vpop.permute.xlu0 %166
  %168 = vrot.lane.b32.xlu0 %v110, 120
  %v169 = vpop.permute.xlu0 %168
  %170 = vrot.lane.b32.xlu0 %v114, 120
  %v171 = vpop.permute.xlu0 %170
  %172 = vrot.lane.b32.xlu0 %v110, 116
  %v173 = vpop.permute.xlu0 %172
  %174 = vrot.lane.b32.xlu0 %v114, 116
  %v175 = vpop.permute.xlu0 %174
  %176 = vrot.lane.b32.xlu0 %v147, 124
  %v177 = vpop.permute.xlu0 %176
  %178 = vrot.lane.b32.xlu0 %v151, 124
  %v179 = vpop.permute.xlu0 %178
  %180 = vrot.lane.b32.xlu0 %v147, 120
  %v181 = vpop.permute.xlu0 %180
  %182 = vrot.lane.b32.xlu0 %v151, 120
  %v183 = vpop.permute.xlu0 %182
  %184 = vrot.lane.b32.xlu0 %v147, 116
  %v185 = vpop.permute.xlu0 %184
  %186 = vrot.lane.b32.xlu0 %v151, 116
  %v187 = vpop.permute.xlu0 %186
  %vm188 = vcmask 31744
  %v189 = vsel %vm188, %v73, 0
  %v191 = vsel %vm188, %v110, 0
  %193 = vmatpush.xpose.msra.mxu0 0.0
  %194 = vmatpush.xpose.msra.mxu0 0.0
  %195 = vmatpush.xpose.msra.mxu0 0.0
  %196 = vmatpush.xpose.msra.mxu0 0.0
  %197 = vmatpush.xpose.msra.mxu0 0.0
  %198 = vmatpush.xpose.msra.mxu0 0.0
  %199 = vmatpush.xpose.msra.mxu0 0.0
  %200 = vmatpush.xpose.msra.mxu0 0.0
  %201 = vmatpush.xpose.msra.mxu0 0.0
  %202 = vmatpush.xpose.msra.mxu0 0.0
  %203 = vmatpush.xpose.msra.mxu0 0.0
  %204 = vmatpush.xpose.msra.mxu0 0.0
  %205 = vmatpush.xpose.msra.mxu0 0.0
  %206 = vmatpush.xpose.msra.mxu0 0.0
  %207 = vmatpush.xpose.msra.mxu0 0.0
  %208 = vmatpush.xpose.msra.mxu0 %v191
  %209 = vmatmul.f32.gmra.mxu0 %v189
  %v210 = vpop.f32.mrf.mxu0
  %v211 = vadd.f32 0.0, %v210
  %212 = vdwg.mxu0
  %v213 = vsel %vm188, %v77, 0
  %v215 = vsel %vm188, %v114, 0
  %217 = vmatpush.xpose.msra.mxu0 0.0
  %218 = vmatpush.xpose.msra.mxu0 0.0
  %219 = vmatpush.xpose.msra.mxu0 0.0
  %220 = vmatpush.xpose.msra.mxu0 0.0
  %221 = vmatpush.xpose.msra.mxu0 0.0
  %222 = vmatpush.xpose.msra.mxu0 0.0
  %223 = vmatpush.xpose.msra.mxu0 0.0
  %224 = vmatpush.xpose.msra.mxu0 0.0
  %225 = vmatpush.xpose.msra.mxu0 0.0
  %226 = vmatpush.xpose.msra.mxu0 0.0
  %227 = vmatpush.xpose.msra.mxu0 0.0
  %228 = vmatpush.xpose.msra.mxu0 0.0
  %229 = vmatpush.xpose.msra.mxu0 0.0
  %230 = vmatpush.xpose.msra.mxu0 0.0
  %231 = vmatpush.xpose.msra.mxu0 0.0
  %232 = vmatpush.xpose.msra.mxu0 %v215
  %233 = vmatmul.f32.gmra.mxu0 %v213
  %v234 = vpop.f32.mrf.mxu0
  %v235 = vadd.f32 0.0, %v234
  %236 = vdwg.mxu0
  %v237 = vsel %vm188, %v153, 0
  %v239 = vsel %vm188, %v165, 0
  %241 = vmatpush.xpose.msra.mxu0 0.0
  %242 = vmatpush.xpose.msra.mxu0 0.0
  %243 = vmatpush.xpose.msra.mxu0 0.0
  %244 = vmatpush.xpose.msra.mxu0 0.0
  %245 = vmatpush.xpose.msra.mxu0 0.0
  %246 = vmatpush.xpose.msra.mxu0 0.0
  %247 = vmatpush.xpose.msra.mxu0 0.0
  %248 = vmatpush.xpose.msra.mxu0 0.0
  %249 = vmatpush.xpose.msra.mxu0 0.0
  %250 = vmatpush.xpose.msra.mxu0 0.0
  %251 = vmatpush.xpose.msra.mxu0 0.0
  %252 = vmatpush.xpose.msra.mxu0 0.0
  %253 = vmatpush.xpose.msra.mxu0 0.0
  %254 = vmatpush.xpose.msra.mxu0 0.0
  %255 = vmatpush.xpose.msra.mxu0 0.0
  %256 = vmatpush.xpose.msra.mxu0 %v239
  %257 = vmatmul.f32.gmra.mxu0 %v237
  %v258 = vpop.f32.mrf.mxu0
  %v259 = vadd.f32 0.0, %v258
  %260 = vdwg.mxu0
  %v261 = vsel %vm188, %v155, 0
  %v263 = vsel %vm188, %v167, 0
  %265 = vmatpush.xpose.msra.mxu0 0.0
  %266 = vmatpush.xpose.msra.mxu0 0.0
  %267 = vmatpush.xpose.msra.mxu0 0.0
  %268 = vmatpush.xpose.msra.mxu0 0.0
  %269 = vmatpush.xpose.msra.mxu0 0.0
  %270 = vmatpush.xpose.msra.mxu0 0.0
  %271 = vmatpush.xpose.msra.mxu0 0.0
  %272 = vmatpush.xpose.msra.mxu0 0.0
  %273 = vmatpush.xpose.msra.mxu0 0.0
  %274 = vmatpush.xpose.msra.mxu0 0.0
  %275 = vmatpush.xpose.msra.mxu0 0.0
  %276 = vmatpush.xpose.msra.mxu0 0.0
  %277 = vmatpush.xpose.msra.mxu0 0.0
  %278 = vmatpush.xpose.msra.mxu0 0.0
  %279 = vmatpush.xpose.msra.mxu0 0.0
  %280 = vmatpush.xpose.msra.mxu0 %v263
  %281 = vmatmul.f32.gmra.mxu0 %v261
  %v282 = vpop.f32.mrf.mxu0
  %v283 = vadd.f32 0.0, %v282
  %284 = vdwg.mxu0
  %v285 = vsel %vm188, %v157, 0
  %v287 = vsel %vm188, %v169, 0
  %289 = vmatpush.xpose.msra.mxu0 0.0
  %290 = vmatpush.xpose.msra.mxu0 0.0
  %291 = vmatpush.xpose.msra.mxu0 0.0
  %292 = vmatpush.xpose.msra.mxu0 0.0
  %293 = vmatpush.xpose.msra.mxu0 0.0
  %294 = vmatpush.xpose.msra.mxu0 0.0
  %295 = vmatpush.xpose.msra.mxu0 0.0
  %296 = vmatpush.xpose.msra.mxu0 0.0
  %297 = vmatpush.xpose.msra.mxu0 0.0
  %298 = vmatpush.xpose.msra.mxu0 0.0
  %299 = vmatpush.xpose.msra.mxu0 0.0
  %300 = vmatpush.xpose.msra.mxu0 0.0
  %301 = vmatpush.xpose.msra.mxu0 0.0
  %302 = vmatpush.xpose.msra.mxu0 0.0
  %303 = vmatpush.xpose.msra.mxu0 0.0
  %304 = vmatpush.xpose.msra.mxu0 %v287
  %305 = vmatmul.f32.gmra.mxu0 %v285
  %v306 = vpop.f32.mrf.mxu0
  %v307 = vadd.f32 0.0, %v306
  %308 = vdwg.mxu0
  %v309 = vsel %vm188, %v159, 0
  %v311 = vsel %vm188, %v171, 0
  %313 = vmatpush.xpose.msra.mxu0 0.0
  %314 = vmatpush.xpose.msra.mxu0 0.0
  %315 = vmatpush.xpose.msra.mxu0 0.0
  %316 = vmatpush.xpose.msra.mxu0 0.0
  %317 = vmatpush.xpose.msra.mxu0 0.0
  %318 = vmatpush.xpose.msra.mxu0 0.0
  %319 = vmatpush.xpose.msra.mxu0 0.0
  %320 = vmatpush.xpose.msra.mxu0 0.0
  %321 = vmatpush.xpose.msra.mxu0 0.0
  %322 = vmatpush.xpose.msra.mxu0 0.0
  %323 = vmatpush.xpose.msra.mxu0 0.0
  %324 = vmatpush.xpose.msra.mxu0 0.0
  %325 = vmatpush.xpose.msra.mxu0 0.0
  %326 = vmatpush.xpose.msra.mxu0 0.0
  %327 = vmatpush.xpose.msra.mxu0 0.0
  %328 = vmatpush.xpose.msra.mxu0 %v311
  %329 = vmatmul.f32.gmra.mxu0 %v309
  %v330 = vpop.f32.mrf.mxu0
  %v331 = vadd.f32 0.0, %v330
  %332 = vdwg.mxu0
  %v333 = vsel %vm188, %v161, 0
  %v335 = vsel %vm188, %v173, 0
  %337 = vmatpush.xpose.msra.mxu0 0.0
  %338 = vmatpush.xpose.msra.mxu0 0.0
  %339 = vmatpush.xpose.msra.mxu0 0.0
  %340 = vmatpush.xpose.msra.mxu0 0.0
  %341 = vmatpush.xpose.msra.mxu0 0.0
  %342 = vmatpush.xpose.msra.mxu0 0.0
  %343 = vmatpush.xpose.msra.mxu0 0.0
  %344 = vmatpush.xpose.msra.mxu0 0.0
  %345 = vmatpush.xpose.msra.mxu0 0.0
  %346 = vmatpush.xpose.msra.mxu0 0.0
  %347 = vmatpush.xpose.msra.mxu0 0.0
  %348 = vmatpush.xpose.msra.mxu0 0.0
  %349 = vmatpush.xpose.msra.mxu0 0.0
  %350 = vmatpush.xpose.msra.mxu0 0.0
  %351 = vmatpush.xpose.msra.mxu0 0.0
  %352 = vmatpush.xpose.msra.mxu0 %v335
  %353 = vmatmul.f32.gmra.mxu0 %v333
  %v354 = vpop.f32.mrf.mxu0
  %v355 = vadd.f32 0.0, %v354
  %356 = vdwg.mxu0
  %v357 = vsel %vm188, %v163, 0
  %v359 = vsel %vm188, %v175, 0
  %361 = vmatpush.xpose.msra.mxu0 0.0
  %362 = vmatpush.xpose.msra.mxu0 0.0
  %363 = vmatpush.xpose.msra.mxu0 0.0
  %364 = vmatpush.xpose.msra.mxu0 0.0
  %365 = vmatpush.xpose.msra.mxu0 0.0
  %366 = vmatpush.xpose.msra.mxu0 0.0
  %367 = vmatpush.xpose.msra.mxu0 0.0
  %368 = vmatpush.xpose.msra.mxu0 0.0
  %369 = vmatpush.xpose.msra.mxu0 0.0
  %370 = vmatpush.xpose.msra.mxu0 0.0
  %371 = vmatpush.xpose.msra.mxu0 0.0
  %372 = vmatpush.xpose.msra.mxu0 0.0
  %373 = vmatpush.xpose.msra.mxu0 0.0
  %374 = vmatpush.xpose.msra.mxu0 0.0
  %375 = vmatpush.xpose.msra.mxu0 0.0
  %376 = vmatpush.xpose.msra.mxu0 %v359
  %377 = vmatmul.f32.gmra.mxu0 %v357
  %v378 = vpop.f32.mrf.mxu0
  %v379 = vadd.f32 0.0, %v378
  %380 = vdwg.mxu0
  %v381 = vmul.f32 %v211, 0.5
  %v382 = vmul.f32 %v235, 0.5
  %v383 = vmul.f32 %v259, 0.5
  %v384 = vmul.f32 %v283, 0.5
  %v385 = vmul.f32 %v307, 0.5
  %v386 = vmul.f32 %v331, 0.5
  %v387 = vmul.f32 %v355, 0.5
  %v388 = vmul.f32 %v379, 0.5
  %vm389 = vcmask 27648
  %v390 = vsel %vm389, %v381, -inf
  %391 = vmax.xlane.f32.xlu0 %v390
  %v392 = vpop.xlane.xlu0 %391
  %v393 = vsel %vm389, %v382, -inf
  %394 = vmax.xlane.f32.xlu0 %v393
  %v395 = vpop.xlane.xlu0 %394
  %v396 = vsel %vm389, %v383, -inf
  %397 = vmax.xlane.f32.xlu0 %v396
  %v398 = vpop.xlane.xlu0 %397
  %v399 = vsel %vm389, %v384, -inf
  %400 = vmax.xlane.f32.xlu0 %v399
  %v401 = vpop.xlane.xlu0 %400
  %v402 = vsel %vm389, %v385, -inf
  %403 = vmax.xlane.f32.xlu0 %v402
  %v404 = vpop.xlane.xlu0 %403
  %v405 = vsel %vm389, %v386, -inf
  %406 = vmax.xlane.f32.xlu0 %v405
  %v407 = vpop.xlane.xlu0 %406
  %v408 = vsel %vm389, %v387, -inf
  %409 = vmax.xlane.f32.xlu0 %v408
  %v410 = vpop.xlane.xlu0 %409
  %v411 = vsel %vm389, %v388, -inf
  %412 = vmax.xlane.f32.xlu0 %v411
  %v413 = vpop.xlane.xlu0 %412
  %v414 = vsub.f32 %v381, %v392
  %v415 = vsub.f32 %v382, %v395
  %v416 = vsub.f32 %v383, %v398
  %v417 = vsub.f32 %v384, %v401
  %v418 = vsub.f32 %v385, %v404
  %v419 = vsub.f32 %v386, %v407
  %v420 = vsub.f32 %v387, %v410
  %v421 = vsub.f32 %v388, %v413
  %v422 = vmul.f32 %v414, 1.442695
  %v423 = vpow.pop %v422
  %v424 = vmul.f32 %v415, 1.442695
  %v425 = vpow.pop %v424
  %v426 = vmul.f32 %v416, 1.442695
  %v427 = vpow.pop %v426
  %v428 = vmul.f32 %v417, 1.442695
  %v429 = vpow.pop %v428
  %v430 = vmul.f32 %v418, 1.442695
  %v431 = vpow.pop %v430
  %v432 = vmul.f32 %v419, 1.442695
  %v433 = vpow.pop %v432
  %v434 = vmul.f32 %v420, 1.442695
  %v435 = vpow.pop %v434
  %v436 = vmul.f32 %v421, 1.442695
  %v437 = vpow.pop %v436
  %v438 = vsel %vm389, %v423, 0.0
  %439 = vadd.xlane.f32.xlu0 %v438
  %v440 = vpop.xlane.xlu0 %439
  %v441 = vsel %vm389, %v425, 0.0
  %442 = vadd.xlane.f32.xlu0 %v441
  %v443 = vpop.xlane.xlu0 %442
  %v444 = vsel %vm389, %v427, 0.0
  %445 = vadd.xlane.f32.xlu0 %v444
  %v446 = vpop.xlane.xlu0 %445
  %v447 = vsel %vm389, %v429, 0.0
  %448 = vadd.xlane.f32.xlu0 %v447
  %v449 = vpop.xlane.xlu0 %448
  %v450 = vsel %vm389, %v431, 0.0
  %451 = vadd.xlane.f32.xlu0 %v450
  %v452 = vpop.xlane.xlu0 %451
  %v453 = vsel %vm389, %v433, 0.0
  %454 = vadd.xlane.f32.xlu0 %v453
  %v455 = vpop.xlane.xlu0 %454
  %v456 = vsel %vm389, %v435, 0.0
  %457 = vadd.xlane.f32.xlu0 %v456
  %v458 = vpop.xlane.xlu0 %457
  %v459 = vsel %vm389, %v437, 0.0
  %460 = vadd.xlane.f32.xlu0 %v459
  %v461 = vpop.xlane.xlu0 %460
  %v462 = vrcp.pop %v440
  %v463 = vrcp.pop %v443
  %v464 = vrcp.pop %v446
  %v465 = vrcp.pop %v449
  %v466 = vrcp.pop %v452
  %v467 = vrcp.pop %v455
  %v468 = vrcp.pop %v458
  %v469 = vrcp.pop %v461
  %v470 = vmul.f32 %v423, %v462
  %v471 = vmul.f32 %v425, %v463
  %v472 = vmul.f32 %v427, %v464
  %v473 = vmul.f32 %v429, %v465
  %v474 = vmul.f32 %v431, %v466
  %v475 = vmul.f32 %v433, %v467
  %v476 = vmul.f32 %v435, %v468
  %v477 = vmul.f32 %v437, %v469
  %v479 = vsel %vm188, %v470, 0
  %vm481 = vcmask 1043456
  %v482 = vsel %vm481, %v147, 0
  %484 = vmatpush.msra.mxu0 0.0
  %485 = vmatpush.msra.mxu0 0.0
  %486 = vmatpush.msra.mxu0 0.0
  %487 = vmatpush.msra.mxu0 0.0
  %488 = vmatpush.msra.mxu0 0.0
  %489 = vmatpush.msra.mxu0 0.0
  %490 = vmatpush.msra.mxu0 0.0
  %491 = vmatpush.msra.mxu0 0.0
  %492 = vmatpush.msra.mxu0 0.0
  %493 = vmatpush.msra.mxu0 0.0
  %494 = vmatpush.msra.mxu0 0.0
  %495 = vmatpush.msra.mxu0 0.0
  %496 = vmatpush.msra.mxu0 0.0
  %497 = vmatpush.msra.mxu0 0.0
  %498 = vmatpush.msra.mxu0 0.0
  %499 = vmatpush.msra.mxu0 %v482
  %500 = vmatmul.f32.gmra.mxu0 %v479
  %v501 = vpop.f32.mrf.mxu0
  %v502 = vadd.f32 0.0, %v501
  %503 = vdwg.mxu0
  %v505 = vsel %vm188, %v471, 0
  %v507 = vsel %vm481, %v151, 0
  %509 = vmatpush.msra.mxu0 0.0
  %510 = vmatpush.msra.mxu0 0.0
  %511 = vmatpush.msra.mxu0 0.0
  %512 = vmatpush.msra.mxu0 0.0
  %513 = vmatpush.msra.mxu0 0.0
  %514 = vmatpush.msra.mxu0 0.0
  %515 = vmatpush.msra.mxu0 0.0
  %516 = vmatpush.msra.mxu0 0.0
  %517 = vmatpush.msra.mxu0 0.0
  %518 = vmatpush.msra.mxu0 0.0
  %519 = vmatpush.msra.mxu0 0.0
  %520 = vmatpush.msra.mxu0 0.0
  %521 = vmatpush.msra.mxu0 0.0
  %522 = vmatpush.msra.mxu0 0.0
  %523 = vmatpush.msra.mxu0 0.0
  %524 = vmatpush.msra.mxu0 %v507
  %525 = vmatmul.f32.gmra.mxu0 %v505
  %v526 = vpop.f32.mrf.mxu0
  %v527 = vadd.f32 0.0, %v526
  %528 = vdwg.mxu0
  %v530 = vsel %vm188, %v472, 0
  %v532 = vsel %vm481, %v177, 0
  %534 = vmatpush.msra.mxu0 0.0
  %535 = vmatpush.msra.mxu0 0.0
  %536 = vmatpush.msra.mxu0 0.0
  %537 = vmatpush.msra.mxu0 0.0
  %538 = vmatpush.msra.mxu0 0.0
  %539 = vmatpush.msra.mxu0 0.0
  %540 = vmatpush.msra.mxu0 0.0
  %541 = vmatpush.msra.mxu0 0.0
  %542 = vmatpush.msra.mxu0 0.0
  %543 = vmatpush.msra.mxu0 0.0
  %544 = vmatpush.msra.mxu0 0.0
  %545 = vmatpush.msra.mxu0 0.0
  %546 = vmatpush.msra.mxu0 0.0
  %547 = vmatpush.msra.mxu0 0.0
  %548 = vmatpush.msra.mxu0 0.0
  %549 = vmatpush.msra.mxu0 %v532
  %550 = vmatmul.f32.gmra.mxu0 %v530
  %v551 = vpop.f32.mrf.mxu0
  %v552 = vadd.f32 0.0, %v551
  %553 = vdwg.mxu0
  %v555 = vsel %vm188, %v473, 0
  %v557 = vsel %vm481, %v179, 0
  %559 = vmatpush.msra.mxu0 0.0
  %560 = vmatpush.msra.mxu0 0.0
  %561 = vmatpush.msra.mxu0 0.0
  %562 = vmatpush.msra.mxu0 0.0
  %563 = vmatpush.msra.mxu0 0.0
  %564 = vmatpush.msra.mxu0 0.0
  %565 = vmatpush.msra.mxu0 0.0
  %566 = vmatpush.msra.mxu0 0.0
  %567 = vmatpush.msra.mxu0 0.0
  %568 = vmatpush.msra.mxu0 0.0
  %569 = vmatpush.msra.mxu0 0.0
  %570 = vmatpush.msra.mxu0 0.0
  %571 = vmatpush.msra.mxu0 0.0
  %572 = vmatpush.msra.mxu0 0.0
  %573 = vmatpush.msra.mxu0 0.0
  %574 = vmatpush.msra.mxu0 %v557
  %575 = vmatmul.f32.gmra.mxu0 %v555
  %v576 = vpop.f32.mrf.mxu0
  %v577 = vadd.f32 0.0, %v576
  %578 = vdwg.mxu0
  %v580 = vsel %vm188, %v474, 0
  %v582 = vsel %vm481, %v181, 0
  %584 = vmatpush.msra.mxu0 0.0
  %585 = vmatpush.msra.mxu0 0.0
  %586 = vmatpush.msra.mxu0 0.0
  %587 = vmatpush.msra.mxu0 0.0
  %588 = vmatpush.msra.mxu0 0.0
  %589 = vmatpush.msra.mxu0 0.0
  %590 = vmatpush.msra.mxu0 0.0
  %591 = vmatpush.msra.mxu0 0.0
  %592 = vmatpush.msra.mxu0 0.0
  %593 = vmatpush.msra.mxu0 0.0
  %594 = vmatpush.msra.mxu0 0.0
  %595 = vmatpush.msra.mxu0 0.0
  %596 = vmatpush.msra.mxu0 0.0
  %597 = vmatpush.msra.mxu0 0.0
  %598 = vmatpush.msra.mxu0 0.0
  %599 = vmatpush.msra.mxu0 %v582
  %600 = vmatmul.f32.gmra.mxu0 %v580
  %v601 = vpop.f32.mrf.mxu0
  %v602 = vadd.f32 0.0, %v601
  %603 = vdwg.mxu0
  %v605 = vsel %vm188, %v475, 0
  %v607 = vsel %vm481, %v183, 0
  %609 = vmatpush.msra.mxu0 0.0
  %610 = vmatpush.msra.mxu0 0.0
  %611 = vmatpush.msra.mxu0 0.0
  %612 = vmatpush.msra.mxu0 0.0
  %613 = vmatpush.msra.mxu0 0.0
  %614 = vmatpush.msra.mxu0 0.0
  %615 = vmatpush.msra.mxu0 0.0
  %616 = vmatpush.msra.mxu0 0.0
  %617 = vmatpush.msra.mxu0 0.0
  %618 = vmatpush.msra.mxu0 0.0
  %619 = vmatpush.msra.mxu0 0.0
  %620 = vmatpush.msra.mxu0 0.0
  %621 = vmatpush.msra.mxu0 0.0
  %622 = vmatpush.msra.mxu0 0.0
  %623 = vmatpush.msra.mxu0 0.0
  %624 = vmatpush.msra.mxu0 %v607
  %625 = vmatmul.f32.gmra.mxu0 %v605
  %v626 = vpop.f32.mrf.mxu0
  %v627 = vadd.f32 0.0, %v626
  %628 = vdwg.mxu0
  %v630 = vsel %vm188, %v476, 0
  %v632 = vsel %vm481, %v185, 0
  %634 = vmatpush.msra.mxu0 0.0
  %635 = vmatpush.msra.mxu0 0.0
  %636 = vmatpush.msra.mxu0 0.0
  %637 = vmatpush.msra.mxu0 0.0
  %638 = vmatpush.msra.mxu0 0.0
  %639 = vmatpush.msra.mxu0 0.0
  %640 = vmatpush.msra.mxu0 0.0
  %641 = vmatpush.msra.mxu0 0.0
  %642 = vmatpush.msra.mxu0 0.0
  %643 = vmatpush.msra.mxu0 0.0
  %644 = vmatpush.msra.mxu0 0.0
  %645 = vmatpush.msra.mxu0 0.0
  %646 = vmatpush.msra.mxu0 0.0
  %647 = vmatpush.msra.mxu0 0.0
  %648 = vmatpush.msra.mxu0 0.0
  %649 = vmatpush.msra.mxu0 %v632
  %650 = vmatmul.f32.gmra.mxu0 %v630
  %v651 = vpop.f32.mrf.mxu0
  %v652 = vadd.f32 0.0, %v651
  %653 = vdwg.mxu0
  %v655 = vsel %vm188, %v477, 0
  %v657 = vsel %vm481, %v187, 0
  %659 = vmatpush.msra.mxu0 0.0
  %660 = vmatpush.msra.mxu0 0.0
  %661 = vmatpush.msra.mxu0 0.0
  %662 = vmatpush.msra.mxu0 0.0
  %663 = vmatpush.msra.mxu0 0.0
  %664 = vmatpush.msra.mxu0 0.0
  %665 = vmatpush.msra.mxu0 0.0
  %666 = vmatpush.msra.mxu0 0.0
  %667 = vmatpush.msra.mxu0 0.0
  %668 = vmatpush.msra.mxu0 0.0
  %669 = vmatpush.msra.mxu0 0.0
  %670 = vmatpush.msra.mxu0 0.0
  %671 = vmatpush.msra.mxu0 0.0
  %672 = vmatpush.msra.mxu0 0.0
  %673 = vmatpush.msra.mxu0 0.0
  %674 = vmatpush.msra.mxu0 %v657
  %675 = vmatmul.f32.gmra.mxu0 %v655
  %v676 = vpop.f32.mrf.mxu0
  %v677 = vadd.f32 0.0, %v676
  %678 = vdwg.mxu0
  %681 = vrot.lane.b32.xlu0 %v552, 4
  %v682 = vpop.permute.xlu0 %681
  %683 = vrot.lane.b32.xlu0 %v577, 4
  %v684 = vpop.permute.xlu0 %683
  %689 = vrot.lane.b32.xlu0 %v602, 8
  %v690 = vpop.permute.xlu0 %689
  %691 = vrot.lane.b32.xlu0 %v627, 8
  %v692 = vpop.permute.xlu0 %691
  %697 = vrot.lane.b32.xlu0 %v652, 12
  %v698 = vpop.permute.xlu0 %697
  %699 = vrot.lane.b32.xlu0 %v677, 12
  %v700 = vpop.permute.xlu0 %699
  %v703 = vsel %vm188, %v502, %v682
  %v704 = vsel %vm188, %v527, %v684
  %vm705 = vcmask 64512
  %v706 = vsel %vm705, %v703, %v690
  %v707 = vsel %vm705, %v704, %v692
  %vm708 = vcmask 97280
  %v709 = vsel %vm708, %v706, %v698
  %v710 = vsel %vm708, %v707, %v700
  %v711 = vpack.c.bf16 %v709, %v709
  %v712 = vpack.c.bf16 %v710, %v710
  %v713 = vld [vmem:[%s7] sm:$0xf]
  %v714 = vld [vmem:[%s7 + $0x4] sm:$0xf]
  %v715 = vld [vmem:[%s8] sm:$0x1]
  %v717 = vperm.slane %v715, 0
  %719 = vst [vmem:[#allocation1] ss:$4 sm:$0xff] %v711
  %s721 = scalar_lea.vmem [#allocation1], 1
  %722 = vst [vmem:[%s721] ss:$4 sm:$0xff] %v712
  %v723 = vld.sshfl [vmem:[#allocation1] sm:$0xff pattern:$0x73625140]
  %v726 = vunpack.c.l.b16 %v713
  %v727 = vunpack.c.l.b16 %v714
  %v728 = vpack.c.b16 %v727, %v726
  %730 = vst [vmem:[#allocation1] ss:$2 sm:$0xff] %v717
  %s731 = scalar_lea.vmem [#allocation1], 1
  %732 = vst [vmem:[%s731] ss:$2 sm:$0xff] %v717
  %v733 = vld.sshfl [vmem:[#allocation1] sm:$0xff pattern:$0x75316420]
  %v735 = vsel %vm60, %v723, 0
  %737 = vmatpush.bf16.msra.mxu0 0
  %738 = vmatpush.bf16.msra.mxu0 0
  %739 = vmatpush.bf16.msra.mxu0 0
  %740 = vmatpush.bf16.msra.mxu0 0
  %741 = vmatpush.bf16.msra.mxu0 0
  %742 = vmatpush.bf16.msra.mxu0 0
  %743 = vmatpush.bf16.msra.mxu0 0
  %744 = vmatpush.bf16.msra.mxu0 %v728
  %745 = vmatmul.bf16.gmra.mxu0 %v735
  %v746 = vpop.f32.mrf.mxu0
  %v747 = vadd.f32 %v733, %v746
  %v748 = vpop.f32.mrf.mxu0
  %749 = vdwg.mxu0
  %v751 = vrot.slane %v747, 4
  %v753 = vtanh.pop %v747
  %v754 = vtanh.pop %v751
  %v755 = vld [vmem:[%s9] sm:$0x1]
  %v757 = vperm.slane %v755, 0
  %v759 = vmul.f32 %v753, %v757
  %v760 = vmul.f32 %v754, %v757
  %vm761 = vcmask 257024
  %v762 = vsel %vm761, %v759, 0.0
  %763 = vadd.xlane.f32.xlu0 %v762
  %v764 = vpop.xlane.xlu0 %763
  %v765 = vsel %vm761, %v760, 0.0
  %766 = vadd.xlane.f32.xlu0 %v765
  %v767 = vpop.xlane.xlu0 %766
  %v770 = vlaneseq
  %v771 = vand.u32 %v770, 127
  %v772 = vperm.slane %v764, %v771
  %v773 = vperm.slane %v767, %v771
  %vm774 = vcmask 1041409
  %v775 = vsel %vm774, %v773, %v772
  %vm777 = vcmask 25600
  %v778 = vsel %vm777, %v775, -inf
  %779 = vmax.xlane.f32.xlu0 %v778
  %v780 = vpop.xlane.xlu0 %779
  %v782 = vperm.slane %v780, 0
  %v783 = vperm.slane %v780, 1
  %v786 = vsub.f32 %v764, %v782
  %v787 = vsub.f32 %v767, %v783
  %v788 = vmul.f32 %v786, 1.442695
  %v789 = vpow.pop %v788
  %v790 = vmul.f32 %v787, 1.442695
  %v791 = vpow.pop %v790
  %794 = vset.pattern.permute.xlu0 0
  %795 = vperm.xlu0 %794, %v789
  %v796 = vpop.permute.xlu0 %795
  %797 = vset.pattern.permute.xlu0 0
  %798 = vperm.xlu0 %797, %v791
  %v799 = vpop.permute.xlu0 %798
  %v800 = vperm.slane %v796, %v771
  %v801 = vperm.slane %v799, %v771
  %v802 = vsel %vm774, %v801, %v800
  %v804 = vsel %vm777, %v802, 0.0
  %805 = vadd.xlane.f32.xlu0 %v804
  %v806 = vpop.xlane.xlu0 %805
  %v807 = vrcp.pop %v806
  %v809 = vperm.slane %v807, 0
  %v810 = vperm.slane %v807, 1
  %v813 = vmul.f32 %v789, %v809
  %v814 = vmul.f32 %v791, %v810
  %816 = vset.pattern.permute.xlu0 0
  %817 = vperm.xlu0 %816, %v813
  %v818 = vpop.permute.xlu0 %817
  %821 = vset.pattern.permute.xlu0 0
  %822 = vperm.xlu0 %821, %v814
  %v823 = vpop.permute.xlu0 %822
  %v825 = vmul.f32 %v709, %v818
  %v826 = vmul.f32 %v710, %v823
  %vm827 = vcmask 125952
  %v828 = vsel %vm827, %v825, 0.0
  %v829 = vrot.slane %v828, 4
  %v830 = vadd.f32 %v828, %v829
  %v831 = vrot.slane %v830, 2
  %v832 = vadd.f32 %v830, %v831
  %v833 = vrot.slane %v832, 1
  %v834 = vadd.f32 %v832, %v833
  %v835 = vsel %vm827, %v826, 0.0
  %v836 = vrot.slane %v835, 4
  %v837 = vadd.f32 %v835, %v836
  %v838 = vrot.slane %v837, 2
  %v839 = vadd.f32 %v837, %v838
  %v840 = vrot.slane %v839, 1
  %v841 = vadd.f32 %v839, %v840
  %v844 = vsel %vm774, %v841, %v834
  %vm846 = vcmask 123904
  %847 = vst.msk [vmem:[%s10] sm:$0x3] %vm846, %v844
  // Predicated region
  $region42: #{nrms_forward.3} parent=0 // pred_check
    _
  $region43: #{nrms_forward.3} parent=0 // pred_check_branch
    %849 = sbr.rel (0) target = $region45
  $region44: #{nrms_forward.3} parent=0 // pred_region
    _
  $region45: #{nrms_forward.3} parent=0 // pred_fallthru
    _
  // Predicated region
  $region46: #{nrms_forward.3} parent=0 // pred_check
    _
  $region47: #{nrms_forward.3} parent=0 // pred_check_branch
    %851 = sbr.rel (0) target = $region49
  $region48: #{nrms_forward.3} parent=0 // pred_region
    _
  $region49: #{nrms_forward.3} parent=0 // pred_fallthru
    _

// kernel: nrms_forward.2
$region0: #{nrms_forward.2}
  #allocation0 [shape = 'u32[]', space=smem, size = 0x4, offset = 0x4, fixed_abs, tag = 'smem constant byte address 0x4 - core index']
  #allocation1 [shape = 'u32[72,128]{1,0:T(1,128)}', space=vmem, size = 0x9000, scoped, tag = 'internal scratch']
  %s0 = inlined_call_operand.vmem [shape: bf16[32,8,32], index: 0, kind: input, shape index: {}]
  %s1 = inlined_call_operand.vmem [shape: bf16[32,16], index: 1, kind: input, shape index: {}]
  %s2 = inlined_call_operand.vmem [shape: f32[1,16], index: 2, kind: input, shape index: {}]
  %s3 = inlined_call_operand.vmem [shape: bf16[32,16], index: 3, kind: input, shape index: {}]
  %s4 = inlined_call_operand.vmem [shape: f32[1,16], index: 4, kind: input, shape index: {}]
  %s5 = inlined_call_operand.vmem [shape: bf16[32,16], index: 5, kind: input, shape index: {}]
  %s6 = inlined_call_operand.vmem [shape: f32[1,16], index: 6, kind: input, shape index: {}]
  %s7 = inlined_call_operand.vmem [shape: bf16[16,32], index: 7, kind: input, shape index: {}]
  %s8 = inlined_call_operand.vmem [shape: f32[1,32], index: 8, kind: input, shape index: {}]
  %s9 = inlined_call_operand.vmem [shape: f32[1,32], index: 9, kind: input, shape index: {}]
  %s10 = inlined_call_operand.vmem [shape: f32[32,16], index: 10, kind: output, shape index: {}]
  %s11 = sld [smem:[#allocation0]]
  $region73: #{nrms_forward.2} parent=0
    _
  %s13 = ssub.s32 1, %s11
  %s14 = scalar_select 0, %s13, %s11
  loop: start=0, step=1, limit=4
  $region2: #{nrms_forward.2} parent=0 // loop_pre_header
    _
  $region3: #{nrms_forward.2} parent=0 // loop_header
    %s16 = sphi 0, %s20
    %p17 = scmp.ge.s32.totalorder %s16, 4
    %s26 = sphi 0, %s28
    %s29 = sphi 0, %s26
    %s30 = sphi 0, %s29
    %s46 = sphi 0, %s30
    %s50 = sphi 0, %s50
    %s52 = sphi 0, %s50
    %s53 = sphi 0, %s52
    %s67 = sphi 0, %s53
    %s71 = sphi 0, %s71
    %s73 = sphi 0, %s71
    %s74 = sphi 0, %s73
    %s88 = sphi 0, %s74
    %s92 = sphi 0, %s92
    %s94 = sphi 0, %s92
    %s95 = sphi 0, %s94
    %s109 = sphi 0, %s95
    %s113 = sphi 0, %s113
    %s115 = sphi 0, %s113
    %s116 = sphi 0, %s115
    %s130 = sphi 0, %s116
    %s134 = sphi 0, %s134
    %s136 = sphi 0, %s134
    %s137 = sphi 0, %s136
    %s151 = sphi 0, %s137
    %s155 = sphi 0, %s155
    %s157 = sphi 0, %s155
    %s158 = sphi 0, %s157
    %s172 = sphi 0, %s158
    %s176 = sphi 0, %s176
    %s178 = sphi 0, %s176
    %s179 = sphi 0, %s178
    %s193 = sphi 0, %s179
    %s197 = sphi 0, %s197
    %s199 = sphi 0, %s197
    %s200 = sphi 0, %s199
    %s214 = sphi 0, %s200
    %s218 = sphi 0, %s218
    %s220 = sphi 0, %s218
    %s221 = sphi 0, %s220
    %s235 = sphi 0, %s221
    %s241 = sphi 0, %s243
    %s244 = sphi 0, %s241
    %s245 = sphi 0, %s244
    %s261 = sphi 0, %s245
  $region4: #{nrms_forward.2} parent=0 // loop_header_branch
    %19 = sbr.rel (%p17) target = $region8
  $region5: #{nrms_forward.2} parent=0 // loop_body
    %s21 = ssub.s32 %s16, 1
    %s22 = ssub.s32 %s16, 2
    %s23 = sadd.s32 %s16, 1
    %s24 = ssub.s32 %s16, %s23
    %p25 = scmp.eq.s32.totalorder %s24, 0
    %s27 = sadd.s32 %s26, 1
    %s28 = scalar_select %p25, %s26, %s27
    %p31 = pneg %p25
    %p32 = scmp.eq.s32.totalorder %s16, 1
    %p33 = por %p31, %p32
    %p34 = scmp.ne.s32.totalorder %s26, %s29
    %p35 = scmp.eq.s32.totalorder %s16, 0
    %p36 = por %p34, %p35
    %p37 = scmp.ne.s32.totalorder %s26, %s29
    %p38 = scmp.eq.s32.totalorder %s21, 1
    %p39 = por %p37, %p38
    %p40 = scmp.ne.s32.totalorder %s29, %s30
    %p41 = scmp.eq.s32.totalorder %s21, 0
    %p42 = por %p40, %p41
    %p43 = scmp.ne.s32.totalorder %s29, %s30
    %p44 = scmp.eq.s32.totalorder %s22, 1
    %p45 = por %p43, %p44
    %p47 = scmp.ne.s32.totalorder %s30, %s46
    %p48 = scmp.eq.s32.totalorder %s22, 0
    %p49 = por %p47, %p48
    %s51 = sadd.s32 %s50, 1
    %p54 = scmp.eq.s32.totalorder %s16, 1
    %p55 = scmp.ne.s32.totalorder %s50, %s52
    %p56 = scmp.eq.s32.totalorder %s16, 0
    %p57 = por %p55, %p56
    %p58 = scmp.ne.s32.totalorder %s50, %s52
    %p59 = scmp.eq.s32.totalorder %s21, 1
    %p60 = por %p58, %p59
    %p61 = scmp.ne.s32.totalorder %s52, %s53
    %p62 = scmp.eq.s32.totalorder %s21, 0
    %p63 = por %p61, %p62
    %p64 = scmp.ne.s32.totalorder %s52, %s53
    %p65 = scmp.eq.s32.totalorder %s22, 1
    %p66 = por %p64, %p65
    %p68 = scmp.ne.s32.totalorder %s53, %s67
    %p69 = scmp.eq.s32.totalorder %s22, 0
    %p70 = por %p68, %p69
    %s72 = sadd.s32 %s71, 1
    %p75 = scmp.eq.s32.totalorder %s16, 1
    %p76 = scmp.ne.s32.totalorder %s71, %s73
    %p77 = scmp.eq.s32.totalorder %s16, 0
    %p78 = por %p76, %p77
    %p79 = scmp.ne.s32.totalorder %s71, %s73
    %p80 = scmp.eq.s32.totalorder %s21, 1
    %p81 = por %p79, %p80
    %p82 = scmp.ne.s32.totalorder %s73, %s74
    %p83 = scmp.eq.s32.totalorder %s21, 0
    %p84 = por %p82, %p83
    %p85 = scmp.ne.s32.totalorder %s73, %s74
    %p86 = scmp.eq.s32.totalorder %s22, 1
    %p87 = por %p85, %p86
    %p89 = scmp.ne.s32.totalorder %s74, %s88
    %p90 = scmp.eq.s32.totalorder %s22, 0
    %p91 = por %p89, %p90
    %s93 = sadd.s32 %s92, 1
    %p96 = scmp.eq.s32.totalorder %s16, 1
    %p97 = scmp.ne.s32.totalorder %s92, %s94
    %p98 = scmp.eq.s32.totalorder %s16, 0
    %p99 = por %p97, %p98
    %p100 = scmp.ne.s32.totalorder %s92, %s94
    %p101 = scmp.eq.s32.totalorder %s21, 1
    %p102 = por %p100, %p101
    %p103 = scmp.ne.s32.totalorder %s94, %s95
    %p104 = scmp.eq.s32.totalorder %s21, 0
    %p105 = por %p103, %p104
    %p106 = scmp.ne.s32.totalorder %s94, %s95
    %p107 = scmp.eq.s32.totalorder %s22, 1
    %p108 = por %p106, %p107
    %p110 = scmp.ne.s32.totalorder %s95, %s109
    %p111 = scmp.eq.s32.totalorder %s22, 0
    %p112 = por %p110, %p111
    %s114 = sadd.s32 %s113, 1
    %p117 = scmp.eq.s32.totalorder %s16, 1
    %p118 = scmp.ne.s32.totalorder %s113, %s115
    %p119 = scmp.eq.s32.totalorder %s16, 0
    %p120 = por %p118, %p119
    %p121 = scmp.ne.s32.totalorder %s113, %s115
    %p122 = scmp.eq.s32.totalorder %s21, 1
    %p123 = por %p121, %p122
    %p124 = scmp.ne.s32.totalorder %s115, %s116
    %p125 = scmp.eq.s32.totalorder %s21, 0
    %p126 = por %p124, %p125
    %p127 = scmp.ne.s32.totalorder %s115, %s116
    %p128 = scmp.eq.s32.totalorder %s22, 1
    %p129 = por %p127, %p128
    %p131 = scmp.ne.s32.totalorder %s116, %s130
    %p132 = scmp.eq.s32.totalorder %s22, 0
    %p133 = por %p131, %p132
    %s135 = sadd.s32 %s134, 1
    %p138 = scmp.eq.s32.totalorder %s16, 1
    %p139 = scmp.ne.s32.totalorder %s134, %s136
    %p140 = scmp.eq.s32.totalorder %s16, 0
    %p141 = por %p139, %p140
    %p142 = scmp.ne.s32.totalorder %s134, %s136
    %p143 = scmp.eq.s32.totalorder %s21, 1
    %p144 = por %p142, %p143
    %p145 = scmp.ne.s32.totalorder %s136, %s137
    %p146 = scmp.eq.s32.totalorder %s21, 0
    %p147 = por %p145, %p146
    %p148 = scmp.ne.s32.totalorder %s136, %s137
    %p149 = scmp.eq.s32.totalorder %s22, 1
    %p150 = por %p148, %p149
    %p152 = scmp.ne.s32.totalorder %s137, %s151
    %p153 = scmp.eq.s32.totalorder %s22, 0
    %p154 = por %p152, %p153
    %s156 = sadd.s32 %s155, 1
    %p159 = scmp.eq.s32.totalorder %s16, 1
    %p160 = scmp.ne.s32.totalorder %s155, %s157
    %p161 = scmp.eq.s32.totalorder %s16, 0
    %p162 = por %p160, %p161
    %p163 = scmp.ne.s32.totalorder %s155, %s157
    %p164 = scmp.eq.s32.totalorder %s21, 1
    %p165 = por %p163, %p164
    %p166 = scmp.ne.s32.totalorder %s157, %s158
    %p167 = scmp.eq.s32.totalorder %s21, 0
    %p168 = por %p166, %p167
    %p169 = scmp.ne.s32.totalorder %s157, %s158
    %p170 = scmp.eq.s32.totalorder %s22, 1
    %p171 = por %p169, %p170
    %p173 = scmp.ne.s32.totalorder %s158, %s172
    %p174 = scmp.eq.s32.totalorder %s22, 0
    %p175 = por %p173, %p174
    %s177 = sadd.s32 %s176, 1
    %p180 = scmp.eq.s32.totalorder %s16, 1
    %p181 = scmp.ne.s32.totalorder %s176, %s178
    %p182 = scmp.eq.s32.totalorder %s16, 0
    %p183 = por %p181, %p182
    %p184 = scmp.ne.s32.totalorder %s176, %s178
    %p185 = scmp.eq.s32.totalorder %s21, 1
    %p186 = por %p184, %p185
    %p187 = scmp.ne.s32.totalorder %s178, %s179
    %p188 = scmp.eq.s32.totalorder %s21, 0
    %p189 = por %p187, %p188
    %p190 = scmp.ne.s32.totalorder %s178, %s179
    %p191 = scmp.eq.s32.totalorder %s22, 1
    %p192 = por %p190, %p191
    %p194 = scmp.ne.s32.totalorder %s179, %s193
    %p195 = scmp.eq.s32.totalorder %s22, 0
    %p196 = por %p194, %p195
    %s198 = sadd.s32 %s197, 1
    %p201 = scmp.eq.s32.totalorder %s16, 1
    %p202 = scmp.ne.s32.totalorder %s197, %s199
    %p203 = scmp.eq.s32.totalorder %s16, 0
    %p204 = por %p202, %p203
    %p205 = scmp.ne.s32.totalorder %s197, %s199
    %p206 = scmp.eq.s32.totalorder %s21, 1
    %p207 = por %p205, %p206
    %p208 = scmp.ne.s32.totalorder %s199, %s200
    %p209 = scmp.eq.s32.totalorder %s21, 0
    %p210 = por %p208, %p209
    %p211 = scmp.ne.s32.totalorder %s199, %s200
    %p212 = scmp.eq.s32.totalorder %s22, 1
    %p213 = por %p211, %p212
    %p215 = scmp.ne.s32.totalorder %s200, %s214
    %p216 = scmp.eq.s32.totalorder %s22, 0
    %p217 = por %p215, %p216
    %s219 = sadd.s32 %s218, 1
    %p222 = scmp.eq.s32.totalorder %s16, 1
    %p223 = scmp.ne.s32.totalorder %s218, %s220
    %p224 = scmp.eq.s32.totalorder %s16, 0
    %p225 = por %p223, %p224
    %p226 = scmp.ne.s32.totalorder %s218, %s220
    %p227 = scmp.eq.s32.totalorder %s21, 1
    %p228 = por %p226, %p227
    %p229 = scmp.ne.s32.totalorder %s220, %s221
    %p230 = scmp.eq.s32.totalorder %s21, 0
    %p231 = por %p229, %p230
    %p232 = scmp.ne.s32.totalorder %s220, %s221
    %p233 = scmp.eq.s32.totalorder %s22, 1
    %p234 = por %p232, %p233
    %p236 = scmp.ne.s32.totalorder %s221, %s235
    %p237 = scmp.eq.s32.totalorder %s22, 0
    %p238 = por %p236, %p237
    %s239 = ssub.s32 %s16, %s23
    %p240 = scmp.eq.s32.totalorder %s239, 0
    %s242 = sadd.s32 %s241, 1
    %s243 = scalar_select %p240, %s241, %s242
    %p246 = pneg %p240
    %p247 = scmp.eq.s32.totalorder %s16, 1
    %p248 = por %p246, %p247
    %p249 = scmp.ne.s32.totalorder %s241, %s244
    %p250 = scmp.eq.s32.totalorder %s16, 0
    %p251 = por %p249, %p250
    %p252 = scmp.ne.s32.totalorder %s241, %s244
    %p253 = scmp.eq.s32.totalorder %s21, 1
    %p254 = por %p252, %p253
    %p255 = scmp.ne.s32.totalorder %s244, %s245
    %p256 = scmp.eq.s32.totalorder %s21, 0
    %p257 = por %p255, %p256
    %p258 = scmp.ne.s32.totalorder %s244, %s245
    %p259 = scmp.eq.s32.totalorder %s22, 1
    %p260 = por %p258, %p259
    %p262 = scmp.ne.s32.totalorder %s245, %s261
    %p263 = scmp.eq.s32.totalorder %s22, 0
    %p264 = por %p262, %p263
    %p265 = scmp.le.s32.totalorder 1, %s16
    %p266 = scmp.lt.s32.totalorder %s16, 3
    %p267 = pnand %p265, %p266
    %p268 = pneg %p267
    // Predicated region
    $region9: #{nrms_forward.2} parent=5 // pred_check
      _
    $region10: #{nrms_forward.2} parent=5 // pred_check_branch
      %270 = sbr.rel (%p267) target = $region12
    $region11: #{nrms_forward.2} parent=5 // pred_region
      %s271 = ssub.s32 %s16, 1
      // Predicated region
      $region13: #{nrms_forward.2} parent=11 // pred_check
        %p272 = pneg %p63
      $region14: #{nrms_forward.2} parent=11 // pred_check_branch
        %274 = sbr.rel (%p272) target = $region16
      $region15: #{nrms_forward.2} parent=11 // pred_region
        _
      $region16: #{nrms_forward.2} parent=11 // pred_fallthru
        _
      // Predicated region
      $region17: #{nrms_forward.2} parent=11 // pred_check
        %p275 = pneg %p84
      $region18: #{nrms_forward.2} parent=11 // pred_check_branch
        %277 = sbr.rel (%p275) target = $region20
      $region19: #{nrms_forward.2} parent=11 // pred_region
        _
      $region20: #{nrms_forward.2} parent=11 // pred_fallthru
        _
      // Predicated region
      $region21: #{nrms_forward.2} parent=11 // pred_check
        %p278 = pneg %p105
      $region22: #{nrms_forward.2} parent=11 // pred_check_branch
        %280 = sbr.rel (%p278) target = $region24
      $region23: #{nrms_forward.2} parent=11 // pred_region
        _
      $region24: #{nrms_forward.2} parent=11 // pred_fallthru
        _
      // Predicated region
      $region25: #{nrms_forward.2} parent=11 // pred_check
        %p281 = pneg %p126
      $region26: #{nrms_forward.2} parent=11 // pred_check_branch
        %283 = sbr.rel (%p281) target = $region28
      $region27: #{nrms_forward.2} parent=11 // pred_region
        _
      $region28: #{nrms_forward.2} parent=11 // pred_fallthru
        _
      // Predicated region
      $region29: #{nrms_forward.2} parent=11 // pred_check
        %p284 = pneg %p147
      $region30: #{nrms_forward.2} parent=11 // pred_check_branch
        %286 = sbr.rel (%p284) target = $region32
      $region31: #{nrms_forward.2} parent=11 // pred_region
        _
      $region32: #{nrms_forward.2} parent=11 // pred_fallthru
        _
      // Predicated region
      $region33: #{nrms_forward.2} parent=11 // pred_check
        %p287 = pneg %p168
      $region34: #{nrms_forward.2} parent=11 // pred_check_branch
        %289 = sbr.rel (%p287) target = $region36
      $region35: #{nrms_forward.2} parent=11 // pred_region
        _
      $region36: #{nrms_forward.2} parent=11 // pred_fallthru
        _
      // Predicated region
      $region37: #{nrms_forward.2} parent=11 // pred_check
        %p290 = pneg %p189
      $region38: #{nrms_forward.2} parent=11 // pred_check_branch
        %292 = sbr.rel (%p290) target = $region40
      $region39: #{nrms_forward.2} parent=11 // pred_region
        _
      $region40: #{nrms_forward.2} parent=11 // pred_fallthru
        _
      // Predicated region
      $region41: #{nrms_forward.2} parent=11 // pred_check
        %p293 = pneg %p210
      $region42: #{nrms_forward.2} parent=11 // pred_check_branch
        %295 = sbr.rel (%p293) target = $region44
      $region43: #{nrms_forward.2} parent=11 // pred_region
        _
      $region44: #{nrms_forward.2} parent=11 // pred_fallthru
        _
      // Predicated region
      $region45: #{nrms_forward.2} parent=11 // pred_check
        %p296 = pneg %p231
      $region46: #{nrms_forward.2} parent=11 // pred_check_branch
        %298 = sbr.rel (%p296) target = $region48
      $region47: #{nrms_forward.2} parent=11 // pred_region
        _
      $region48: #{nrms_forward.2} parent=11 // pred_fallthru
        _
    $region12: #{nrms_forward.2} parent=5 // pred_fallthru
      _
    %p299 = scmp.lt.s32.totalorder %s16, 2
    // Predicated region
    $region49: #{nrms_forward.2} parent=5 // pred_check
      %p300 = pneg %p299
    $region50: #{nrms_forward.2} parent=5 // pred_check_branch
      %302 = sbr.rel (%p300) target = $region52
    $region51: #{nrms_forward.2} parent=5 // pred_region
      // Predicated region
      $region53: #{nrms_forward.2} parent=51 // pred_check
        %p303 = pneg %p36
      $region54: #{nrms_forward.2} parent=51 // pred_check_branch
        %305 = sbr.rel (%p303) target = $region56
      $region55: #{nrms_forward.2} parent=51 // pred_region
        %s306 = smul.u32 16, %s16
        %p307 = scmp.lt.s32.totalorder %s306, 31
        %s308 = scalar_select %p307, %s306, 31
        %s309 = smul.addr %s308, 4
        %s310 = scalar_lea.vmem %s0, %s309
        %s311 = smul.u32 16, %s16
      $region56: #{nrms_forward.2} parent=51 // pred_fallthru
        _
    $region52: #{nrms_forward.2} parent=5 // pred_fallthru
      _
    %p312 = scmp.le.s32.totalorder 1, %s16
    %p313 = scmp.lt.s32.totalorder %s16, 3
    %p314 = pnand %p312, %p313
    %p315 = pneg %p314
    // Predicated region
    $region57: #{nrms_forward.2} parent=5 // pred_check
      _
    $region58: #{nrms_forward.2} parent=5 // pred_check_branch
      %317 = sbr.rel (%p314) target = $region60
    $region59: #{nrms_forward.2} parent=5 // pred_region
      %s318 = ssub.s32 %s16, 1
      %s319 = smul.u32 16, %s21
      %p320 = scmp.lt.s32.totalorder %s319, 31
      %s321 = scalar_select %p320, %s319, 31
      %s322 = smul.addr %s321, 4
      %s323 = scalar_lea.vmem %s0, %s322
      %p324 = pneg %p42
      %p325 = pneg %p39
      %p326 = pneg %p63
      %p327 = pneg %p60
      %p328 = pneg %p84
      %p329 = pneg %p81
      %p330 = pneg %p105
      %p331 = pneg %p102
      %p332 = pneg %p126
      %p333 = pneg %p123
      %p334 = pneg %p147
      %p335 = pneg %p144
      %p336 = pneg %p168
      %p337 = pneg %p165
      %p338 = pneg %p189
      %p339 = pneg %p186
      %p340 = pneg %p210
      %p341 = pneg %p207
      %p342 = pneg %p231
      %p343 = pneg %p228
      %p344 = pneg %p257
      %p345 = pneg %p254
      %s346 = smul.u32 2, %s21
      %p347 = scmp.lt.s32.totalorder %s346, 3
      %s348 = scalar_select %p347, %s346, 3
      %s349 = smul.addr %s348, 8
      %s350 = scalar_lea.vmem %s10, %s349
      %s351 = smul.u32 16, %s21
      %p352 = scmp.lt.s32.totalorder %s351, 31
      %s353 = scalar_select %p352, %s351, 31
      %s354 = smul.addr %s353, 4
      %s355 = scalar_lea.vmem %s0, %s354
      %s356 = smul.u32 16, %s21
      %s357 = smul.u32 2, %s21
      %p358 = scmp.lt.s32.totalorder %s357, 3
      %s359 = scalar_select %p358, %s357, 3
      %s360 = smul.addr %s359, 8
      %s361 = scalar_lea.vmem %s10, %s360
      %s362 = smul.u32 2, %s21
      %v364 = vld [vmem:[%s355] sm:$0xf]
      %v365 = vld [vmem:[%s355 + $0x4] sm:$0xf]
      %v366 = vld [vmem:[%s355 + $0x8] sm:$0xf]
      %v367 = vld [vmem:[%s355 + $0xc] sm:$0xf]
      %v368 = vld [vmem:[%s355 + $0x10] sm:$0xf]
      %v369 = vld [vmem:[%s355 + $0x14] sm:$0xf]
      %v370 = vld [vmem:[%s355 + $0x18] sm:$0xf]
      %v371 = vld [vmem:[%s355 + $0x1c] sm:$0xf]
      %v372 = vld [vmem:[%s355 + $0x20] sm:$0xf]
      %v373 = vld [vmem:[%s355 + $0x24] sm:$0xf]
      %v374 = vld [vmem:[%s355 + $0x28] sm:$0xf]
      %v375 = vld [vmem:[%s355 + $0x2c] sm:$0xf]
      %v376 = vld [vmem:[%s355 + $0x30] sm:$0xf]
      %v377 = vld [vmem:[%s355 + $0x34] sm:$0xf]
      %v378 = vld [vmem:[%s355 + $0x38] sm:$0xf]
      %v379 = vld [vmem:[%s355 + $0x3c] sm:$0xf]
      %v380 = vld [vmem:[%s1] sm:$0xf]
      %v381 = vld [vmem:[%s1 + $0x4] sm:$0xf]
      %v382 = vld [vmem:[%s1 + $0x8] sm:$0xf]
      %v383 = vld [vmem:[%s1 + $0xc] sm:$0xf]
      %v384 = vld [vmem:[%s2] sm:$0x1]
      %v386 = vperm.slane %v384, 0
      %v404 = vunpack.c.l.b16 %v364
      %v405 = vunpack.c.l.b16 %v365
      %v406 = vunpack.c.l.b16 %v366
      %v407 = vunpack.c.l.b16 %v367
      %v408 = vunpack.c.l.b16 %v368
      %v409 = vunpack.c.l.b16 %v369
      %v410 = vunpack.c.l.b16 %v370
      %v411 = vunpack.c.l.b16 %v371
      %v412 = vunpack.c.l.b16 %v372
      %v413 = vunpack.c.l.b16 %v373
      %v414 = vunpack.c.l.b16 %v374
      %v415 = vunpack.c.l.b16 %v375
      %v416 = vunpack.c.l.b16 %v376
      %v417 = vunpack.c.l.b16 %v377
      %v418 = vunpack.c.l.b16 %v378
      %v419 = vunpack.c.l.b16 %v379
      %v420 = vpack.c.b16 %v405, %v404
      %v421 = vpack.c.b16 %v407, %v406
      %v422 = vpack.c.b16 %v409, %v408
      %v423 = vpack.c.b16 %v411, %v410
      %v424 = vpack.c.b16 %v413, %v412
      %v425 = vpack.c.b16 %v415, %v414
      %v426 = vpack.c.b16 %v417, %v416
      %v427 = vpack.c.b16 %v419, %v418
      %v432 = vunpack.c.l.b16 %v380
      %v433 = vunpack.c.l.b16 %v381
      %v434 = vunpack.c.l.b16 %v382
      %v435 = vunpack.c.l.b16 %v383
      %v436 = vpack.c.b16 %v433, %v432
      %v437 = vpack.c.b16 %v435, %v434
      %vm440 = vcmask 261120
      %v442 = vsel %vm440, %v420, 0
      %v445 = vsel %vm440, %v421, 0
      %v448 = vsel %vm440, %v422, 0
      %v451 = vsel %vm440, %v423, 0
      %v454 = vsel %vm440, %v424, 0
      %v457 = vsel %vm440, %v425, 0
      %v460 = vsel %vm440, %v426, 0
      %v463 = vsel %vm440, %v427, 0
      %465 = vmatpush.bf16.msra.mxu0 0
      %466 = vmatpush.bf16.msra.mxu0 0
      %467 = vmatpush.bf16.msra.mxu0 0
      %468 = vmatpush.bf16.msra.mxu0 0
      %469 = vmatpush.bf16.msra.mxu0 0
      %470 = vmatpush.bf16.msra.mxu0 0
      %471 = vmatpush.bf16.msra.mxu0 %v437
      %472 = vmatpush.bf16.msra.mxu0 %v436
      %473 = vmatmul.bf16.gmra.mxu0 %v442
      %v474 = vpop.f32.mrf.mxu0
      %v475 = vadd.f32 %v386, %v474
      %v476 = vpop.f32.mrf.mxu0
      %v477 = vadd.f32 %v386, %v476
      %478 = vmatmul.bf16.gmra.mxu0 %v445
      %v479 = vpop.f32.mrf.mxu0
      %v480 = vadd.f32 %v386, %v479
      %v481 = vpop.f32.mrf.mxu0
      %v482 = vadd.f32 %v386, %v481
      %483 = vmatmul.bf16.gmra.mxu0 %v448
      %v484 = vpop.f32.mrf.mxu0
      %v485 = vadd.f32 %v386, %v484
      %v486 = vpop.f32.mrf.mxu0
      %v487 = vadd.f32 %v386, %v486
      %488 = vmatmul.bf16.gmra.mxu0 %v451
      %v489 = vpop.f32.mrf.mxu0
      %v490 = vadd.f32 %v386, %v489
      %v491 = vpop.f32.mrf.mxu0
      %v492 = vadd.f32 %v386, %v491
      %493 = vmatmul.bf16.gmra.mxu0 %v454
      %v494 = vpop.f32.mrf.mxu0
      %v495 = vadd.f32 %v386, %v494
      %v496 = vpop.f32.mrf.mxu0
      %v497 = vadd.f32 %v386, %v496
      %498 = vmatmul.bf16.gmra.mxu0 %v457
      %v499 = vpop.f32.mrf.mxu0
      %v500 = vadd.f32 %v386, %v499
      %v501 = vpop.f32.mrf.mxu0
      %v502 = vadd.f32 %v386, %v501
      %503 = vmatmul.bf16.gmra.mxu0 %v460
      %v504 = vpop.f32.mrf.mxu0
      %v505 = vadd.f32 %v386, %v504
      %v506 = vpop.f32.mrf.mxu0
      %v507 = vadd.f32 %v386, %v506
      %508 = vmatmul.bf16.gmra.mxu0 %v463
      %v509 = vpop.f32.mrf.mxu0
      %v510 = vadd.f32 %v386, %v509
      %v511 = vpop.f32.mrf.mxu0
      %v512 = vadd.f32 %v386, %v511
      %513 = vdwg.mxu0
      %v514 = vld [vmem:[%s3] sm:$0xf]
      %v515 = vld [vmem:[%s3 + $0x4] sm:$0xf]
      %v516 = vld [vmem:[%s3 + $0x8] sm:$0xf]
      %v517 = vld [vmem:[%s3 + $0xc] sm:$0xf]
      %v518 = vld [vmem:[%s4] sm:$0x1]
      %v520 = vperm.slane %v518, 0
      %v526 = vunpack.c.l.b16 %v514
      %v527 = vunpack.c.l.b16 %v515
      %v528 = vunpack.c.l.b16 %v516
      %v529 = vunpack.c.l.b16 %v517
      %v530 = vpack.c.b16 %v527, %v526
      %v531 = vpack.c.b16 %v529, %v528
      %534 = vmatpush.bf16.msra.mxu0 0
      %535 = vmatpush.bf16.msra.mxu0 0
      %536 = vmatpush.bf16.msra.mxu0 0
      %537 = vmatpush.bf16.msra.mxu0 0
      %538 = vmatpush.bf16.msra.mxu0 0
      %539 = vmatpush.bf16.msra.mxu0 0
      %540 = vmatpush.bf16.msra.mxu0 %v531
      %541 = vmatpush.bf16.msra.mxu0 %v530
      %542 = vmatmul.bf16.gmra.mxu0 %v442
      %v543 = vpop.f32.mrf.mxu0
      %v544 = vadd.f32 %v520, %v543
      %v545 = vpop.f32.mrf.mxu0
      %v546 = vadd.f32 %v520, %v545
      %547 = vmatmul.bf16.gmra.mxu0 %v445
      %v548 = vpop.f32.mrf.mxu0
      %v549 = vadd.f32 %v520, %v548
      %v550 = vpop.f32.mrf.mxu0
      %v551 = vadd.f32 %v520, %v550
      %552 = vmatmul.bf16.gmra.mxu0 %v448
      %v553 = vpop.f32.mrf.mxu0
      %v554 = vadd.f32 %v520, %v553
      %v555 = vpop.f32.mrf.mxu0
      %v556 = vadd.f32 %v520, %v555
      %557 = vmatmul.bf16.gmra.mxu0 %v451
      %v558 = vpop.f32.mrf.mxu0
      %v559 = vadd.f32 %v520, %v558
      %v560 = vpop.f32.mrf.mxu0
      %v561 = vadd.f32 %v520, %v560
      %562 = vmatmul.bf16.gmra.mxu0 %v454
      %v563 = vpop.f32.mrf.mxu0
      %v564 = vadd.f32 %v520, %v563
      %v565 = vpop.f32.mrf.mxu0
      %v566 = vadd.f32 %v520, %v565
      %567 = vmatmul.bf16.gmra.mxu0 %v457
      %v568 = vpop.f32.mrf.mxu0
      %v569 = vadd.f32 %v520, %v568
      %v570 = vpop.f32.mrf.mxu0
      %v571 = vadd.f32 %v520, %v570
      %572 = vmatmul.bf16.gmra.mxu0 %v460
      %v573 = vpop.f32.mrf.mxu0
      %v574 = vadd.f32 %v520, %v573
      %v575 = vpop.f32.mrf.mxu0
      %v576 = vadd.f32 %v520, %v575
      %577 = vmatmul.bf16.gmra.mxu0 %v463
      %v578 = vpop.f32.mrf.mxu0
      %v579 = vadd.f32 %v520, %v578
      %v580 = vpop.f32.mrf.mxu0
      %v581 = vadd.f32 %v520, %v580
      %582 = vdwg.mxu0
      %v583 = vld [vmem:[%s5] sm:$0xf]
      %v584 = vld [vmem:[%s5 + $0x4] sm:$0xf]
      %v585 = vld [vmem:[%s5 + $0x8] sm:$0xf]
      %v586 = vld [vmem:[%s5 + $0xc] sm:$0xf]
      %v587 = vld [vmem:[%s6] sm:$0x1]
      %v589 = vperm.slane %v587, 0
      %v595 = vunpack.c.l.b16 %v583
      %v596 = vunpack.c.l.b16 %v584
      %v597 = vunpack.c.l.b16 %v585
      %v598 = vunpack.c.l.b16 %v586
      %v599 = vpack.c.b16 %v596, %v595
      %v600 = vpack.c.b16 %v598, %v597
      %603 = vmatpush.bf16.msra.mxu0 0
      %604 = vmatpush.bf16.msra.mxu0 0
      %605 = vmatpush.bf16.msra.mxu0 0
      %606 = vmatpush.bf16.msra.mxu0 0
      %607 = vmatpush.bf16.msra.mxu0 0
      %608 = vmatpush.bf16.msra.mxu0 0
      %609 = vmatpush.bf16.msra.mxu0 %v600
      %610 = vmatpush.bf16.msra.mxu0 %v599
      %611 = vmatmul.bf16.gmra.mxu0 %v442
      %v612 = vpop.f32.mrf.mxu0
      %v613 = vadd.f32 %v589, %v612
      %v614 = vpop.f32.mrf.mxu0
      %v615 = vadd.f32 %v589, %v614
      %616 = vmatmul.bf16.gmra.mxu0 %v445
      %v617 = vpop.f32.mrf.mxu0
      %v618 = vadd.f32 %v589, %v617
      %v619 = vpop.f32.mrf.mxu0
      %v620 = vadd.f32 %v589, %v619
      %621 = vmatmul.bf16.gmra.mxu0 %v448
      %v622 = vpop.f32.mrf.mxu0
      %v623 = vadd.f32 %v589, %v622
      %v624 = vpop.f32.mrf.mxu0
      %v625 = vadd.f32 %v589, %v624
      %626 = vmatmul.bf16.gmra.mxu0 %v451
      %v627 = vpop.f32.mrf.mxu0
      %v628 = vadd.f32 %v589, %v627
      %v629 = vpop.f32.mrf.mxu0
      %v630 = vadd.f32 %v589, %v629
      %631 = vmatmul.bf16.gmra.mxu0 %v454
      %v632 = vpop.f32.mrf.mxu0
      %v633 = vadd.f32 %v589, %v632
      %v634 = vpop.f32.mrf.mxu0
      %v635 = vadd.f32 %v589, %v634
      %636 = vmatmul.bf16.gmra.mxu0 %v457
      %v637 = vpop.f32.mrf.mxu0
      %v638 = vadd.f32 %v589, %v637
      %v639 = vpop.f32.mrf.mxu0
      %v640 = vadd.f32 %v589, %v639
      %641 = vmatmul.bf16.gmra.mxu0 %v460
      %v642 = vpop.f32.mrf.mxu0
      %v643 = vadd.f32 %v589, %v642
      %v644 = vpop.f32.mrf.mxu0
      %v645 = vadd.f32 %v589, %v644
      %646 = vmatmul.bf16.gmra.mxu0 %v463
      %v647 = vpop.f32.mrf.mxu0
      %v648 = vadd.f32 %v589, %v647
      %v649 = vpop.f32.mrf.mxu0
      %v650 = vadd.f32 %v589, %v649
      %651 = vdwg.mxu0
      %668 = vrot.lane.b32.xlu0 %v475, 124
      %v669 = vpop.permute.xlu0 %668
      %670 = vrot.lane.b32.xlu0 %v477, 124
      %v671 = vpop.permute.xlu0 %670
      %672 = vrot.lane.b32.xlu0 %v480, 124
      %v673 = vpop.permute.xlu0 %672
      %674 = vrot.lane.b32.xlu0 %v482, 124
      %v675 = vpop.permute.xlu0 %674
      %676 = vrot.lane.b32.xlu0 %v485, 124
      %v677 = vpop.permute.xlu0 %676
      %678 = vrot.lane.b32.xlu0 %v487, 124
      %v679 = vpop.permute.xlu0 %678
      %680 = vrot.lane.b32.xlu0 %v490, 124
      %v681 = vpop.permute.xlu0 %680
      %682 = vrot.lane.b32.xlu0 %v492, 124
      %v683 = vpop.permute.xlu0 %682
      %684 = vrot.lane.b32.xlu0 %v495, 124
      %v685 = vpop.permute.xlu0 %684
      %686 = vrot.lane.b32.xlu0 %v497, 124
      %v687 = vpop.permute.xlu0 %686
      %688 = vrot.lane.b32.xlu0 %v500, 124
      %v689 = vpop.permute.xlu0 %688
      %690 = vrot.lane.b32.xlu0 %v502, 124
      %v691 = vpop.permute.xlu0 %690
      %692 = vrot.lane.b32.xlu0 %v505, 124
      %v693 = vpop.permute.xlu0 %692
      %694 = vrot.lane.b32.xlu0 %v507, 124
      %v695 = vpop.permute.xlu0 %694
      %696 = vrot.lane.b32.xlu0 %v510, 124
      %v697 = vpop.permute.xlu0 %696
      %698 = vrot.lane.b32.xlu0 %v512, 124
      %v699 = vpop.permute.xlu0 %698
      %700 = vrot.lane.b32.xlu0 %v475, 120
      %v701 = vpop.permute.xlu0 %700
      %702 = vrot.lane.b32.xlu0 %v477, 120
      %v703 = vpop.permute.xlu0 %702
      %704 = vrot.lane.b32.xlu0 %v480, 120
      %v705 = vpop.permute.xlu0 %704
      %706 = vrot.lane.b32.xlu0 %v482, 120
      %v707 = vpop.permute.xlu0 %706
      %708 = vrot.lane.b32.xlu0 %v485, 120
      %v709 = vpop.permute.xlu0 %708
      %710 = vrot.lane.b32.xlu0 %v487, 120
      %v711 = vpop.permute.xlu0 %710
      %712 = vrot.lane.b32.xlu0 %v490, 120
      %v713 = vpop.permute.xlu0 %712
      %714 = vrot.lane.b32.xlu0 %v492, 120
      %v715 = vpop.permute.xlu0 %714
      %716 = vrot.lane.b32.xlu0 %v495, 120
      %v717 = vpop.permute.xlu0 %716
      %718 = vrot.lane.b32.xlu0 %v497, 120
      %v719 = vpop.permute.xlu0 %718
      %720 = vrot.lane.b32.xlu0 %v500, 120
      %v721 = vpop.permute.xlu0 %720
      %722 = vrot.lane.b32.xlu0 %v502, 120
      %v723 = vpop.permute.xlu0 %722
      %724 = vrot.lane.b32.xlu0 %v505, 120
      %v725 = vpop.permute.xlu0 %724
      %726 = vrot.lane.b32.xlu0 %v507, 120
      %v727 = vpop.permute.xlu0 %726
      %728 = vrot.lane.b32.xlu0 %v510, 120
      %v729 = vpop.permute.xlu0 %728
      %730 = vrot.lane.b32.xlu0 %v512, 120
      %v731 = vpop.permute.xlu0 %730
      %732 = vrot.lane.b32.xlu0 %v475, 116
      %v733 = vpop.permute.xlu0 %732
      %734 = vrot.lane.b32.xlu0 %v477, 116
      %v735 = vpop.permute.xlu0 %734
      %736 = vrot.lane.b32.xlu0 %v480, 116
      %v737 = vpop.permute.xlu0 %736
      %738 = vrot.lane.b32.xlu0 %v482, 116
      %v739 = vpop.permute.xlu0 %738
      %740 = vrot.lane.b32.xlu0 %v485, 116
      %v741 = vpop.permute.xlu0 %740
      %742 = vrot.lane.b32.xlu0 %v487, 116
      %v743 = vpop.permute.xlu0 %742
      %744 = vrot.lane.b32.xlu0 %v490, 116
      %v745 = vpop.permute.xlu0 %744
      %746 = vrot.lane.b32.xlu0 %v492, 116
      %v747 = vpop.permute.xlu0 %746
      %748 = vrot.lane.b32.xlu0 %v495, 116
      %v749 = vpop.permute.xlu0 %748
      %750 = vrot.lane.b32.xlu0 %v497, 116
      %v751 = vpop.permute.xlu0 %750
      %752 = vrot.lane.b32.xlu0 %v500, 116
      %v753 = vpop.permute.xlu0 %752
      %754 = vrot.lane.b32.xlu0 %v502, 116
      %v755 = vpop.permute.xlu0 %754
      %756 = vrot.lane.b32.xlu0 %v505, 116
      %v757 = vpop.permute.xlu0 %756
      %758 = vrot.lane.b32.xlu0 %v507, 116
      %v759 = vpop.permute.xlu0 %758
      %760 = vrot.lane.b32.xlu0 %v510, 116
      %v761 = vpop.permute.xlu0 %760
      %762 = vrot.lane.b32.xlu0 %v512, 116
      %v763 = vpop.permute.xlu0 %762
      %780 = vrot.lane.b32.xlu0 %v544, 124
      %v781 = vpop.permute.xlu0 %780
      %782 = vrot.lane.b32.xlu0 %v546, 124
      %v783 = vpop.permute.xlu0 %782
      %784 = vrot.lane.b32.xlu0 %v549, 124
      %v785 = vpop.permute.xlu0 %784
      %786 = vrot.lane.b32.xlu0 %v551, 124
      %v787 = vpop.permute.xlu0 %786
      %788 = vrot.lane.b32.xlu0 %v554, 124
      %v789 = vpop.permute.xlu0 %788
      %790 = vrot.lane.b32.xlu0 %v556, 124
      %v791 = vpop.permute.xlu0 %790
      %792 = vrot.lane.b32.xlu0 %v559, 124
      %v793 = vpop.permute.xlu0 %792
      %794 = vrot.lane.b32.xlu0 %v561, 124
      %v795 = vpop.permute.xlu0 %794
      %796 = vrot.lane.b32.xlu0 %v564, 124
      %v797 = vpop.permute.xlu0 %796
      %798 = vrot.lane.b32.xlu0 %v566, 124
      %v799 = vpop.permute.xlu0 %798
      %800 = vrot.lane.b32.xlu0 %v569, 124
      %v801 = vpop.permute.xlu0 %800
      %802 = vrot.lane.b32.xlu0 %v571, 124
      %v803 = vpop.permute.xlu0 %802
      %804 = vrot.lane.b32.xlu0 %v574, 124
      %v805 = vpop.permute.xlu0 %804
      %806 = vrot.lane.b32.xlu0 %v576, 124
      %v807 = vpop.permute.xlu0 %806
      %808 = vrot.lane.b32.xlu0 %v579, 124
      %v809 = vpop.permute.xlu0 %808
      %810 = vrot.lane.b32.xlu0 %v581, 124
      %v811 = vpop.permute.xlu0 %810
      %812 = vrot.lane.b32.xlu0 %v544, 120
      %v813 = vpop.permute.xlu0 %812
      %814 = vrot.lane.b32.xlu0 %v546, 120
      %v815 = vpop.permute.xlu0 %814
      %816 = vrot.lane.b32.xlu0 %v549, 120
      %v817 = vpop.permute.xlu0 %816
      %818 = vrot.lane.b32.xlu0 %v551, 120
      %v819 = vpop.permute.xlu0 %818
      %820 = vrot.lane.b32.xlu0 %v554, 120
      %v821 = vpop.permute.xlu0 %820
      %822 = vrot.lane.b32.xlu0 %v556, 120
      %v823 = vpop.permute.xlu0 %822
      %824 = vrot.lane.b32.xlu0 %v559, 120
      %v825 = vpop.permute.xlu0 %824
      %826 = vrot.lane.b32.xlu0 %v561, 120
      %v827 = vpop.permute.xlu0 %826
      %828 = vrot.lane.b32.xlu0 %v564, 120
      %v829 = vpop.permute.xlu0 %828
      %830 = vrot.lane.b32.xlu0 %v566, 120
      %v831 = vpop.permute.xlu0 %830
      %832 = vrot.lane.b32.xlu0 %v569, 120
      %v833 = vpop.permute.xlu0 %832
      %834 = vrot.lane.b32.xlu0 %v571, 120
      %v835 = vpop.permute.xlu0 %834
      %836 = vrot.lane.b32.xlu0 %v574, 120
      %v837 = vpop.permute.xlu0 %836
      %838 = vrot.lane.b32.xlu0 %v576, 120
      %v839 = vpop.permute.xlu0 %838
      %840 = vrot.lane.b32.xlu0 %v579, 120
      %v841 = vpop.permute.xlu0 %840
      %842 = vrot.lane.b32.xlu0 %v581, 120
      %v843 = vpop.permute.xlu0 %842
      %844 = vrot.lane.b32.xlu0 %v544, 116
      %v845 = vpop.permute.xlu0 %844
      %846 = vrot.lane.b32.xlu0 %v546, 116
      %v847 = vpop.permute.xlu0 %846
      %848 = vrot.lane.b32.xlu0 %v549, 116
      %v849 = vpop.permute.xlu0 %848
      %850 = vrot.lane.b32.xlu0 %v551, 116
      %v851 = vpop.permute.xlu0 %850
      %852 = vrot.lane.b32.xlu0 %v554, 116
      %v853 = vpop.permute.xlu0 %852
      %854 = vrot.lane.b32.xlu0 %v556, 116
      %v855 = vpop.permute.xlu0 %854
      %856 = vrot.lane.b32.xlu0 %v559, 116
      %v857 = vpop.permute.xlu0 %856
      %858 = vrot.lane.b32.xlu0 %v561, 116
      %v859 = vpop.permute.xlu0 %858
      %860 = vrot.lane.b32.xlu0 %v564, 116
      %v861 = vpop.permute.xlu0 %860
      %862 = vrot.lane.b32.xlu0 %v566, 116
      %v863 = vpop.permute.xlu0 %862
      %864 = vrot.lane.b32.xlu0 %v569, 116
      %v865 = vpop.permute.xlu0 %864
      %866 = vrot.lane.b32.xlu0 %v571, 116
      %v867 = vpop.permute.xlu0 %866
      %868 = vrot.lane.b32.xlu0 %v574, 116
      %v869 = vpop.permute.xlu0 %868
      %870 = vrot.lane.b32.xlu0 %v576, 116
      %v871 = vpop.permute.xlu0 %870
      %872 = vrot.lane.b32.xlu0 %v579, 116
      %v873 = vpop.permute.xlu0 %872
      %874 = vrot.lane.b32.xlu0 %v581, 116
      %v875 = vpop.permute.xlu0 %874
      %892 = vrot.lane.b32.xlu0 %v613, 124
      %v893 = vpop.permute.xlu0 %892
      %894 = vrot.lane.b32.xlu0 %v615, 124
      %v895 = vpop.permute.xlu0 %894
      %896 = vrot.lane.b32.xlu0 %v618, 124
      %v897 = vpop.permute.xlu0 %896
      %898 = vrot.lane.b32.xlu0 %v620, 124
      %v899 = vpop.permute.xlu0 %898
      %900 = vrot.lane.b32.xlu0 %v623, 124
      %v901 = vpop.permute.xlu0 %900
      %902 = vrot.lane.b32.xlu0 %v625, 124
      %v903 = vpop.permute.xlu0 %902
      %904 = vrot.lane.b32.xlu0 %v628, 124
      %v905 = vpop.permute.xlu0 %904
      %906 = vrot.lane.b32.xlu0 %v630, 124
      %v907 = vpop.permute.xlu0 %906
      %908 = vrot.lane.b32.xlu0 %v633, 124
      %v909 = vpop.permute.xlu0 %908
      %910 = vrot.lane.b32.xlu0 %v635, 124
      %v911 = vpop.permute.xlu0 %910
      %912 = vrot.lane.b32.xlu0 %v638, 124
      %v913 = vpop.permute.xlu0 %912
      %914 = vrot.lane.b32.xlu0 %v640, 124
      %v915 = vpop.permute.xlu0 %914
      %916 = vrot.lane.b32.xlu0 %v643, 124
      %v917 = vpop.permute.xlu0 %916
      %918 = vrot.lane.b32.xlu0 %v645, 124
      %v919 = vpop.permute.xlu0 %918
      %920 = vrot.lane.b32.xlu0 %v648, 124
      %v921 = vpop.permute.xlu0 %920
      %922 = vrot.lane.b32.xlu0 %v650, 124
      %v923 = vpop.permute.xlu0 %922
      %940 = vrot.lane.b32.xlu0 %v613, 120
      %v941 = vpop.permute.xlu0 %940
      %942 = vrot.lane.b32.xlu0 %v615, 120
      %v943 = vpop.permute.xlu0 %942
      %944 = vrot.lane.b32.xlu0 %v618, 120
      %v945 = vpop.permute.xlu0 %944
      %946 = vrot.lane.b32.xlu0 %v620, 120
      %v947 = vpop.permute.xlu0 %946
      %948 = vrot.lane.b32.xlu0 %v623, 120
      %v949 = vpop.permute.xlu0 %948
      %950 = vrot.lane.b32.xlu0 %v625, 120
      %v951 = vpop.permute.xlu0 %950
      %952 = vrot.lane.b32.xlu0 %v628, 120
      %v953 = vpop.permute.xlu0 %952
      %954 = vrot.lane.b32.xlu0 %v630, 120
      %v955 = vpop.permute.xlu0 %954
      %956 = vrot.lane.b32.xlu0 %v633, 120
      %v957 = vpop.permute.xlu0 %956
      %958 = vrot.lane.b32.xlu0 %v635, 120
      %v959 = vpop.permute.xlu0 %958
      %960 = vrot.lane.b32.xlu0 %v638, 120
      %v961 = vpop.permute.xlu0 %960
      %962 = vrot.lane.b32.xlu0 %v640, 120
      %v963 = vpop.permute.xlu0 %962
      %964 = vrot.lane.b32.xlu0 %v643, 120
      %v965 = vpop.permute.xlu0 %964
      %966 = vrot.lane.b32.xlu0 %v645, 120
      %v967 = vpop.permute.xlu0 %966
      %968 = vrot.lane.b32.xlu0 %v648, 120
      %v969 = vpop.permute.xlu0 %968
      %970 = vrot.lane.b32.xlu0 %v650, 120
      %v971 = vpop.permute.xlu0 %970
      %988 = vrot.lane.b32.xlu0 %v613, 116
      %v989 = vpop.permute.xlu0 %988
      %990 = vrot.lane.b32.xlu0 %v615, 116
      %v991 = vpop.permute.xlu0 %990
      %992 = vrot.lane.b32.xlu0 %v618, 116
      %v993 = vpop.permute.xlu0 %992
      %994 = vrot.lane.b32.xlu0 %v620, 116
      %v995 = vpop.permute.xlu0 %994
      %996 = vrot.lane.b32.xlu0 %v623, 116
      %v997 = vpop.permute.xlu0 %996
      %998 = vrot.lane.b32.xlu0 %v625, 116
      %v999 = vpop.permute.xlu0 %998
      %1000 = vrot.lane.b32.xlu0 %v628, 116
      %v1001 = vpop.permute.xlu0 %1000
      %1002 = vrot.lane.b32.xlu0 %v630, 116
      %v1003 = vpop.permute.xlu0 %1002
      %1004 = vrot.lane.b32.xlu0 %v633, 116
      %v1005 = vpop.permute.xlu0 %1004
      %1006 = vrot.lane.b32.xlu0 %v635, 116
      %v1007 = vpop.permute.xlu0 %1006
      %1008 = vrot.lane.b32.xlu0 %v638, 116
      %v1009 = vpop.permute.xlu0 %1008
      %1010 = vrot.lane.b32.xlu0 %v640, 116
      %v1011 = vpop.permute.xlu0 %1010
      %1012 = vrot.lane.b32.xlu0 %v643, 116
      %v1013 = vpop.permute.xlu0 %1012
      %1014 = vrot.lane.b32.xlu0 %v645, 116
      %v1015 = vpop.permute.xlu0 %1014
      %1016 = vrot.lane.b32.xlu0 %v648, 116
      %v1017 = vpop.permute.xlu0 %1016
      %1018 = vrot.lane.b32.xlu0 %v650, 116
      %v1019 = vpop.permute.xlu0 %1018
      %vm1036 = vcmask 31744
      %v1037 = vsel %vm1036, %v475, 0
      %v1039 = vsel %vm1036, %v544, 0
      %1041 = vmatpush.xpose.msra.mxu0 0.0
      %1042 = vmatpush.xpose.msra.mxu0 0.0
      %1043 = vmatpush.xpose.msra.mxu0 0.0
      %1044 = vmatpush.xpose.msra.mxu0 0.0
      %1045 = vmatpush.xpose.msra.mxu0 0.0
      %1046 = vmatpush.xpose.msra.mxu0 0.0
      %1047 = vmatpush.xpose.msra.mxu0 0.0
      %1048 = vmatpush.xpose.msra.mxu0 0.0
      %1049 = vmatpush.xpose.msra.mxu0 0.0
      %1050 = vmatpush.xpose.msra.mxu0 0.0
      %1051 = vmatpush.xpose.msra.mxu0 0.0
      %1052 = vmatpush.xpose.msra.mxu0 0.0
      %1053 = vmatpush.xpose.msra.mxu0 0.0
      %1054 = vmatpush.xpose.msra.mxu0 0.0
      %1055 = vmatpush.xpose.msra.mxu0 0.0
      %1056 = vmatpush.xpose.msra.mxu0 %v1039
      %1057 = vmatmul.f32.gmra.mxu0 %v1037
      %v1058 = vpop.f32.mrf.mxu0
      %v1059 = vadd.f32 0.0, %v1058
      %1060 = vdwg.mxu0
      %v1061 = vsel %vm1036, %v477, 0
      %v1063 = vsel %vm1036, %v546, 0
      %1065 = vmatpush.xpose.msra.mxu0 0.0
      %1066 = vmatpush.xpose.msra.mxu0 0.0
      %1067 = vmatpush.xpose.msra.mxu0 0.0
      %1068 = vmatpush.xpose.msra.mxu0 0.0
      %1069 = vmatpush.xpose.msra.mxu0 0.0
      %1070 = vmatpush.xpose.msra.mxu0 0.0
      %1071 = vmatpush.xpose.msra.mxu0 0.0
      %1072 = vmatpush.xpose.msra.mxu0 0.0
      %1073 = vmatpush.xpose.msra.mxu0 0.0
      %1074 = vmatpush.xpose.msra.mxu0 0.0
      %1075 = vmatpush.xpose.msra.mxu0 0.0
      %1076 = vmatpush.xpose.msra.mxu0 0.0
      %1077 = vmatpush.xpose.msra.mxu0 0.0
      %1078 = vmatpush.xpose.msra.mxu0 0.0
      %1079 = vmatpush.xpose.msra.mxu0 0.0
      %1080 = vmatpush.xpose.msra.mxu0 %v1063
      %1081 = vmatmul.f32.gmra.mxu0 %v1061
      %v1082 = vpop.f32.mrf.mxu0
      %v1083 = vadd.f32 0.0, %v1082
      %1084 = vdwg.mxu0
      %v1085 = vsel %vm1036, %v480, 0
      %v1087 = vsel %vm1036, %v549, 0
      %1089 = vmatpush.xpose.msra.mxu0 0.0
      %1090 = vmatpush.xpose.msra.mxu0 0.0
      %1091 = vmatpush.xpose.msra.mxu0 0.0
      %1092 = vmatpush.xpose.msra.mxu0 0.0
      %1093 = vmatpush.xpose.msra.mxu0 0.0
      %1094 = vmatpush.xpose.msra.mxu0 0.0
      %1095 = vmatpush.xpose.msra.mxu0 0.0
      %1096 = vmatpush.xpose.msra.mxu0 0.0
      %1097 = vmatpush.xpose.msra.mxu0 0.0
      %1098 = vmatpush.xpose.msra.mxu0 0.0
      %1099 = vmatpush.xpose.msra.mxu0 0.0
      %1100 = vmatpush.xpose.msra.mxu0 0.0
      %1101 = vmatpush.xpose.msra.mxu0 0.0
      %1102 = vmatpush.xpose.msra.mxu0 0.0
      %1103 = vmatpush.xpose.msra.mxu0 0.0
      %1104 = vmatpush.xpose.msra.mxu0 %v1087
      %1105 = vmatmul.f32.gmra.mxu0 %v1085
      %v1106 = vpop.f32.mrf.mxu0
      %v1107 = vadd.f32 0.0, %v1106
      %1108 = vdwg.mxu0
      %v1109 = vsel %vm1036, %v482, 0
      %v1111 = vsel %vm1036, %v551, 0
      %1113 = vmatpush.xpose.msra.mxu0 0.0
      %1114 = vmatpush.xpose.msra.mxu0 0.0
      %1115 = vmatpush.xpose.msra.mxu0 0.0
      %1116 = vmatpush.xpose.msra.mxu0 0.0
      %1117 = vmatpush.xpose.msra.mxu0 0.0
      %1118 = vmatpush.xpose.msra.mxu0 0.0
      %1119 = vmatpush.xpose.msra.mxu0 0.0
      %1120 = vmatpush.xpose.msra.mxu0 0.0
      %1121 = vmatpush.xpose.msra.mxu0 0.0
      %1122 = vmatpush.xpose.msra.mxu0 0.0
      %1123 = vmatpush.xpose.msra.mxu0 0.0
      %1124 = vmatpush.xpose.msra.mxu0 0.0
      %1125 = vmatpush.xpose.msra.mxu0 0.0
      %1126 = vmatpush.xpose.msra.mxu0 0.0
      %1127 = vmatpush.xpose.msra.mxu0 0.0
      %1128 = vmatpush.xpose.msra.mxu0 %v1111
      %1129 = vmatmul.f32.gmra.mxu0 %v1109
      %v1130 = vpop.f32.mrf.mxu0
      %v1131 = vadd.f32 0.0, %v1130
      %1132 = vdwg.mxu0
      %v1133 = vsel %vm1036, %v485, 0
      %v1135 = vsel %vm1036, %v554, 0
      %1137 = vmatpush.xpose.msra.mxu0 0.0
      %1138 = vmatpush.xpose.msra.mxu0 0.0
      %1139 = vmatpush.xpose.msra.mxu0 0.0
      %1140 = vmatpush.xpose.msra.mxu0 0.0
      %1141 = vmatpush.xpose.msra.mxu0 0.0
      %1142 = vmatpush.xpose.msra.mxu0 0.0
      %1143 = vmatpush.xpose.msra.mxu0 0.0
      %1144 = vmatpush.xpose.msra.mxu0 0.0
      %1145 = vmatpush.xpose.msra.mxu0 0.0
      %1146 = vmatpush.xpose.msra.mxu0 0.0
      %1147 = vmatpush.xpose.msra.mxu0 0.0
      %1148 = vmatpush.xpose.msra.mxu0 0.0
      %1149 = vmatpush.xpose.msra.mxu0 0.0
      %1150 = vmatpush.xpose.msra.mxu0 0.0
      %1151 = vmatpush.xpose.msra.mxu0 0.0
      %1152 = vmatpush.xpose.msra.mxu0 %v1135
      %1153 = vmatmul.f32.gmra.mxu0 %v1133
      %v1154 = vpop.f32.mrf.mxu0
      %v1155 = vadd.f32 0.0, %v1154
      %1156 = vdwg.mxu0
      %v1157 = vsel %vm1036, %v487, 0
      %v1159 = vsel %vm1036, %v556, 0
      %1161 = vmatpush.xpose.msra.mxu0 0.0
      %1162 = vmatpush.xpose.msra.mxu0 0.0
      %1163 = vmatpush.xpose.msra.mxu0 0.0
      %1164 = vmatpush.xpose.msra.mxu0 0.0
      %1165 = vmatpush.xpose.msra.mxu0 0.0
      %1166 = vmatpush.xpose.msra.mxu0 0.0
      %1167 = vmatpush.xpose.msra.mxu0 0.0
      %1168 = vmatpush.xpose.msra.mxu0 0.0
      %1169 = vmatpush.xpose.msra.mxu0 0.0
      %1170 = vmatpush.xpose.msra.mxu0 0.0
      %1171 = vmatpush.xpose.msra.mxu0 0.0
      %1172 = vmatpush.xpose.msra.mxu0 0.0
      %1173 = vmatpush.xpose.msra.mxu0 0.0
      %1174 = vmatpush.xpose.msra.mxu0 0.0
      %1175 = vmatpush.xpose.msra.mxu0 0.0
      %1176 = vmatpush.xpose.msra.mxu0 %v1159
      %1177 = vmatmul.f32.gmra.mxu0 %v1157
      %v1178 = vpop.f32.mrf.mxu0
      %v1179 = vadd.f32 0.0, %v1178
      %1180 = vdwg.mxu0
      %v1181 = vsel %vm1036, %v490, 0
      %v1183 = vsel %vm1036, %v559, 0
      %1185 = vmatpush.xpose.msra.mxu0 0.0
      %1186 = vmatpush.xpose.msra.mxu0 0.0
      %1187 = vmatpush.xpose.msra.mxu0 0.0
      %1188 = vmatpush.xpose.msra.mxu0 0.0
      %1189 = vmatpush.xpose.msra.mxu0 0.0
      %1190 = vmatpush.xpose.msra.mxu0 0.0
      %1191 = vmatpush.xpose.msra.mxu0 0.0
      %1192 = vmatpush.xpose.msra.mxu0 0.0
      %1193 = vmatpush.xpose.msra.mxu0 0.0
      %1194 = vmatpush.xpose.msra.mxu0 0.0
      %1195 = vmatpush.xpose.msra.mxu0 0.0
      %1196 = vmatpush.xpose.msra.mxu0 0.0
      %1197 = vmatpush.xpose.msra.mxu0 0.0
      %1198 = vmatpush.xpose.msra.mxu0 0.0
      %1199 = vmatpush.xpose.msra.mxu0 0.0
      %1200 = vmatpush.xpose.msra.mxu0 %v1183
      %1201 = vmatmul.f32.gmra.mxu0 %v1181
      %v1202 = vpop.f32.mrf.mxu0
      %v1203 = vadd.f32 0.0, %v1202
      %1204 = vdwg.mxu0
      %v1205 = vsel %vm1036, %v492, 0
      %v1207 = vsel %vm1036, %v561, 0
      %1209 = vmatpush.xpose.msra.mxu0 0.0
      %1210 = vmatpush.xpose.msra.mxu0 0.0
      %1211 = vmatpush.xpose.msra.mxu0 0.0
      %1212 = vmatpush.xpose.msra.mxu0 0.0
      %1213 = vmatpush.xpose.msra.mxu0 0.0
      %1214 = vmatpush.xpose.msra.mxu0 0.0
      %1215 = vmatpush.xpose.msra.mxu0 0.0
      %1216 = vmatpush.xpose.msra.mxu0 0.0
      %1217 = vmatpush.xpose.msra.mxu0 0.0
      %1218 = vmatpush.xpose.msra.mxu0 0.0
      %1219 = vmatpush.xpose.msra.mxu0 0.0
      %1220 = vmatpush.xpose.msra.mxu0 0.0
      %1221 = vmatpush.xpose.msra.mxu0 0.0
      %1222 = vmatpush.xpose.msra.mxu0 0.0
      %1223 = vmatpush.xpose.msra.mxu0 0.0
      %1224 = vmatpush.xpose.msra.mxu0 %v1207
      %1225 = vmatmul.f32.gmra.mxu0 %v1205
      %v1226 = vpop.f32.mrf.mxu0
      %v1227 = vadd.f32 0.0, %v1226
      %1228 = vdwg.mxu0
      %v1229 = vsel %vm1036, %v495, 0
      %v1231 = vsel %vm1036, %v564, 0
      %1233 = vmatpush.xpose.msra.mxu0 0.0
      %1234 = vmatpush.xpose.msra.mxu0 0.0
      %1235 = vmatpush.xpose.msra.mxu0 0.0
      %1236 = vmatpush.xpose.msra.mxu0 0.0
      %1237 = vmatpush.xpose.msra.mxu0 0.0
      %1238 = vmatpush.xpose.msra.mxu0 0.0
      %1239 = vmatpush.xpose.msra.mxu0 0.0
      %1240 = vmatpush.xpose.msra.mxu0 0.0
      %1241 = vmatpush.xpose.msra.mxu0 0.0
      %1242 = vmatpush.xpose.msra.mxu0 0.0
      %1243 = vmatpush.xpose.msra.mxu0 0.0
      %1244 = vmatpush.xpose.msra.mxu0 0.0
      %1245 = vmatpush.xpose.msra.mxu0 0.0
      %1246 = vmatpush.xpose.msra.mxu0 0.0
      %1247 = vmatpush.xpose.msra.mxu0 0.0
      %1248 = vmatpush.xpose.msra.mxu0 %v1231
      %1249 = vmatmul.f32.gmra.mxu0 %v1229
      %v1250 = vpop.f32.mrf.mxu0
      %v1251 = vadd.f32 0.0, %v1250
      %1252 = vdwg.mxu0
      %v1253 = vsel %vm1036, %v497, 0
      %v1255 = vsel %vm1036, %v566, 0
      %1257 = vmatpush.xpose.msra.mxu0 0.0
      %1258 = vmatpush.xpose.msra.mxu0 0.0
      %1259 = vmatpush.xpose.msra.mxu0 0.0
      %1260 = vmatpush.xpose.msra.mxu0 0.0
      %1261 = vmatpush.xpose.msra.mxu0 0.0
      %1262 = vmatpush.xpose.msra.mxu0 0.0
      %1263 = vmatpush.xpose.msra.mxu0 0.0
      %1264 = vmatpush.xpose.msra.mxu0 0.0
      %1265 = vmatpush.xpose.msra.mxu0 0.0
      %1266 = vmatpush.xpose.msra.mxu0 0.0
      %1267 = vmatpush.xpose.msra.mxu0 0.0
      %1268 = vmatpush.xpose.msra.mxu0 0.0
      %1269 = vmatpush.xpose.msra.mxu0 0.0
      %1270 = vmatpush.xpose.msra.mxu0 0.0
      %1271 = vmatpush.xpose.msra.mxu0 0.0
      %1272 = vmatpush.xpose.msra.mxu0 %v1255
      %1273 = vmatmul.f32.gmra.mxu0 %v1253
      %v1274 = vpop.f32.mrf.mxu0
      %v1275 = vadd.f32 0.0, %v1274
      %1276 = vdwg.mxu0
      %v1277 = vsel %vm1036, %v500, 0
      %v1279 = vsel %vm1036, %v569, 0
      %1281 = vmatpush.xpose.msra.mxu0 0.0
      %1282 = vmatpush.xpose.msra.mxu0 0.0
      %1283 = vmatpush.xpose.msra.mxu0 0.0
      %1284 = vmatpush.xpose.msra.mxu0 0.0
      %1285 = vmatpush.xpose.msra.mxu0 0.0
      %1286 = vmatpush.xpose.msra.mxu0 0.0
      %1287 = vmatpush.xpose.msra.mxu0 0.0
      %1288 = vmatpush.xpose.msra.mxu0 0.0
      %1289 = vmatpush.xpose.msra.mxu0 0.0
      %1290 = vmatpush.xpose.msra.mxu0 0.0
      %1291 = vmatpush.xpose.msra.mxu0 0.0
      %1292 = vmatpush.xpose.msra.mxu0 0.0
      %1293 = vmatpush.xpose.msra.mxu0 0.0
      %1294 = vmatpush.xpose.msra.mxu0 0.0
      %1295 = vmatpush.xpose.msra.mxu0 0.0
      %1296 = vmatpush.xpose.msra.mxu0 %v1279
      %1297 = vmatmul.f32.gmra.mxu0 %v1277
      %v1298 = vpop.f32.mrf.mxu0
      %v1299 = vadd.f32 0.0, %v1298
      %1300 = vdwg.mxu0
      %v1301 = vsel %vm1036, %v502, 0
      %v1303 = vsel %vm1036, %v571, 0
      %1305 = vmatpush.xpose.msra.mxu0 0.0
      %1306 = vmatpush.xpose.msra.mxu0 0.0
      %1307 = vmatpush.xpose.msra.mxu0 0.0
      %1308 = vmatpush.xpose.msra.mxu0 0.0
      %1309 = vmatpush.xpose.msra.mxu0 0.0
      %1310 = vmatpush.xpose.msra.mxu0 0.0
      %1311 = vmatpush.xpose.msra.mxu0 0.0
      %1312 = vmatpush.xpose.msra.mxu0 0.0
      %1313 = vmatpush.xpose.msra.mxu0 0.0
      %1314 = vmatpush.xpose.msra.mxu0 0.0
      %1315 = vmatpush.xpose.msra.mxu0 0.0
      %1316 = vmatpush.xpose.msra.mxu0 0.0
      %1317 = vmatpush.xpose.msra.mxu0 0.0
      %1318 = vmatpush.xpose.msra.mxu0 0.0
      %1319 = vmatpush.xpose.msra.mxu0 0.0
      %1320 = vmatpush.xpose.msra.mxu0 %v1303
      %1321 = vmatmul.f32.gmra.mxu0 %v1301
      %v1322 = vpop.f32.mrf.mxu0
      %v1323 = vadd.f32 0.0, %v1322
      %1324 = vdwg.mxu0
      %v1325 = vsel %vm1036, %v505, 0
      %v1327 = vsel %vm1036, %v574, 0
      %1329 = vmatpush.xpose.msra.mxu0 0.0
      %1330 = vmatpush.xpose.msra.mxu0 0.0
      %1331 = vmatpush.xpose.msra.mxu0 0.0
      %1332 = vmatpush.xpose.msra.mxu0 0.0
      %1333 = vmatpush.xpose.msra.mxu0 0.0
      %1334 = vmatpush.xpose.msra.mxu0 0.0
      %1335 = vmatpush.xpose.msra.mxu0 0.0
      %1336 = vmatpush.xpose.msra.mxu0 0.0
      %1337 = vmatpush.xpose.msra.mxu0 0.0
      %1338 = vmatpush.xpose.msra.mxu0 0.0
      %1339 = vmatpush.xpose.msra.mxu0 0.0
      %1340 = vmatpush.xpose.msra.mxu0 0.0
      %1341 = vmatpush.xpose.msra.mxu0 0.0
      %1342 = vmatpush.xpose.msra.mxu0 0.0
      %1343 = vmatpush.xpose.msra.mxu0 0.0
      %1344 = vmatpush.xpose.msra.mxu0 %v1327
      %1345 = vmatmul.f32.gmra.mxu0 %v1325
      %v1346 = vpop.f32.mrf.mxu0
      %v1347 = vadd.f32 0.0, %v1346
      %1348 = vdwg.mxu0
      %v1349 = vsel %vm1036, %v507, 0
      %v1351 = vsel %vm1036, %v576, 0
      %1353 = vmatpush.xpose.msra.mxu0 0.0
      %1354 = vmatpush.xpose.msra.mxu0 0.0
      %1355 = vmatpush.xpose.msra.mxu0 0.0
      %1356 = vmatpush.xpose.msra.mxu0 0.0
      %1357 = vmatpush.xpose.msra.mxu0 0.0
      %1358 = vmatpush.xpose.msra.mxu0 0.0
      %1359 = vmatpush.xpose.msra.mxu0 0.0
      %1360 = vmatpush.xpose.msra.mxu0 0.0
      %1361 = vmatpush.xpose.msra.mxu0 0.0
      %1362 = vmatpush.xpose.msra.mxu0 0.0
      %1363 = vmatpush.xpose.msra.mxu0 0.0
      %1364 = vmatpush.xpose.msra.mxu0 0.0
      %1365 = vmatpush.xpose.msra.mxu0 0.0
      %1366 = vmatpush.xpose.msra.mxu0 0.0
      %1367 = vmatpush.xpose.msra.mxu0 0.0
      %1368 = vmatpush.xpose.msra.mxu0 %v1351
      %1369 = vmatmul.f32.gmra.mxu0 %v1349
      %v1370 = vpop.f32.mrf.mxu0
      %v1371 = vadd.f32 0.0, %v1370
      %1372 = vdwg.mxu0
      %v1373 = vsel %vm1036, %v510, 0
      %v1375 = vsel %vm1036, %v579, 0
      %1377 = vmatpush.xpose.msra.mxu0 0.0
      %1378 = vmatpush.xpose.msra.mxu0 0.0
      %1379 = vmatpush.xpose.msra.mxu0 0.0
      %1380 = vmatpush.xpose.msra.mxu0 0.0
      %1381 = vmatpush.xpose.msra.mxu0 0.0
      %1382 = vmatpush.xpose.msra.mxu0 0.0
      %1383 = vmatpush.xpose.msra.mxu0 0.0
      %1384 = vmatpush.xpose.msra.mxu0 0.0
      %1385 = vmatpush.xpose.msra.mxu0 0.0
      %1386 = vmatpush.xpose.msra.mxu0 0.0
      %1387 = vmatpush.xpose.msra.mxu0 0.0
      %1388 = vmatpush.xpose.msra.mxu0 0.0
      %1389 = vmatpush.xpose.msra.mxu0 0.0
      %1390 = vmatpush.xpose.msra.mxu0 0.0
      %1391 = vmatpush.xpose.msra.mxu0 0.0
      %1392 = vmatpush.xpose.msra.mxu0 %v1375
      %1393 = vmatmul.f32.gmra.mxu0 %v1373
      %v1394 = vpop.f32.mrf.mxu0
      %v1395 = vadd.f32 0.0, %v1394
      %1396 = vdwg.mxu0
      %v1397 = vsel %vm1036, %v512, 0
      %v1399 = vsel %vm1036, %v581, 0
      %1401 = vmatpush.xpose.msra.mxu0 0.0
      %1402 = vmatpush.xpose.msra.mxu0 0.0
      %1403 = vmatpush.xpose.msra.mxu0 0.0
      %1404 = vmatpush.xpose.msra.mxu0 0.0
      %1405 = vmatpush.xpose.msra.mxu0 0.0
      %1406 = vmatpush.xpose.msra.mxu0 0.0
      %1407 = vmatpush.xpose.msra.mxu0 0.0
      %1408 = vmatpush.xpose.msra.mxu0 0.0
      %1409 = vmatpush.xpose.msra.mxu0 0.0
      %1410 = vmatpush.xpose.msra.mxu0 0.0
      %1411 = vmatpush.xpose.msra.mxu0 0.0
      %1412 = vmatpush.xpose.msra.mxu0 0.0
      %1413 = vmatpush.xpose.msra.mxu0 0.0
      %1414 = vmatpush.xpose.msra.mxu0 0.0
      %1415 = vmatpush.xpose.msra.mxu0 0.0
      %1416 = vmatpush.xpose.msra.mxu0 %v1399
      %1417 = vmatmul.f32.gmra.mxu0 %v1397
      %v1418 = vpop.f32.mrf.mxu0
      %v1419 = vadd.f32 0.0, %v1418
      %1420 = vdwg.mxu0
      %v1421 = vsel %vm1036, %v669, 0
      %v1423 = vsel %vm1036, %v781, 0
      %1425 = vmatpush.xpose.msra.mxu0 0.0
      %1426 = vmatpush.xpose.msra.mxu0 0.0
      %1427 = vmatpush.xpose.msra.mxu0 0.0
      %1428 = vmatpush.xpose.msra.mxu0 0.0
      %1429 = vmatpush.xpose.msra.mxu0 0.0
      %1430 = vmatpush.xpose.msra.mxu0 0.0
      %1431 = vmatpush.xpose.msra.mxu0 0.0
      %1432 = vmatpush.xpose.msra.mxu0 0.0
      %1433 = vmatpush.xpose.msra.mxu0 0.0
      %1434 = vmatpush.xpose.msra.mxu0 0.0
      %1435 = vmatpush.xpose.msra.mxu0 0.0
      %1436 = vmatpush.xpose.msra.mxu0 0.0
      %1437 = vmatpush.xpose.msra.mxu0 0.0
      %1438 = vmatpush.xpose.msra.mxu0 0.0
      %1439 = vmatpush.xpose.msra.mxu0 0.0
      %1440 = vmatpush.xpose.msra.mxu0 %v1423
      %1441 = vmatmul.f32.gmra.mxu0 %v1421
      %v1442 = vpop.f32.mrf.mxu0
      %v1443 = vadd.f32 0.0, %v1442
      %1444 = vdwg.mxu0
      %v1445 = vsel %vm1036, %v671, 0
      %v1447 = vsel %vm1036, %v783, 0
      %1449 = vmatpush.xpose.msra.mxu0 0.0
      %1450 = vmatpush.xpose.msra.mxu0 0.0
      %1451 = vmatpush.xpose.msra.mxu0 0.0
      %1452 = vmatpush.xpose.msra.mxu0 0.0
      %1453 = vmatpush.xpose.msra.mxu0 0.0
      %1454 = vmatpush.xpose.msra.mxu0 0.0
      %1455 = vmatpush.xpose.msra.mxu0 0.0
      %1456 = vmatpush.xpose.msra.mxu0 0.0
      %1457 = vmatpush.xpose.msra.mxu0 0.0
      %1458 = vmatpush.xpose.msra.mxu0 0.0
      %1459 = vmatpush.xpose.msra.mxu0 0.0
      %1460 = vmatpush.xpose.msra.mxu0 0.0
      %1461 = vmatpush.xpose.msra.mxu0 0.0
      %1462 = vmatpush.xpose.msra.mxu0 0.0
      %1463 = vmatpush.xpose.msra.mxu0 0.0
      %1464 = vmatpush.xpose.msra.mxu0 %v1447
      %1465 = vmatmul.f32.gmra.mxu0 %v1445
      %v1466 = vpop.f32.mrf.mxu0
      %v1467 = vadd.f32 0.0, %v1466
      %1468 = vdwg.mxu0
      %v1469 = vsel %vm1036, %v673, 0
      %v1471 = vsel %vm1036, %v785, 0
      %1473 = vmatpush.xpose.msra.mxu0 0.0
      %1474 = vmatpush.xpose.msra.mxu0 0.0
      %1475 = vmatpush.xpose.msra.mxu0 0.0
      %1476 = vmatpush.xpose.msra.mxu0 0.0
      %1477 = vmatpush.xpose.msra.mxu0 0.0
      %1478 = vmatpush.xpose.msra.mxu0 0.0
      %1479 = vmatpush.xpose.msra.mxu0 0.0
      %1480 = vmatpush.xpose.msra.mxu0 0.0
      %1481 = vmatpush.xpose.msra.mxu0 0.0
      %1482 = vmatpush.xpose.msra.mxu0 0.0
      %1483 = vmatpush.xpose.msra.mxu0 0.0
      %1484 = vmatpush.xpose.msra.mxu0 0.0
      %1485 = vmatpush.xpose.msra.mxu0 0.0
      %1486 = vmatpush.xpose.msra.mxu0 0.0
      %1487 = vmatpush.xpose.msra.mxu0 0.0
      %1488 = vmatpush.xpose.msra.mxu0 %v1471
      %1489 = vmatmul.f32.gmra.mxu0 %v1469
      %v1490 = vpop.f32.mrf.mxu0
      %v1491 = vadd.f32 0.0, %v1490
      %1492 = vdwg.mxu0
      %v1493 = vsel %vm1036, %v675, 0
      %v1495 = vsel %vm1036, %v787, 0
      %1497 = vmatpush.xpose.msra.mxu0 0.0
      %1498 = vmatpush.xpose.msra.mxu0 0.0
      %1499 = vmatpush.xpose.msra.mxu0 0.0
      %1500 = vmatpush.xpose.msra.mxu0 0.0
      %1501 = vmatpush.xpose.msra.mxu0 0.0
      %1502 = vmatpush.xpose.msra.mxu0 0.0
      %1503 = vmatpush.xpose.msra.mxu0 0.0
      %1504 = vmatpush.xpose.msra.mxu0 0.0
      %1505 = vmatpush.xpose.msra.mxu0 0.0
      %1506 = vmatpush.xpose.msra.mxu0 0.0
      %1507 = vmatpush.xpose.msra.mxu0 0.0
      %1508 = vmatpush.xpose.msra.mxu0 0.0
      %1509 = vmatpush.xpose.msra.mxu0 0.0
      %1510 = vmatpush.xpose.msra.mxu0 0.0
      %1511 = vmatpush.xpose.msra.mxu0 0.0
      %1512 = vmatpush.xpose.msra.mxu0 %v1495
      %1513 = vmatmul.f32.gmra.mxu0 %v1493
      %v1514 = vpop.f32.mrf.mxu0
      %v1515 = vadd.f32 0.0, %v1514
      %1516 = vdwg.mxu0
      %v1517 = vsel %vm1036, %v677, 0
      %v1519 = vsel %vm1036, %v789, 0
      %1521 = vmatpush.xpose.msra.mxu0 0.0
      %1522 = vmatpush.xpose.msra.mxu0 0.0
      %1523 = vmatpush.xpose.msra.mxu0 0.0
      %1524 = vmatpush.xpose.msra.mxu0 0.0
      %1525 = vmatpush.xpose.msra.mxu0 0.0
      %1526 = vmatpush.xpose.msra.mxu0 0.0
      %1527 = vmatpush.xpose.msra.mxu0 0.0
      %1528 = vmatpush.xpose.msra.mxu0 0.0
      %1529 = vmatpush.xpose.msra.mxu0 0.0
      %1530 = vmatpush.xpose.msra.mxu0 0.0
      %1531 = vmatpush.xpose.msra.mxu0 0.0
      %1532 = vmatpush.xpose.msra.mxu0 0.0
      %1533 = vmatpush.xpose.msra.mxu0 0.0
      %1534 = vmatpush.xpose.msra.mxu0 0.0
      %1535 = vmatpush.xpose.msra.mxu0 0.0
      %1536 = vmatpush.xpose.msra.mxu0 %v1519
      %1537 = vmatmul.f32.gmra.mxu0 %v1517
      %v1538 = vpop.f32.mrf.mxu0
      %v1539 = vadd.f32 0.0, %v1538
      %1540 = vdwg.mxu0
      %v1541 = vsel %vm1036, %v679, 0
      %v1543 = vsel %vm1036, %v791, 0
      %1545 = vmatpush.xpose.msra.mxu0 0.0
      %1546 = vmatpush.xpose.msra.mxu0 0.0
      %1547 = vmatpush.xpose.msra.mxu0 0.0
      %1548 = vmatpush.xpose.msra.mxu0 0.0
      %1549 = vmatpush.xpose.msra.mxu0 0.0
      %1550 = vmatpush.xpose.msra.mxu0 0.0
      %1551 = vmatpush.xpose.msra.mxu0 0.0
      %1552 = vmatpush.xpose.msra.mxu0 0.0
      %1553 = vmatpush.xpose.msra.mxu0 0.0
      %1554 = vmatpush.xpose.msra.mxu0 0.0
      %1555 = vmatpush.xpose.msra.mxu0 0.0
      %1556 = vmatpush.xpose.msra.mxu0 0.0
      %1557 = vmatpush.xpose.msra.mxu0 0.0
      %1558 = vmatpush.xpose.msra.mxu0 0.0
      %1559 = vmatpush.xpose.msra.mxu0 0.0
      %1560 = vmatpush.xpose.msra.mxu0 %v1543
      %1561 = vmatmul.f32.gmra.mxu0 %v1541
      %v1562 = vpop.f32.mrf.mxu0
      %v1563 = vadd.f32 0.0, %v1562
      %1564 = vdwg.mxu0
      %v1565 = vsel %vm1036, %v681, 0
      %v1567 = vsel %vm1036, %v793, 0
      %1569 = vmatpush.xpose.msra.mxu0 0.0
      %1570 = vmatpush.xpose.msra.mxu0 0.0
      %1571 = vmatpush.xpose.msra.mxu0 0.0
      %1572 = vmatpush.xpose.msra.mxu0 0.0
      %1573 = vmatpush.xpose.msra.mxu0 0.0
      %1574 = vmatpush.xpose.msra.mxu0 0.0
      %1575 = vmatpush.xpose.msra.mxu0 0.0
      %1576 = vmatpush.xpose.msra.mxu0 0.0
      %1577 = vmatpush.xpose.msra.mxu0 0.0
      %1578 = vmatpush.xpose.msra.mxu0 0.0
      %1579 = vmatpush.xpose.msra.mxu0 0.0
      %1580 = vmatpush.xpose.msra.mxu0 0.0
      %1581 = vmatpush.xpose.msra.mxu0 0.0
      %1582 = vmatpush.xpose.msra.mxu0 0.0
      %1583 = vmatpush.xpose.msra.mxu0 0.0
      %1584 = vmatpush.xpose.msra.mxu0 %v1567
      %1585 = vmatmul.f32.gmra.mxu0 %v1565
      %v1586 = vpop.f32.mrf.mxu0
      %v1587 = vadd.f32 0.0, %v1586
      %1588 = vdwg.mxu0
      %v1589 = vsel %vm1036, %v683, 0
      %v1591 = vsel %vm1036, %v795, 0
      %1593 = vmatpush.xpose.msra.mxu0 0.0
      %1594 = vmatpush.xpose.msra.mxu0 0.0
      %1595 = vmatpush.xpose.msra.mxu0 0.0
      %1596 = vmatpush.xpose.msra.mxu0 0.0
      %1597 = vmatpush.xpose.msra.mxu0 0.0
      %1598 = vmatpush.xpose.msra.mxu0 0.0
      %1599 = vmatpush.xpose.msra.mxu0 0.0
      %1600 = vmatpush.xpose.msra.mxu0 0.0
      %1601 = vmatpush.xpose.msra.mxu0 0.0
      %1602 = vmatpush.xpose.msra.mxu0 0.0
      %1603 = vmatpush.xpose.msra.mxu0 0.0
      %1604 = vmatpush.xpose.msra.mxu0 0.0
      %1605 = vmatpush.xpose.msra.mxu0 0.0
      %1606 = vmatpush.xpose.msra.mxu0 0.0
      %1607 = vmatpush.xpose.msra.mxu0 0.0
      %1608 = vmatpush.xpose.msra.mxu0 %v1591
      %1609 = vmatmul.f32.gmra.mxu0 %v1589
      %v1610 = vpop.f32.mrf.mxu0
      %v1611 = vadd.f32 0.0, %v1610
      %1612 = vdwg.mxu0
      %v1613 = vsel %vm1036, %v685, 0
      %v1615 = vsel %vm1036, %v797, 0
      %1617 = vmatpush.xpose.msra.mxu0 0.0
      %1618 = vmatpush.xpose.msra.mxu0 0.0
      %1619 = vmatpush.xpose.msra.mxu0 0.0
      %1620 = vmatpush.xpose.msra.mxu0 0.0
      %1621 = vmatpush.xpose.msra.mxu0 0.0
      %1622 = vmatpush.xpose.msra.mxu0 0.0
      %1623 = vmatpush.xpose.msra.mxu0 0.0
      %1624 = vmatpush.xpose.msra.mxu0 0.0
      %1625 = vmatpush.xpose.msra.mxu0 0.0
      %1626 = vmatpush.xpose.msra.mxu0 0.0
      %1627 = vmatpush.xpose.msra.mxu0 0.0
      %1628 = vmatpush.xpose.msra.mxu0 0.0
      %1629 = vmatpush.xpose.msra.mxu0 0.0
      %1630 = vmatpush.xpose.msra.mxu0 0.0
      %1631 = vmatpush.xpose.msra.mxu0 0.0
      %1632 = vmatpush.xpose.msra.mxu0 %v1615
      %1633 = vmatmul.f32.gmra.mxu0 %v1613
      %v1634 = vpop.f32.mrf.mxu0
      %v1635 = vadd.f32 0.0, %v1634
      %1636 = vdwg.mxu0
      %v1637 = vsel %vm1036, %v687, 0
      %v1639 = vsel %vm1036, %v799, 0
      %1641 = vmatpush.xpose.msra.mxu0 0.0
      %1642 = vmatpush.xpose.msra.mxu0 0.0
      %1643 = vmatpush.xpose.msra.mxu0 0.0
      %1644 = vmatpush.xpose.msra.mxu0 0.0
      %1645 = vmatpush.xpose.msra.mxu0 0.0
      %1646 = vmatpush.xpose.msra.mxu0 0.0
      %1647 = vmatpush.xpose.msra.mxu0 0.0
      %1648 = vmatpush.xpose.msra.mxu0 0.0
      %1649 = vmatpush.xpose.msra.mxu0 0.0
      %1650 = vmatpush.xpose.msra.mxu0 0.0
      %1651 = vmatpush.xpose.msra.mxu0 0.0
      %1652 = vmatpush.xpose.msra.mxu0 0.0
      %1653 = vmatpush.xpose.msra.mxu0 0.0
      %1654 = vmatpush.xpose.msra.mxu0 0.0
      %1655 = vmatpush.xpose.msra.mxu0 0.0
      %1656 = vmatpush.xpose.msra.mxu0 %v1639
      %1657 = vmatmul.f32.gmra.mxu0 %v1637
      %v1658 = vpop.f32.mrf.mxu0
      %v1659 = vadd.f32 0.0, %v1658
      %1660 = vdwg.mxu0
      %v1661 = vsel %vm1036, %v689, 0
      %v1663 = vsel %vm1036, %v801, 0
      %1665 = vmatpush.xpose.msra.mxu0 0.0
      %1666 = vmatpush.xpose.msra.mxu0 0.0
      %1667 = vmatpush.xpose.msra.mxu0 0.0
      %1668 = vmatpush.xpose.msra.mxu0 0.0
      %1669 = vmatpush.xpose.msra.mxu0 0.0
      %1670 = vmatpush.xpose.msra.mxu0 0.0
      %1671 = vmatpush.xpose.msra.mxu0 0.0
      %1672 = vmatpush.xpose.msra.mxu0 0.0
      %1673 = vmatpush.xpose.msra.mxu0 0.0
      %1674 = vmatpush.xpose.msra.mxu0 0.0
      %1675 = vmatpush.xpose.msra.mxu0 0.0
      %1676 = vmatpush.xpose.msra.mxu0 0.0
      %1677 = vmatpush.xpose.msra.mxu0 0.0
      %1678 = vmatpush.xpose.msra.mxu0 0.0
      %1679 = vmatpush.xpose.msra.mxu0 0.0
      %1680 = vmatpush.xpose.msra.mxu0 %v1663
      %1681 = vmatmul.f32.gmra.mxu0 %v1661
      %v1682 = vpop.f32.mrf.mxu0
      %v1683 = vadd.f32 0.0, %v1682
      %1684 = vdwg.mxu0
      %v1685 = vsel %vm1036, %v691, 0
      %v1687 = vsel %vm1036, %v803, 0
      %1689 = vmatpush.xpose.msra.mxu0 0.0
      %1690 = vmatpush.xpose.msra.mxu0 0.0
      %1691 = vmatpush.xpose.msra.mxu0 0.0
      %1692 = vmatpush.xpose.msra.mxu0 0.0
      %1693 = vmatpush.xpose.msra.mxu0 0.0
      %1694 = vmatpush.xpose.msra.mxu0 0.0
      %1695 = vmatpush.xpose.msra.mxu0 0.0
      %1696 = vmatpush.xpose.msra.mxu0 0.0
      %1697 = vmatpush.xpose.msra.mxu0 0.0
      %1698 = vmatpush.xpose.msra.mxu0 0.0
      %1699 = vmatpush.xpose.msra.mxu0 0.0
      %1700 = vmatpush.xpose.msra.mxu0 0.0
      %1701 = vmatpush.xpose.msra.mxu0 0.0
      %1702 = vmatpush.xpose.msra.mxu0 0.0
      %1703 = vmatpush.xpose.msra.mxu0 0.0
      %1704 = vmatpush.xpose.msra.mxu0 %v1687
      %1705 = vmatmul.f32.gmra.mxu0 %v1685
      %v1706 = vpop.f32.mrf.mxu0
      %v1707 = vadd.f32 0.0, %v1706
      %1708 = vdwg.mxu0
      %v1709 = vsel %vm1036, %v693, 0
      %v1711 = vsel %vm1036, %v805, 0
      %1713 = vmatpush.xpose.msra.mxu0 0.0
      %1714 = vmatpush.xpose.msra.mxu0 0.0
      %1715 = vmatpush.xpose.msra.mxu0 0.0
      %1716 = vmatpush.xpose.msra.mxu0 0.0
      %1717 = vmatpush.xpose.msra.mxu0 0.0
      %1718 = vmatpush.xpose.msra.mxu0 0.0
      %1719 = vmatpush.xpose.msra.mxu0 0.0
      %1720 = vmatpush.xpose.msra.mxu0 0.0
      %1721 = vmatpush.xpose.msra.mxu0 0.0
      %1722 = vmatpush.xpose.msra.mxu0 0.0
      %1723 = vmatpush.xpose.msra.mxu0 0.0
      %1724 = vmatpush.xpose.msra.mxu0 0.0
      %1725 = vmatpush.xpose.msra.mxu0 0.0
      %1726 = vmatpush.xpose.msra.mxu0 0.0
      %1727 = vmatpush.xpose.msra.mxu0 0.0
      %1728 = vmatpush.xpose.msra.mxu0 %v1711
      %1729 = vmatmul.f32.gmra.mxu0 %v1709
      %v1730 = vpop.f32.mrf.mxu0
      %v1731 = vadd.f32 0.0, %v1730
      %1732 = vdwg.mxu0
      %v1733 = vsel %vm1036, %v695, 0
      %v1735 = vsel %vm1036, %v807, 0
      %1737 = vmatpush.xpose.msra.mxu0 0.0
      %1738 = vmatpush.xpose.msra.mxu0 0.0
      %1739 = vmatpush.xpose.msra.mxu0 0.0
      %1740 = vmatpush.xpose.msra.mxu0 0.0
      %1741 = vmatpush.xpose.msra.mxu0 0.0
      %1742 = vmatpush.xpose.msra.mxu0 0.0
      %1743 = vmatpush.xpose.msra.mxu0 0.0
      %1744 = vmatpush.xpose.msra.mxu0 0.0
      %1745 = vmatpush.xpose.msra.mxu0 0.0
      %1746 = vmatpush.xpose.msra.mxu0 0.0
      %1747 = vmatpush.xpose.msra.mxu0 0.0
      %1748 = vmatpush.xpose.msra.mxu0 0.0
      %1749 = vmatpush.xpose.msra.mxu0 0.0
      %1750 = vmatpush.xpose.msra.mxu0 0.0
      %1751 = vmatpush.xpose.msra.mxu0 0.0
      %1752 = vmatpush.xpose.msra.mxu0 %v1735
      %1753 = vmatmul.f32.gmra.mxu0 %v1733
      %v1754 = vpop.f32.mrf.mxu0
      %v1755 = vadd.f32 0.0, %v1754
      %1756 = vdwg.mxu0
      %v1757 = vsel %vm1036, %v697, 0
      %v1759 = vsel %vm1036, %v809, 0
      %1761 = vmatpush.xpose.msra.mxu0 0.0
      %1762 = vmatpush.xpose.msra.mxu0 0.0
      %1763 = vmatpush.xpose.msra.mxu0 0.0
      %1764 = vmatpush.xpose.msra.mxu0 0.0
      %1765 = vmatpush.xpose.msra.mxu0 0.0
      %1766 = vmatpush.xpose.msra.mxu0 0.0
      %1767 = vmatpush.xpose.msra.mxu0 0.0
      %1768 = vmatpush.xpose.msra.mxu0 0.0
      %1769 = vmatpush.xpose.msra.mxu0 0.0
      %1770 = vmatpush.xpose.msra.mxu0 0.0
      %1771 = vmatpush.xpose.msra.mxu0 0.0
      %1772 = vmatpush.xpose.msra.mxu0 0.0
      %1773 = vmatpush.xpose.msra.mxu0 0.0
      %1774 = vmatpush.xpose.msra.mxu0 0.0
      %1775 = vmatpush.xpose.msra.mxu0 0.0
      %1776 = vmatpush.xpose.msra.mxu0 %v1759
      %1777 = vmatmul.f32.gmra.mxu0 %v1757
      %v1778 = vpop.f32.mrf.mxu0
      %v1779 = vadd.f32 0.0, %v1778
      %1780 = vdwg.mxu0
      %v1781 = vsel %vm1036, %v699, 0
      %v1783 = vsel %vm1036, %v811, 0
      %1785 = vmatpush.xpose.msra.mxu0 0.0
      %1786 = vmatpush.xpose.msra.mxu0 0.0
      %1787 = vmatpush.xpose.msra.mxu0 0.0
      %1788 = vmatpush.xpose.msra.mxu0 0.0
      %1789 = vmatpush.xpose.msra.mxu0 0.0
      %1790 = vmatpush.xpose.msra.mxu0 0.0
      %1791 = vmatpush.xpose.msra.mxu0 0.0
      %1792 = vmatpush.xpose.msra.mxu0 0.0
      %1793 = vmatpush.xpose.msra.mxu0 0.0
      %1794 = vmatpush.xpose.msra.mxu0 0.0
      %1795 = vmatpush.xpose.msra.mxu0 0.0
      %1796 = vmatpush.xpose.msra.mxu0 0.0
      %1797 = vmatpush.xpose.msra.mxu0 0.0
      %1798 = vmatpush.xpose.msra.mxu0 0.0
      %1799 = vmatpush.xpose.msra.mxu0 0.0
      %1800 = vmatpush.xpose.msra.mxu0 %v1783
      %1801 = vmatmul.f32.gmra.mxu0 %v1781
      %v1802 = vpop.f32.mrf.mxu0
      %v1803 = vadd.f32 0.0, %v1802
      %1804 = vdwg.mxu0
      %v1805 = vsel %vm1036, %v701, 0
      %v1807 = vsel %vm1036, %v813, 0
      %1809 = vmatpush.xpose.msra.mxu0 0.0
      %1810 = vmatpush.xpose.msra.mxu0 0.0
      %1811 = vmatpush.xpose.msra.mxu0 0.0
      %1812 = vmatpush.xpose.msra.mxu0 0.0
      %1813 = vmatpush.xpose.msra.mxu0 0.0
      %1814 = vmatpush.xpose.msra.mxu0 0.0
      %1815 = vmatpush.xpose.msra.mxu0 0.0
      %1816 = vmatpush.xpose.msra.mxu0 0.0
      %1817 = vmatpush.xpose.msra.mxu0 0.0
      %1818 = vmatpush.xpose.msra.mxu0 0.0
      %1819 = vmatpush.xpose.msra.mxu0 0.0
      %1820 = vmatpush.xpose.msra.mxu0 0.0
      %1821 = vmatpush.xpose.msra.mxu0 0.0
      %1822 = vmatpush.xpose.msra.mxu0 0.0
      %1823 = vmatpush.xpose.msra.mxu0 0.0
      %1824 = vmatpush.xpose.msra.mxu0 %v1807
      %1825 = vmatmul.f32.gmra.mxu0 %v1805
      %v1826 = vpop.f32.mrf.mxu0
      %v1827 = vadd.f32 0.0, %v1826
      %1828 = vdwg.mxu0
      %v1829 = vsel %vm1036, %v703, 0
      %v1831 = vsel %vm1036, %v815, 0
      %1833 = vmatpush.xpose.msra.mxu0 0.0
      %1834 = vmatpush.xpose.msra.mxu0 0.0
      %1835 = vmatpush.xpose.msra.mxu0 0.0
      %1836 = vmatpush.xpose.msra.mxu0 0.0
      %1837 = vmatpush.xpose.msra.mxu0 0.0
      %1838 = vmatpush.xpose.msra.mxu0 0.0
      %1839 = vmatpush.xpose.msra.mxu0 0.0
      %1840 = vmatpush.xpose.msra.mxu0 0.0
      %1841 = vmatpush.xpose.msra.mxu0 0.0
      %1842 = vmatpush.xpose.msra.mxu0 0.0
      %1843 = vmatpush.xpose.msra.mxu0 0.0
      %1844 = vmatpush.xpose.msra.mxu0 0.0
      %1845 = vmatpush.xpose.msra.mxu0 0.0
      %1846 = vmatpush.xpose.msra.mxu0 0.0
      %1847 = vmatpush.xpose.msra.mxu0 0.0
      %1848 = vmatpush.xpose.msra.mxu0 %v1831
      %1849 = vmatmul.f32.gmra.mxu0 %v1829
      %v1850 = vpop.f32.mrf.mxu0
      %v1851 = vadd.f32 0.0, %v1850
      %1852 = vdwg.mxu0
      %v1853 = vsel %vm1036, %v705, 0
      %v1855 = vsel %vm1036, %v817, 0
      %1857 = vmatpush.xpose.msra.mxu0 0.0
      %1858 = vmatpush.xpose.msra.mxu0 0.0
      %1859 = vmatpush.xpose.msra.mxu0 0.0
      %1860 = vmatpush.xpose.msra.mxu0 0.0
      %1861 = vmatpush.xpose.msra.mxu0 0.0
      %1862 = vmatpush.xpose.msra.mxu0 0.0
      %1863 = vmatpush.xpose.msra.mxu0 0.0
      %1864 = vmatpush.xpose.msra.mxu0 0.0
      %1865 = vmatpush.xpose.msra.mxu0 0.0
      %1866 = vmatpush.xpose.msra.mxu0 0.0
      %1867 = vmatpush.xpose.msra.mxu0 0.0
      %1868 = vmatpush.xpose.msra.mxu0 0.0
      %1869 = vmatpush.xpose.msra.mxu0 0.0
      %1870 = vmatpush.xpose.msra.mxu0 0.0
      %1871 = vmatpush.xpose.msra.mxu0 0.0
      %1872 = vmatpush.xpose.msra.mxu0 %v1855
      %1873 = vmatmul.f32.gmra.mxu0 %v1853
      %v1874 = vpop.f32.mrf.mxu0
      %v1875 = vadd.f32 0.0, %v1874
      %1876 = vdwg.mxu0
      %v1877 = vsel %vm1036, %v707, 0
      %v1879 = vsel %vm1036, %v819, 0
      %1881 = vmatpush.xpose.msra.mxu0 0.0
      %1882 = vmatpush.xpose.msra.mxu0 0.0
      %1883 = vmatpush.xpose.msra.mxu0 0.0
      %1884 = vmatpush.xpose.msra.mxu0 0.0
      %1885 = vmatpush.xpose.msra.mxu0 0.0
      %1886 = vmatpush.xpose.msra.mxu0 0.0
      %1887 = vmatpush.xpose.msra.mxu0 0.0
      %1888 = vmatpush.xpose.msra.mxu0 0.0
      %1889 = vmatpush.xpose.msra.mxu0 0.0
      %1890 = vmatpush.xpose.msra.mxu0 0.0
      %1891 = vmatpush.xpose.msra.mxu0 0.0
      %1892 = vmatpush.xpose.msra.mxu0 0.0
      %1893 = vmatpush.xpose.msra.mxu0 0.0
      %1894 = vmatpush.xpose.msra.mxu0 0.0
      %1895 = vmatpush.xpose.msra.mxu0 0.0
      %1896 = vmatpush.xpose.msra.mxu0 %v1879
      %1897 = vmatmul.f32.gmra.mxu0 %v1877
      %v1898 = vpop.f32.mrf.mxu0
      %v1899 = vadd.f32 0.0, %v1898
      %1900 = vdwg.mxu0
      %v1901 = vsel %vm1036, %v709, 0
      %v1903 = vsel %vm1036, %v821, 0
      %1905 = vmatpush.xpose.msra.mxu0 0.0
      %1906 = vmatpush.xpose.msra.mxu0 0.0
      %1907 = vmatpush.xpose.msra.mxu0 0.0
      %1908 = vmatpush.xpose.msra.mxu0 0.0
      %1909 = vmatpush.xpose.msra.mxu0 0.0
      %1910 = vmatpush.xpose.msra.mxu0 0.0
      %1911 = vmatpush.xpose.msra.mxu0 0.0
      %1912 = vmatpush.xpose.msra.mxu0 0.0
      %1913 = vmatpush.xpose.msra.mxu0 0.0
      %1914 = vmatpush.xpose.msra.mxu0 0.0
      %1915 = vmatpush.xpose.msra.mxu0 0.0
      %1916 = vmatpush.xpose.msra.mxu0 0.0
      %1917 = vmatpush.xpose.msra.mxu0 0.0
      %1918 = vmatpush.xpose.msra.mxu0 0.0
      %1919 = vmatpush.xpose.msra.mxu0 0.0
      %1920 = vmatpush.xpose.msra.mxu0 %v1903
      %1921 = vmatmul.f32.gmra.mxu0 %v1901
      %v1922 = vpop.f32.mrf.mxu0
      %v1923 = vadd.f32 0.0, %v1922
      %1924 = vdwg.mxu0
      %v1925 = vsel %vm1036, %v711, 0
      %v1927 = vsel %vm1036, %v823, 0
      %1929 = vmatpush.xpose.msra.mxu0 0.0
      %1930 = vmatpush.xpose.msra.mxu0 0.0
      %1931 = vmatpush.xpose.msra.mxu0 0.0
      %1932 = vmatpush.xpose.msra.mxu0 0.0
      %1933 = vmatpush.xpose.msra.mxu0 0.0
      %1934 = vmatpush.xpose.msra.mxu0 0.0
      %1935 = vmatpush.xpose.msra.mxu0 0.0
      %1936 = vmatpush.xpose.msra.mxu0 0.0
      %1937 = vmatpush.xpose.msra.mxu0 0.0
      %1938 = vmatpush.xpose.msra.mxu0 0.0
      %1939 = vmatpush.xpose.msra.mxu0 0.0
      %1940 = vmatpush.xpose.msra.mxu0 0.0
      %1941 = vmatpush.xpose.msra.mxu0 0.0
      %1942 = vmatpush.xpose.msra.mxu0 0.0
      %1943 = vmatpush.xpose.msra.mxu0 0.0
      %1944 = vmatpush.xpose.msra.mxu0 %v1927
      %1945 = vmatmul.f32.gmra.mxu0 %v1925
      %v1946 = vpop.f32.mrf.mxu0
      %v1947 = vadd.f32 0.0, %v1946
      %1948 = vdwg.mxu0
      %v1949 = vsel %vm1036, %v713, 0
      %v1951 = vsel %vm1036, %v825, 0
      %1953 = vmatpush.xpose.msra.mxu0 0.0
      %1954 = vmatpush.xpose.msra.mxu0 0.0
      %1955 = vmatpush.xpose.msra.mxu0 0.0
      %1956 = vmatpush.xpose.msra.mxu0 0.0
      %1957 = vmatpush.xpose.msra.mxu0 0.0
      %1958 = vmatpush.xpose.msra.mxu0 0.0
      %1959 = vmatpush.xpose.msra.mxu0 0.0
      %1960 = vmatpush.xpose.msra.mxu0 0.0
      %1961 = vmatpush.xpose.msra.mxu0 0.0
      %1962 = vmatpush.xpose.msra.mxu0 0.0
      %1963 = vmatpush.xpose.msra.mxu0 0.0
      %1964 = vmatpush.xpose.msra.mxu0 0.0
      %1965 = vmatpush.xpose.msra.mxu0 0.0
      %1966 = vmatpush.xpose.msra.mxu0 0.0
      %1967 = vmatpush.xpose.msra.mxu0 0.0
      %1968 = vmatpush.xpose.msra.mxu0 %v1951
      %1969 = vmatmul.f32.gmra.mxu0 %v1949
      %v1970 = vpop.f32.mrf.mxu0
      %v1971 = vadd.f32 0.0, %v1970
      %1972 = vdwg.mxu0
      %v1973 = vsel %vm1036, %v715, 0
      %v1975 = vsel %vm1036, %v827, 0
      %1977 = vmatpush.xpose.msra.mxu0 0.0
      %1978 = vmatpush.xpose.msra.mxu0 0.0
      %1979 = vmatpush.xpose.msra.mxu0 0.0
      %1980 = vmatpush.xpose.msra.mxu0 0.0
      %1981 = vmatpush.xpose.msra.mxu0 0.0
      %1982 = vmatpush.xpose.msra.mxu0 0.0
      %1983 = vmatpush.xpose.msra.mxu0 0.0
      %1984 = vmatpush.xpose.msra.mxu0 0.0
      %1985 = vmatpush.xpose.msra.mxu0 0.0
      %1986 = vmatpush.xpose.msra.mxu0 0.0
      %1987 = vmatpush.xpose.msra.mxu0 0.0
      %1988 = vmatpush.xpose.msra.mxu0 0.0
      %1989 = vmatpush.xpose.msra.mxu0 0.0
      %1990 = vmatpush.xpose.msra.mxu0 0.0
      %1991 = vmatpush.xpose.msra.mxu0 0.0
      %1992 = vmatpush.xpose.msra.mxu0 %v1975
      %1993 = vmatmul.f32.gmra.mxu0 %v1973
      %v1994 = vpop.f32.mrf.mxu0
      %v1995 = vadd.f32 0.0, %v1994
      %1996 = vdwg.mxu0
      %v1997 = vsel %vm1036, %v717, 0
      %v1999 = vsel %vm1036, %v829, 0
      %2001 = vmatpush.xpose.msra.mxu0 0.0
      %2002 = vmatpush.xpose.msra.mxu0 0.0
      %2003 = vmatpush.xpose.msra.mxu0 0.0
      %2004 = vmatpush.xpose.msra.mxu0 0.0
      %2005 = vmatpush.xpose.msra.mxu0 0.0
      %2006 = vmatpush.xpose.msra.mxu0 0.0
      %2007 = vmatpush.xpose.msra.mxu0 0.0
      %2008 = vmatpush.xpose.msra.mxu0 0.0
      %2009 = vmatpush.xpose.msra.mxu0 0.0
      %2010 = vmatpush.xpose.msra.mxu0 0.0
      %2011 = vmatpush.xpose.msra.mxu0 0.0
      %2012 = vmatpush.xpose.msra.mxu0 0.0
      %2013 = vmatpush.xpose.msra.mxu0 0.0
      %2014 = vmatpush.xpose.msra.mxu0 0.0
      %2015 = vmatpush.xpose.msra.mxu0 0.0
      %2016 = vmatpush.xpose.msra.mxu0 %v1999
      %2017 = vmatmul.f32.gmra.mxu0 %v1997
      %v2018 = vpop.f32.mrf.mxu0
      %v2019 = vadd.f32 0.0, %v2018
      %2020 = vdwg.mxu0
      %v2021 = vsel %vm1036, %v719, 0
      %v2023 = vsel %vm1036, %v831, 0
      %2025 = vmatpush.xpose.msra.mxu0 0.0
      %2026 = vmatpush.xpose.msra.mxu0 0.0
      %2027 = vmatpush.xpose.msra.mxu0 0.0
      %2028 = vmatpush.xpose.msra.mxu0 0.0
      %2029 = vmatpush.xpose.msra.mxu0 0.0
      %2030 = vmatpush.xpose.msra.mxu0 0.0
      %2031 = vmatpush.xpose.msra.mxu0 0.0
      %2032 = vmatpush.xpose.msra.mxu0 0.0
      %2033 = vmatpush.xpose.msra.mxu0 0.0
      %2034 = vmatpush.xpose.msra.mxu0 0.0
      %2035 = vmatpush.xpose.msra.mxu0 0.0
      %2036 = vmatpush.xpose.msra.mxu0 0.0
      %2037 = vmatpush.xpose.msra.mxu0 0.0
      %2038 = vmatpush.xpose.msra.mxu0 0.0
      %2039 = vmatpush.xpose.msra.mxu0 0.0
      %2040 = vmatpush.xpose.msra.mxu0 %v2023
      %2041 = vmatmul.f32.gmra.mxu0 %v2021
      %v2042 = vpop.f32.mrf.mxu0
      %v2043 = vadd.f32 0.0, %v2042
      %2044 = vdwg.mxu0
      %v2045 = vsel %vm1036, %v721, 0
      %v2047 = vsel %vm1036, %v833, 0
      %2049 = vmatpush.xpose.msra.mxu0 0.0
      %2050 = vmatpush.xpose.msra.mxu0 0.0
      %2051 = vmatpush.xpose.msra.mxu0 0.0
      %2052 = vmatpush.xpose.msra.mxu0 0.0
      %2053 = vmatpush.xpose.msra.mxu0 0.0
      %2054 = vmatpush.xpose.msra.mxu0 0.0
      %2055 = vmatpush.xpose.msra.mxu0 0.0
      %2056 = vmatpush.xpose.msra.mxu0 0.0
      %2057 = vmatpush.xpose.msra.mxu0 0.0
      %2058 = vmatpush.xpose.msra.mxu0 0.0
      %2059 = vmatpush.xpose.msra.mxu0 0.0
      %2060 = vmatpush.xpose.msra.mxu0 0.0
      %2061 = vmatpush.xpose.msra.mxu0 0.0
      %2062 = vmatpush.xpose.msra.mxu0 0.0
      %2063 = vmatpush.xpose.msra.mxu0 0.0
      %2064 = vmatpush.xpose.msra.mxu0 %v2047
      %2065 = vmatmul.f32.gmra.mxu0 %v2045
      %v2066 = vpop.f32.mrf.mxu0
      %v2067 = vadd.f32 0.0, %v2066
      %2068 = vdwg.mxu0
      %v2069 = vsel %vm1036, %v723, 0
      %v2071 = vsel %vm1036, %v835, 0
      %2073 = vmatpush.xpose.msra.mxu0 0.0
      %2074 = vmatpush.xpose.msra.mxu0 0.0
      %2075 = vmatpush.xpose.msra.mxu0 0.0
      %2076 = vmatpush.xpose.msra.mxu0 0.0
      %2077 = vmatpush.xpose.msra.mxu0 0.0
      %2078 = vmatpush.xpose.msra.mxu0 0.0
      %2079 = vmatpush.xpose.msra.mxu0 0.0
      %2080 = vmatpush.xpose.msra.mxu0 0.0
      %2081 = vmatpush.xpose.msra.mxu0 0.0
      %2082 = vmatpush.xpose.msra.mxu0 0.0
      %2083 = vmatpush.xpose.msra.mxu0 0.0
      %2084 = vmatpush.xpose.msra.mxu0 0.0
      %2085 = vmatpush.xpose.msra.mxu0 0.0
      %2086 = vmatpush.xpose.msra.mxu0 0.0
      %2087 = vmatpush.xpose.msra.mxu0 0.0
      %2088 = vmatpush.xpose.msra.mxu0 %v2071
      %2089 = vmatmul.f32.gmra.mxu0 %v2069
      %v2090 = vpop.f32.mrf.mxu0
      %v2091 = vadd.f32 0.0, %v2090
      %2092 = vdwg.mxu0
      %v2093 = vsel %vm1036, %v725, 0
      %v2095 = vsel %vm1036, %v837, 0
      %2097 = vmatpush.xpose.msra.mxu0 0.0
      %2098 = vmatpush.xpose.msra.mxu0 0.0
      %2099 = vmatpush.xpose.msra.mxu0 0.0
      %2100 = vmatpush.xpose.msra.mxu0 0.0
      %2101 = vmatpush.xpose.msra.mxu0 0.0
      %2102 = vmatpush.xpose.msra.mxu0 0.0
      %2103 = vmatpush.xpose.msra.mxu0 0.0
      %2104 = vmatpush.xpose.msra.mxu0 0.0
      %2105 = vmatpush.xpose.msra.mxu0 0.0
      %2106 = vmatpush.xpose.msra.mxu0 0.0
      %2107 = vmatpush.xpose.msra.mxu0 0.0
      %2108 = vmatpush.xpose.msra.mxu0 0.0
      %2109 = vmatpush.xpose.msra.mxu0 0.0
      %2110 = vmatpush.xpose.msra.mxu0 0.0
      %2111 = vmatpush.xpose.msra.mxu0 0.0
      %2112 = vmatpush.xpose.msra.mxu0 %v2095
      %2113 = vmatmul.f32.gmra.mxu0 %v2093
      %v2114 = vpop.f32.mrf.mxu0
      %v2115 = vadd.f32 0.0, %v2114
      %2116 = vdwg.mxu0
      %v2117 = vsel %vm1036, %v727, 0
      %v2119 = vsel %vm1036, %v839, 0
      %2121 = vmatpush.xpose.msra.mxu0 0.0
      %2122 = vmatpush.xpose.msra.mxu0 0.0
      %2123 = vmatpush.xpose.msra.mxu0 0.0
      %2124 = vmatpush.xpose.msra.mxu0 0.0
      %2125 = vmatpush.xpose.msra.mxu0 0.0
      %2126 = vmatpush.xpose.msra.mxu0 0.0
      %2127 = vmatpush.xpose.msra.mxu0 0.0
      %2128 = vmatpush.xpose.msra.mxu0 0.0
      %2129 = vmatpush.xpose.msra.mxu0 0.0
      %2130 = vmatpush.xpose.msra.mxu0 0.0
      %2131 = vmatpush.xpose.msra.mxu0 0.0
      %2132 = vmatpush.xpose.msra.mxu0 0.0
      %2133 = vmatpush.xpose.msra.mxu0 0.0
      %2134 = vmatpush.xpose.msra.mxu0 0.0
      %2135 = vmatpush.xpose.msra.mxu0 0.0
      %2136 = vmatpush.xpose.msra.mxu0 %v2119
      %2137 = vmatmul.f32.gmra.mxu0 %v2117
      %v2138 = vpop.f32.mrf.mxu0
      %v2139 = vadd.f32 0.0, %v2138
      %2140 = vdwg.mxu0
      %v2141 = vsel %vm1036, %v729, 0
      %v2143 = vsel %vm1036, %v841, 0
      %2145 = vmatpush.xpose.msra.mxu0 0.0
      %2146 = vmatpush.xpose.msra.mxu0 0.0
      %2147 = vmatpush.xpose.msra.mxu0 0.0
      %2148 = vmatpush.xpose.msra.mxu0 0.0
      %2149 = vmatpush.xpose.msra.mxu0 0.0
      %2150 = vmatpush.xpose.msra.mxu0 0.0
      %2151 = vmatpush.xpose.msra.mxu0 0.0
      %2152 = vmatpush.xpose.msra.mxu0 0.0
      %2153 = vmatpush.xpose.msra.mxu0 0.0
      %2154 = vmatpush.xpose.msra.mxu0 0.0
      %2155 = vmatpush.xpose.msra.mxu0 0.0
      %2156 = vmatpush.xpose.msra.mxu0 0.0
      %2157 = vmatpush.xpose.msra.mxu0 0.0
      %2158 = vmatpush.xpose.msra.mxu0 0.0
      %2159 = vmatpush.xpose.msra.mxu0 0.0
      %2160 = vmatpush.xpose.msra.mxu0 %v2143
      %2161 = vmatmul.f32.gmra.mxu0 %v2141
      %v2162 = vpop.f32.mrf.mxu0
      %v2163 = vadd.f32 0.0, %v2162
      %2164 = vdwg.mxu0
      %v2165 = vsel %vm1036, %v731, 0
      %v2167 = vsel %vm1036, %v843, 0
      %2169 = vmatpush.xpose.msra.mxu0 0.0
      %2170 = vmatpush.xpose.msra.mxu0 0.0
      %2171 = vmatpush.xpose.msra.mxu0 0.0
      %2172 = vmatpush.xpose.msra.mxu0 0.0
      %2173 = vmatpush.xpose.msra.mxu0 0.0
      %2174 = vmatpush.xpose.msra.mxu0 0.0
      %2175 = vmatpush.xpose.msra.mxu0 0.0
      %2176 = vmatpush.xpose.msra.mxu0 0.0
      %2177 = vmatpush.xpose.msra.mxu0 0.0
      %2178 = vmatpush.xpose.msra.mxu0 0.0
      %2179 = vmatpush.xpose.msra.mxu0 0.0
      %2180 = vmatpush.xpose.msra.mxu0 0.0
      %2181 = vmatpush.xpose.msra.mxu0 0.0
      %2182 = vmatpush.xpose.msra.mxu0 0.0
      %2183 = vmatpush.xpose.msra.mxu0 0.0
      %2184 = vmatpush.xpose.msra.mxu0 %v2167
      %2185 = vmatmul.f32.gmra.mxu0 %v2165
      %v2186 = vpop.f32.mrf.mxu0
      %v2187 = vadd.f32 0.0, %v2186
      %2188 = vdwg.mxu0
      %v2189 = vsel %vm1036, %v733, 0
      %v2191 = vsel %vm1036, %v845, 0
      %2193 = vmatpush.xpose.msra.mxu0 0.0
      %2194 = vmatpush.xpose.msra.mxu0 0.0
      %2195 = vmatpush.xpose.msra.mxu0 0.0
      %2196 = vmatpush.xpose.msra.mxu0 0.0
      %2197 = vmatpush.xpose.msra.mxu0 0.0
      %2198 = vmatpush.xpose.msra.mxu0 0.0
      %2199 = vmatpush.xpose.msra.mxu0 0.0
      %2200 = vmatpush.xpose.msra.mxu0 0.0
      %2201 = vmatpush.xpose.msra.mxu0 0.0
      %2202 = vmatpush.xpose.msra.mxu0 0.0
      %2203 = vmatpush.xpose.msra.mxu0 0.0
      %2204 = vmatpush.xpose.msra.mxu0 0.0
      %2205 = vmatpush.xpose.msra.mxu0 0.0
      %2206 = vmatpush.xpose.msra.mxu0 0.0
      %2207 = vmatpush.xpose.msra.mxu0 0.0
      %2208 = vmatpush.xpose.msra.mxu0 %v2191
      %2209 = vmatmul.f32.gmra.mxu0 %v2189
      %v2210 = vpop.f32.mrf.mxu0
      %v2211 = vadd.f32 0.0, %v2210
      %2212 = vdwg.mxu0
      %v2213 = vsel %vm1036, %v735, 0
      %v2215 = vsel %vm1036, %v847, 0
      %2217 = vmatpush.xpose.msra.mxu0 0.0
      %2218 = vmatpush.xpose.msra.mxu0 0.0
      %2219 = vmatpush.xpose.msra.mxu0 0.0
      %2220 = vmatpush.xpose.msra.mxu0 0.0
      %2221 = vmatpush.xpose.msra.mxu0 0.0
      %2222 = vmatpush.xpose.msra.mxu0 0.0
      %2223 = vmatpush.xpose.msra.mxu0 0.0
      %2224 = vmatpush.xpose.msra.mxu0 0.0
      %2225 = vmatpush.xpose.msra.mxu0 0.0
      %2226 = vmatpush.xpose.msra.mxu0 0.0
      %2227 = vmatpush.xpose.msra.mxu0 0.0
      %2228 = vmatpush.xpose.msra.mxu0 0.0
      %2229 = vmatpush.xpose.msra.mxu0 0.0
      %2230 = vmatpush.xpose.msra.mxu0 0.0
      %2231 = vmatpush.xpose.msra.mxu0 0.0
      %2232 = vmatpush.xpose.msra.mxu0 %v2215
      %2233 = vmatmul.f32.gmra.mxu0 %v2213
      %v2234 = vpop.f32.mrf.mxu0
      %v2235 = vadd.f32 0.0, %v2234
      %2236 = vdwg.mxu0
      %v2237 = vsel %vm1036, %v737, 0
      %v2239 = vsel %vm1036, %v849, 0
      %2241 = vmatpush.xpose.msra.mxu0 0.0
      %2242 = vmatpush.xpose.msra.mxu0 0.0
      %2243 = vmatpush.xpose.msra.mxu0 0.0
      %2244 = vmatpush.xpose.msra.mxu0 0.0
      %2245 = vmatpush.xpose.msra.mxu0 0.0
      %2246 = vmatpush.xpose.msra.mxu0 0.0
      %2247 = vmatpush.xpose.msra.mxu0 0.0
      %2248 = vmatpush.xpose.msra.mxu0 0.0
      %2249 = vmatpush.xpose.msra.mxu0 0.0
      %2250 = vmatpush.xpose.msra.mxu0 0.0
      %2251 = vmatpush.xpose.msra.mxu0 0.0
      %2252 = vmatpush.xpose.msra.mxu0 0.0
      %2253 = vmatpush.xpose.msra.mxu0 0.0
      %2254 = vmatpush.xpose.msra.mxu0 0.0
      %2255 = vmatpush.xpose.msra.mxu0 0.0
      %2256 = vmatpush.xpose.msra.mxu0 %v2239
      %2257 = vmatmul.f32.gmra.mxu0 %v2237
      %v2258 = vpop.f32.mrf.mxu0
      %v2259 = vadd.f32 0.0, %v2258
      %2260 = vdwg.mxu0
      %v2261 = vsel %vm1036, %v739, 0
      %v2263 = vsel %vm1036, %v851, 0
      %2265 = vmatpush.xpose.msra.mxu0 0.0
      %2266 = vmatpush.xpose.msra.mxu0 0.0
      %2267 = vmatpush.xpose.msra.mxu0 0.0
      %2268 = vmatpush.xpose.msra.mxu0 0.0
      %2269 = vmatpush.xpose.msra.mxu0 0.0
      %2270 = vmatpush.xpose.msra.mxu0 0.0
      %2271 = vmatpush.xpose.msra.mxu0 0.0
      %2272 = vmatpush.xpose.msra.mxu0 0.0
      %2273 = vmatpush.xpose.msra.mxu0 0.0
      %2274 = vmatpush.xpose.msra.mxu0 0.0
      %2275 = vmatpush.xpose.msra.mxu0 0.0
      %2276 = vmatpush.xpose.msra.mxu0 0.0
      %2277 = vmatpush.xpose.msra.mxu0 0.0
      %2278 = vmatpush.xpose.msra.mxu0 0.0
      %2279 = vmatpush.xpose.msra.mxu0 0.0
      %2280 = vmatpush.xpose.msra.mxu0 %v2263
      %2281 = vmatmul.f32.gmra.mxu0 %v2261
      %v2282 = vpop.f32.mrf.mxu0
      %v2283 = vadd.f32 0.0, %v2282
      %2284 = vdwg.mxu0
      %v2285 = vsel %vm1036, %v741, 0
      %v2287 = vsel %vm1036, %v853, 0
      %2289 = vmatpush.xpose.msra.mxu0 0.0
      %2290 = vmatpush.xpose.msra.mxu0 0.0
      %2291 = vmatpush.xpose.msra.mxu0 0.0
      %2292 = vmatpush.xpose.msra.mxu0 0.0
      %2293 = vmatpush.xpose.msra.mxu0 0.0
      %2294 = vmatpush.xpose.msra.mxu0 0.0
      %2295 = vmatpush.xpose.msra.mxu0 0.0
      %2296 = vmatpush.xpose.msra.mxu0 0.0
      %2297 = vmatpush.xpose.msra.mxu0 0.0
      %2298 = vmatpush.xpose.msra.mxu0 0.0
      %2299 = vmatpush.xpose.msra.mxu0 0.0
      %2300 = vmatpush.xpose.msra.mxu0 0.0
      %2301 = vmatpush.xpose.msra.mxu0 0.0
      %2302 = vmatpush.xpose.msra.mxu0 0.0
      %2303 = vmatpush.xpose.msra.mxu0 0.0
      %2304 = vmatpush.xpose.msra.mxu0 %v2287
      %2305 = vmatmul.f32.gmra.mxu0 %v2285
      %v2306 = vpop.f32.mrf.mxu0
      %v2307 = vadd.f32 0.0, %v2306
      %2308 = vdwg.mxu0
      %v2309 = vsel %vm1036, %v743, 0
      %v2311 = vsel %vm1036, %v855, 0
      %2313 = vmatpush.xpose.msra.mxu0 0.0
      %2314 = vmatpush.xpose.msra.mxu0 0.0
      %2315 = vmatpush.xpose.msra.mxu0 0.0
      %2316 = vmatpush.xpose.msra.mxu0 0.0
      %2317 = vmatpush.xpose.msra.mxu0 0.0
      %2318 = vmatpush.xpose.msra.mxu0 0.0
      %2319 = vmatpush.xpose.msra.mxu0 0.0
      %2320 = vmatpush.xpose.msra.mxu0 0.0
      %2321 = vmatpush.xpose.msra.mxu0 0.0
      %2322 = vmatpush.xpose.msra.mxu0 0.0
      %2323 = vmatpush.xpose.msra.mxu0 0.0
      %2324 = vmatpush.xpose.msra.mxu0 0.0
      %2325 = vmatpush.xpose.msra.mxu0 0.0
      %2326 = vmatpush.xpose.msra.mxu0 0.0
      %2327 = vmatpush.xpose.msra.mxu0 0.0
      %2328 = vmatpush.xpose.msra.mxu0 %v2311
      %2329 = vmatmul.f32.gmra.mxu0 %v2309
      %v2330 = vpop.f32.mrf.mxu0
      %v2331 = vadd.f32 0.0, %v2330
      %2332 = vdwg.mxu0
      %v2333 = vsel %vm1036, %v745, 0
      %v2335 = vsel %vm1036, %v857, 0
      %2337 = vmatpush.xpose.msra.mxu0 0.0
      %2338 = vmatpush.xpose.msra.mxu0 0.0
      %2339 = vmatpush.xpose.msra.mxu0 0.0
      %2340 = vmatpush.xpose.msra.mxu0 0.0
      %2341 = vmatpush.xpose.msra.mxu0 0.0
      %2342 = vmatpush.xpose.msra.mxu0 0.0
      %2343 = vmatpush.xpose.msra.mxu0 0.0
      %2344 = vmatpush.xpose.msra.mxu0 0.0
      %2345 = vmatpush.xpose.msra.mxu0 0.0
      %2346 = vmatpush.xpose.msra.mxu0 0.0
      %2347 = vmatpush.xpose.msra.mxu0 0.0
      %2348 = vmatpush.xpose.msra.mxu0 0.0
      %2349 = vmatpush.xpose.msra.mxu0 0.0
      %2350 = vmatpush.xpose.msra.mxu0 0.0
      %2351 = vmatpush.xpose.msra.mxu0 0.0
      %2352 = vmatpush.xpose.msra.mxu0 %v2335
      %2353 = vmatmul.f32.gmra.mxu0 %v2333
      %v2354 = vpop.f32.mrf.mxu0
      %v2355 = vadd.f32 0.0, %v2354
      %2356 = vdwg.mxu0
      %v2357 = vsel %vm1036, %v747, 0
      %v2359 = vsel %vm1036, %v859, 0
      %2361 = vmatpush.xpose.msra.mxu0 0.0
      %2362 = vmatpush.xpose.msra.mxu0 0.0
      %2363 = vmatpush.xpose.msra.mxu0 0.0
      %2364 = vmatpush.xpose.msra.mxu0 0.0
      %2365 = vmatpush.xpose.msra.mxu0 0.0
      %2366 = vmatpush.xpose.msra.mxu0 0.0
      %2367 = vmatpush.xpose.msra.mxu0 0.0
      %2368 = vmatpush.xpose.msra.mxu0 0.0
      %2369 = vmatpush.xpose.msra.mxu0 0.0
      %2370 = vmatpush.xpose.msra.mxu0 0.0
      %2371 = vmatpush.xpose.msra.mxu0 0.0
      %2372 = vmatpush.xpose.msra.mxu0 0.0
      %2373 = vmatpush.xpose.msra.mxu0 0.0
      %2374 = vmatpush.xpose.msra.mxu0 0.0
      %2375 = vmatpush.xpose.msra.mxu0 0.0
      %2376 = vmatpush.xpose.msra.mxu0 %v2359
      %2377 = vmatmul.f32.gmra.mxu0 %v2357
      %v2378 = vpop.f32.mrf.mxu0
      %v2379 = vadd.f32 0.0, %v2378
      %2380 = vdwg.mxu0
      %v2381 = vsel %vm1036, %v749, 0
      %v2383 = vsel %vm1036, %v861, 0
      %2385 = vmatpush.xpose.msra.mxu0 0.0
      %2386 = vmatpush.xpose.msra.mxu0 0.0
      %2387 = vmatpush.xpose.msra.mxu0 0.0
      %2388 = vmatpush.xpose.msra.mxu0 0.0
      %2389 = vmatpush.xpose.msra.mxu0 0.0
      %2390 = vmatpush.xpose.msra.mxu0 0.0
      %2391 = vmatpush.xpose.msra.mxu0 0.0
      %2392 = vmatpush.xpose.msra.mxu0 0.0
      %2393 = vmatpush.xpose.msra.mxu0 0.0
      %2394 = vmatpush.xpose.msra.mxu0 0.0
      %2395 = vmatpush.xpose.msra.mxu0 0.0
      %2396 = vmatpush.xpose.msra.mxu0 0.0
      %2397 = vmatpush.xpose.msra.mxu0 0.0
      %2398 = vmatpush.xpose.msra.mxu0 0.0
      %2399 = vmatpush.xpose.msra.mxu0 0.0
      %2400 = vmatpush.xpose.msra.mxu0 %v2383
      %2401 = vmatmul.f32.gmra.mxu0 %v2381
      %v2402 = vpop.f32.mrf.mxu0
      %v2403 = vadd.f32 0.0, %v2402
      %2404 = vdwg.mxu0
      %v2405 = vsel %vm1036, %v751, 0
      %v2407 = vsel %vm1036, %v863, 0
      %2409 = vmatpush.xpose.msra.mxu0 0.0
      %2410 = vmatpush.xpose.msra.mxu0 0.0
      %2411 = vmatpush.xpose.msra.mxu0 0.0
      %2412 = vmatpush.xpose.msra.mxu0 0.0
      %2413 = vmatpush.xpose.msra.mxu0 0.0
      %2414 = vmatpush.xpose.msra.mxu0 0.0
      %2415 = vmatpush.xpose.msra.mxu0 0.0
      %2416 = vmatpush.xpose.msra.mxu0 0.0
      %2417 = vmatpush.xpose.msra.mxu0 0.0
      %2418 = vmatpush.xpose.msra.mxu0 0.0
      %2419 = vmatpush.xpose.msra.mxu0 0.0
      %2420 = vmatpush.xpose.msra.mxu0 0.0
      %2421 = vmatpush.xpose.msra.mxu0 0.0
      %2422 = vmatpush.xpose.msra.mxu0 0.0
      %2423 = vmatpush.xpose.msra.mxu0 0.0
      %2424 = vmatpush.xpose.msra.mxu0 %v2407
      %2425 = vmatmul.f32.gmra.mxu0 %v2405
      %v2426 = vpop.f32.mrf.mxu0
      %v2427 = vadd.f32 0.0, %v2426
      %2428 = vdwg.mxu0
      %v2429 = vsel %vm1036, %v753, 0
      %v2431 = vsel %vm1036, %v865, 0
      %2433 = vmatpush.xpose.msra.mxu0 0.0
      %2434 = vmatpush.xpose.msra.mxu0 0.0
      %2435 = vmatpush.xpose.msra.mxu0 0.0
      %2436 = vmatpush.xpose.msra.mxu0 0.0
      %2437 = vmatpush.xpose.msra.mxu0 0.0
      %2438 = vmatpush.xpose.msra.mxu0 0.0
      %2439 = vmatpush.xpose.msra.mxu0 0.0
      %2440 = vmatpush.xpose.msra.mxu0 0.0
      %2441 = vmatpush.xpose.msra.mxu0 0.0
      %2442 = vmatpush.xpose.msra.mxu0 0.0
      %2443 = vmatpush.xpose.msra.mxu0 0.0
      %2444 = vmatpush.xpose.msra.mxu0 0.0
      %2445 = vmatpush.xpose.msra.mxu0 0.0
      %2446 = vmatpush.xpose.msra.mxu0 0.0
      %2447 = vmatpush.xpose.msra.mxu0 0.0
      %2448 = vmatpush.xpose.msra.mxu0 %v2431
      %2449 = vmatmul.f32.gmra.mxu0 %v2429
      %v2450 = vpop.f32.mrf.mxu0
      %v2451 = vadd.f32 0.0, %v2450
      %2452 = vdwg.mxu0
      %v2453 = vsel %vm1036, %v755, 0
      %v2455 = vsel %vm1036, %v867, 0
      %2457 = vmatpush.xpose.msra.mxu0 0.0
      %2458 = vmatpush.xpose.msra.mxu0 0.0
      %2459 = vmatpush.xpose.msra.mxu0 0.0
      %2460 = vmatpush.xpose.msra.mxu0 0.0
      %2461 = vmatpush.xpose.msra.mxu0 0.0
      %2462 = vmatpush.xpose.msra.mxu0 0.0
      %2463 = vmatpush.xpose.msra.mxu0 0.0
      %2464 = vmatpush.xpose.msra.mxu0 0.0
      %2465 = vmatpush.xpose.msra.mxu0 0.0
      %2466 = vmatpush.xpose.msra.mxu0 0.0
      %2467 = vmatpush.xpose.msra.mxu0 0.0
      %2468 = vmatpush.xpose.msra.mxu0 0.0
      %2469 = vmatpush.xpose.msra.mxu0 0.0
      %2470 = vmatpush.xpose.msra.mxu0 0.0
      %2471 = vmatpush.xpose.msra.mxu0 0.0
      %2472 = vmatpush.xpose.msra.mxu0 %v2455
      %2473 = vmatmul.f32.gmra.mxu0 %v2453
      %v2474 = vpop.f32.mrf.mxu0
      %v2475 = vadd.f32 0.0, %v2474
      %2476 = vdwg.mxu0
      %v2477 = vsel %vm1036, %v757, 0
      %v2479 = vsel %vm1036, %v869, 0
      %2481 = vmatpush.xpose.msra.mxu0 0.0
      %2482 = vmatpush.xpose.msra.mxu0 0.0
      %2483 = vmatpush.xpose.msra.mxu0 0.0
      %2484 = vmatpush.xpose.msra.mxu0 0.0
      %2485 = vmatpush.xpose.msra.mxu0 0.0
      %2486 = vmatpush.xpose.msra.mxu0 0.0
      %2487 = vmatpush.xpose.msra.mxu0 0.0
      %2488 = vmatpush.xpose.msra.mxu0 0.0
      %2489 = vmatpush.xpose.msra.mxu0 0.0
      %2490 = vmatpush.xpose.msra.mxu0 0.0
      %2491 = vmatpush.xpose.msra.mxu0 0.0
      %2492 = vmatpush.xpose.msra.mxu0 0.0
      %2493 = vmatpush.xpose.msra.mxu0 0.0
      %2494 = vmatpush.xpose.msra.mxu0 0.0
      %2495 = vmatpush.xpose.msra.mxu0 0.0
      %2496 = vmatpush.xpose.msra.mxu0 %v2479
      %2497 = vmatmul.f32.gmra.mxu0 %v2477
      %v2498 = vpop.f32.mrf.mxu0
      %v2499 = vadd.f32 0.0, %v2498
      %2500 = vdwg.mxu0
      %v2501 = vsel %vm1036, %v759, 0
      %v2503 = vsel %vm1036, %v871, 0
      %2505 = vmatpush.xpose.msra.mxu0 0.0
      %2506 = vmatpush.xpose.msra.mxu0 0.0
      %2507 = vmatpush.xpose.msra.mxu0 0.0
      %2508 = vmatpush.xpose.msra.mxu0 0.0
      %2509 = vmatpush.xpose.msra.mxu0 0.0
      %2510 = vmatpush.xpose.msra.mxu0 0.0
      %2511 = vmatpush.xpose.msra.mxu0 0.0
      %2512 = vmatpush.xpose.msra.mxu0 0.0
      %2513 = vmatpush.xpose.msra.mxu0 0.0
      %2514 = vmatpush.xpose.msra.mxu0 0.0
      %2515 = vmatpush.xpose.msra.mxu0 0.0
      %2516 = vmatpush.xpose.msra.mxu0 0.0
      %2517 = vmatpush.xpose.msra.mxu0 0.0
      %2518 = vmatpush.xpose.msra.mxu0 0.0
      %2519 = vmatpush.xpose.msra.mxu0 0.0
      %2520 = vmatpush.xpose.msra.mxu0 %v2503
      %2521 = vmatmul.f32.gmra.mxu0 %v2501
      %v2522 = vpop.f32.mrf.mxu0
      %v2523 = vadd.f32 0.0, %v2522
      %2524 = vdwg.mxu0
      %v2525 = vsel %vm1036, %v761, 0
      %v2527 = vsel %vm1036, %v873, 0
      %2529 = vmatpush.xpose.msra.mxu0 0.0
      %2530 = vmatpush.xpose.msra.mxu0 0.0
      %2531 = vmatpush.xpose.msra.mxu0 0.0
      %2532 = vmatpush.xpose.msra.mxu0 0.0
      %2533 = vmatpush.xpose.msra.mxu0 0.0
      %2534 = vmatpush.xpose.msra.mxu0 0.0
      %2535 = vmatpush.xpose.msra.mxu0 0.0
      %2536 = vmatpush.xpose.msra.mxu0 0.0
      %2537 = vmatpush.xpose.msra.mxu0 0.0
      %2538 = vmatpush.xpose.msra.mxu0 0.0
      %2539 = vmatpush.xpose.msra.mxu0 0.0
      %2540 = vmatpush.xpose.msra.mxu0 0.0
      %2541 = vmatpush.xpose.msra.mxu0 0.0
      %2542 = vmatpush.xpose.msra.mxu0 0.0
      %2543 = vmatpush.xpose.msra.mxu0 0.0
      %2544 = vmatpush.xpose.msra.mxu0 %v2527
      %2545 = vmatmul.f32.gmra.mxu0 %v2525
      %v2546 = vpop.f32.mrf.mxu0
      %v2547 = vadd.f32 0.0, %v2546
      %2548 = vdwg.mxu0
      %v2549 = vsel %vm1036, %v763, 0
      %v2551 = vsel %vm1036, %v875, 0
      %2553 = vmatpush.xpose.msra.mxu0 0.0
      %2554 = vmatpush.xpose.msra.mxu0 0.0
      %2555 = vmatpush.xpose.msra.mxu0 0.0
      %2556 = vmatpush.xpose.msra.mxu0 0.0
      %2557 = vmatpush.xpose.msra.mxu0 0.0
      %2558 = vmatpush.xpose.msra.mxu0 0.0
      %2559 = vmatpush.xpose.msra.mxu0 0.0
      %2560 = vmatpush.xpose.msra.mxu0 0.0
      %2561 = vmatpush.xpose.msra.mxu0 0.0
      %2562 = vmatpush.xpose.msra.mxu0 0.0
      %2563 = vmatpush.xpose.msra.mxu0 0.0
      %2564 = vmatpush.xpose.msra.mxu0 0.0
      %2565 = vmatpush.xpose.msra.mxu0 0.0
      %2566 = vmatpush.xpose.msra.mxu0 0.0
      %2567 = vmatpush.xpose.msra.mxu0 0.0
      %2568 = vmatpush.xpose.msra.mxu0 %v2551
      %2569 = vmatmul.f32.gmra.mxu0 %v2549
      %v2570 = vpop.f32.mrf.mxu0
      %v2571 = vadd.f32 0.0, %v2570
      %2572 = vdwg.mxu0
      %v2573 = vmul.f32 %v1059, 0.5
      %v2574 = vmul.f32 %v1083, 0.5
      %v2575 = vmul.f32 %v1107, 0.5
      %v2576 = vmul.f32 %v1131, 0.5
      %v2577 = vmul.f32 %v1155, 0.5
      %v2578 = vmul.f32 %v1179, 0.5
      %v2579 = vmul.f32 %v1203, 0.5
      %v2580 = vmul.f32 %v1227, 0.5
      %v2581 = vmul.f32 %v1251, 0.5
      %v2582 = vmul.f32 %v1275, 0.5
      %v2583 = vmul.f32 %v1299, 0.5
      %v2584 = vmul.f32 %v1323, 0.5
      %v2585 = vmul.f32 %v1347, 0.5
      %v2586 = vmul.f32 %v1371, 0.5
      %v2587 = vmul.f32 %v1395, 0.5
      %v2588 = vmul.f32 %v1419, 0.5
      %v2589 = vmul.f32 %v1443, 0.5
      %v2590 = vmul.f32 %v1467, 0.5
      %v2591 = vmul.f32 %v1491, 0.5
      %v2592 = vmul.f32 %v1515, 0.5
      %v2593 = vmul.f32 %v1539, 0.5
      %v2594 = vmul.f32 %v1563, 0.5
      %v2595 = vmul.f32 %v1587, 0.5
      %v2596 = vmul.f32 %v1611, 0.5
      %v2597 = vmul.f32 %v1635, 0.5
      %v2598 = vmul.f32 %v1659, 0.5
      %v2599 = vmul.f32 %v1683, 0.5
      %v2600 = vmul.f32 %v1707, 0.5
      %v2601 = vmul.f32 %v1731, 0.5
      %v2602 = vmul.f32 %v1755, 0.5
      %v2603 = vmul.f32 %v1779, 0.5
      %v2604 = vmul.f32 %v1803, 0.5
      %v2605 = vmul.f32 %v1827, 0.5
      %v2606 = vmul.f32 %v1851, 0.5
      %v2607 = vmul.f32 %v1875, 0.5
      %v2608 = vmul.f32 %v1899, 0.5
      %v2609 = vmul.f32 %v1923, 0.5
      %v2610 = vmul.f32 %v1947, 0.5
      %v2611 = vmul.f32 %v1971, 0.5
      %v2612 = vmul.f32 %v1995, 0.5
      %v2613 = vmul.f32 %v2019, 0.5
      %v2614 = vmul.f32 %v2043, 0.5
      %v2615 = vmul.f32 %v2067, 0.5
      %v2616 = vmul.f32 %v2091, 0.5
      %v2617 = vmul.f32 %v2115, 0.5
      %v2618 = vmul.f32 %v2139, 0.5
      %v2619 = vmul.f32 %v2163, 0.5
      %v2620 = vmul.f32 %v2187, 0.5
      %v2621 = vmul.f32 %v2211, 0.5
      %v2622 = vmul.f32 %v2235, 0.5
      %v2623 = vmul.f32 %v2259, 0.5
      %v2624 = vmul.f32 %v2283, 0.5
      %v2625 = vmul.f32 %v2307, 0.5
      %v2626 = vmul.f32 %v2331, 0.5
      %v2627 = vmul.f32 %v2355, 0.5
      %v2628 = vmul.f32 %v2379, 0.5
      %v2629 = vmul.f32 %v2403, 0.5
      %v2630 = vmul.f32 %v2427, 0.5
      %v2631 = vmul.f32 %v2451, 0.5
      %v2632 = vmul.f32 %v2475, 0.5
      %v2633 = vmul.f32 %v2499, 0.5
      %v2634 = vmul.f32 %v2523, 0.5
      %v2635 = vmul.f32 %v2547, 0.5
      %v2636 = vmul.f32 %v2571, 0.5
      %vm2637 = vcmask 64512
      %v2638 = vsel %vm2637, %v2573, -inf
      %2639 = vmax.xlane.f32.xlu0 %v2638
      %v2640 = vpop.xlane.xlu0 %2639
      %v2641 = vsel %vm2637, %v2574, -inf
      %2642 = vmax.xlane.f32.xlu0 %v2641
      %v2643 = vpop.xlane.xlu0 %2642
      %v2644 = vsel %vm2637, %v2575, -inf
      %2645 = vmax.xlane.f32.xlu0 %v2644
      %v2646 = vpop.xlane.xlu0 %2645
      %v2647 = vsel %vm2637, %v2576, -inf
      %2648 = vmax.xlane.f32.xlu0 %v2647
      %v2649 = vpop.xlane.xlu0 %2648
      %v2650 = vsel %vm2637, %v2577, -inf
      %2651 = vmax.xlane.f32.xlu0 %v2650
      %v2652 = vpop.xlane.xlu0 %2651
      %v2653 = vsel %vm2637, %v2578, -inf
      %2654 = vmax.xlane.f32.xlu0 %v2653
      %v2655 = vpop.xlane.xlu0 %2654
      %v2656 = vsel %vm2637, %v2579, -inf
      %2657 = vmax.xlane.f32.xlu0 %v2656
      %v2658 = vpop.xlane.xlu0 %2657
      %v2659 = vsel %vm2637, %v2580, -inf
      %2660 = vmax.xlane.f32.xlu0 %v2659
      %v2661 = vpop.xlane.xlu0 %2660
      %v2662 = vsel %vm2637, %v2581, -inf
      %2663 = vmax.xlane.f32.xlu0 %v2662
      %v2664 = vpop.xlane.xlu0 %2663
      %v2665 = vsel %vm2637, %v2582, -inf
      %2666 = vmax.xlane.f32.xlu0 %v2665
      %v2667 = vpop.xlane.xlu0 %2666
      %v2668 = vsel %vm2637, %v2583, -inf
      %2669 = vmax.xlane.f32.xlu0 %v2668
      %v2670 = vpop.xlane.xlu0 %2669
      %v2671 = vsel %vm2637, %v2584, -inf
      %2672 = vmax.xlane.f32.xlu0 %v2671
      %v2673 = vpop.xlane.xlu0 %2672
      %v2674 = vsel %vm2637, %v2585, -inf
      %2675 = vmax.xlane.f32.xlu0 %v2674
      %v2676 = vpop.xlane.xlu0 %2675
      %v2677 = vsel %vm2637, %v2586, -inf
      %2678 = vmax.xlane.f32.xlu0 %v2677
      %v2679 = vpop.xlane.xlu0 %2678
      %v2680 = vsel %vm2637, %v2587, -inf
      %2681 = vmax.xlane.f32.xlu0 %v2680
      %v2682 = vpop.xlane.xlu0 %2681
      %v2683 = vsel %vm2637, %v2588, -inf
      %2684 = vmax.xlane.f32.xlu0 %v2683
      %v2685 = vpop.xlane.xlu0 %2684
      %v2686 = vsel %vm2637, %v2589, -inf
      %2687 = vmax.xlane.f32.xlu0 %v2686
      %v2688 = vpop.xlane.xlu0 %2687
      %v2689 = vsel %vm2637, %v2590, -inf
      %2690 = vmax.xlane.f32.xlu0 %v2689
      %v2691 = vpop.xlane.xlu0 %2690
      %v2692 = vsel %vm2637, %v2591, -inf
      %2693 = vmax.xlane.f32.xlu0 %v2692
      %v2694 = vpop.xlane.xlu0 %2693
      %v2695 = vsel %vm2637, %v2592, -inf
      %2696 = vmax.xlane.f32.xlu0 %v2695
      %v2697 = vpop.xlane.xlu0 %2696
      %v2698 = vsel %vm2637, %v2593, -inf
      %2699 = vmax.xlane.f32.xlu0 %v2698
      %v2700 = vpop.xlane.xlu0 %2699
      %v2701 = vsel %vm2637, %v2594, -inf
      %2702 = vmax.xlane.f32.xlu0 %v2701
      %v2703 = vpop.xlane.xlu0 %2702
      %v2704 = vsel %vm2637, %v2595, -inf
      %2705 = vmax.xlane.f32.xlu0 %v2704
      %v2706 = vpop.xlane.xlu0 %2705
      %v2707 = vsel %vm2637, %v2596, -inf
      %2708 = vmax.xlane.f32.xlu0 %v2707
      %v2709 = vpop.xlane.xlu0 %2708
      %v2710 = vsel %vm2637, %v2597, -inf
      %2711 = vmax.xlane.f32.xlu0 %v2710
      %v2712 = vpop.xlane.xlu0 %2711
      %v2713 = vsel %vm2637, %v2598, -inf
      %2714 = vmax.xlane.f32.xlu0 %v2713
      %v2715 = vpop.xlane.xlu0 %2714
      %v2716 = vsel %vm2637, %v2599, -inf
      %2717 = vmax.xlane.f32.xlu0 %v2716
      %v2718 = vpop.xlane.xlu0 %2717
      %v2719 = vsel %vm2637, %v2600, -inf
      %2720 = vmax.xlane.f32.xlu0 %v2719
      %v2721 = vpop.xlane.xlu0 %2720
      %v2722 = vsel %vm2637, %v2601, -inf
      %2723 = vmax.xlane.f32.xlu0 %v2722
      %v2724 = vpop.xlane.xlu0 %2723
      %v2725 = vsel %vm2637, %v2602, -inf
      %2726 = vmax.xlane.f32.xlu0 %v2725
      %v2727 = vpop.xlane.xlu0 %2726
      %v2728 = vsel %vm2637, %v2603, -inf
      %2729 = vmax.xlane.f32.xlu0 %v2728
      %v2730 = vpop.xlane.xlu0 %2729
      %v2731 = vsel %vm2637, %v2604, -inf
      %2732 = vmax.xlane.f32.xlu0 %v2731
      %v2733 = vpop.xlane.xlu0 %2732
      %v2734 = vsel %vm2637, %v2605, -inf
      %2735 = vmax.xlane.f32.xlu0 %v2734
      %v2736 = vpop.xlane.xlu0 %2735
      %v2737 = vsel %vm2637, %v2606, -inf
      %2738 = vmax.xlane.f32.xlu0 %v2737
      %v2739 = vpop.xlane.xlu0 %2738
      %v2740 = vsel %vm2637, %v2607, -inf
      %2741 = vmax.xlane.f32.xlu0 %v2740
      %v2742 = vpop.xlane.xlu0 %2741
      %v2743 = vsel %vm2637, %v2608, -inf
      %2744 = vmax.xlane.f32.xlu0 %v2743
      %v2745 = vpop.xlane.xlu0 %2744
      %v2746 = vsel %vm2637, %v2609, -inf
      %2747 = vmax.xlane.f32.xlu0 %v2746
      %v2748 = vpop.xlane.xlu0 %2747
      %v2749 = vsel %vm2637, %v2610, -inf
      %2750 = vmax.xlane.f32.xlu0 %v2749
      %v2751 = vpop.xlane.xlu0 %2750
      %v2752 = vsel %vm2637, %v2611, -inf
      %2753 = vmax.xlane.f32.xlu0 %v2752
      %v2754 = vpop.xlane.xlu0 %2753
      %v2755 = vsel %vm2637, %v2612, -inf
      %2756 = vmax.xlane.f32.xlu0 %v2755
      %v2757 = vpop.xlane.xlu0 %2756
      %v2758 = vsel %vm2637, %v2613, -inf
      %2759 = vmax.xlane.f32.xlu0 %v2758
      %v2760 = vpop.xlane.xlu0 %2759
      %v2761 = vsel %vm2637, %v2614, -inf
      %2762 = vmax.xlane.f32.xlu0 %v2761
      %v2763 = vpop.xlane.xlu0 %2762
      %v2764 = vsel %vm2637, %v2615, -inf
      %2765 = vmax.xlane.f32.xlu0 %v2764
      %v2766 = vpop.xlane.xlu0 %2765
      %v2767 = vsel %vm2637, %v2616, -inf
      %2768 = vmax.xlane.f32.xlu0 %v2767
      %v2769 = vpop.xlane.xlu0 %2768
      %v2770 = vsel %vm2637, %v2617, -inf
      %2771 = vmax.xlane.f32.xlu0 %v2770
      %v2772 = vpop.xlane.xlu0 %2771
      %v2773 = vsel %vm2637, %v2618, -inf
      %2774 = vmax.xlane.f32.xlu0 %v2773
      %v2775 = vpop.xlane.xlu0 %2774
      %v2776 = vsel %vm2637, %v2619, -inf
      %2777 = vmax.xlane.f32.xlu0 %v2776
      %v2778 = vpop.xlane.xlu0 %2777
      %v2779 = vsel %vm2637, %v2620, -inf
      %2780 = vmax.xlane.f32.xlu0 %v2779
      %v2781 = vpop.xlane.xlu0 %2780
      %v2782 = vsel %vm2637, %v2621, -inf
      %2783 = vmax.xlane.f32.xlu0 %v2782
      %v2784 = vpop.xlane.xlu0 %2783
      %v2785 = vsel %vm2637, %v2622, -inf
      %2786 = vmax.xlane.f32.xlu0 %v2785
      %v2787 = vpop.xlane.xlu0 %2786
      %v2788 = vsel %vm2637, %v2623, -inf
      %2789 = vmax.xlane.f32.xlu0 %v2788
      %v2790 = vpop.xlane.xlu0 %2789
      %v2791 = vsel %vm2637, %v2624, -inf
      %2792 = vmax.xlane.f32.xlu0 %v2791
      %v2793 = vpop.xlane.xlu0 %2792
      %v2794 = vsel %vm2637, %v2625, -inf
      %2795 = vmax.xlane.f32.xlu0 %v2794
      %v2796 = vpop.xlane.xlu0 %2795
      %v2797 = vsel %vm2637, %v2626, -inf
      %2798 = vmax.xlane.f32.xlu0 %v2797
      %v2799 = vpop.xlane.xlu0 %2798
      %v2800 = vsel %vm2637, %v2627, -inf
      %2801 = vmax.xlane.f32.xlu0 %v2800
      %v2802 = vpop.xlane.xlu0 %2801
      %v2803 = vsel %vm2637, %v2628, -inf
      %2804 = vmax.xlane.f32.xlu0 %v2803
      %v2805 = vpop.xlane.xlu0 %2804
      %v2806 = vsel %vm2637, %v2629, -inf
      %2807 = vmax.xlane.f32.xlu0 %v2806
      %v2808 = vpop.xlane.xlu0 %2807
      %v2809 = vsel %vm2637, %v2630, -inf
      %2810 = vmax.xlane.f32.xlu0 %v2809
      %v2811 = vpop.xlane.xlu0 %2810
      %v2812 = vsel %vm2637, %v2631, -inf
      %2813 = vmax.xlane.f32.xlu0 %v2812
      %v2814 = vpop.xlane.xlu0 %2813
      %v2815 = vsel %vm2637, %v2632, -inf
      %2816 = vmax.xlane.f32.xlu0 %v2815
      %v2817 = vpop.xlane.xlu0 %2816
      %v2818 = vsel %vm2637, %v2633, -inf
      %2819 = vmax.xlane.f32.xlu0 %v2818
      %v2820 = vpop.xlane.xlu0 %2819
      %v2821 = vsel %vm2637, %v2634, -inf
      %2822 = vmax.xlane.f32.xlu0 %v2821
      %v2823 = vpop.xlane.xlu0 %2822
      %v2824 = vsel %vm2637, %v2635, -inf
      %2825 = vmax.xlane.f32.xlu0 %v2824
      %v2826 = vpop.xlane.xlu0 %2825
      %v2827 = vsel %vm2637, %v2636, -inf
      %2828 = vmax.xlane.f32.xlu0 %v2827
      %v2829 = vpop.xlane.xlu0 %2828
      %v2830 = vsub.f32 %v2573, %v2640
      %v2831 = vsub.f32 %v2574, %v2643
      %v2832 = vsub.f32 %v2575, %v2646
      %v2833 = vsub.f32 %v2576, %v2649
      %v2834 = vsub.f32 %v2577, %v2652
      %v2835 = vsub.f32 %v2578, %v2655
      %v2836 = vsub.f32 %v2579, %v2658
      %v2837 = vsub.f32 %v2580, %v2661
      %v2838 = vsub.f32 %v2581, %v2664
      %v2839 = vsub.f32 %v2582, %v2667
      %v2840 = vsub.f32 %v2583, %v2670
      %v2841 = vsub.f32 %v2584, %v2673
      %v2842 = vsub.f32 %v2585, %v2676
      %v2843 = vsub.f32 %v2586, %v2679
      %v2844 = vsub.f32 %v2587, %v2682
      %v2845 = vsub.f32 %v2588, %v2685
      %v2846 = vsub.f32 %v2589, %v2688
      %v2847 = vsub.f32 %v2590, %v2691
      %v2848 = vsub.f32 %v2591, %v2694
      %v2849 = vsub.f32 %v2592, %v2697
      %v2850 = vsub.f32 %v2593, %v2700
      %v2851 = vsub.f32 %v2594, %v2703
      %v2852 = vsub.f32 %v2595, %v2706
      %v2853 = vsub.f32 %v2596, %v2709
      %v2854 = vsub.f32 %v2597, %v2712
      %v2855 = vsub.f32 %v2598, %v2715
      %v2856 = vsub.f32 %v2599, %v2718
      %v2857 = vsub.f32 %v2600, %v2721
      %v2858 = vsub.f32 %v2601, %v2724
      %v2859 = vsub.f32 %v2602, %v2727
      %v2860 = vsub.f32 %v2603, %v2730
      %v2861 = vsub.f32 %v2604, %v2733
      %v2862 = vsub.f32 %v2605, %v2736
      %v2863 = vsub.f32 %v2606, %v2739
      %v2864 = vsub.f32 %v2607, %v2742
      %v2865 = vsub.f32 %v2608, %v2745
      %v2866 = vsub.f32 %v2609, %v2748
      %v2867 = vsub.f32 %v2610, %v2751
      %v2868 = vsub.f32 %v2611, %v2754
      %v2869 = vsub.f32 %v2612, %v2757
      %v2870 = vsub.f32 %v2613, %v2760
      %v2871 = vsub.f32 %v2614, %v2763
      %v2872 = vsub.f32 %v2615, %v2766
      %v2873 = vsub.f32 %v2616, %v2769
      %v2874 = vsub.f32 %v2617, %v2772
      %v2875 = vsub.f32 %v2618, %v2775
      %v2876 = vsub.f32 %v2619, %v2778
      %v2877 = vsub.f32 %v2620, %v2781
      %v2878 = vsub.f32 %v2621, %v2784
      %v2879 = vsub.f32 %v2622, %v2787
      %v2880 = vsub.f32 %v2623, %v2790
      %v2881 = vsub.f32 %v2624, %v2793
      %v2882 = vsub.f32 %v2625, %v2796
      %v2883 = vsub.f32 %v2626, %v2799
      %v2884 = vsub.f32 %v2627, %v2802
      %v2885 = vsub.f32 %v2628, %v2805
      %v2886 = vsub.f32 %v2629, %v2808
      %v2887 = vsub.f32 %v2630, %v2811
      %v2888 = vsub.f32 %v2631, %v2814
      %v2889 = vsub.f32 %v2632, %v2817
      %v2890 = vsub.f32 %v2633, %v2820
      %v2891 = vsub.f32 %v2634, %v2823
      %v2892 = vsub.f32 %v2635, %v2826
      %v2893 = vsub.f32 %v2636, %v2829
      %v2894 = vmul.f32 %v2830, 1.442695
      %v2895 = vpow.pop %v2894
      %v2896 = vmul.f32 %v2831, 1.442695
      %v2897 = vpow.pop %v2896
      %v2898 = vmul.f32 %v2832, 1.442695
      %v2899 = vpow.pop %v2898
      %v2900 = vmul.f32 %v2833, 1.442695
      %v2901 = vpow.pop %v2900
      %v2902 = vmul.f32 %v2834, 1.442695
      %v2903 = vpow.pop %v2902
      %v2904 = vmul.f32 %v2835, 1.442695
      %v2905 = vpow.pop %v2904
      %v2906 = vmul.f32 %v2836, 1.442695
      %v2907 = vpow.pop %v2906
      %v2908 = vmul.f32 %v2837, 1.442695
      %v2909 = vpow.pop %v2908
      %v2910 = vmul.f32 %v2838, 1.442695
      %v2911 = vpow.pop %v2910
      %v2912 = vmul.f32 %v2839, 1.442695
      %v2913 = vpow.pop %v2912
      %v2914 = vmul.f32 %v2840, 1.442695
      %v2915 = vpow.pop %v2914
      %v2916 = vmul.f32 %v2841, 1.442695
      %v2917 = vpow.pop %v2916
      %v2918 = vmul.f32 %v2842, 1.442695
      %v2919 = vpow.pop %v2918
      %v2920 = vmul.f32 %v2843, 1.442695
      %v2921 = vpow.pop %v2920
      %v2922 = vmul.f32 %v2844, 1.442695
      %v2923 = vpow.pop %v2922
      %v2924 = vmul.f32 %v2845, 1.442695
      %v2925 = vpow.pop %v2924
      %v2926 = vmul.f32 %v2846, 1.442695
      %v2927 = vpow.pop %v2926
      %v2928 = vmul.f32 %v2847, 1.442695
      %v2929 = vpow.pop %v2928
      %v2930 = vmul.f32 %v2848, 1.442695
      %v2931 = vpow.pop %v2930
      %v2932 = vmul.f32 %v2849, 1.442695
      %v2933 = vpow.pop %v2932
      %v2934 = vmul.f32 %v2850, 1.442695
      %v2935 = vpow.pop %v2934
      %v2936 = vmul.f32 %v2851, 1.442695
      %v2937 = vpow.pop %v2936
      %v2938 = vmul.f32 %v2852, 1.442695
      %v2939 = vpow.pop %v2938
      %v2940 = vmul.f32 %v2853, 1.442695
      %v2941 = vpow.pop %v2940
      %v2942 = vmul.f32 %v2854, 1.442695
      %v2943 = vpow.pop %v2942
      %v2944 = vmul.f32 %v2855, 1.442695
      %v2945 = vpow.pop %v2944
      %v2946 = vmul.f32 %v2856, 1.442695
      %v2947 = vpow.pop %v2946
      %v2948 = vmul.f32 %v2857, 1.442695
      %v2949 = vpow.pop %v2948
      %v2950 = vmul.f32 %v2858, 1.442695
      %v2951 = vpow.pop %v2950
      %v2952 = vmul.f32 %v2859, 1.442695
      %v2953 = vpow.pop %v2952
      %v2954 = vmul.f32 %v2860, 1.442695
      %v2955 = vpow.pop %v2954
      %v2956 = vmul.f32 %v2861, 1.442695
      %v2957 = vpow.pop %v2956
      %v2958 = vmul.f32 %v2862, 1.442695
      %v2959 = vpow.pop %v2958
      %v2960 = vmul.f32 %v2863, 1.442695
      %v2961 = vpow.pop %v2960
      %v2962 = vmul.f32 %v2864, 1.442695
      %v2963 = vpow.pop %v2962
      %v2964 = vmul.f32 %v2865, 1.442695
      %v2965 = vpow.pop %v2964
      %v2966 = vmul.f32 %v2866, 1.442695
      %v2967 = vpow.pop %v2966
      %v2968 = vmul.f32 %v2867, 1.442695
      %v2969 = vpow.pop %v2968
      %v2970 = vmul.f32 %v2868, 1.442695
      %v2971 = vpow.pop %v2970
      %v2972 = vmul.f32 %v2869, 1.442695
      %v2973 = vpow.pop %v2972
      %v2974 = vmul.f32 %v2870, 1.442695
      %v2975 = vpow.pop %v2974
      %v2976 = vmul.f32 %v2871, 1.442695
      %v2977 = vpow.pop %v2976
      %v2978 = vmul.f32 %v2872, 1.442695
      %v2979 = vpow.pop %v2978
      %v2980 = vmul.f32 %v2873, 1.442695
      %v2981 = vpow.pop %v2980
      %v2982 = vmul.f32 %v2874, 1.442695
      %v2983 = vpow.pop %v2982
      %v2984 = vmul.f32 %v2875, 1.442695
      %v2985 = vpow.pop %v2984
      %v2986 = vmul.f32 %v2876, 1.442695
      %v2987 = vpow.pop %v2986
      %v2988 = vmul.f32 %v2877, 1.442695
      %v2989 = vpow.pop %v2988
      %v2990 = vmul.f32 %v2878, 1.442695
      %v2991 = vpow.pop %v2990
      %v2992 = vmul.f32 %v2879, 1.442695
      %v2993 = vpow.pop %v2992
      %v2994 = vmul.f32 %v2880, 1.442695
      %v2995 = vpow.pop %v2994
      %v2996 = vmul.f32 %v2881, 1.442695
      %v2997 = vpow.pop %v2996
      %v2998 = vmul.f32 %v2882, 1.442695
      %v2999 = vpow.pop %v2998
      %v3000 = vmul.f32 %v2883, 1.442695
      %v3001 = vpow.pop %v3000
      %v3002 = vmul.f32 %v2884, 1.442695
      %v3003 = vpow.pop %v3002
      %v3004 = vmul.f32 %v2885, 1.442695
      %v3005 = vpow.pop %v3004
      %v3006 = vmul.f32 %v2886, 1.442695
      %v3007 = vpow.pop %v3006
      %v3008 = vmul.f32 %v2887, 1.442695
      %v3009 = vpow.pop %v3008
      %v3010 = vmul.f32 %v2888, 1.442695
      %v3011 = vpow.pop %v3010
      %v3012 = vmul.f32 %v2889, 1.442695
      %v3013 = vpow.pop %v3012
      %v3014 = vmul.f32 %v2890, 1.442695
      %v3015 = vpow.pop %v3014
      %v3016 = vmul.f32 %v2891, 1.442695
      %v3017 = vpow.pop %v3016
      %v3018 = vmul.f32 %v2892, 1.442695
      %v3019 = vpow.pop %v3018
      %v3020 = vmul.f32 %v2893, 1.442695
      %v3021 = vpow.pop %v3020
      %v3022 = vsel %vm2637, %v2895, 0.0
      %3023 = vadd.xlane.f32.xlu0 %v3022
      %v3024 = vpop.xlane.xlu0 %3023
      %v3025 = vsel %vm2637, %v2897, 0.0
      %3026 = vadd.xlane.f32.xlu0 %v3025
      %v3027 = vpop.xlane.xlu0 %3026
      %v3028 = vsel %vm2637, %v2899, 0.0
      %3029 = vadd.xlane.f32.xlu0 %v3028
      %v3030 = vpop.xlane.xlu0 %3029
      %v3031 = vsel %vm2637, %v2901, 0.0
      %3032 = vadd.xlane.f32.xlu0 %v3031
      %v3033 = vpop.xlane.xlu0 %3032
      %v3034 = vsel %vm2637, %v2903, 0.0
      %3035 = vadd.xlane.f32.xlu0 %v3034
      %v3036 = vpop.xlane.xlu0 %3035
      %v3037 = vsel %vm2637, %v2905, 0.0
      %3038 = vadd.xlane.f32.xlu0 %v3037
      %v3039 = vpop.xlane.xlu0 %3038
      %v3040 = vsel %vm2637, %v2907, 0.0
      %3041 = vadd.xlane.f32.xlu0 %v3040
      %v3042 = vpop.xlane.xlu0 %3041
      %v3043 = vsel %vm2637, %v2909, 0.0
      %3044 = vadd.xlane.f32.xlu0 %v3043
      %v3045 = vpop.xlane.xlu0 %3044
      %v3046 = vsel %vm2637, %v2911, 0.0
      %3047 = vadd.xlane.f32.xlu0 %v3046
      %v3048 = vpop.xlane.xlu0 %3047
      %v3049 = vsel %vm2637, %v2913, 0.0
      %3050 = vadd.xlane.f32.xlu0 %v3049
      %v3051 = vpop.xlane.xlu0 %3050
      %v3052 = vsel %vm2637, %v2915, 0.0
      %3053 = vadd.xlane.f32.xlu0 %v3052
      %v3054 = vpop.xlane.xlu0 %3053
      %v3055 = vsel %vm2637, %v2917, 0.0
      %3056 = vadd.xlane.f32.xlu0 %v3055
      %v3057 = vpop.xlane.xlu0 %3056
      %v3058 = vsel %vm2637, %v2919, 0.0
      %3059 = vadd.xlane.f32.xlu0 %v3058
      %v3060 = vpop.xlane.xlu0 %3059
      %v3061 = vsel %vm2637, %v2921, 0.0
      %3062 = vadd.xlane.f32.xlu0 %v3061
      %v3063 = vpop.xlane.xlu0 %3062
      %v3064 = vsel %vm2637, %v2923, 0.0
      %3065 = vadd.xlane.f32.xlu0 %v3064
      %v3066 = vpop.xlane.xlu0 %3065
      %v3067 = vsel %vm2637, %v2925, 0.0
      %3068 = vadd.xlane.f32.xlu0 %v3067
      %v3069 = vpop.xlane.xlu0 %3068
      %v3070 = vsel %vm2637, %v2927, 0.0
      %3071 = vadd.xlane.f32.xlu0 %v3070
      %v3072 = vpop.xlane.xlu0 %3071
      %v3073 = vsel %vm2637, %v2929, 0.0
      %3074 = vadd.xlane.f32.xlu0 %v3073
      %v3075 = vpop.xlane.xlu0 %3074
      %v3076 = vsel %vm2637, %v2931, 0.0
      %3077 = vadd.xlane.f32.xlu0 %v3076
      %v3078 = vpop.xlane.xlu0 %3077
      %v3079 = vsel %vm2637, %v2933, 0.0
      %3080 = vadd.xlane.f32.xlu0 %v3079
      %v3081 = vpop.xlane.xlu0 %3080
      %v3082 = vsel %vm2637, %v2935, 0.0
      %3083 = vadd.xlane.f32.xlu0 %v3082
      %v3084 = vpop.xlane.xlu0 %3083
      %v3085 = vsel %vm2637, %v2937, 0.0
      %3086 = vadd.xlane.f32.xlu0 %v3085
      %v3087 = vpop.xlane.xlu0 %3086
      %v3088 = vsel %vm2637, %v2939, 0.0
      %3089 = vadd.xlane.f32.xlu0 %v3088
      %v3090 = vpop.xlane.xlu0 %3089
      %v3091 = vsel %vm2637, %v2941, 0.0
      %3092 = vadd.xlane.f32.xlu0 %v3091
      %v3093 = vpop.xlane.xlu0 %3092
      %v3094 = vsel %vm2637, %v2943, 0.0
      %3095 = vadd.xlane.f32.xlu0 %v3094
      %v3096 = vpop.xlane.xlu0 %3095
      %v3097 = vsel %vm2637, %v2945, 0.0
      %3098 = vadd.xlane.f32.xlu0 %v3097
      %v3099 = vpop.xlane.xlu0 %3098
      %v3100 = vsel %vm2637, %v2947, 0.0
      %3101 = vadd.xlane.f32.xlu0 %v3100
      %v3102 = vpop.xlane.xlu0 %3101
      %v3103 = vsel %vm2637, %v2949, 0.0
      %3104 = vadd.xlane.f32.xlu0 %v3103
      %v3105 = vpop.xlane.xlu0 %3104
      %v3106 = vsel %vm2637, %v2951, 0.0
      %3107 = vadd.xlane.f32.xlu0 %v3106
      %v3108 = vpop.xlane.xlu0 %3107
      %v3109 = vsel %vm2637, %v2953, 0.0
      %3110 = vadd.xlane.f32.xlu0 %v3109
      %v3111 = vpop.xlane.xlu0 %3110
      %v3112 = vsel %vm2637, %v2955, 0.0
      %3113 = vadd.xlane.f32.xlu0 %v3112
      %v3114 = vpop.xlane.xlu0 %3113
      %v3115 = vsel %vm2637, %v2957, 0.0
      %3116 = vadd.xlane.f32.xlu0 %v3115
      %v3117 = vpop.xlane.xlu0 %3116
      %v3118 = vsel %vm2637, %v2959, 0.0
      %3119 = vadd.xlane.f32.xlu0 %v3118
      %v3120 = vpop.xlane.xlu0 %3119
      %v3121 = vsel %vm2637, %v2961, 0.0
      %3122 = vadd.xlane.f32.xlu0 %v3121
      %v3123 = vpop.xlane.xlu0 %3122
      %v3124 = vsel %vm2637, %v2963, 0.0
      %3125 = vadd.xlane.f32.xlu0 %v3124
      %v3126 = vpop.xlane.xlu0 %3125
      %v3127 = vsel %vm2637, %v2965, 0.0
      %3128 = vadd.xlane.f32.xlu0 %v3127
      %v3129 = vpop.xlane.xlu0 %3128
      %v3130 = vsel %vm2637, %v2967, 0.0
      %3131 = vadd.xlane.f32.xlu0 %v3130
      %v3132 = vpop.xlane.xlu0 %3131
      %v3133 = vsel %vm2637, %v2969, 0.0
      %3134 = vadd.xlane.f32.xlu0 %v3133
      %v3135 = vpop.xlane.xlu0 %3134
      %v3136 = vsel %vm2637, %v2971, 0.0
      %3137 = vadd.xlane.f32.xlu0 %v3136
      %v3138 = vpop.xlane.xlu0 %3137
      %v3139 = vsel %vm2637, %v2973, 0.0
      %3140 = vadd.xlane.f32.xlu0 %v3139
      %v3141 = vpop.xlane.xlu0 %3140
      %v3142 = vsel %vm2637, %v2975, 0.0
      %3143 = vadd.xlane.f32.xlu0 %v3142
      %v3144 = vpop.xlane.xlu0 %3143
      %v3145 = vsel %vm2637, %v2977, 0.0
      %3146 = vadd.xlane.f32.xlu0 %v3145
      %v3147 = vpop.xlane.xlu0 %3146
      %v3148 = vsel %vm2637, %v2979, 0.0
      %3149 = vadd.xlane.f32.xlu0 %v3148
      %v3150 = vpop.xlane.xlu0 %3149
      %v3151 = vsel %vm2637, %v2981, 0.0
      %3152 = vadd.xlane.f32.xlu0 %v3151
      %v3153 = vpop.xlane.xlu0 %3152
      %v3154 = vsel %vm2637, %v2983, 0.0
      %3155 = vadd.xlane.f32.xlu0 %v3154
      %v3156 = vpop.xlane.xlu0 %3155
      %v3157 = vsel %vm2637, %v2985, 0.0
      %3158 = vadd.xlane.f32.xlu0 %v3157
      %v3159 = vpop.xlane.xlu0 %3158
      %v3160 = vsel %vm2637, %v2987, 0.0
      %3161 = vadd.xlane.f32.xlu0 %v3160
      %v3162 = vpop.xlane.xlu0 %3161
      %v3163 = vsel %vm2637, %v2989, 0.0
      %3164 = vadd.xlane.f32.xlu0 %v3163
      %v3165 = vpop.xlane.xlu0 %3164
      %v3166 = vsel %vm2637, %v2991, 0.0
      %3167 = vadd.xlane.f32.xlu0 %v3166
      %v3168 = vpop.xlane.xlu0 %3167
      %v3169 = vsel %vm2637, %v2993, 0.0
      %3170 = vadd.xlane.f32.xlu0 %v3169
      %v3171 = vpop.xlane.xlu0 %3170
      %v3172 = vsel %vm2637, %v2995, 0.0
      %3173 = vadd.xlane.f32.xlu0 %v3172
      %v3174 = vpop.xlane.xlu0 %3173
      %v3175 = vsel %vm2637, %v2997, 0.0
      %3176 = vadd.xlane.f32.xlu0 %v3175
      %v3177 = vpop.xlane.xlu0 %3176
      %v3178 = vsel %vm2637, %v2999, 0.0
      %3179 = vadd.xlane.f32.xlu0 %v3178
      %v3180 = vpop.xlane.xlu0 %3179
      %v3181 = vsel %vm2637, %v3001, 0.0
      %3182 = vadd.xlane.f32.xlu0 %v3181
      %v3183 = vpop.xlane.xlu0 %3182
      %v3184 = vsel %vm2637, %v3003, 0.0
      %3185 = vadd.xlane.f32.xlu0 %v3184
      %v3186 = vpop.xlane.xlu0 %3185
      %v3187 = vsel %vm2637, %v3005, 0.0
      %3188 = vadd.xlane.f32.xlu0 %v3187
      %v3189 = vpop.xlane.xlu0 %3188
      %v3190 = vsel %vm2637, %v3007, 0.0
      %3191 = vadd.xlane.f32.xlu0 %v3190
      %v3192 = vpop.xlane.xlu0 %3191
      %v3193 = vsel %vm2637, %v3009, 0.0
      %3194 = vadd.xlane.f32.xlu0 %v3193
      %v3195 = vpop.xlane.xlu0 %3194
      %v3196 = vsel %vm2637, %v3011, 0.0
      %3197 = vadd.xlane.f32.xlu0 %v3196
      %v3198 = vpop.xlane.xlu0 %3197
      %v3199 = vsel %vm2637, %v3013, 0.0
      %3200 = vadd.xlane.f32.xlu0 %v3199
      %v3201 = vpop.xlane.xlu0 %3200
      %v3202 = vsel %vm2637, %v3015, 0.0
      %3203 = vadd.xlane.f32.xlu0 %v3202
      %v3204 = vpop.xlane.xlu0 %3203
      %v3205 = vsel %vm2637, %v3017, 0.0
      %3206 = vadd.xlane.f32.xlu0 %v3205
      %v3207 = vpop.xlane.xlu0 %3206
      %v3208 = vsel %vm2637, %v3019, 0.0
      %3209 = vadd.xlane.f32.xlu0 %v3208
      %v3210 = vpop.xlane.xlu0 %3209
      %v3211 = vsel %vm2637, %v3021, 0.0
      %3212 = vadd.xlane.f32.xlu0 %v3211
      %v3213 = vpop.xlane.xlu0 %3212
      %v3214 = vrcp.pop %v3024
      %v3215 = vrcp.pop %v3027
      %v3216 = vrcp.pop %v3030
      %v3217 = vrcp.pop %v3033
      %v3218 = vrcp.pop %v3036
      %v3219 = vrcp.pop %v3039
      %v3220 = vrcp.pop %v3042
      %v3221 = vrcp.pop %v3045
      %v3222 = vrcp.pop %v3048
      %v3223 = vrcp.pop %v3051
      %v3224 = vrcp.pop %v3054
      %v3225 = vrcp.pop %v3057
      %v3226 = vrcp.pop %v3060
      %v3227 = vrcp.pop %v3063
      %v3228 = vrcp.pop %v3066
      %v3229 = vrcp.pop %v3069
      %v3230 = vrcp.pop %v3072
      %v3231 = vrcp.pop %v3075
      %v3232 = vrcp.pop %v3078
      %v3233 = vrcp.pop %v3081
      %v3234 = vrcp.pop %v3084
      %v3235 = vrcp.pop %v3087
      %v3236 = vrcp.pop %v3090
      %v3237 = vrcp.pop %v3093
      %v3238 = vrcp.pop %v3096
      %v3239 = vrcp.pop %v3099
      %v3240 = vrcp.pop %v3102
      %v3241 = vrcp.pop %v3105
      %v3242 = vrcp.pop %v3108
      %v3243 = vrcp.pop %v3111
      %v3244 = vrcp.pop %v3114
      %v3245 = vrcp.pop %v3117
      %v3246 = vrcp.pop %v3120
      %v3247 = vrcp.pop %v3123
      %v3248 = vrcp.pop %v3126
      %v3249 = vrcp.pop %v3129
      %v3250 = vrcp.pop %v3132
      %v3251 = vrcp.pop %v3135
      %v3252 = vrcp.pop %v3138
      %v3253 = vrcp.pop %v3141
      %v3254 = vrcp.pop %v3144
      %v3255 = vrcp.pop %v3147
      %v3256 = vrcp.pop %v3150
      %v3257 = vrcp.pop %v3153
      %v3258 = vrcp.pop %v3156
      %v3259 = vrcp.pop %v3159
      %v3260 = vrcp.pop %v3162
      %v3261 = vrcp.pop %v3165
      %v3262 = vrcp.pop %v3168
      %v3263 = vrcp.pop %v3171
      %v3264 = vrcp.pop %v3174
      %v3265 = vrcp.pop %v3177
      %v3266 = vrcp.pop %v3180
      %v3267 = vrcp.pop %v3183
      %v3268 = vrcp.pop %v3186
      %v3269 = vrcp.pop %v3189
      %v3270 = vrcp.pop %v3192
      %v3271 = vrcp.pop %v3195
      %v3272 = vrcp.pop %v3198
      %v3273 = vrcp.pop %v3201
      %v3274 = vrcp.pop %v3204
      %v3275 = vrcp.pop %v3207
      %v3276 = vrcp.pop %v3210
      %v3277 = vrcp.pop %v3213
      %v3278 = vmul.f32 %v2895, %v3214
      %v3279 = vmul.f32 %v2897, %v3215
      %v3280 = vmul.f32 %v2899, %v3216
      %v3281 = vmul.f32 %v2901, %v3217
      %v3282 = vmul.f32 %v2903, %v3218
      %v3283 = vmul.f32 %v2905, %v3219
      %v3284 = vmul.f32 %v2907, %v3220
      %v3285 = vmul.f32 %v2909, %v3221
      %v3286 = vmul.f32 %v2911, %v3222
      %v3287 = vmul.f32 %v2913, %v3223
      %v3288 = vmul.f32 %v2915, %v3224
      %v3289 = vmul.f32 %v2917, %v3225
      %v3290 = vmul.f32 %v2919, %v3226
      %v3291 = vmul.f32 %v2921, %v3227
      %v3292 = vmul.f32 %v2923, %v3228
      %v3293 = vmul.f32 %v2925, %v3229
      %v3294 = vmul.f32 %v2927, %v3230
      %v3295 = vmul.f32 %v2929, %v3231
      %v3296 = vmul.f32 %v2931, %v3232
      %v3297 = vmul.f32 %v2933, %v3233
      %v3298 = vmul.f32 %v2935, %v3234
      %v3299 = vmul.f32 %v2937, %v3235
      %v3300 = vmul.f32 %v2939, %v3236
      %v3301 = vmul.f32 %v2941, %v3237
      %v3302 = vmul.f32 %v2943, %v3238
      %v3303 = vmul.f32 %v2945, %v3239
      %v3304 = vmul.f32 %v2947, %v3240
      %v3305 = vmul.f32 %v2949, %v3241
      %v3306 = vmul.f32 %v2951, %v3242
      %v3307 = vmul.f32 %v2953, %v3243
      %v3308 = vmul.f32 %v2955, %v3244
      %v3309 = vmul.f32 %v2957, %v3245
      %v3310 = vmul.f32 %v2959, %v3246
      %v3311 = vmul.f32 %v2961, %v3247
      %v3312 = vmul.f32 %v2963, %v3248
      %v3313 = vmul.f32 %v2965, %v3249
      %v3314 = vmul.f32 %v2967, %v3250
      %v3315 = vmul.f32 %v2969, %v3251
      %v3316 = vmul.f32 %v2971, %v3252
      %v3317 = vmul.f32 %v2973, %v3253
      %v3318 = vmul.f32 %v2975, %v3254
      %v3319 = vmul.f32 %v2977, %v3255
      %v3320 = vmul.f32 %v2979, %v3256
      %v3321 = vmul.f32 %v2981, %v3257
      %v3322 = vmul.f32 %v2983, %v3258
      %v3323 = vmul.f32 %v2985, %v3259
      %v3324 = vmul.f32 %v2987, %v3260
      %v3325 = vmul.f32 %v2989, %v3261
      %v3326 = vmul.f32 %v2991, %v3262
      %v3327 = vmul.f32 %v2993, %v3263
      %v3328 = vmul.f32 %v2995, %v3264
      %v3329 = vmul.f32 %v2997, %v3265
      %v3330 = vmul.f32 %v2999, %v3266
      %v3331 = vmul.f32 %v3001, %v3267
      %v3332 = vmul.f32 %v3003, %v3268
      %v3333 = vmul.f32 %v3005, %v3269
      %v3334 = vmul.f32 %v3007, %v3270
      %v3335 = vmul.f32 %v3009, %v3271
      %v3336 = vmul.f32 %v3011, %v3272
      %v3337 = vmul.f32 %v3013, %v3273
      %v3338 = vmul.f32 %v3015, %v3274
      %v3339 = vmul.f32 %v3017, %v3275
      %v3340 = vmul.f32 %v3019, %v3276
      %v3341 = vmul.f32 %v3021, %v3277
      %v3343 = vsel %vm2637, %v3278, 0
      %3345 = vmatpush.msra.mxu0 0.0
      %3346 = vmatpush.msra.mxu0 0.0
      %3347 = vmatpush.msra.mxu0 0.0
      %3348 = vmatpush.msra.mxu0 0.0
      %3349 = vmatpush.msra.mxu0 0.0
      %3350 = vmatpush.msra.mxu0 0.0
      %3351 = vmatpush.msra.mxu0 0.0
      %3352 = vmatpush.msra.mxu0 0.0
      %3353 = vmatpush.msra.mxu0 0.0
      %3354 = vmatpush.msra.mxu0 0.0
      %3355 = vmatpush.msra.mxu0 0.0
      %3356 = vmatpush.msra.mxu0 0.0
      %3357 = vmatpush.msra.mxu0 0.0
      %3358 = vmatpush.msra.mxu0 0.0
      %3359 = vmatpush.msra.mxu0 0.0
      %3360 = vmatpush.msra.mxu0 %v613
      %3361 = vmatmul.f32.gmra.mxu0 %v3343
      %v3362 = vpop.f32.mrf.mxu0
      %v3363 = vadd.f32 0.0, %v3362
      %3364 = vdwg.mxu0
      %v3366 = vsel %vm2637, %v3279, 0
      %3368 = vmatpush.msra.mxu0 0.0
      %3369 = vmatpush.msra.mxu0 0.0
      %3370 = vmatpush.msra.mxu0 0.0
      %3371 = vmatpush.msra.mxu0 0.0
      %3372 = vmatpush.msra.mxu0 0.0
      %3373 = vmatpush.msra.mxu0 0.0
      %3374 = vmatpush.msra.mxu0 0.0
      %3375 = vmatpush.msra.mxu0 0.0
      %3376 = vmatpush.msra.mxu0 0.0
      %3377 = vmatpush.msra.mxu0 0.0
      %3378 = vmatpush.msra.mxu0 0.0
      %3379 = vmatpush.msra.mxu0 0.0
      %3380 = vmatpush.msra.mxu0 0.0
      %3381 = vmatpush.msra.mxu0 0.0
      %3382 = vmatpush.msra.mxu0 0.0
      %3383 = vmatpush.msra.mxu0 %v615
      %3384 = vmatmul.f32.gmra.mxu0 %v3366
      %v3385 = vpop.f32.mrf.mxu0
      %v3386 = vadd.f32 0.0, %v3385
      %3387 = vdwg.mxu0
      %v3389 = vsel %vm2637, %v3280, 0
      %3391 = vmatpush.msra.mxu0 0.0
      %3392 = vmatpush.msra.mxu0 0.0
      %3393 = vmatpush.msra.mxu0 0.0
      %3394 = vmatpush.msra.mxu0 0.0
      %3395 = vmatpush.msra.mxu0 0.0
      %3396 = vmatpush.msra.mxu0 0.0
      %3397 = vmatpush.msra.mxu0 0.0
      %3398 = vmatpush.msra.mxu0 0.0
      %3399 = vmatpush.msra.mxu0 0.0
      %3400 = vmatpush.msra.mxu0 0.0
      %3401 = vmatpush.msra.mxu0 0.0
      %3402 = vmatpush.msra.mxu0 0.0
      %3403 = vmatpush.msra.mxu0 0.0
      %3404 = vmatpush.msra.mxu0 0.0
      %3405 = vmatpush.msra.mxu0 0.0
      %3406 = vmatpush.msra.mxu0 %v618
      %3407 = vmatmul.f32.gmra.mxu0 %v3389
      %v3408 = vpop.f32.mrf.mxu0
      %v3409 = vadd.f32 0.0, %v3408
      %3410 = vdwg.mxu0
      %v3412 = vsel %vm2637, %v3281, 0
      %3414 = vmatpush.msra.mxu0 0.0
      %3415 = vmatpush.msra.mxu0 0.0
      %3416 = vmatpush.msra.mxu0 0.0
      %3417 = vmatpush.msra.mxu0 0.0
      %3418 = vmatpush.msra.mxu0 0.0
      %3419 = vmatpush.msra.mxu0 0.0
      %3420 = vmatpush.msra.mxu0 0.0
      %3421 = vmatpush.msra.mxu0 0.0
      %3422 = vmatpush.msra.mxu0 0.0
      %3423 = vmatpush.msra.mxu0 0.0
      %3424 = vmatpush.msra.mxu0 0.0
      %3425 = vmatpush.msra.mxu0 0.0
      %3426 = vmatpush.msra.mxu0 0.0
      %3427 = vmatpush.msra.mxu0 0.0
      %3428 = vmatpush.msra.mxu0 0.0
      %3429 = vmatpush.msra.mxu0 %v620
      %3430 = vmatmul.f32.gmra.mxu0 %v3412
      %v3431 = vpop.f32.mrf.mxu0
      %v3432 = vadd.f32 0.0, %v3431
      %3433 = vdwg.mxu0
      %v3435 = vsel %vm2637, %v3282, 0
      %3437 = vmatpush.msra.mxu0 0.0
      %3438 = vmatpush.msra.mxu0 0.0
      %3439 = vmatpush.msra.mxu0 0.0
      %3440 = vmatpush.msra.mxu0 0.0
      %3441 = vmatpush.msra.mxu0 0.0
      %3442 = vmatpush.msra.mxu0 0.0
      %3443 = vmatpush.msra.mxu0 0.0
      %3444 = vmatpush.msra.mxu0 0.0
      %3445 = vmatpush.msra.mxu0 0.0
      %3446 = vmatpush.msra.mxu0 0.0
      %3447 = vmatpush.msra.mxu0 0.0
      %3448 = vmatpush.msra.mxu0 0.0
      %3449 = vmatpush.msra.mxu0 0.0
      %3450 = vmatpush.msra.mxu0 0.0
      %3451 = vmatpush.msra.mxu0 0.0
      %3452 = vmatpush.msra.mxu0 %v623
      %3453 = vmatmul.f32.gmra.mxu0 %v3435
      %v3454 = vpop.f32.mrf.mxu0
      %v3455 = vadd.f32 0.0, %v3454
      %3456 = vdwg.mxu0
      %v3458 = vsel %vm2637, %v3283, 0
      %3460 = vmatpush.msra.mxu0 0.0
      %3461 = vmatpush.msra.mxu0 0.0
      %3462 = vmatpush.msra.mxu0 0.0
      %3463 = vmatpush.msra.mxu0 0.0
      %3464 = vmatpush.msra.mxu0 0.0
      %3465 = vmatpush.msra.mxu0 0.0
      %3466 = vmatpush.msra.mxu0 0.0
      %3467 = vmatpush.msra.mxu0 0.0
      %3468 = vmatpush.msra.mxu0 0.0
      %3469 = vmatpush.msra.mxu0 0.0
      %3470 = vmatpush.msra.mxu0 0.0
      %3471 = vmatpush.msra.mxu0 0.0
      %3472 = vmatpush.msra.mxu0 0.0
      %3473 = vmatpush.msra.mxu0 0.0
      %3474 = vmatpush.msra.mxu0 0.0
      %3475 = vmatpush.msra.mxu0 %v625
      %3476 = vmatmul.f32.gmra.mxu0 %v3458
      %v3477 = vpop.f32.mrf.mxu0
      %v3478 = vadd.f32 0.0, %v3477
      %3479 = vdwg.mxu0
      %v3481 = vsel %vm2637, %v3284, 0
      %3483 = vmatpush.msra.mxu0 0.0
      %3484 = vmatpush.msra.mxu0 0.0
      %3485 = vmatpush.msra.mxu0 0.0
      %3486 = vmatpush.msra.mxu0 0.0
      %3487 = vmatpush.msra.mxu0 0.0
      %3488 = vmatpush.msra.mxu0 0.0
      %3489 = vmatpush.msra.mxu0 0.0
      %3490 = vmatpush.msra.mxu0 0.0
      %3491 = vmatpush.msra.mxu0 0.0
      %3492 = vmatpush.msra.mxu0 0.0
      %3493 = vmatpush.msra.mxu0 0.0
      %3494 = vmatpush.msra.mxu0 0.0
      %3495 = vmatpush.msra.mxu0 0.0
      %3496 = vmatpush.msra.mxu0 0.0
      %3497 = vmatpush.msra.mxu0 0.0
      %3498 = vmatpush.msra.mxu0 %v628
      %3499 = vmatmul.f32.gmra.mxu0 %v3481
      %v3500 = vpop.f32.mrf.mxu0
      %v3501 = vadd.f32 0.0, %v3500
      %3502 = vdwg.mxu0
      %v3504 = vsel %vm2637, %v3285, 0
      %3506 = vmatpush.msra.mxu0 0.0
      %3507 = vmatpush.msra.mxu0 0.0
      %3508 = vmatpush.msra.mxu0 0.0
      %3509 = vmatpush.msra.mxu0 0.0
      %3510 = vmatpush.msra.mxu0 0.0
      %3511 = vmatpush.msra.mxu0 0.0
      %3512 = vmatpush.msra.mxu0 0.0
      %3513 = vmatpush.msra.mxu0 0.0
      %3514 = vmatpush.msra.mxu0 0.0
      %3515 = vmatpush.msra.mxu0 0.0
      %3516 = vmatpush.msra.mxu0 0.0
      %3517 = vmatpush.msra.mxu0 0.0
      %3518 = vmatpush.msra.mxu0 0.0
      %3519 = vmatpush.msra.mxu0 0.0
      %3520 = vmatpush.msra.mxu0 0.0
      %3521 = vmatpush.msra.mxu0 %v630
      %3522 = vmatmul.f32.gmra.mxu0 %v3504
      %v3523 = vpop.f32.mrf.mxu0
      %v3524 = vadd.f32 0.0, %v3523
      %3525 = vdwg.mxu0
      %v3527 = vsel %vm2637, %v3286, 0
      %3529 = vmatpush.msra.mxu0 0.0
      %3530 = vmatpush.msra.mxu0 0.0
      %3531 = vmatpush.msra.mxu0 0.0
      %3532 = vmatpush.msra.mxu0 0.0
      %3533 = vmatpush.msra.mxu0 0.0
      %3534 = vmatpush.msra.mxu0 0.0
      %3535 = vmatpush.msra.mxu0 0.0
      %3536 = vmatpush.msra.mxu0 0.0
      %3537 = vmatpush.msra.mxu0 0.0
      %3538 = vmatpush.msra.mxu0 0.0
      %3539 = vmatpush.msra.mxu0 0.0
      %3540 = vmatpush.msra.mxu0 0.0
      %3541 = vmatpush.msra.mxu0 0.0
      %3542 = vmatpush.msra.mxu0 0.0
      %3543 = vmatpush.msra.mxu0 0.0
      %3544 = vmatpush.msra.mxu0 %v633
      %3545 = vmatmul.f32.gmra.mxu0 %v3527
      %v3546 = vpop.f32.mrf.mxu0
      %v3547 = vadd.f32 0.0, %v3546
      %3548 = vdwg.mxu0
      %v3550 = vsel %vm2637, %v3287, 0
      %3552 = vmatpush.msra.mxu0 0.0
      %3553 = vmatpush.msra.mxu0 0.0
      %3554 = vmatpush.msra.mxu0 0.0
      %3555 = vmatpush.msra.mxu0 0.0
      %3556 = vmatpush.msra.mxu0 0.0
      %3557 = vmatpush.msra.mxu0 0.0
      %3558 = vmatpush.msra.mxu0 0.0
      %3559 = vmatpush.msra.mxu0 0.0
      %3560 = vmatpush.msra.mxu0 0.0
      %3561 = vmatpush.msra.mxu0 0.0
      %3562 = vmatpush.msra.mxu0 0.0
      %3563 = vmatpush.msra.mxu0 0.0
      %3564 = vmatpush.msra.mxu0 0.0
      %3565 = vmatpush.msra.mxu0 0.0
      %3566 = vmatpush.msra.mxu0 0.0
      %3567 = vmatpush.msra.mxu0 %v635
      %3568 = vmatmul.f32.gmra.mxu0 %v3550
      %v3569 = vpop.f32.mrf.mxu0
      %v3570 = vadd.f32 0.0, %v3569
      %3571 = vdwg.mxu0
      %v3573 = vsel %vm2637, %v3288, 0
      %3575 = vmatpush.msra.mxu0 0.0
      %3576 = vmatpush.msra.mxu0 0.0
      %3577 = vmatpush.msra.mxu0 0.0
      %3578 = vmatpush.msra.mxu0 0.0
      %3579 = vmatpush.msra.mxu0 0.0
      %3580 = vmatpush.msra.mxu0 0.0
      %3581 = vmatpush.msra.mxu0 0.0
      %3582 = vmatpush.msra.mxu0 0.0
      %3583 = vmatpush.msra.mxu0 0.0
      %3584 = vmatpush.msra.mxu0 0.0
      %3585 = vmatpush.msra.mxu0 0.0
      %3586 = vmatpush.msra.mxu0 0.0
      %3587 = vmatpush.msra.mxu0 0.0
      %3588 = vmatpush.msra.mxu0 0.0
      %3589 = vmatpush.msra.mxu0 0.0
      %3590 = vmatpush.msra.mxu0 %v638
      %3591 = vmatmul.f32.gmra.mxu0 %v3573
      %v3592 = vpop.f32.mrf.mxu0
      %v3593 = vadd.f32 0.0, %v3592
      %3594 = vdwg.mxu0
      %v3596 = vsel %vm2637, %v3289, 0
      %3598 = vmatpush.msra.mxu0 0.0
      %3599 = vmatpush.msra.mxu0 0.0
      %3600 = vmatpush.msra.mxu0 0.0
      %3601 = vmatpush.msra.mxu0 0.0
      %3602 = vmatpush.msra.mxu0 0.0
      %3603 = vmatpush.msra.mxu0 0.0
      %3604 = vmatpush.msra.mxu0 0.0
      %3605 = vmatpush.msra.mxu0 0.0
      %3606 = vmatpush.msra.mxu0 0.0
      %3607 = vmatpush.msra.mxu0 0.0
      %3608 = vmatpush.msra.mxu0 0.0
      %3609 = vmatpush.msra.mxu0 0.0
      %3610 = vmatpush.msra.mxu0 0.0
      %3611 = vmatpush.msra.mxu0 0.0
      %3612 = vmatpush.msra.mxu0 0.0
      %3613 = vmatpush.msra.mxu0 %v640
      %3614 = vmatmul.f32.gmra.mxu0 %v3596
      %v3615 = vpop.f32.mrf.mxu0
      %v3616 = vadd.f32 0.0, %v3615
      %3617 = vdwg.mxu0
      %v3619 = vsel %vm2637, %v3290, 0
      %3621 = vmatpush.msra.mxu0 0.0
      %3622 = vmatpush.msra.mxu0 0.0
      %3623 = vmatpush.msra.mxu0 0.0
      %3624 = vmatpush.msra.mxu0 0.0
      %3625 = vmatpush.msra.mxu0 0.0
      %3626 = vmatpush.msra.mxu0 0.0
      %3627 = vmatpush.msra.mxu0 0.0
      %3628 = vmatpush.msra.mxu0 0.0
      %3629 = vmatpush.msra.mxu0 0.0
      %3630 = vmatpush.msra.mxu0 0.0
      %3631 = vmatpush.msra.mxu0 0.0
      %3632 = vmatpush.msra.mxu0 0.0
      %3633 = vmatpush.msra.mxu0 0.0
      %3634 = vmatpush.msra.mxu0 0.0
      %3635 = vmatpush.msra.mxu0 0.0
      %3636 = vmatpush.msra.mxu0 %v643
      %3637 = vmatmul.f32.gmra.mxu0 %v3619
      %v3638 = vpop.f32.mrf.mxu0
      %v3639 = vadd.f32 0.0, %v3638
      %3640 = vdwg.mxu0
      %v3642 = vsel %vm2637, %v3291, 0
      %3644 = vmatpush.msra.mxu0 0.0
      %3645 = vmatpush.msra.mxu0 0.0
      %3646 = vmatpush.msra.mxu0 0.0
      %3647 = vmatpush.msra.mxu0 0.0
      %3648 = vmatpush.msra.mxu0 0.0
      %3649 = vmatpush.msra.mxu0 0.0
      %3650 = vmatpush.msra.mxu0 0.0
      %3651 = vmatpush.msra.mxu0 0.0
      %3652 = vmatpush.msra.mxu0 0.0
      %3653 = vmatpush.msra.mxu0 0.0
      %3654 = vmatpush.msra.mxu0 0.0
      %3655 = vmatpush.msra.mxu0 0.0
      %3656 = vmatpush.msra.mxu0 0.0
      %3657 = vmatpush.msra.mxu0 0.0
      %3658 = vmatpush.msra.mxu0 0.0
      %3659 = vmatpush.msra.mxu0 %v645
      %3660 = vmatmul.f32.gmra.mxu0 %v3642
      %v3661 = vpop.f32.mrf.mxu0
      %v3662 = vadd.f32 0.0, %v3661
      %3663 = vdwg.mxu0
      %v3665 = vsel %vm2637, %v3292, 0
      %3667 = vmatpush.msra.mxu0 0.0
      %3668 = vmatpush.msra.mxu0 0.0
      %3669 = vmatpush.msra.mxu0 0.0
      %3670 = vmatpush.msra.mxu0 0.0
      %3671 = vmatpush.msra.mxu0 0.0
      %3672 = vmatpush.msra.mxu0 0.0
      %3673 = vmatpush.msra.mxu0 0.0
      %3674 = vmatpush.msra.mxu0 0.0
      %3675 = vmatpush.msra.mxu0 0.0
      %3676 = vmatpush.msra.mxu0 0.0
      %3677 = vmatpush.msra.mxu0 0.0
      %3678 = vmatpush.msra.mxu0 0.0
      %3679 = vmatpush.msra.mxu0 0.0
      %3680 = vmatpush.msra.mxu0 0.0
      %3681 = vmatpush.msra.mxu0 0.0
      %3682 = vmatpush.msra.mxu0 %v648
      %3683 = vmatmul.f32.gmra.mxu0 %v3665
      %v3684 = vpop.f32.mrf.mxu0
      %v3685 = vadd.f32 0.0, %v3684
      %3686 = vdwg.mxu0
      %v3688 = vsel %vm2637, %v3293, 0
      %3690 = vmatpush.msra.mxu0 0.0
      %3691 = vmatpush.msra.mxu0 0.0
      %3692 = vmatpush.msra.mxu0 0.0
      %3693 = vmatpush.msra.mxu0 0.0
      %3694 = vmatpush.msra.mxu0 0.0
      %3695 = vmatpush.msra.mxu0 0.0
      %3696 = vmatpush.msra.mxu0 0.0
      %3697 = vmatpush.msra.mxu0 0.0
      %3698 = vmatpush.msra.mxu0 0.0
      %3699 = vmatpush.msra.mxu0 0.0
      %3700 = vmatpush.msra.mxu0 0.0
      %3701 = vmatpush.msra.mxu0 0.0
      %3702 = vmatpush.msra.mxu0 0.0
      %3703 = vmatpush.msra.mxu0 0.0
      %3704 = vmatpush.msra.mxu0 0.0
      %3705 = vmatpush.msra.mxu0 %v650
      %3706 = vmatmul.f32.gmra.mxu0 %v3688
      %v3707 = vpop.f32.mrf.mxu0
      %v3708 = vadd.f32 0.0, %v3707
      %3709 = vdwg.mxu0
      %v3711 = vsel %vm2637, %v3294, 0
      %3713 = vmatpush.msra.mxu0 0.0
      %3714 = vmatpush.msra.mxu0 0.0
      %3715 = vmatpush.msra.mxu0 0.0
      %3716 = vmatpush.msra.mxu0 0.0
      %3717 = vmatpush.msra.mxu0 0.0
      %3718 = vmatpush.msra.mxu0 0.0
      %3719 = vmatpush.msra.mxu0 0.0
      %3720 = vmatpush.msra.mxu0 0.0
      %3721 = vmatpush.msra.mxu0 0.0
      %3722 = vmatpush.msra.mxu0 0.0
      %3723 = vmatpush.msra.mxu0 0.0
      %3724 = vmatpush.msra.mxu0 0.0
      %3725 = vmatpush.msra.mxu0 0.0
      %3726 = vmatpush.msra.mxu0 0.0
      %3727 = vmatpush.msra.mxu0 0.0
      %3728 = vmatpush.msra.mxu0 %v893
      %3729 = vmatmul.f32.gmra.mxu0 %v3711
      %v3730 = vpop.f32.mrf.mxu0
      %v3731 = vadd.f32 0.0, %v3730
      %3732 = vdwg.mxu0
      %v3734 = vsel %vm2637, %v3295, 0
      %3736 = vmatpush.msra.mxu0 0.0
      %3737 = vmatpush.msra.mxu0 0.0
      %3738 = vmatpush.msra.mxu0 0.0
      %3739 = vmatpush.msra.mxu0 0.0
      %3740 = vmatpush.msra.mxu0 0.0
      %3741 = vmatpush.msra.mxu0 0.0
      %3742 = vmatpush.msra.mxu0 0.0
      %3743 = vmatpush.msra.mxu0 0.0
      %3744 = vmatpush.msra.mxu0 0.0
      %3745 = vmatpush.msra.mxu0 0.0
      %3746 = vmatpush.msra.mxu0 0.0
      %3747 = vmatpush.msra.mxu0 0.0
      %3748 = vmatpush.msra.mxu0 0.0
      %3749 = vmatpush.msra.mxu0 0.0
      %3750 = vmatpush.msra.mxu0 0.0
      %3751 = vmatpush.msra.mxu0 %v895
      %3752 = vmatmul.f32.gmra.mxu0 %v3734
      %v3753 = vpop.f32.mrf.mxu0
      %v3754 = vadd.f32 0.0, %v3753
      %3755 = vdwg.mxu0
      %v3757 = vsel %vm2637, %v3296, 0
      %3759 = vmatpush.msra.mxu0 0.0
      %3760 = vmatpush.msra.mxu0 0.0
      %3761 = vmatpush.msra.mxu0 0.0
      %3762 = vmatpush.msra.mxu0 0.0
      %3763 = vmatpush.msra.mxu0 0.0
      %3764 = vmatpush.msra.mxu0 0.0
      %3765 = vmatpush.msra.mxu0 0.0
      %3766 = vmatpush.msra.mxu0 0.0
      %3767 = vmatpush.msra.mxu0 0.0
      %3768 = vmatpush.msra.mxu0 0.0
      %3769 = vmatpush.msra.mxu0 0.0
      %3770 = vmatpush.msra.mxu0 0.0
      %3771 = vmatpush.msra.mxu0 0.0
      %3772 = vmatpush.msra.mxu0 0.0
      %3773 = vmatpush.msra.mxu0 0.0
      %3774 = vmatpush.msra.mxu0 %v897
      %3775 = vmatmul.f32.gmra.mxu0 %v3757
      %v3776 = vpop.f32.mrf.mxu0
      %v3777 = vadd.f32 0.0, %v3776
      %3778 = vdwg.mxu0
      %v3780 = vsel %vm2637, %v3297, 0
      %3782 = vmatpush.msra.mxu0 0.0
      %3783 = vmatpush.msra.mxu0 0.0
      %3784 = vmatpush.msra.mxu0 0.0
      %3785 = vmatpush.msra.mxu0 0.0
      %3786 = vmatpush.msra.mxu0 0.0
      %3787 = vmatpush.msra.mxu0 0.0
      %3788 = vmatpush.msra.mxu0 0.0
      %3789 = vmatpush.msra.mxu0 0.0
      %3790 = vmatpush.msra.mxu0 0.0
      %3791 = vmatpush.msra.mxu0 0.0
      %3792 = vmatpush.msra.mxu0 0.0
      %3793 = vmatpush.msra.mxu0 0.0
      %3794 = vmatpush.msra.mxu0 0.0
      %3795 = vmatpush.msra.mxu0 0.0
      %3796 = vmatpush.msra.mxu0 0.0
      %3797 = vmatpush.msra.mxu0 %v899
      %3798 = vmatmul.f32.gmra.mxu0 %v3780
      %v3799 = vpop.f32.mrf.mxu0
      %v3800 = vadd.f32 0.0, %v3799
      %3801 = vdwg.mxu0
      %v3803 = vsel %vm2637, %v3298, 0
      %3805 = vmatpush.msra.mxu0 0.0
      %3806 = vmatpush.msra.mxu0 0.0
      %3807 = vmatpush.msra.mxu0 0.0
      %3808 = vmatpush.msra.mxu0 0.0
      %3809 = vmatpush.msra.mxu0 0.0
      %3810 = vmatpush.msra.mxu0 0.0
      %3811 = vmatpush.msra.mxu0 0.0
      %3812 = vmatpush.msra.mxu0 0.0
      %3813 = vmatpush.msra.mxu0 0.0
      %3814 = vmatpush.msra.mxu0 0.0
      %3815 = vmatpush.msra.mxu0 0.0
      %3816 = vmatpush.msra.mxu0 0.0
      %3817 = vmatpush.msra.mxu0 0.0
      %3818 = vmatpush.msra.mxu0 0.0
      %3819 = vmatpush.msra.mxu0 0.0
      %3820 = vmatpush.msra.mxu0 %v901
      %3821 = vmatmul.f32.gmra.mxu0 %v3803
      %v3822 = vpop.f32.mrf.mxu0
      %v3823 = vadd.f32 0.0, %v3822
      %3824 = vdwg.mxu0
      %v3826 = vsel %vm2637, %v3299, 0
      %3828 = vmatpush.msra.mxu0 0.0
      %3829 = vmatpush.msra.mxu0 0.0
      %3830 = vmatpush.msra.mxu0 0.0
      %3831 = vmatpush.msra.mxu0 0.0
      %3832 = vmatpush.msra.mxu0 0.0
      %3833 = vmatpush.msra.mxu0 0.0
      %3834 = vmatpush.msra.mxu0 0.0
      %3835 = vmatpush.msra.mxu0 0.0
      %3836 = vmatpush.msra.mxu0 0.0
      %3837 = vmatpush.msra.mxu0 0.0
      %3838 = vmatpush.msra.mxu0 0.0
      %3839 = vmatpush.msra.mxu0 0.0
      %3840 = vmatpush.msra.mxu0 0.0
      %3841 = vmatpush.msra.mxu0 0.0
      %3842 = vmatpush.msra.mxu0 0.0
      %3843 = vmatpush.msra.mxu0 %v903
      %3844 = vmatmul.f32.gmra.mxu0 %v3826
      %v3845 = vpop.f32.mrf.mxu0
      %v3846 = vadd.f32 0.0, %v3845
      %3847 = vdwg.mxu0
      %v3849 = vsel %vm2637, %v3300, 0
      %3851 = vmatpush.msra.mxu0 0.0
      %3852 = vmatpush.msra.mxu0 0.0
      %3853 = vmatpush.msra.mxu0 0.0
      %3854 = vmatpush.msra.mxu0 0.0
      %3855 = vmatpush.msra.mxu0 0.0
      %3856 = vmatpush.msra.mxu0 0.0
      %3857 = vmatpush.msra.mxu0 0.0
      %3858 = vmatpush.msra.mxu0 0.0
      %3859 = vmatpush.msra.mxu0 0.0
      %3860 = vmatpush.msra.mxu0 0.0
      %3861 = vmatpush.msra.mxu0 0.0
      %3862 = vmatpush.msra.mxu0 0.0
      %3863 = vmatpush.msra.mxu0 0.0
      %3864 = vmatpush.msra.mxu0 0.0
      %3865 = vmatpush.msra.mxu0 0.0
      %3866 = vmatpush.msra.mxu0 %v905
      %3867 = vmatmul.f32.gmra.mxu0 %v3849
      %v3868 = vpop.f32.mrf.mxu0
      %v3869 = vadd.f32 0.0, %v3868
      %3870 = vdwg.mxu0
      %v3872 = vsel %vm2637, %v3301, 0
      %3874 = vmatpush.msra.mxu0 0.0
      %3875 = vmatpush.msra.mxu0 0.0
      %3876 = vmatpush.msra.mxu0 0.0
      %3877 = vmatpush.msra.mxu0 0.0
      %3878 = vmatpush.msra.mxu0 0.0
      %3879 = vmatpush.msra.mxu0 0.0
      %3880 = vmatpush.msra.mxu0 0.0
      %3881 = vmatpush.msra.mxu0 0.0
      %3882 = vmatpush.msra.mxu0 0.0
      %3883 = vmatpush.msra.mxu0 0.0
      %3884 = vmatpush.msra.mxu0 0.0
      %3885 = vmatpush.msra.mxu0 0.0
      %3886 = vmatpush.msra.mxu0 0.0
      %3887 = vmatpush.msra.mxu0 0.0
      %3888 = vmatpush.msra.mxu0 0.0
      %3889 = vmatpush.msra.mxu0 %v907
      %3890 = vmatmul.f32.gmra.mxu0 %v3872
      %v3891 = vpop.f32.mrf.mxu0
      %v3892 = vadd.f32 0.0, %v3891
      %3893 = vdwg.mxu0
      %v3895 = vsel %vm2637, %v3302, 0
      %3897 = vmatpush.msra.mxu0 0.0
      %3898 = vmatpush.msra.mxu0 0.0
      %3899 = vmatpush.msra.mxu0 0.0
      %3900 = vmatpush.msra.mxu0 0.0
      %3901 = vmatpush.msra.mxu0 0.0
      %3902 = vmatpush.msra.mxu0 0.0
      %3903 = vmatpush.msra.mxu0 0.0
      %3904 = vmatpush.msra.mxu0 0.0
      %3905 = vmatpush.msra.mxu0 0.0
      %3906 = vmatpush.msra.mxu0 0.0
      %3907 = vmatpush.msra.mxu0 0.0
      %3908 = vmatpush.msra.mxu0 0.0
      %3909 = vmatpush.msra.mxu0 0.0
      %3910 = vmatpush.msra.mxu0 0.0
      %3911 = vmatpush.msra.mxu0 0.0
      %3912 = vmatpush.msra.mxu0 %v909
      %3913 = vmatmul.f32.gmra.mxu0 %v3895
      %v3914 = vpop.f32.mrf.mxu0
      %v3915 = vadd.f32 0.0, %v3914
      %3916 = vdwg.mxu0
      %v3918 = vsel %vm2637, %v3303, 0
      %3920 = vmatpush.msra.mxu0 0.0
      %3921 = vmatpush.msra.mxu0 0.0
      %3922 = vmatpush.msra.mxu0 0.0
      %3923 = vmatpush.msra.mxu0 0.0
      %3924 = vmatpush.msra.mxu0 0.0
      %3925 = vmatpush.msra.mxu0 0.0
      %3926 = vmatpush.msra.mxu0 0.0
      %3927 = vmatpush.msra.mxu0 0.0
      %3928 = vmatpush.msra.mxu0 0.0
      %3929 = vmatpush.msra.mxu0 0.0
      %3930 = vmatpush.msra.mxu0 0.0
      %3931 = vmatpush.msra.mxu0 0.0
      %3932 = vmatpush.msra.mxu0 0.0
      %3933 = vmatpush.msra.mxu0 0.0
      %3934 = vmatpush.msra.mxu0 0.0
      %3935 = vmatpush.msra.mxu0 %v911
      %3936 = vmatmul.f32.gmra.mxu0 %v3918
      %v3937 = vpop.f32.mrf.mxu0
      %v3938 = vadd.f32 0.0, %v3937
      %3939 = vdwg.mxu0
      %v3941 = vsel %vm2637, %v3304, 0
      %3943 = vmatpush.msra.mxu0 0.0
      %3944 = vmatpush.msra.mxu0 0.0
      %3945 = vmatpush.msra.mxu0 0.0
      %3946 = vmatpush.msra.mxu0 0.0
      %3947 = vmatpush.msra.mxu0 0.0
      %3948 = vmatpush.msra.mxu0 0.0
      %3949 = vmatpush.msra.mxu0 0.0
      %3950 = vmatpush.msra.mxu0 0.0
      %3951 = vmatpush.msra.mxu0 0.0
      %3952 = vmatpush.msra.mxu0 0.0
      %3953 = vmatpush.msra.mxu0 0.0
      %3954 = vmatpush.msra.mxu0 0.0
      %3955 = vmatpush.msra.mxu0 0.0
      %3956 = vmatpush.msra.mxu0 0.0
      %3957 = vmatpush.msra.mxu0 0.0
      %3958 = vmatpush.msra.mxu0 %v913
      %3959 = vmatmul.f32.gmra.mxu0 %v3941
      %v3960 = vpop.f32.mrf.mxu0
      %v3961 = vadd.f32 0.0, %v3960
      %3962 = vdwg.mxu0
      %v3964 = vsel %vm2637, %v3305, 0
      %3966 = vmatpush.msra.mxu0 0.0
      %3967 = vmatpush.msra.mxu0 0.0
      %3968 = vmatpush.msra.mxu0 0.0
      %3969 = vmatpush.msra.mxu0 0.0
      %3970 = vmatpush.msra.mxu0 0.0
      %3971 = vmatpush.msra.mxu0 0.0
      %3972 = vmatpush.msra.mxu0 0.0
      %3973 = vmatpush.msra.mxu0 0.0
      %3974 = vmatpush.msra.mxu0 0.0
      %3975 = vmatpush.msra.mxu0 0.0
      %3976 = vmatpush.msra.mxu0 0.0
      %3977 = vmatpush.msra.mxu0 0.0
      %3978 = vmatpush.msra.mxu0 0.0
      %3979 = vmatpush.msra.mxu0 0.0
      %3980 = vmatpush.msra.mxu0 0.0
      %3981 = vmatpush.msra.mxu0 %v915
      %3982 = vmatmul.f32.gmra.mxu0 %v3964
      %v3983 = vpop.f32.mrf.mxu0
      %v3984 = vadd.f32 0.0, %v3983
      %3985 = vdwg.mxu0
      %v3987 = vsel %vm2637, %v3306, 0
      %3989 = vmatpush.msra.mxu0 0.0
      %3990 = vmatpush.msra.mxu0 0.0
      %3991 = vmatpush.msra.mxu0 0.0
      %3992 = vmatpush.msra.mxu0 0.0
      %3993 = vmatpush.msra.mxu0 0.0
      %3994 = vmatpush.msra.mxu0 0.0
      %3995 = vmatpush.msra.mxu0 0.0
      %3996 = vmatpush.msra.mxu0 0.0
      %3997 = vmatpush.msra.mxu0 0.0
      %3998 = vmatpush.msra.mxu0 0.0
      %3999 = vmatpush.msra.mxu0 0.0
      %4000 = vmatpush.msra.mxu0 0.0
      %4001 = vmatpush.msra.mxu0 0.0
      %4002 = vmatpush.msra.mxu0 0.0
      %4003 = vmatpush.msra.mxu0 0.0
      %4004 = vmatpush.msra.mxu0 %v917
      %4005 = vmatmul.f32.gmra.mxu0 %v3987
      %v4006 = vpop.f32.mrf.mxu0
      %v4007 = vadd.f32 0.0, %v4006
      %4008 = vdwg.mxu0
      %v4010 = vsel %vm2637, %v3307, 0
      %4012 = vmatpush.msra.mxu0 0.0
      %4013 = vmatpush.msra.mxu0 0.0
      %4014 = vmatpush.msra.mxu0 0.0
      %4015 = vmatpush.msra.mxu0 0.0
      %4016 = vmatpush.msra.mxu0 0.0
      %4017 = vmatpush.msra.mxu0 0.0
      %4018 = vmatpush.msra.mxu0 0.0
      %4019 = vmatpush.msra.mxu0 0.0
      %4020 = vmatpush.msra.mxu0 0.0
      %4021 = vmatpush.msra.mxu0 0.0
      %4022 = vmatpush.msra.mxu0 0.0
      %4023 = vmatpush.msra.mxu0 0.0
      %4024 = vmatpush.msra.mxu0 0.0
      %4025 = vmatpush.msra.mxu0 0.0
      %4026 = vmatpush.msra.mxu0 0.0
      %4027 = vmatpush.msra.mxu0 %v919
      %4028 = vmatmul.f32.gmra.mxu0 %v4010
      %v4029 = vpop.f32.mrf.mxu0
      %v4030 = vadd.f32 0.0, %v4029
      %4031 = vdwg.mxu0
      %v4033 = vsel %vm2637, %v3308, 0
      %4035 = vmatpush.msra.mxu0 0.0
      %4036 = vmatpush.msra.mxu0 0.0
      %4037 = vmatpush.msra.mxu0 0.0
      %4038 = vmatpush.msra.mxu0 0.0
      %4039 = vmatpush.msra.mxu0 0.0
      %4040 = vmatpush.msra.mxu0 0.0
      %4041 = vmatpush.msra.mxu0 0.0
      %4042 = vmatpush.msra.mxu0 0.0
      %4043 = vmatpush.msra.mxu0 0.0
      %4044 = vmatpush.msra.mxu0 0.0
      %4045 = vmatpush.msra.mxu0 0.0
      %4046 = vmatpush.msra.mxu0 0.0
      %4047 = vmatpush.msra.mxu0 0.0
      %4048 = vmatpush.msra.mxu0 0.0
      %4049 = vmatpush.msra.mxu0 0.0
      %4050 = vmatpush.msra.mxu0 %v921
      %4051 = vmatmul.f32.gmra.mxu0 %v4033
      %v4052 = vpop.f32.mrf.mxu0
      %v4053 = vadd.f32 0.0, %v4052
      %4054 = vdwg.mxu0
      %v4056 = vsel %vm2637, %v3309, 0
      %4058 = vmatpush.msra.mxu0 0.0
      %4059 = vmatpush.msra.mxu0 0.0
      %4060 = vmatpush.msra.mxu0 0.0
      %4061 = vmatpush.msra.mxu0 0.0
      %4062 = vmatpush.msra.mxu0 0.0
      %4063 = vmatpush.msra.mxu0 0.0
      %4064 = vmatpush.msra.mxu0 0.0
      %4065 = vmatpush.msra.mxu0 0.0
      %4066 = vmatpush.msra.mxu0 0.0
      %4067 = vmatpush.msra.mxu0 0.0
      %4068 = vmatpush.msra.mxu0 0.0
      %4069 = vmatpush.msra.mxu0 0.0
      %4070 = vmatpush.msra.mxu0 0.0
      %4071 = vmatpush.msra.mxu0 0.0
      %4072 = vmatpush.msra.mxu0 0.0
      %4073 = vmatpush.msra.mxu0 %v923
      %4074 = vmatmul.f32.gmra.mxu0 %v4056
      %v4075 = vpop.f32.mrf.mxu0
      %v4076 = vadd.f32 0.0, %v4075
      %4077 = vdwg.mxu0
      %v4079 = vsel %vm2637, %v3310, 0
      %4081 = vmatpush.msra.mxu0 0.0
      %4082 = vmatpush.msra.mxu0 0.0
      %4083 = vmatpush.msra.mxu0 0.0
      %4084 = vmatpush.msra.mxu0 0.0
      %4085 = vmatpush.msra.mxu0 0.0
      %4086 = vmatpush.msra.mxu0 0.0
      %4087 = vmatpush.msra.mxu0 0.0
      %4088 = vmatpush.msra.mxu0 0.0
      %4089 = vmatpush.msra.mxu0 0.0
      %4090 = vmatpush.msra.mxu0 0.0
      %4091 = vmatpush.msra.mxu0 0.0
      %4092 = vmatpush.msra.mxu0 0.0
      %4093 = vmatpush.msra.mxu0 0.0
      %4094 = vmatpush.msra.mxu0 0.0
      %4095 = vmatpush.msra.mxu0 0.0
      %4096 = vmatpush.msra.mxu0 %v941
      %4097 = vmatmul.f32.gmra.mxu0 %v4079
      %v4098 = vpop.f32.mrf.mxu0
      %v4099 = vadd.f32 0.0, %v4098
      %4100 = vdwg.mxu0
      %v4102 = vsel %vm2637, %v3311, 0
      %4104 = vmatpush.msra.mxu0 0.0
      %4105 = vmatpush.msra.mxu0 0.0
      %4106 = vmatpush.msra.mxu0 0.0
      %4107 = vmatpush.msra.mxu0 0.0
      %4108 = vmatpush.msra.mxu0 0.0
      %4109 = vmatpush.msra.mxu0 0.0
      %4110 = vmatpush.msra.mxu0 0.0
      %4111 = vmatpush.msra.mxu0 0.0
      %4112 = vmatpush.msra.mxu0 0.0
      %4113 = vmatpush.msra.mxu0 0.0
      %4114 = vmatpush.msra.mxu0 0.0
      %4115 = vmatpush.msra.mxu0 0.0
      %4116 = vmatpush.msra.mxu0 0.0
      %4117 = vmatpush.msra.mxu0 0.0
      %4118 = vmatpush.msra.mxu0 0.0
      %4119 = vmatpush.msra.mxu0 %v943
      %4120 = vmatmul.f32.gmra.mxu0 %v4102
      %v4121 = vpop.f32.mrf.mxu0
      %v4122 = vadd.f32 0.0, %v4121
      %4123 = vdwg.mxu0
      %v4125 = vsel %vm2637, %v3312, 0
      %4127 = vmatpush.msra.mxu0 0.0
      %4128 = vmatpush.msra.mxu0 0.0
      %4129 = vmatpush.msra.mxu0 0.0
      %4130 = vmatpush.msra.mxu0 0.0
      %4131 = vmatpush.msra.mxu0 0.0
      %4132 = vmatpush.msra.mxu0 0.0
      %4133 = vmatpush.msra.mxu0 0.0
      %4134 = vmatpush.msra.mxu0 0.0
      %4135 = vmatpush.msra.mxu0 0.0
      %4136 = vmatpush.msra.mxu0 0.0
      %4137 = vmatpush.msra.mxu0 0.0
      %4138 = vmatpush.msra.mxu0 0.0
      %4139 = vmatpush.msra.mxu0 0.0
      %4140 = vmatpush.msra.mxu0 0.0
      %4141 = vmatpush.msra.mxu0 0.0
      %4142 = vmatpush.msra.mxu0 %v945
      %4143 = vmatmul.f32.gmra.mxu0 %v4125
      %v4144 = vpop.f32.mrf.mxu0
      %v4145 = vadd.f32 0.0, %v4144
      %4146 = vdwg.mxu0
      %v4148 = vsel %vm2637, %v3313, 0
      %4150 = vmatpush.msra.mxu0 0.0
      %4151 = vmatpush.msra.mxu0 0.0
      %4152 = vmatpush.msra.mxu0 0.0
      %4153 = vmatpush.msra.mxu0 0.0
      %4154 = vmatpush.msra.mxu0 0.0
      %4155 = vmatpush.msra.mxu0 0.0
      %4156 = vmatpush.msra.mxu0 0.0
      %4157 = vmatpush.msra.mxu0 0.0
      %4158 = vmatpush.msra.mxu0 0.0
      %4159 = vmatpush.msra.mxu0 0.0
      %4160 = vmatpush.msra.mxu0 0.0
      %4161 = vmatpush.msra.mxu0 0.0
      %4162 = vmatpush.msra.mxu0 0.0
      %4163 = vmatpush.msra.mxu0 0.0
      %4164 = vmatpush.msra.mxu0 0.0
      %4165 = vmatpush.msra.mxu0 %v947
      %4166 = vmatmul.f32.gmra.mxu0 %v4148
      %v4167 = vpop.f32.mrf.mxu0
      %v4168 = vadd.f32 0.0, %v4167
      %4169 = vdwg.mxu0
      %v4171 = vsel %vm2637, %v3314, 0
      %4173 = vmatpush.msra.mxu0 0.0
      %4174 = vmatpush.msra.mxu0 0.0
      %4175 = vmatpush.msra.mxu0 0.0
      %4176 = vmatpush.msra.mxu0 0.0
      %4177 = vmatpush.msra.mxu0 0.0
      %4178 = vmatpush.msra.mxu0 0.0
      %4179 = vmatpush.msra.mxu0 0.0
      %4180 = vmatpush.msra.mxu0 0.0
      %4181 = vmatpush.msra.mxu0 0.0
      %4182 = vmatpush.msra.mxu0 0.0
      %4183 = vmatpush.msra.mxu0 0.0
      %4184 = vmatpush.msra.mxu0 0.0
      %4185 = vmatpush.msra.mxu0 0.0
      %4186 = vmatpush.msra.mxu0 0.0
      %4187 = vmatpush.msra.mxu0 0.0
      %4188 = vmatpush.msra.mxu0 %v949
      %4189 = vmatmul.f32.gmra.mxu0 %v4171
      %v4190 = vpop.f32.mrf.mxu0
      %v4191 = vadd.f32 0.0, %v4190
      %4192 = vdwg.mxu0
      %v4194 = vsel %vm2637, %v3315, 0
      %4196 = vmatpush.msra.mxu0 0.0
      %4197 = vmatpush.msra.mxu0 0.0
      %4198 = vmatpush.msra.mxu0 0.0
      %4199 = vmatpush.msra.mxu0 0.0
      %4200 = vmatpush.msra.mxu0 0.0
      %4201 = vmatpush.msra.mxu0 0.0
      %4202 = vmatpush.msra.mxu0 0.0
      %4203 = vmatpush.msra.mxu0 0.0
      %4204 = vmatpush.msra.mxu0 0.0
      %4205 = vmatpush.msra.mxu0 0.0
      %4206 = vmatpush.msra.mxu0 0.0
      %4207 = vmatpush.msra.mxu0 0.0
      %4208 = vmatpush.msra.mxu0 0.0
      %4209 = vmatpush.msra.mxu0 0.0
      %4210 = vmatpush.msra.mxu0 0.0
      %4211 = vmatpush.msra.mxu0 %v951
      %4212 = vmatmul.f32.gmra.mxu0 %v4194
      %v4213 = vpop.f32.mrf.mxu0
      %v4214 = vadd.f32 0.0, %v4213
      %4215 = vdwg.mxu0
      %v4217 = vsel %vm2637, %v3316, 0
      %4219 = vmatpush.msra.mxu0 0.0
      %4220 = vmatpush.msra.mxu0 0.0
      %4221 = vmatpush.msra.mxu0 0.0
      %4222 = vmatpush.msra.mxu0 0.0
      %4223 = vmatpush.msra.mxu0 0.0
      %4224 = vmatpush.msra.mxu0 0.0
      %4225 = vmatpush.msra.mxu0 0.0
      %4226 = vmatpush.msra.mxu0 0.0
      %4227 = vmatpush.msra.mxu0 0.0
      %4228 = vmatpush.msra.mxu0 0.0
      %4229 = vmatpush.msra.mxu0 0.0
      %4230 = vmatpush.msra.mxu0 0.0
      %4231 = vmatpush.msra.mxu0 0.0
      %4232 = vmatpush.msra.mxu0 0.0
      %4233 = vmatpush.msra.mxu0 0.0
      %4234 = vmatpush.msra.mxu0 %v953
      %4235 = vmatmul.f32.gmra.mxu0 %v4217
      %v4236 = vpop.f32.mrf.mxu0
      %v4237 = vadd.f32 0.0, %v4236
      %4238 = vdwg.mxu0
      %v4240 = vsel %vm2637, %v3317, 0
      %4242 = vmatpush.msra.mxu0 0.0
      %4243 = vmatpush.msra.mxu0 0.0
      %4244 = vmatpush.msra.mxu0 0.0
      %4245 = vmatpush.msra.mxu0 0.0
      %4246 = vmatpush.msra.mxu0 0.0
      %4247 = vmatpush.msra.mxu0 0.0
      %4248 = vmatpush.msra.mxu0 0.0
      %4249 = vmatpush.msra.mxu0 0.0
      %4250 = vmatpush.msra.mxu0 0.0
      %4251 = vmatpush.msra.mxu0 0.0
      %4252 = vmatpush.msra.mxu0 0.0
      %4253 = vmatpush.msra.mxu0 0.0
      %4254 = vmatpush.msra.mxu0 0.0
      %4255 = vmatpush.msra.mxu0 0.0
      %4256 = vmatpush.msra.mxu0 0.0
      %4257 = vmatpush.msra.mxu0 %v955
      %4258 = vmatmul.f32.gmra.mxu0 %v4240
      %v4259 = vpop.f32.mrf.mxu0
      %v4260 = vadd.f32 0.0, %v4259
      %4261 = vdwg.mxu0
      %v4263 = vsel %vm2637, %v3318, 0
      %4265 = vmatpush.msra.mxu0 0.0
      %4266 = vmatpush.msra.mxu0 0.0
      %4267 = vmatpush.msra.mxu0 0.0
      %4268 = vmatpush.msra.mxu0 0.0
      %4269 = vmatpush.msra.mxu0 0.0
      %4270 = vmatpush.msra.mxu0 0.0
      %4271 = vmatpush.msra.mxu0 0.0
      %4272 = vmatpush.msra.mxu0 0.0
      %4273 = vmatpush.msra.mxu0 0.0
      %4274 = vmatpush.msra.mxu0 0.0
      %4275 = vmatpush.msra.mxu0 0.0
      %4276 = vmatpush.msra.mxu0 0.0
      %4277 = vmatpush.msra.mxu0 0.0
      %4278 = vmatpush.msra.mxu0 0.0
      %4279 = vmatpush.msra.mxu0 0.0
      %4280 = vmatpush.msra.mxu0 %v957
      %4281 = vmatmul.f32.gmra.mxu0 %v4263
      %v4282 = vpop.f32.mrf.mxu0
      %v4283 = vadd.f32 0.0, %v4282
      %4284 = vdwg.mxu0
      %v4286 = vsel %vm2637, %v3319, 0
      %4288 = vmatpush.msra.mxu0 0.0
      %4289 = vmatpush.msra.mxu0 0.0
      %4290 = vmatpush.msra.mxu0 0.0
      %4291 = vmatpush.msra.mxu0 0.0
      %4292 = vmatpush.msra.mxu0 0.0
      %4293 = vmatpush.msra.mxu0 0.0
      %4294 = vmatpush.msra.mxu0 0.0
      %4295 = vmatpush.msra.mxu0 0.0
      %4296 = vmatpush.msra.mxu0 0.0
      %4297 = vmatpush.msra.mxu0 0.0
      %4298 = vmatpush.msra.mxu0 0.0
      %4299 = vmatpush.msra.mxu0 0.0
      %4300 = vmatpush.msra.mxu0 0.0
      %4301 = vmatpush.msra.mxu0 0.0
      %4302 = vmatpush.msra.mxu0 0.0
      %4303 = vmatpush.msra.mxu0 %v959
      %4304 = vmatmul.f32.gmra.mxu0 %v4286
      %v4305 = vpop.f32.mrf.mxu0
      %v4306 = vadd.f32 0.0, %v4305
      %4307 = vdwg.mxu0
      %v4309 = vsel %vm2637, %v3320, 0
      %4311 = vmatpush.msra.mxu0 0.0
      %4312 = vmatpush.msra.mxu0 0.0
      %4313 = vmatpush.msra.mxu0 0.0
      %4314 = vmatpush.msra.mxu0 0.0
      %4315 = vmatpush.msra.mxu0 0.0
      %4316 = vmatpush.msra.mxu0 0.0
      %4317 = vmatpush.msra.mxu0 0.0
      %4318 = vmatpush.msra.mxu0 0.0
      %4319 = vmatpush.msra.mxu0 0.0
      %4320 = vmatpush.msra.mxu0 0.0
      %4321 = vmatpush.msra.mxu0 0.0
      %4322 = vmatpush.msra.mxu0 0.0
      %4323 = vmatpush.msra.mxu0 0.0
      %4324 = vmatpush.msra.mxu0 0.0
      %4325 = vmatpush.msra.mxu0 0.0
      %4326 = vmatpush.msra.mxu0 %v961
      %4327 = vmatmul.f32.gmra.mxu0 %v4309
      %v4328 = vpop.f32.mrf.mxu0
      %v4329 = vadd.f32 0.0, %v4328
      %4330 = vdwg.mxu0
      %v4332 = vsel %vm2637, %v3321, 0
      %4334 = vmatpush.msra.mxu0 0.0
      %4335 = vmatpush.msra.mxu0 0.0
      %4336 = vmatpush.msra.mxu0 0.0
      %4337 = vmatpush.msra.mxu0 0.0
      %4338 = vmatpush.msra.mxu0 0.0
      %4339 = vmatpush.msra.mxu0 0.0
      %4340 = vmatpush.msra.mxu0 0.0
      %4341 = vmatpush.msra.mxu0 0.0
      %4342 = vmatpush.msra.mxu0 0.0
      %4343 = vmatpush.msra.mxu0 0.0
      %4344 = vmatpush.msra.mxu0 0.0
      %4345 = vmatpush.msra.mxu0 0.0
      %4346 = vmatpush.msra.mxu0 0.0
      %4347 = vmatpush.msra.mxu0 0.0
      %4348 = vmatpush.msra.mxu0 0.0
      %4349 = vmatpush.msra.mxu0 %v963
      %4350 = vmatmul.f32.gmra.mxu0 %v4332
      %v4351 = vpop.f32.mrf.mxu0
      %v4352 = vadd.f32 0.0, %v4351
      %4353 = vdwg.mxu0
      %v4355 = vsel %vm2637, %v3322, 0
      %4357 = vmatpush.msra.mxu0 0.0
      %4358 = vmatpush.msra.mxu0 0.0
      %4359 = vmatpush.msra.mxu0 0.0
      %4360 = vmatpush.msra.mxu0 0.0
      %4361 = vmatpush.msra.mxu0 0.0
      %4362 = vmatpush.msra.mxu0 0.0
      %4363 = vmatpush.msra.mxu0 0.0
      %4364 = vmatpush.msra.mxu0 0.0
      %4365 = vmatpush.msra.mxu0 0.0
      %4366 = vmatpush.msra.mxu0 0.0
      %4367 = vmatpush.msra.mxu0 0.0
      %4368 = vmatpush.msra.mxu0 0.0
      %4369 = vmatpush.msra.mxu0 0.0
      %4370 = vmatpush.msra.mxu0 0.0
      %4371 = vmatpush.msra.mxu0 0.0
      %4372 = vmatpush.msra.mxu0 %v965
      %4373 = vmatmul.f32.gmra.mxu0 %v4355
      %v4374 = vpop.f32.mrf.mxu0
      %v4375 = vadd.f32 0.0, %v4374
      %4376 = vdwg.mxu0
      %v4378 = vsel %vm2637, %v3323, 0
      %4380 = vmatpush.msra.mxu0 0.0
      %4381 = vmatpush.msra.mxu0 0.0
      %4382 = vmatpush.msra.mxu0 0.0
      %4383 = vmatpush.msra.mxu0 0.0
      %4384 = vmatpush.msra.mxu0 0.0
      %4385 = vmatpush.msra.mxu0 0.0
      %4386 = vmatpush.msra.mxu0 0.0
      %4387 = vmatpush.msra.mxu0 0.0
      %4388 = vmatpush.msra.mxu0 0.0
      %4389 = vmatpush.msra.mxu0 0.0
      %4390 = vmatpush.msra.mxu0 0.0
      %4391 = vmatpush.msra.mxu0 0.0
      %4392 = vmatpush.msra.mxu0 0.0
      %4393 = vmatpush.msra.mxu0 0.0
      %4394 = vmatpush.msra.mxu0 0.0
      %4395 = vmatpush.msra.mxu0 %v967
      %4396 = vmatmul.f32.gmra.mxu0 %v4378
      %v4397 = vpop.f32.mrf.mxu0
      %v4398 = vadd.f32 0.0, %v4397
      %4399 = vdwg.mxu0
      %v4401 = vsel %vm2637, %v3324, 0
      %4403 = vmatpush.msra.mxu0 0.0
      %4404 = vmatpush.msra.mxu0 0.0
      %4405 = vmatpush.msra.mxu0 0.0
      %4406 = vmatpush.msra.mxu0 0.0
      %4407 = vmatpush.msra.mxu0 0.0
      %4408 = vmatpush.msra.mxu0 0.0
      %4409 = vmatpush.msra.mxu0 0.0
      %4410 = vmatpush.msra.mxu0 0.0
      %4411 = vmatpush.msra.mxu0 0.0
      %4412 = vmatpush.msra.mxu0 0.0
      %4413 = vmatpush.msra.mxu0 0.0
      %4414 = vmatpush.msra.mxu0 0.0
      %4415 = vmatpush.msra.mxu0 0.0
      %4416 = vmatpush.msra.mxu0 0.0
      %4417 = vmatpush.msra.mxu0 0.0
      %4418 = vmatpush.msra.mxu0 %v969
      %4419 = vmatmul.f32.gmra.mxu0 %v4401
      %v4420 = vpop.f32.mrf.mxu0
      %v4421 = vadd.f32 0.0, %v4420
      %4422 = vdwg.mxu0
      %v4424 = vsel %vm2637, %v3325, 0
      %4426 = vmatpush.msra.mxu0 0.0
      %4427 = vmatpush.msra.mxu0 0.0
      %4428 = vmatpush.msra.mxu0 0.0
      %4429 = vmatpush.msra.mxu0 0.0
      %4430 = vmatpush.msra.mxu0 0.0
      %4431 = vmatpush.msra.mxu0 0.0
      %4432 = vmatpush.msra.mxu0 0.0
      %4433 = vmatpush.msra.mxu0 0.0
      %4434 = vmatpush.msra.mxu0 0.0
      %4435 = vmatpush.msra.mxu0 0.0
      %4436 = vmatpush.msra.mxu0 0.0
      %4437 = vmatpush.msra.mxu0 0.0
      %4438 = vmatpush.msra.mxu0 0.0
      %4439 = vmatpush.msra.mxu0 0.0
      %4440 = vmatpush.msra.mxu0 0.0
      %4441 = vmatpush.msra.mxu0 %v971
      %4442 = vmatmul.f32.gmra.mxu0 %v4424
      %v4443 = vpop.f32.mrf.mxu0
      %v4444 = vadd.f32 0.0, %v4443
      %4445 = vdwg.mxu0
      %v4447 = vsel %vm2637, %v3326, 0
      %4449 = vmatpush.msra.mxu0 0.0
      %4450 = vmatpush.msra.mxu0 0.0
      %4451 = vmatpush.msra.mxu0 0.0
      %4452 = vmatpush.msra.mxu0 0.0
      %4453 = vmatpush.msra.mxu0 0.0
      %4454 = vmatpush.msra.mxu0 0.0
      %4455 = vmatpush.msra.mxu0 0.0
      %4456 = vmatpush.msra.mxu0 0.0
      %4457 = vmatpush.msra.mxu0 0.0
      %4458 = vmatpush.msra.mxu0 0.0
      %4459 = vmatpush.msra.mxu0 0.0
      %4460 = vmatpush.msra.mxu0 0.0
      %4461 = vmatpush.msra.mxu0 0.0
      %4462 = vmatpush.msra.mxu0 0.0
      %4463 = vmatpush.msra.mxu0 0.0
      %4464 = vmatpush.msra.mxu0 %v989
      %4465 = vmatmul.f32.gmra.mxu0 %v4447
      %v4466 = vpop.f32.mrf.mxu0
      %v4467 = vadd.f32 0.0, %v4466
      %4468 = vdwg.mxu0
      %v4470 = vsel %vm2637, %v3327, 0
      %4472 = vmatpush.msra.mxu0 0.0
      %4473 = vmatpush.msra.mxu0 0.0
      %4474 = vmatpush.msra.mxu0 0.0
      %4475 = vmatpush.msra.mxu0 0.0
      %4476 = vmatpush.msra.mxu0 0.0
      %4477 = vmatpush.msra.mxu0 0.0
      %4478 = vmatpush.msra.mxu0 0.0
      %4479 = vmatpush.msra.mxu0 0.0
      %4480 = vmatpush.msra.mxu0 0.0
      %4481 = vmatpush.msra.mxu0 0.0
      %4482 = vmatpush.msra.mxu0 0.0
      %4483 = vmatpush.msra.mxu0 0.0
      %4484 = vmatpush.msra.mxu0 0.0
      %4485 = vmatpush.msra.mxu0 0.0
      %4486 = vmatpush.msra.mxu0 0.0
      %4487 = vmatpush.msra.mxu0 %v991
      %4488 = vmatmul.f32.gmra.mxu0 %v4470
      %v4489 = vpop.f32.mrf.mxu0
      %v4490 = vadd.f32 0.0, %v4489
      %4491 = vdwg.mxu0
      %v4493 = vsel %vm2637, %v3328, 0
      %4495 = vmatpush.msra.mxu0 0.0
      %4496 = vmatpush.msra.mxu0 0.0
      %4497 = vmatpush.msra.mxu0 0.0
      %4498 = vmatpush.msra.mxu0 0.0
      %4499 = vmatpush.msra.mxu0 0.0
      %4500 = vmatpush.msra.mxu0 0.0
      %4501 = vmatpush.msra.mxu0 0.0
      %4502 = vmatpush.msra.mxu0 0.0
      %4503 = vmatpush.msra.mxu0 0.0
      %4504 = vmatpush.msra.mxu0 0.0
      %4505 = vmatpush.msra.mxu0 0.0
      %4506 = vmatpush.msra.mxu0 0.0
      %4507 = vmatpush.msra.mxu0 0.0
      %4508 = vmatpush.msra.mxu0 0.0
      %4509 = vmatpush.msra.mxu0 0.0
      %4510 = vmatpush.msra.mxu0 %v993
      %4511 = vmatmul.f32.gmra.mxu0 %v4493
      %v4512 = vpop.f32.mrf.mxu0
      %v4513 = vadd.f32 0.0, %v4512
      %4514 = vdwg.mxu0
      %v4516 = vsel %vm2637, %v3329, 0
      %4518 = vmatpush.msra.mxu0 0.0
      %4519 = vmatpush.msra.mxu0 0.0
      %4520 = vmatpush.msra.mxu0 0.0
      %4521 = vmatpush.msra.mxu0 0.0
      %4522 = vmatpush.msra.mxu0 0.0
      %4523 = vmatpush.msra.mxu0 0.0
      %4524 = vmatpush.msra.mxu0 0.0
      %4525 = vmatpush.msra.mxu0 0.0
      %4526 = vmatpush.msra.mxu0 0.0
      %4527 = vmatpush.msra.mxu0 0.0
      %4528 = vmatpush.msra.mxu0 0.0
      %4529 = vmatpush.msra.mxu0 0.0
      %4530 = vmatpush.msra.mxu0 0.0
      %4531 = vmatpush.msra.mxu0 0.0
      %4532 = vmatpush.msra.mxu0 0.0
      %4533 = vmatpush.msra.mxu0 %v995
      %4534 = vmatmul.f32.gmra.mxu0 %v4516
      %v4535 = vpop.f32.mrf.mxu0
      %v4536 = vadd.f32 0.0, %v4535
      %4537 = vdwg.mxu0
      %v4539 = vsel %vm2637, %v3330, 0
      %4541 = vmatpush.msra.mxu0 0.0
      %4542 = vmatpush.msra.mxu0 0.0
      %4543 = vmatpush.msra.mxu0 0.0
      %4544 = vmatpush.msra.mxu0 0.0
      %4545 = vmatpush.msra.mxu0 0.0
      %4546 = vmatpush.msra.mxu0 0.0
      %4547 = vmatpush.msra.mxu0 0.0
      %4548 = vmatpush.msra.mxu0 0.0
      %4549 = vmatpush.msra.mxu0 0.0
      %4550 = vmatpush.msra.mxu0 0.0
      %4551 = vmatpush.msra.mxu0 0.0
      %4552 = vmatpush.msra.mxu0 0.0
      %4553 = vmatpush.msra.mxu0 0.0
      %4554 = vmatpush.msra.mxu0 0.0
      %4555 = vmatpush.msra.mxu0 0.0
      %4556 = vmatpush.msra.mxu0 %v997
      %4557 = vmatmul.f32.gmra.mxu0 %v4539
      %v4558 = vpop.f32.mrf.mxu0
      %v4559 = vadd.f32 0.0, %v4558
      %4560 = vdwg.mxu0
      %v4562 = vsel %vm2637, %v3331, 0
      %4564 = vmatpush.msra.mxu0 0.0
      %4565 = vmatpush.msra.mxu0 0.0
      %4566 = vmatpush.msra.mxu0 0.0
      %4567 = vmatpush.msra.mxu0 0.0
      %4568 = vmatpush.msra.mxu0 0.0
      %4569 = vmatpush.msra.mxu0 0.0
      %4570 = vmatpush.msra.mxu0 0.0
      %4571 = vmatpush.msra.mxu0 0.0
      %4572 = vmatpush.msra.mxu0 0.0
      %4573 = vmatpush.msra.mxu0 0.0
      %4574 = vmatpush.msra.mxu0 0.0
      %4575 = vmatpush.msra.mxu0 0.0
      %4576 = vmatpush.msra.mxu0 0.0
      %4577 = vmatpush.msra.mxu0 0.0
      %4578 = vmatpush.msra.mxu0 0.0
      %4579 = vmatpush.msra.mxu0 %v999
      %4580 = vmatmul.f32.gmra.mxu0 %v4562
      %v4581 = vpop.f32.mrf.mxu0
      %v4582 = vadd.f32 0.0, %v4581
      %4583 = vdwg.mxu0
      %v4585 = vsel %vm2637, %v3332, 0
      %4587 = vmatpush.msra.mxu0 0.0
      %4588 = vmatpush.msra.mxu0 0.0
      %4589 = vmatpush.msra.mxu0 0.0
      %4590 = vmatpush.msra.mxu0 0.0
      %4591 = vmatpush.msra.mxu0 0.0
      %4592 = vmatpush.msra.mxu0 0.0
      %4593 = vmatpush.msra.mxu0 0.0
      %4594 = vmatpush.msra.mxu0 0.0
      %4595 = vmatpush.msra.mxu0 0.0
      %4596 = vmatpush.msra.mxu0 0.0
      %4597 = vmatpush.msra.mxu0 0.0
      %4598 = vmatpush.msra.mxu0 0.0
      %4599 = vmatpush.msra.mxu0 0.0
      %4600 = vmatpush.msra.mxu0 0.0
      %4601 = vmatpush.msra.mxu0 0.0
      %4602 = vmatpush.msra.mxu0 %v1001
      %4603 = vmatmul.f32.gmra.mxu0 %v4585
      %v4604 = vpop.f32.mrf.mxu0
      %v4605 = vadd.f32 0.0, %v4604
      %4606 = vdwg.mxu0
      %v4608 = vsel %vm2637, %v3333, 0
      %4610 = vmatpush.msra.mxu0 0.0
      %4611 = vmatpush.msra.mxu0 0.0
      %4612 = vmatpush.msra.mxu0 0.0
      %4613 = vmatpush.msra.mxu0 0.0
      %4614 = vmatpush.msra.mxu0 0.0
      %4615 = vmatpush.msra.mxu0 0.0
      %4616 = vmatpush.msra.mxu0 0.0
      %4617 = vmatpush.msra.mxu0 0.0
      %4618 = vmatpush.msra.mxu0 0.0
      %4619 = vmatpush.msra.mxu0 0.0
      %4620 = vmatpush.msra.mxu0 0.0
      %4621 = vmatpush.msra.mxu0 0.0
      %4622 = vmatpush.msra.mxu0 0.0
      %4623 = vmatpush.msra.mxu0 0.0
      %4624 = vmatpush.msra.mxu0 0.0
      %4625 = vmatpush.msra.mxu0 %v1003
      %4626 = vmatmul.f32.gmra.mxu0 %v4608
      %v4627 = vpop.f32.mrf.mxu0
      %v4628 = vadd.f32 0.0, %v4627
      %4629 = vdwg.mxu0
      %v4631 = vsel %vm2637, %v3334, 0
      %4633 = vmatpush.msra.mxu0 0.0
      %4634 = vmatpush.msra.mxu0 0.0
      %4635 = vmatpush.msra.mxu0 0.0
      %4636 = vmatpush.msra.mxu0 0.0
      %4637 = vmatpush.msra.mxu0 0.0
      %4638 = vmatpush.msra.mxu0 0.0
      %4639 = vmatpush.msra.mxu0 0.0
      %4640 = vmatpush.msra.mxu0 0.0
      %4641 = vmatpush.msra.mxu0 0.0
      %4642 = vmatpush.msra.mxu0 0.0
      %4643 = vmatpush.msra.mxu0 0.0
      %4644 = vmatpush.msra.mxu0 0.0
      %4645 = vmatpush.msra.mxu0 0.0
      %4646 = vmatpush.msra.mxu0 0.0
      %4647 = vmatpush.msra.mxu0 0.0
      %4648 = vmatpush.msra.mxu0 %v1005
      %4649 = vmatmul.f32.gmra.mxu0 %v4631
      %v4650 = vpop.f32.mrf.mxu0
      %v4651 = vadd.f32 0.0, %v4650
      %4652 = vdwg.mxu0
      %v4654 = vsel %vm2637, %v3335, 0
      %4656 = vmatpush.msra.mxu0 0.0
      %4657 = vmatpush.msra.mxu0 0.0
      %4658 = vmatpush.msra.mxu0 0.0
      %4659 = vmatpush.msra.mxu0 0.0
      %4660 = vmatpush.msra.mxu0 0.0
      %4661 = vmatpush.msra.mxu0 0.0
      %4662 = vmatpush.msra.mxu0 0.0
      %4663 = vmatpush.msra.mxu0 0.0
      %4664 = vmatpush.msra.mxu0 0.0
      %4665 = vmatpush.msra.mxu0 0.0
      %4666 = vmatpush.msra.mxu0 0.0
      %4667 = vmatpush.msra.mxu0 0.0
      %4668 = vmatpush.msra.mxu0 0.0
      %4669 = vmatpush.msra.mxu0 0.0
      %4670 = vmatpush.msra.mxu0 0.0
      %4671 = vmatpush.msra.mxu0 %v1007
      %4672 = vmatmul.f32.gmra.mxu0 %v4654
      %v4673 = vpop.f32.mrf.mxu0
      %v4674 = vadd.f32 0.0, %v4673
      %4675 = vdwg.mxu0
      %v4677 = vsel %vm2637, %v3336, 0
      %4679 = vmatpush.msra.mxu0 0.0
      %4680 = vmatpush.msra.mxu0 0.0
      %4681 = vmatpush.msra.mxu0 0.0
      %4682 = vmatpush.msra.mxu0 0.0
      %4683 = vmatpush.msra.mxu0 0.0
      %4684 = vmatpush.msra.mxu0 0.0
      %4685 = vmatpush.msra.mxu0 0.0
      %4686 = vmatpush.msra.mxu0 0.0
      %4687 = vmatpush.msra.mxu0 0.0
      %4688 = vmatpush.msra.mxu0 0.0
      %4689 = vmatpush.msra.mxu0 0.0
      %4690 = vmatpush.msra.mxu0 0.0
      %4691 = vmatpush.msra.mxu0 0.0
      %4692 = vmatpush.msra.mxu0 0.0
      %4693 = vmatpush.msra.mxu0 0.0
      %4694 = vmatpush.msra.mxu0 %v1009
      %4695 = vmatmul.f32.gmra.mxu0 %v4677
      %v4696 = vpop.f32.mrf.mxu0
      %v4697 = vadd.f32 0.0, %v4696
      %4698 = vdwg.mxu0
      %v4700 = vsel %vm2637, %v3337, 0
      %4702 = vmatpush.msra.mxu0 0.0
      %4703 = vmatpush.msra.mxu0 0.0
      %4704 = vmatpush.msra.mxu0 0.0
      %4705 = vmatpush.msra.mxu0 0.0
      %4706 = vmatpush.msra.mxu0 0.0
      %4707 = vmatpush.msra.mxu0 0.0
      %4708 = vmatpush.msra.mxu0 0.0
      %4709 = vmatpush.msra.mxu0 0.0
      %4710 = vmatpush.msra.mxu0 0.0
      %4711 = vmatpush.msra.mxu0 0.0
      %4712 = vmatpush.msra.mxu0 0.0
      %4713 = vmatpush.msra.mxu0 0.0
      %4714 = vmatpush.msra.mxu0 0.0
      %4715 = vmatpush.msra.mxu0 0.0
      %4716 = vmatpush.msra.mxu0 0.0
      %4717 = vmatpush.msra.mxu0 %v1011
      %4718 = vmatmul.f32.gmra.mxu0 %v4700
      %v4719 = vpop.f32.mrf.mxu0
      %v4720 = vadd.f32 0.0, %v4719
      %4721 = vdwg.mxu0
      %v4723 = vsel %vm2637, %v3338, 0
      %4725 = vmatpush.msra.mxu0 0.0
      %4726 = vmatpush.msra.mxu0 0.0
      %4727 = vmatpush.msra.mxu0 0.0
      %4728 = vmatpush.msra.mxu0 0.0
      %4729 = vmatpush.msra.mxu0 0.0
      %4730 = vmatpush.msra.mxu0 0.0
      %4731 = vmatpush.msra.mxu0 0.0
      %4732 = vmatpush.msra.mxu0 0.0
      %4733 = vmatpush.msra.mxu0 0.0
      %4734 = vmatpush.msra.mxu0 0.0
      %4735 = vmatpush.msra.mxu0 0.0
      %4736 = vmatpush.msra.mxu0 0.0
      %4737 = vmatpush.msra.mxu0 0.0
      %4738 = vmatpush.msra.mxu0 0.0
      %4739 = vmatpush.msra.mxu0 0.0
      %4740 = vmatpush.msra.mxu0 %v1013
      %4741 = vmatmul.f32.gmra.mxu0 %v4723
      %v4742 = vpop.f32.mrf.mxu0
      %v4743 = vadd.f32 0.0, %v4742
      %4744 = vdwg.mxu0
      %v4746 = vsel %vm2637, %v3339, 0
      %4748 = vmatpush.msra.mxu0 0.0
      %4749 = vmatpush.msra.mxu0 0.0
      %4750 = vmatpush.msra.mxu0 0.0
      %4751 = vmatpush.msra.mxu0 0.0
      %4752 = vmatpush.msra.mxu0 0.0
      %4753 = vmatpush.msra.mxu0 0.0
      %4754 = vmatpush.msra.mxu0 0.0
      %4755 = vmatpush.msra.mxu0 0.0
      %4756 = vmatpush.msra.mxu0 0.0
      %4757 = vmatpush.msra.mxu0 0.0
      %4758 = vmatpush.msra.mxu0 0.0
      %4759 = vmatpush.msra.mxu0 0.0
      %4760 = vmatpush.msra.mxu0 0.0
      %4761 = vmatpush.msra.mxu0 0.0
      %4762 = vmatpush.msra.mxu0 0.0
      %4763 = vmatpush.msra.mxu0 %v1015
      %4764 = vmatmul.f32.gmra.mxu0 %v4746
      %v4765 = vpop.f32.mrf.mxu0
      %v4766 = vadd.f32 0.0, %v4765
      %4767 = vdwg.mxu0
      %v4769 = vsel %vm2637, %v3340, 0
      %4771 = vmatpush.msra.mxu0 0.0
      %4772 = vmatpush.msra.mxu0 0.0
      %4773 = vmatpush.msra.mxu0 0.0
      %4774 = vmatpush.msra.mxu0 0.0
      %4775 = vmatpush.msra.mxu0 0.0
      %4776 = vmatpush.msra.mxu0 0.0
      %4777 = vmatpush.msra.mxu0 0.0
      %4778 = vmatpush.msra.mxu0 0.0
      %4779 = vmatpush.msra.mxu0 0.0
      %4780 = vmatpush.msra.mxu0 0.0
      %4781 = vmatpush.msra.mxu0 0.0
      %4782 = vmatpush.msra.mxu0 0.0
      %4783 = vmatpush.msra.mxu0 0.0
      %4784 = vmatpush.msra.mxu0 0.0
      %4785 = vmatpush.msra.mxu0 0.0
      %4786 = vmatpush.msra.mxu0 %v1017
      %4787 = vmatmul.f32.gmra.mxu0 %v4769
      %v4788 = vpop.f32.mrf.mxu0
      %v4789 = vadd.f32 0.0, %v4788
      %4790 = vdwg.mxu0
      %v4792 = vsel %vm2637, %v3341, 0
      %4794 = vmatpush.msra.mxu0 0.0
      %4795 = vmatpush.msra.mxu0 0.0
      %4796 = vmatpush.msra.mxu0 0.0
      %4797 = vmatpush.msra.mxu0 0.0
      %4798 = vmatpush.msra.mxu0 0.0
      %4799 = vmatpush.msra.mxu0 0.0
      %4800 = vmatpush.msra.mxu0 0.0
      %4801 = vmatpush.msra.mxu0 0.0
      %4802 = vmatpush.msra.mxu0 0.0
      %4803 = vmatpush.msra.mxu0 0.0
      %4804 = vmatpush.msra.mxu0 0.0
      %4805 = vmatpush.msra.mxu0 0.0
      %4806 = vmatpush.msra.mxu0 0.0
      %4807 = vmatpush.msra.mxu0 0.0
      %4808 = vmatpush.msra.mxu0 0.0
      %4809 = vmatpush.msra.mxu0 %v1019
      %4810 = vmatmul.f32.gmra.mxu0 %v4792
      %v4811 = vpop.f32.mrf.mxu0
      %v4812 = vadd.f32 0.0, %v4811
      %4813 = vdwg.mxu0
      %4830 = vrot.lane.b32.xlu0 %v3731, 4
      %v4831 = vpop.permute.xlu0 %4830
      %4832 = vrot.lane.b32.xlu0 %v3754, 4
      %v4833 = vpop.permute.xlu0 %4832
      %4834 = vrot.lane.b32.xlu0 %v3777, 4
      %v4835 = vpop.permute.xlu0 %4834
      %4836 = vrot.lane.b32.xlu0 %v3800, 4
      %v4837 = vpop.permute.xlu0 %4836
      %4838 = vrot.lane.b32.xlu0 %v3823, 4
      %v4839 = vpop.permute.xlu0 %4838
      %4840 = vrot.lane.b32.xlu0 %v3846, 4
      %v4841 = vpop.permute.xlu0 %4840
      %4842 = vrot.lane.b32.xlu0 %v3869, 4
      %v4843 = vpop.permute.xlu0 %4842
      %4844 = vrot.lane.b32.xlu0 %v3892, 4
      %v4845 = vpop.permute.xlu0 %4844
      %4846 = vrot.lane.b32.xlu0 %v3915, 4
      %v4847 = vpop.permute.xlu0 %4846
      %4848 = vrot.lane.b32.xlu0 %v3938, 4
      %v4849 = vpop.permute.xlu0 %4848
      %4850 = vrot.lane.b32.xlu0 %v3961, 4
      %v4851 = vpop.permute.xlu0 %4850
      %4852 = vrot.lane.b32.xlu0 %v3984, 4
      %v4853 = vpop.permute.xlu0 %4852
      %4854 = vrot.lane.b32.xlu0 %v4007, 4
      %v4855 = vpop.permute.xlu0 %4854
      %4856 = vrot.lane.b32.xlu0 %v4030, 4
      %v4857 = vpop.permute.xlu0 %4856
      %4858 = vrot.lane.b32.xlu0 %v4053, 4
      %v4859 = vpop.permute.xlu0 %4858
      %4860 = vrot.lane.b32.xlu0 %v4076, 4
      %v4861 = vpop.permute.xlu0 %4860
      %4894 = vrot.lane.b32.xlu0 %v4099, 8
      %v4895 = vpop.permute.xlu0 %4894
      %4896 = vrot.lane.b32.xlu0 %v4122, 8
      %v4897 = vpop.permute.xlu0 %4896
      %4898 = vrot.lane.b32.xlu0 %v4145, 8
      %v4899 = vpop.permute.xlu0 %4898
      %4900 = vrot.lane.b32.xlu0 %v4168, 8
      %v4901 = vpop.permute.xlu0 %4900
      %4902 = vrot.lane.b32.xlu0 %v4191, 8
      %v4903 = vpop.permute.xlu0 %4902
      %4904 = vrot.lane.b32.xlu0 %v4214, 8
      %v4905 = vpop.permute.xlu0 %4904
      %4906 = vrot.lane.b32.xlu0 %v4237, 8
      %v4907 = vpop.permute.xlu0 %4906
      %4908 = vrot.lane.b32.xlu0 %v4260, 8
      %v4909 = vpop.permute.xlu0 %4908
      %4910 = vrot.lane.b32.xlu0 %v4283, 8
      %v4911 = vpop.permute.xlu0 %4910
      %4912 = vrot.lane.b32.xlu0 %v4306, 8
      %v4913 = vpop.permute.xlu0 %4912
      %4914 = vrot.lane.b32.xlu0 %v4329, 8
      %v4915 = vpop.permute.xlu0 %4914
      %4916 = vrot.lane.b32.xlu0 %v4352, 8
      %v4917 = vpop.permute.xlu0 %4916
      %4918 = vrot.lane.b32.xlu0 %v4375, 8
      %v4919 = vpop.permute.xlu0 %4918
      %4920 = vrot.lane.b32.xlu0 %v4398, 8
      %v4921 = vpop.permute.xlu0 %4920
      %4922 = vrot.lane.b32.xlu0 %v4421, 8
      %v4923 = vpop.permute.xlu0 %4922
      %4924 = vrot.lane.b32.xlu0 %v4444, 8
      %v4925 = vpop.permute.xlu0 %4924
      %4958 = vrot.lane.b32.xlu0 %v4467, 12
      %v4959 = vpop.permute.xlu0 %4958
      %4960 = vrot.lane.b32.xlu0 %v4490, 12
      %v4961 = vpop.permute.xlu0 %4960
      %4962 = vrot.lane.b32.xlu0 %v4513, 12
      %v4963 = vpop.permute.xlu0 %4962
      %4964 = vrot.lane.b32.xlu0 %v4536, 12
      %v4965 = vpop.permute.xlu0 %4964
      %4966 = vrot.lane.b32.xlu0 %v4559, 12
      %v4967 = vpop.permute.xlu0 %4966
      %4968 = vrot.lane.b32.xlu0 %v4582, 12
      %v4969 = vpop.permute.xlu0 %4968
      %4970 = vrot.lane.b32.xlu0 %v4605, 12
      %v4971 = vpop.permute.xlu0 %4970
      %4972 = vrot.lane.b32.xlu0 %v4628, 12
      %v4973 = vpop.permute.xlu0 %4972
      %4974 = vrot.lane.b32.xlu0 %v4651, 12
      %v4975 = vpop.permute.xlu0 %4974
      %4976 = vrot.lane.b32.xlu0 %v4674, 12
      %v4977 = vpop.permute.xlu0 %4976
      %4978 = vrot.lane.b32.xlu0 %v4697, 12
      %v4979 = vpop.permute.xlu0 %4978
      %4980 = vrot.lane.b32.xlu0 %v4720, 12
      %v4981 = vpop.permute.xlu0 %4980
      %4982 = vrot.lane.b32.xlu0 %v4743, 12
      %v4983 = vpop.permute.xlu0 %4982
      %4984 = vrot.lane.b32.xlu0 %v4766, 12
      %v4985 = vpop.permute.xlu0 %4984
      %4986 = vrot.lane.b32.xlu0 %v4789, 12
      %v4987 = vpop.permute.xlu0 %4986
      %4988 = vrot.lane.b32.xlu0 %v4812, 12
      %v4989 = vpop.permute.xlu0 %4988
      %v5006 = vsel %vm1036, %v3363, %v4831
      %v5007 = vsel %vm1036, %v3386, %v4833
      %v5008 = vsel %vm1036, %v3409, %v4835
      %v5009 = vsel %vm1036, %v3432, %v4837
      %v5010 = vsel %vm1036, %v3455, %v4839
      %v5011 = vsel %vm1036, %v3478, %v4841
      %v5012 = vsel %vm1036, %v3501, %v4843
      %v5013 = vsel %vm1036, %v3524, %v4845
      %v5014 = vsel %vm1036, %v3547, %v4847
      %v5015 = vsel %vm1036, %v3570, %v4849
      %v5016 = vsel %vm1036, %v3593, %v4851
      %v5017 = vsel %vm1036, %v3616, %v4853
      %v5018 = vsel %vm1036, %v3639, %v4855
      %v5019 = vsel %vm1036, %v3662, %v4857
      %v5020 = vsel %vm1036, %v3685, %v4859
      %v5021 = vsel %vm1036, %v3708, %v4861
      %v5022 = vsel %vm2637, %v5006, %v4895
      %v5023 = vsel %vm2637, %v5007, %v4897
      %v5024 = vsel %vm2637, %v5008, %v4899
      %v5025 = vsel %vm2637, %v5009, %v4901
      %v5026 = vsel %vm2637, %v5010, %v4903
      %v5027 = vsel %vm2637, %v5011, %v4905
      %v5028 = vsel %vm2637, %v5012, %v4907
      %v5029 = vsel %vm2637, %v5013, %v4909
      %v5030 = vsel %vm2637, %v5014, %v4911
      %v5031 = vsel %vm2637, %v5015, %v4913
      %v5032 = vsel %vm2637, %v5016, %v4915
      %v5033 = vsel %vm2637, %v5017, %v4917
      %v5034 = vsel %vm2637, %v5018, %v4919
      %v5035 = vsel %vm2637, %v5019, %v4921
      %v5036 = vsel %vm2637, %v5020, %v4923
      %v5037 = vsel %vm2637, %v5021, %v4925
      %vm5038 = vcmask 97280
      %v5039 = vsel %vm5038, %v5022, %v4959
      %v5040 = vsel %vm5038, %v5023, %v4961
      %v5041 = vsel %vm5038, %v5024, %v4963
      %v5042 = vsel %vm5038, %v5025, %v4965
      %v5043 = vsel %vm5038, %v5026, %v4967
      %v5044 = vsel %vm5038, %v5027, %v4969
      %v5045 = vsel %vm5038, %v5028, %v4971
      %v5046 = vsel %vm5038, %v5029, %v4973
      %v5047 = vsel %vm5038, %v5030, %v4975
      %v5048 = vsel %vm5038, %v5031, %v4977
      %v5049 = vsel %vm5038, %v5032, %v4979
      %v5050 = vsel %vm5038, %v5033, %v4981
      %v5051 = vsel %vm5038, %v5034, %v4983
      %v5052 = vsel %vm5038, %v5035, %v4985
      %v5053 = vsel %vm5038, %v5036, %v4987
      %v5054 = vsel %vm5038, %v5037, %v4989
      %v5055 = vpack.c.bf16 %v5039, %v5039
      %v5056 = vpack.c.bf16 %v5040, %v5040
      %v5057 = vpack.c.bf16 %v5041, %v5041
      %v5058 = vpack.c.bf16 %v5042, %v5042
      %v5059 = vpack.c.bf16 %v5043, %v5043
      %v5060 = vpack.c.bf16 %v5044, %v5044
      %v5061 = vpack.c.bf16 %v5045, %v5045
      %v5062 = vpack.c.bf16 %v5046, %v5046
      %v5063 = vpack.c.bf16 %v5047, %v5047
      %v5064 = vpack.c.bf16 %v5048, %v5048
      %v5065 = vpack.c.bf16 %v5049, %v5049
      %v5066 = vpack.c.bf16 %v5050, %v5050
      %v5067 = vpack.c.bf16 %v5051, %v5051
      %v5068 = vpack.c.bf16 %v5052, %v5052
      %v5069 = vpack.c.bf16 %v5053, %v5053
      %v5070 = vpack.c.bf16 %v5054, %v5054
      %v5071 = vld [vmem:[%s7] sm:$0xf]
      %v5072 = vld [vmem:[%s7 + $0x4] sm:$0xf]
      %v5073 = vld [vmem:[%s8] sm:$0x1]
      %v5075 = vperm.slane %v5073, 0
      %v5093 = vunpack.c.l.b16 %v5055
      %v5094 = vunpack.c.l.b16 %v5056
      %v5095 = vunpack.c.l.b16 %v5057
      %v5096 = vunpack.c.l.b16 %v5058
      %v5097 = vunpack.c.l.b16 %v5059
      %v5098 = vunpack.c.l.b16 %v5060
      %v5099 = vunpack.c.l.b16 %v5061
      %v5100 = vunpack.c.l.b16 %v5062
      %v5101 = vunpack.c.l.b16 %v5063
      %v5102 = vunpack.c.l.b16 %v5064
      %v5103 = vunpack.c.l.b16 %v5065
      %v5104 = vunpack.c.l.b16 %v5066
      %v5105 = vunpack.c.l.b16 %v5067
      %v5106 = vunpack.c.l.b16 %v5068
      %v5107 = vunpack.c.l.b16 %v5069
      %v5108 = vunpack.c.l.b16 %v5070
      %v5109 = vpack.c.b16 %v5094, %v5093
      %v5110 = vpack.c.b16 %v5096, %v5095
      %v5111 = vpack.c.b16 %v5098, %v5097
      %v5112 = vpack.c.b16 %v5100, %v5099
      %v5113 = vpack.c.b16 %v5102, %v5101
      %v5114 = vpack.c.b16 %v5104, %v5103
      %v5115 = vpack.c.b16 %v5106, %v5105
      %v5116 = vpack.c.b16 %v5108, %v5107
      %v5119 = vunpack.c.l.b16 %v5071
      %v5120 = vunpack.c.l.b16 %v5072
      %v5121 = vpack.c.b16 %v5120, %v5119
      %vm5123 = vcmask 130048
      %v5125 = vsel %vm5123, %v5109, 0
      %v5128 = vsel %vm5123, %v5110, 0
      %v5131 = vsel %vm5123, %v5111, 0
      %v5134 = vsel %vm5123, %v5112, 0
      %v5137 = vsel %vm5123, %v5113, 0
      %v5140 = vsel %vm5123, %v5114, 0
      %v5143 = vsel %vm5123, %v5115, 0
      %v5146 = vsel %vm5123, %v5116, 0
      %5148 = vmatpush.bf16.msra.mxu0 0
      %5149 = vmatpush.bf16.msra.mxu0 0
      %5150 = vmatpush.bf16.msra.mxu0 0
      %5151 = vmatpush.bf16.msra.mxu0 0
      %5152 = vmatpush.bf16.msra.mxu0 0
      %5153 = vmatpush.bf16.msra.mxu0 0
      %5154 = vmatpush.bf16.msra.mxu0 0
      %5155 = vmatpush.bf16.msra.mxu0 %v5121
      %5156 = vmatmul.bf16.gmra.mxu0 %v5125
      %v5157 = vpop.f32.mrf.mxu0
      %v5158 = vadd.f32 %v5075, %v5157
      %v5159 = vpop.f32.mrf.mxu0
      %v5160 = vadd.f32 %v5075, %v5159
      %5161 = vmatmul.bf16.gmra.mxu0 %v5128
      %v5162 = vpop.f32.mrf.mxu0
      %v5163 = vadd.f32 %v5075, %v5162
      %v5164 = vpop.f32.mrf.mxu0
      %v5165 = vadd.f32 %v5075, %v5164
      %5166 = vmatmul.bf16.gmra.mxu0 %v5131
      %v5167 = vpop.f32.mrf.mxu0
      %v5168 = vadd.f32 %v5075, %v5167
      %v5169 = vpop.f32.mrf.mxu0
      %v5170 = vadd.f32 %v5075, %v5169
      %5171 = vmatmul.bf16.gmra.mxu0 %v5134
      %v5172 = vpop.f32.mrf.mxu0
      %v5173 = vadd.f32 %v5075, %v5172
      %v5174 = vpop.f32.mrf.mxu0
      %v5175 = vadd.f32 %v5075, %v5174
      %5176 = vmatmul.bf16.gmra.mxu0 %v5137
      %v5177 = vpop.f32.mrf.mxu0
      %v5178 = vadd.f32 %v5075, %v5177
      %v5179 = vpop.f32.mrf.mxu0
      %v5180 = vadd.f32 %v5075, %v5179
      %5181 = vmatmul.bf16.gmra.mxu0 %v5140
      %v5182 = vpop.f32.mrf.mxu0
      %v5183 = vadd.f32 %v5075, %v5182
      %v5184 = vpop.f32.mrf.mxu0
      %v5185 = vadd.f32 %v5075, %v5184
      %5186 = vmatmul.bf16.gmra.mxu0 %v5143
      %v5187 = vpop.f32.mrf.mxu0
      %v5188 = vadd.f32 %v5075, %v5187
      %v5189 = vpop.f32.mrf.mxu0
      %v5190 = vadd.f32 %v5075, %v5189
      %5191 = vmatmul.bf16.gmra.mxu0 %v5146
      %v5192 = vpop.f32.mrf.mxu0
      %v5193 = vadd.f32 %v5075, %v5192
      %v5194 = vpop.f32.mrf.mxu0
      %v5195 = vadd.f32 %v5075, %v5194
      %5196 = vdwg.mxu0
      %v5197 = vtanh.pop %v5158
      %v5198 = vtanh.pop %v5160
      %v5199 = vtanh.pop %v5163
      %v5200 = vtanh.pop %v5165
      %v5201 = vtanh.pop %v5168
      %v5202 = vtanh.pop %v5170
      %v5203 = vtanh.pop %v5173
      %v5204 = vtanh.pop %v5175
      %v5205 = vtanh.pop %v5178
      %v5206 = vtanh.pop %v5180
      %v5207 = vtanh.pop %v5183
      %v5208 = vtanh.pop %v5185
      %v5209 = vtanh.pop %v5188
      %v5210 = vtanh.pop %v5190
      %v5211 = vtanh.pop %v5193
      %v5212 = vtanh.pop %v5195
      %v5213 = vld [vmem:[%s9] sm:$0x1]
      %v5215 = vperm.slane %v5213, 0
      %v5217 = vmul.f32 %v5197, %v5215
      %v5218 = vmul.f32 %v5198, %v5215
      %v5219 = vmul.f32 %v5199, %v5215
      %v5220 = vmul.f32 %v5200, %v5215
      %v5221 = vmul.f32 %v5201, %v5215
      %v5222 = vmul.f32 %v5202, %v5215
      %v5223 = vmul.f32 %v5203, %v5215
      %v5224 = vmul.f32 %v5204, %v5215
      %v5225 = vmul.f32 %v5205, %v5215
      %v5226 = vmul.f32 %v5206, %v5215
      %v5227 = vmul.f32 %v5207, %v5215
      %v5228 = vmul.f32 %v5208, %v5215
      %v5229 = vmul.f32 %v5209, %v5215
      %v5230 = vmul.f32 %v5210, %v5215
      %v5231 = vmul.f32 %v5211, %v5215
      %v5232 = vmul.f32 %v5212, %v5215
      %v5233 = vsel %vm440, %v5217, 0.0
      %5234 = vadd.xlane.f32.xlu0 %v5233
      %v5235 = vpop.xlane.xlu0 %5234
      %v5236 = vsel %vm440, %v5218, 0.0
      %5237 = vadd.xlane.f32.xlu0 %v5236
      %v5238 = vpop.xlane.xlu0 %5237
      %v5239 = vsel %vm440, %v5219, 0.0
      %5240 = vadd.xlane.f32.xlu0 %v5239
      %v5241 = vpop.xlane.xlu0 %5240
      %v5242 = vsel %vm440, %v5220, 0.0
      %5243 = vadd.xlane.f32.xlu0 %v5242
      %v5244 = vpop.xlane.xlu0 %5243
      %v5245 = vsel %vm440, %v5221, 0.0
      %5246 = vadd.xlane.f32.xlu0 %v5245
      %v5247 = vpop.xlane.xlu0 %5246
      %v5248 = vsel %vm440, %v5222, 0.0
      %5249 = vadd.xlane.f32.xlu0 %v5248
      %v5250 = vpop.xlane.xlu0 %5249
      %v5251 = vsel %vm440, %v5223, 0.0
      %5252 = vadd.xlane.f32.xlu0 %v5251
      %v5253 = vpop.xlane.xlu0 %5252
      %v5254 = vsel %vm440, %v5224, 0.0
      %5255 = vadd.xlane.f32.xlu0 %v5254
      %v5256 = vpop.xlane.xlu0 %5255
      %v5257 = vsel %vm440, %v5225, 0.0
      %5258 = vadd.xlane.f32.xlu0 %v5257
      %v5259 = vpop.xlane.xlu0 %5258
      %v5260 = vsel %vm440, %v5226, 0.0
      %5261 = vadd.xlane.f32.xlu0 %v5260
      %v5262 = vpop.xlane.xlu0 %5261
      %v5263 = vsel %vm440, %v5227, 0.0
      %5264 = vadd.xlane.f32.xlu0 %v5263
      %v5265 = vpop.xlane.xlu0 %5264
      %v5266 = vsel %vm440, %v5228, 0.0
      %5267 = vadd.xlane.f32.xlu0 %v5266
      %v5268 = vpop.xlane.xlu0 %5267
      %v5269 = vsel %vm440, %v5229, 0.0
      %5270 = vadd.xlane.f32.xlu0 %v5269
      %v5271 = vpop.xlane.xlu0 %5270
      %v5272 = vsel %vm440, %v5230, 0.0
      %5273 = vadd.xlane.f32.xlu0 %v5272
      %v5274 = vpop.xlane.xlu0 %5273
      %v5275 = vsel %vm440, %v5231, 0.0
      %5276 = vadd.xlane.f32.xlu0 %v5275
      %v5277 = vpop.xlane.xlu0 %5276
      %v5278 = vsel %vm440, %v5232, 0.0
      %5279 = vadd.xlane.f32.xlu0 %v5278
      %v5280 = vpop.xlane.xlu0 %5279
      %v5297 = vlaneseq
      %v5298 = vand.u32 %v5297, 127
      %v5299 = vperm.slane %v5235, %v5298
      %v5300 = vperm.slane %v5238, %v5298
      %v5301 = vperm.slane %v5241, %v5298
      %v5302 = vperm.slane %v5244, %v5298
      %v5303 = vperm.slane %v5247, %v5298
      %v5304 = vperm.slane %v5250, %v5298
      %v5305 = vperm.slane %v5253, %v5298
      %v5306 = vperm.slane %v5256, %v5298
      %v5307 = vperm.slane %v5259, %v5298
      %v5308 = vperm.slane %v5262, %v5298
      %v5309 = vperm.slane %v5265, %v5298
      %v5310 = vperm.slane %v5268, %v5298
      %v5311 = vperm.slane %v5271, %v5298
      %v5312 = vperm.slane %v5274, %v5298
      %v5313 = vperm.slane %v5277, %v5298
      %v5314 = vperm.slane %v5280, %v5298
      %vm5315 = vcmask 1041409
      %v5316 = vsel %vm5315, %v5300, %v5299
      %vm5317 = vcmask 1042434
      %v5318 = vsel %vm5317, %v5301, %v5316
      %vm5319 = vcmask 1043459
      %v5320 = vsel %vm5319, %v5302, %v5318
      %vm5321 = vcmask 1044484
      %v5322 = vsel %vm5321, %v5303, %v5320
      %vm5323 = vcmask 1045509
      %v5324 = vsel %vm5323, %v5304, %v5322
      %vm5325 = vcmask 1046534
      %v5326 = vsel %vm5325, %v5305, %v5324
      %vm5327 = vcmask 1047559
      %v5328 = vsel %vm5327, %v5306, %v5326
      %v5329 = vsel %vm5315, %v5308, %v5307
      %v5330 = vsel %vm5317, %v5309, %v5329
      %v5331 = vsel %vm5319, %v5310, %v5330
      %v5332 = vsel %vm5321, %v5311, %v5331
      %v5333 = vsel %vm5323, %v5312, %v5332
      %v5334 = vsel %vm5325, %v5313, %v5333
      %v5335 = vsel %vm5327, %v5314, %v5334
      %v5338 = vsel %vm2637, %v5328, -inf
      %5339 = vmax.xlane.f32.xlu0 %v5338
      %v5340 = vpop.xlane.xlu0 %5339
      %v5341 = vsel %vm2637, %v5335, -inf
      %5342 = vmax.xlane.f32.xlu0 %v5341
      %v5343 = vpop.xlane.xlu0 %5342
      %v5346 = vperm.slane %v5340, 0
      %v5347 = vperm.slane %v5340, 1
      %v5348 = vperm.slane %v5340, 2
      %v5349 = vperm.slane %v5340, 3
      %v5350 = vperm.slane %v5340, 4
      %v5351 = vperm.slane %v5340, 5
      %v5352 = vperm.slane %v5340, 6
      %v5353 = vperm.slane %v5340, 7
      %v5354 = vperm.slane %v5343, 0
      %v5355 = vperm.slane %v5343, 1
      %v5356 = vperm.slane %v5343, 2
      %v5357 = vperm.slane %v5343, 3
      %v5358 = vperm.slane %v5343, 4
      %v5359 = vperm.slane %v5343, 5
      %v5360 = vperm.slane %v5343, 6
      %v5361 = vperm.slane %v5343, 7
      %v5378 = vsub.f32 %v5235, %v5346
      %v5379 = vsub.f32 %v5238, %v5347
      %v5380 = vsub.f32 %v5241, %v5348
      %v5381 = vsub.f32 %v5244, %v5349
      %v5382 = vsub.f32 %v5247, %v5350
      %v5383 = vsub.f32 %v5250, %v5351
      %v5384 = vsub.f32 %v5253, %v5352
      %v5385 = vsub.f32 %v5256, %v5353
      %v5386 = vsub.f32 %v5259, %v5354
      %v5387 = vsub.f32 %v5262, %v5355
      %v5388 = vsub.f32 %v5265, %v5356
      %v5389 = vsub.f32 %v5268, %v5357
      %v5390 = vsub.f32 %v5271, %v5358
      %v5391 = vsub.f32 %v5274, %v5359
      %v5392 = vsub.f32 %v5277, %v5360
      %v5393 = vsub.f32 %v5280, %v5361
      %v5394 = vmul.f32 %v5378, 1.442695
      %v5395 = vpow.pop %v5394
      %v5396 = vmul.f32 %v5379, 1.442695
      %v5397 = vpow.pop %v5396
      %v5398 = vmul.f32 %v5380, 1.442695
      %v5399 = vpow.pop %v5398
      %v5400 = vmul.f32 %v5381, 1.442695
      %v5401 = vpow.pop %v5400
      %v5402 = vmul.f32 %v5382, 1.442695
      %v5403 = vpow.pop %v5402
      %v5404 = vmul.f32 %v5383, 1.442695
      %v5405 = vpow.pop %v5404
      %v5406 = vmul.f32 %v5384, 1.442695
      %v5407 = vpow.pop %v5406
      %v5408 = vmul.f32 %v5385, 1.442695
      %v5409 = vpow.pop %v5408
      %v5410 = vmul.f32 %v5386, 1.442695
      %v5411 = vpow.pop %v5410
      %v5412 = vmul.f32 %v5387, 1.442695
      %v5413 = vpow.pop %v5412
      %v5414 = vmul.f32 %v5388, 1.442695
      %v5415 = vpow.pop %v5414
      %v5416 = vmul.f32 %v5389, 1.442695
      %v5417 = vpow.pop %v5416
      %v5418 = vmul.f32 %v5390, 1.442695
      %v5419 = vpow.pop %v5418
      %v5420 = vmul.f32 %v5391, 1.442695
      %v5421 = vpow.pop %v5420
      %v5422 = vmul.f32 %v5392, 1.442695
      %v5423 = vpow.pop %v5422
      %v5424 = vmul.f32 %v5393, 1.442695
      %v5425 = vpow.pop %v5424
      %5442 = vset.pattern.permute.xlu0 0
      %5443 = vperm.xlu0 %5442, %v5395
      %v5444 = vpop.permute.xlu0 %5443
      %5445 = vset.pattern.permute.xlu0 0
      %5446 = vperm.xlu0 %5445, %v5397
      %v5447 = vpop.permute.xlu0 %5446
      %5448 = vset.pattern.permute.xlu0 0
      %5449 = vperm.xlu0 %5448, %v5399
      %v5450 = vpop.permute.xlu0 %5449
      %5451 = vset.pattern.permute.xlu0 0
      %5452 = vperm.xlu0 %5451, %v5401
      %v5453 = vpop.permute.xlu0 %5452
      %5454 = vset.pattern.permute.xlu0 0
      %5455 = vperm.xlu0 %5454, %v5403
      %v5456 = vpop.permute.xlu0 %5455
      %5457 = vset.pattern.permute.xlu0 0
      %5458 = vperm.xlu0 %5457, %v5405
      %v5459 = vpop.permute.xlu0 %5458
      %5460 = vset.pattern.permute.xlu0 0
      %5461 = vperm.xlu0 %5460, %v5407
      %v5462 = vpop.permute.xlu0 %5461
      %5463 = vset.pattern.permute.xlu0 0
      %5464 = vperm.xlu0 %5463, %v5409
      %v5465 = vpop.permute.xlu0 %5464
      %5466 = vset.pattern.permute.xlu0 0
      %5467 = vperm.xlu0 %5466, %v5411
      %v5468 = vpop.permute.xlu0 %5467
      %5469 = vset.pattern.permute.xlu0 0
      %5470 = vperm.xlu0 %5469, %v5413
      %v5471 = vpop.permute.xlu0 %5470
      %5472 = vset.pattern.permute.xlu0 0
      %5473 = vperm.xlu0 %5472, %v5415
      %v5474 = vpop.permute.xlu0 %5473
      %5475 = vset.pattern.permute.xlu0 0
      %5476 = vperm.xlu0 %5475, %v5417
      %v5477 = vpop.permute.xlu0 %5476
      %5478 = vset.pattern.permute.xlu0 0
      %5479 = vperm.xlu0 %5478, %v5419
      %v5480 = vpop.permute.xlu0 %5479
      %5481 = vset.pattern.permute.xlu0 0
      %5482 = vperm.xlu0 %5481, %v5421
      %v5483 = vpop.permute.xlu0 %5482
      %5484 = vset.pattern.permute.xlu0 0
      %5485 = vperm.xlu0 %5484, %v5423
      %v5486 = vpop.permute.xlu0 %5485
      %5487 = vset.pattern.permute.xlu0 0
      %5488 = vperm.xlu0 %5487, %v5425
      %v5489 = vpop.permute.xlu0 %5488
      %v5490 = vperm.slane %v5444, %v5298
      %v5491 = vperm.slane %v5447, %v5298
      %v5492 = vperm.slane %v5450, %v5298
      %v5493 = vperm.slane %v5453, %v5298
      %v5494 = vperm.slane %v5456, %v5298
      %v5495 = vperm.slane %v5459, %v5298
      %v5496 = vperm.slane %v5462, %v5298
      %v5497 = vperm.slane %v5465, %v5298
      %v5498 = vperm.slane %v5468, %v5298
      %v5499 = vperm.slane %v5471, %v5298
      %v5500 = vperm.slane %v5474, %v5298
      %v5501 = vperm.slane %v5477, %v5298
      %v5502 = vperm.slane %v5480, %v5298
      %v5503 = vperm.slane %v5483, %v5298
      %v5504 = vperm.slane %v5486, %v5298
      %v5505 = vperm.slane %v5489, %v5298
      %v5506 = vsel %vm5315, %v5491, %v5490
      %v5507 = vsel %vm5317, %v5492, %v5506
      %v5508 = vsel %vm5319, %v5493, %v5507
      %v5509 = vsel %vm5321, %v5494, %v5508
      %v5510 = vsel %vm5323, %v5495, %v5509
      %v5511 = vsel %vm5325, %v5496, %v5510
      %v5512 = vsel %vm5327, %v5497, %v5511
      %v5513 = vsel %vm5315, %v5499, %v5498
      %v5514 = vsel %vm5317, %v5500, %v5513
      %v5515 = vsel %vm5319, %v5501, %v5514
      %v5516 = vsel %vm5321, %v5502, %v5515
      %v5517 = vsel %vm5323, %v5503, %v5516
      %v5518 = vsel %vm5325, %v5504, %v5517
      %v5519 = vsel %vm5327, %v5505, %v5518
      %v5522 = vsel %vm2637, %v5512, 0.0
      %5523 = vadd.xlane.f32.xlu0 %v5522
      %v5524 = vpop.xlane.xlu0 %5523
      %v5525 = vsel %vm2637, %v5519, 0.0
      %5526 = vadd.xlane.f32.xlu0 %v5525
      %v5527 = vpop.xlane.xlu0 %5526
      %v5528 = vrcp.pop %v5524
      %v5529 = vrcp.pop %v5527
      %v5532 = vperm.slane %v5528, 0
      %v5533 = vperm.slane %v5528, 1
      %v5534 = vperm.slane %v5528, 2
      %v5535 = vperm.slane %v5528, 3
      %v5536 = vperm.slane %v5528, 4
      %v5537 = vperm.slane %v5528, 5
      %v5538 = vperm.slane %v5528, 6
      %v5539 = vperm.slane %v5528, 7
      %v5540 = vperm.slane %v5529, 0
      %v5541 = vperm.slane %v5529, 1
      %v5542 = vperm.slane %v5529, 2
      %v5543 = vperm.slane %v5529, 3
      %v5544 = vperm.slane %v5529, 4
      %v5545 = vperm.slane %v5529, 5
      %v5546 = vperm.slane %v5529, 6
      %v5547 = vperm.slane %v5529, 7
      %v5564 = vmul.f32 %v5395, %v5532
      %v5565 = vmul.f32 %v5397, %v5533
      %v5566 = vmul.f32 %v5399, %v5534
      %v5567 = vmul.f32 %v5401, %v5535
      %v5568 = vmul.f32 %v5403, %v5536
      %v5569 = vmul.f32 %v5405, %v5537
      %v5570 = vmul.f32 %v5407, %v5538
      %v5571 = vmul.f32 %v5409, %v5539
      %v5572 = vmul.f32 %v5411, %v5540
      %v5573 = vmul.f32 %v5413, %v5541
      %v5574 = vmul.f32 %v5415, %v5542
      %v5575 = vmul.f32 %v5417, %v5543
      %v5576 = vmul.f32 %v5419, %v5544
      %v5577 = vmul.f32 %v5421, %v5545
      %v5578 = vmul.f32 %v5423, %v5546
      %v5579 = vmul.f32 %v5425, %v5547
      %5581 = vset.pattern.permute.xlu0 0
      %5582 = vperm.xlu0 %5581, %v5564
      %v5583 = vpop.permute.xlu0 %5582
      %5586 = vset.pattern.permute.xlu0 0
      %5587 = vperm.xlu0 %5586, %v5565
      %v5588 = vpop.permute.xlu0 %5587
      %5591 = vset.pattern.permute.xlu0 0
      %5592 = vperm.xlu0 %5591, %v5566
      %v5593 = vpop.permute.xlu0 %5592
      %5596 = vset.pattern.permute.xlu0 0
      %5597 = vperm.xlu0 %5596, %v5567
      %v5598 = vpop.permute.xlu0 %5597
      %5601 = vset.pattern.permute.xlu0 0
      %5602 = vperm.xlu0 %5601, %v5568
      %v5603 = vpop.permute.xlu0 %5602
      %5606 = vset.pattern.permute.xlu0 0
      %5607 = vperm.xlu0 %5606, %v5569
      %v5608 = vpop.permute.xlu0 %5607
      %5611 = vset.pattern.permute.xlu0 0
      %5612 = vperm.xlu0 %5611, %v5570
      %v5613 = vpop.permute.xlu0 %5612
      %5616 = vset.pattern.permute.xlu0 0
      %5617 = vperm.xlu0 %5616, %v5571
      %v5618 = vpop.permute.xlu0 %5617
      %5621 = vset.pattern.permute.xlu0 0
      %5622 = vperm.xlu0 %5621, %v5572
      %v5623 = vpop.permute.xlu0 %5622
      %5626 = vset.pattern.permute.xlu0 0
      %5627 = vperm.xlu0 %5626, %v5573
      %v5628 = vpop.permute.xlu0 %5627
      %5631 = vset.pattern.permute.xlu0 0
      %5632 = vperm.xlu0 %5631, %v5574
      %v5633 = vpop.permute.xlu0 %5632
      %5636 = vset.pattern.permute.xlu0 0
      %5637 = vperm.xlu0 %5636, %v5575
      %v5638 = vpop.permute.xlu0 %5637
      %5641 = vset.pattern.permute.xlu0 0
      %5642 = vperm.xlu0 %5641, %v5576
      %v5643 = vpop.permute.xlu0 %5642
      %5646 = vset.pattern.permute.xlu0 0
      %5647 = vperm.xlu0 %5646, %v5577
      %v5648 = vpop.permute.xlu0 %5647
      %5651 = vset.pattern.permute.xlu0 0
      %5652 = vperm.xlu0 %5651, %v5578
      %v5653 = vpop.permute.xlu0 %5652
      %5656 = vset.pattern.permute.xlu0 0
      %5657 = vperm.xlu0 %5656, %v5579
      %v5658 = vpop.permute.xlu0 %5657
      %v5660 = vmul.f32 %v5039, %v5583
      %v5661 = vmul.f32 %v5040, %v5588
      %v5662 = vmul.f32 %v5041, %v5593
      %v5663 = vmul.f32 %v5042, %v5598
      %v5664 = vmul.f32 %v5043, %v5603
      %v5665 = vmul.f32 %v5044, %v5608
      %v5666 = vmul.f32 %v5045, %v5613
      %v5667 = vmul.f32 %v5046, %v5618
      %v5668 = vmul.f32 %v5047, %v5623
      %v5669 = vmul.f32 %v5048, %v5628
      %v5670 = vmul.f32 %v5049, %v5633
      %v5671 = vmul.f32 %v5050, %v5638
      %v5672 = vmul.f32 %v5051, %v5643
      %v5673 = vmul.f32 %v5052, %v5648
      %v5674 = vmul.f32 %v5053, %v5653
      %v5675 = vmul.f32 %v5054, %v5658
      %v5676 = vsel %vm5123, %v5660, 0.0
      %v5677 = vrot.slane %v5676, 4
      %v5678 = vadd.f32 %v5676, %v5677
      %v5679 = vrot.slane %v5678, 2
      %v5680 = vadd.f32 %v5678, %v5679
      %v5681 = vrot.slane %v5680, 1
      %v5682 = vadd.f32 %v5680, %v5681
      %v5683 = vsel %vm5123, %v5661, 0.0
      %v5684 = vrot.slane %v5683, 4
      %v5685 = vadd.f32 %v5683, %v5684
      %v5686 = vrot.slane %v5685, 2
      %v5687 = vadd.f32 %v5685, %v5686
      %v5688 = vrot.slane %v5687, 1
      %v5689 = vadd.f32 %v5687, %v5688
      %v5690 = vsel %vm5123, %v5662, 0.0
      %v5691 = vrot.slane %v5690, 4
      %v5692 = vadd.f32 %v5690, %v5691
      %v5693 = vrot.slane %v5692, 2
      %v5694 = vadd.f32 %v5692, %v5693
      %v5695 = vrot.slane %v5694, 1
      %v5696 = vadd.f32 %v5694, %v5695
      %v5697 = vsel %vm5123, %v5663, 0.0
      %v5698 = vrot.slane %v5697, 4
      %v5699 = vadd.f32 %v5697, %v5698
      %v5700 = vrot.slane %v5699, 2
      %v5701 = vadd.f32 %v5699, %v5700
      %v5702 = vrot.slane %v5701, 1
      %v5703 = vadd.f32 %v5701, %v5702
      %v5704 = vsel %vm5123, %v5664, 0.0
      %v5705 = vrot.slane %v5704, 4
      %v5706 = vadd.f32 %v5704, %v5705
      %v5707 = vrot.slane %v5706, 2
      %v5708 = vadd.f32 %v5706, %v5707
      %v5709 = vrot.slane %v5708, 1
      %v5710 = vadd.f32 %v5708, %v5709
      %v5711 = vsel %vm5123, %v5665, 0.0
      %v5712 = vrot.slane %v5711, 4
      %v5713 = vadd.f32 %v5711, %v5712
      %v5714 = vrot.slane %v5713, 2
      %v5715 = vadd.f32 %v5713, %v5714
      %v5716 = vrot.slane %v5715, 1
      %v5717 = vadd.f32 %v5715, %v5716
      %v5718 = vsel %vm5123, %v5666, 0.0
      %v5719 = vrot.slane %v5718, 4
      %v5720 = vadd.f32 %v5718, %v5719
      %v5721 = vrot.slane %v5720, 2
      %v5722 = vadd.f32 %v5720, %v5721
      %v5723 = vrot.slane %v5722, 1
      %v5724 = vadd.f32 %v5722, %v5723
      %v5725 = vsel %vm5123, %v5667, 0.0
      %v5726 = vrot.slane %v5725, 4
      %v5727 = vadd.f32 %v5725, %v5726
      %v5728 = vrot.slane %v5727, 2
      %v5729 = vadd.f32 %v5727, %v5728
      %v5730 = vrot.slane %v5729, 1
      %v5731 = vadd.f32 %v5729, %v5730
      %v5732 = vsel %vm5123, %v5668, 0.0
      %v5733 = vrot.slane %v5732, 4
      %v5734 = vadd.f32 %v5732, %v5733
      %v5735 = vrot.slane %v5734, 2
      %v5736 = vadd.f32 %v5734, %v5735
      %v5737 = vrot.slane %v5736, 1
      %v5738 = vadd.f32 %v5736, %v5737
      %v5739 = vsel %vm5123, %v5669, 0.0
      %v5740 = vrot.slane %v5739, 4
      %v5741 = vadd.f32 %v5739, %v5740
      %v5742 = vrot.slane %v5741, 2
      %v5743 = vadd.f32 %v5741, %v5742
      %v5744 = vrot.slane %v5743, 1
      %v5745 = vadd.f32 %v5743, %v5744
      %v5746 = vsel %vm5123, %v5670, 0.0
      %v5747 = vrot.slane %v5746, 4
      %v5748 = vadd.f32 %v5746, %v5747
      %v5749 = vrot.slane %v5748, 2
      %v5750 = vadd.f32 %v5748, %v5749
      %v5751 = vrot.slane %v5750, 1
      %v5752 = vadd.f32 %v5750, %v5751
      %v5753 = vsel %vm5123, %v5671, 0.0
      %v5754 = vrot.slane %v5753, 4
      %v5755 = vadd.f32 %v5753, %v5754
      %v5756 = vrot.slane %v5755, 2
      %v5757 = vadd.f32 %v5755, %v5756
      %v5758 = vrot.slane %v5757, 1
      %v5759 = vadd.f32 %v5757, %v5758
      %v5760 = vsel %vm5123, %v5672, 0.0
      %v5761 = vrot.slane %v5760, 4
      %v5762 = vadd.f32 %v5760, %v5761
      %v5763 = vrot.slane %v5762, 2
      %v5764 = vadd.f32 %v5762, %v5763
      %v5765 = vrot.slane %v5764, 1
      %v5766 = vadd.f32 %v5764, %v5765
      %v5767 = vsel %vm5123, %v5673, 0.0
      %v5768 = vrot.slane %v5767, 4
      %v5769 = vadd.f32 %v5767, %v5768
      %v5770 = vrot.slane %v5769, 2
      %v5771 = vadd.f32 %v5769, %v5770
      %v5772 = vrot.slane %v5771, 1
      %v5773 = vadd.f32 %v5771, %v5772
      %v5774 = vsel %vm5123, %v5674, 0.0
      %v5775 = vrot.slane %v5774, 4
      %v5776 = vadd.f32 %v5774, %v5775
      %v5777 = vrot.slane %v5776, 2
      %v5778 = vadd.f32 %v5776, %v5777
      %v5779 = vrot.slane %v5778, 1
      %v5780 = vadd.f32 %v5778, %v5779
      %v5781 = vsel %vm5123, %v5675, 0.0
      %v5782 = vrot.slane %v5781, 4
      %v5783 = vadd.f32 %v5781, %v5782
      %v5784 = vrot.slane %v5783, 2
      %v5785 = vadd.f32 %v5783, %v5784
      %v5786 = vrot.slane %v5785, 1
      %v5787 = vadd.f32 %v5785, %v5786
      %v5804 = vsel %vm5315, %v5689, %v5682
      %v5805 = vsel %vm5317, %v5696, %v5804
      %v5806 = vsel %vm5319, %v5703, %v5805
      %v5807 = vsel %vm5321, %v5710, %v5806
      %v5808 = vsel %vm5323, %v5717, %v5807
      %v5809 = vsel %vm5325, %v5724, %v5808
      %v5810 = vsel %vm5327, %v5731, %v5809
      %v5811 = vsel %vm5315, %v5745, %v5738
      %v5812 = vsel %vm5317, %v5752, %v5811
      %v5813 = vsel %vm5319, %v5759, %v5812
      %v5814 = vsel %vm5321, %v5766, %v5813
      %v5815 = vsel %vm5323, %v5773, %v5814
      %v5816 = vsel %vm5325, %v5780, %v5815
      %v5817 = vsel %vm5327, %v5787, %v5816
      %5820 = vst.msk [vmem:[%s361] sm:$0xff] %vm5123, %v5810
      %5821 = vst.msk [vmem:[%s361 + $0x8] sm:$0xff] %vm5123, %v5817
      %s5822 = smul.u32 2, %s21
      %p5823 = scmp.lt.s32.totalorder %s5822, 3
      %s5824 = scalar_select %p5823, %s5822, 3
      %s5825 = smul.addr %s5824, 8
      %s5826 = scalar_lea.vmem %s10, %s5825
      // Predicated region
      $region61: #{nrms_forward.2} parent=59 // pred_check
        %p5827 = pneg %p254
      $region62: #{nrms_forward.2} parent=59 // pred_check_branch
        %5829 = sbr.rel (%p5827) target = $region64
      $region63: #{nrms_forward.2} parent=59 // pred_region
        %s5830 = smul.u32 2, %s21
      $region64: #{nrms_forward.2} parent=59 // pred_fallthru
        _
    $region60: #{nrms_forward.2} parent=5 // pred_fallthru
      _
    %p5831 = scmp.le.s32.totalorder 2, %s16
    // Predicated region
    $region65: #{nrms_forward.2} parent=5 // pred_check
      %p5832 = pneg %p5831
    $region66: #{nrms_forward.2} parent=5 // pred_check_branch
      %5834 = sbr.rel (%p5832) target = $region68
    $region67: #{nrms_forward.2} parent=5 // pred_region
      %s5835 = ssub.s32 %s16, 2
      // Predicated region
      $region69: #{nrms_forward.2} parent=67 // pred_check
        %p5836 = pneg %p260
      $region70: #{nrms_forward.2} parent=67 // pred_check_branch
        %5838 = sbr.rel (%p5836) target = $region72
      $region71: #{nrms_forward.2} parent=67 // pred_region
        %s5839 = smul.u32 2, %s22
        %p5840 = scmp.lt.s32.totalorder %s5839, 3
        %s5841 = scalar_select %p5840, %s5839, 3
        %s5842 = smul.addr %s5841, 8
        %s5843 = scalar_lea.vmem %s10, %s5842
      $region72: #{nrms_forward.2} parent=67 // pred_fallthru
        _
    $region68: #{nrms_forward.2} parent=5 // pred_fallthru
      _
  $region6: #{nrms_forward.2} parent=0 // loop_footer
    %s20 = sadd.s32 1, %s16
  $region7: #{nrms_forward.2} parent=0 // loop_footer_branch
    %15 = sbr.rel target = $region3
  $region8: #{nrms_forward.2} parent=0 // loop_exit
    _

</llo_original>
